<compile_context>
chip_gen: v5e
topology: v5e:2x2
jax: 0.10.0
libtpu: 0.0.40
codegen_flags: <defaults>
</compile_context>

<pallas_src>
import functools
import math

import numpy as np

import jax
import jax.numpy as jnp
from jax.experimental import pallas as pl
from jax.experimental.pallas import tpu as pltpu


def _ru8(n):
    return ((n + 7) // 8) * 8


def _sinusoidal_pe(L, D, padding_idx=0):
    """fairseq-style sinusoidal positional embedding, as a numpy constant (L, D)."""
    half = D // 2
    log_t = math.log(10000.0) / (half - 1)
    freqs = np.exp(np.arange(half, dtype=np.float32) * -log_t)
    pos = np.arange(padding_idx + 1, padding_idx + 1 + L, dtype=np.float32)
    args = pos[:, None] * freqs[None, :]
    pe = np.concatenate([np.sin(args), np.cos(args)], axis=1)
    if D % 2 == 1:
        pe = np.concatenate([pe, np.zeros((L, 1), np.float32)], axis=1)
    return pe.astype(np.float32)


def _packed_pos_embeddings(B, Ll, La, Lv, D, CD):
    """One constant slab holding pe_a | pe_v | pe_l | pe_mem at 8-aligned row offsets."""
    RA, RV, RL = B * La, B * Lv, B * Ll
    p_a = 0
    p_v = p_a + _ru8(RA)
    p_l = p_v + _ru8(RV)
    p_m = p_l + _ru8(RL)
    tot = p_m + _ru8(RL)
    pe = np.zeros((tot, CD), np.float32)
    pe[p_a:p_a + RA, :D] = np.tile(_sinusoidal_pe(La, D), (B, 1))
    pe[p_v:p_v + RV, :D] = np.tile(_sinusoidal_pe(Lv, D), (B, 1))
    pe[p_l:p_l + RL, :D] = np.tile(_sinusoidal_pe(Ll, D), (B, 1))
    pe[p_m:p_m + RL, :CD] = np.tile(_sinusoidal_pe(Ll, CD), (B, 1))
    return jnp.asarray(pe)


# ----------------------------------------------------------------------------
# The single fused kernel: 3 encoder stacks + output head, all VMEM-resident.
# ----------------------------------------------------------------------------

def _mult_kernel(xl_ref, xa_ref, xv_ref, wproj_ref, pe_ref, pad_ref,
                 c_w4, c_f1w, c_f2w, c_vec, c_f1b, c_lnf,
                 m_w4, m_f1w, m_f2w, m_vec, m_f1b, m_lnf,
                 hw_ref, hb_ref, ow_ref, ob_ref,
                 o_ref,
                 *, num_heads, B, Ll, La, Lv, orig_dims, n_cross, n_mem, eps=1e-5):
    f32 = jnp.float32
    NEG = f32(-1e9)
    D, CD = 30, 60
    RL, RA, RV = B * Ll, B * La, B * Lv

    # ---------- small helpers (all traced inline, loops fully unrolled) ----------
    def layer_norm(t, g, b):
        mu = jnp.mean(t, axis=-1, keepdims=True)
        tc = t - mu
        var = jnp.mean(tc * tc, axis=-1, keepdims=True)
        return tc * jax.lax.rsqrt(var + eps) * g + b

    def head_masks(width):
        # 0/1 column masks per head: full-width matmuls replace Dh-sized lane slices.
        dh = width // num_heads
        col = jax.lax.broadcasted_iota(jnp.int32, (1, width), 1)
        masks = [jnp.where((col >= h * dh) & (col < (h + 1) * dh), f32(1.0), f32(0.0))
                 for h in range(num_heads)]
        scale = f32(1.0 / math.sqrt(dh))
        qmasks = [m * scale for m in masks]
        return masks, qmasks

    def block_mask(RQ, Lq, RK, Lk, pad_row):
        # Batch block-diagonal + key padding additive mask, built in-kernel.
        ri = jax.lax.broadcasted_iota(jnp.int32, (RQ, RK), 0)
        ci = jax.lax.broadcasted_iota(jnp.int32, (RQ, RK), 1)
        same = None
        for b in range(B):
            blk = ((ri >= b * Lq) & (ri < (b + 1) * Lq) &
                   (ci >= b * Lk) & (ci < (b + 1) * Lk))
            same = blk if same is None else (same | blk)
        return jnp.where(same, f32(0.0), NEG) + pad_row * NEG

    hm_d, qm_d = head_masks(D)
    hm_cd, qm_cd = head_masks(CD)

    def run_encoder(x, x_kv, mask, w4, f1w, f2w, vec, f1b, lnf,
                    layer_base, lnf_base, n_layers, hmasks, qmasks):
        cross = x_kv is not None
        if cross:
            # x_kv is constant across layers: hoist the LN statistics out of the loop.
            kv_mu = jnp.mean(x_kv, axis=-1, keepdims=True)
            kv_c = x_kv - kv_mu
            kv_rs = jax.lax.rsqrt(jnp.mean(kv_c * kv_c, axis=-1, keepdims=True) + eps)
            kv_norm = kv_c * kv_rs
        for lyr in range(n_layers):
            li = layer_base + lyr

            def vrow(j, li=li):
                return vec[li, j:j + 1, :]                        # (1, width)

            ln0_g, ln0_b = vrow(0), vrow(1)
            bq, bk, bv, bo = vrow(2), vrow(3), vrow(4), vrow(5)
            ln1_g, ln1_b, f2b = vrow(6), vrow(7), vrow(8)

            # ---------------- attention block (pre-LayerNorm) ----------------
            xn = layer_norm(x, ln0_g, ln0_b)
            src = (kv_norm * ln0_g + ln0_b) if cross else xn

            q = jnp.dot(xn, w4[li * 4 + 0], preferred_element_type=f32) + bq
            k = jnp.dot(src, w4[li * 4 + 1], preferred_element_type=f32) + bk
            v = jnp.dot(src, w4[li * 4 + 2], preferred_element_type=f32) + bv

            acc = None
            for h in range(num_heads):
                qh = q * qmasks[h]                                # zero non-head cols + scale
                s = jax.lax.dot_general(qh, k, (((1,), (1,)), ((), ())),
                                        preferred_element_type=f32)
                s = s + mask
                s = s - jnp.max(s, axis=-1, keepdims=True)
                p = jnp.exp(s)
                p = p * pl.reciprocal(jnp.sum(p, axis=-1, keepdims=True), approx=True)
                part = jnp.dot(p, v * hmasks[h], preferred_element_type=f32)
                acc = part if acc is None else acc + part

            attn = jnp.dot(acc, w4[li * 4 + 3], preferred_element_type=f32) + bo
            x = x + attn

            # ---------------- feed-forward block (pre-LayerNorm) ----------------
            xn2 = layer_norm(x, ln1_g, ln1_b)
            h1 = jnp.dot(xn2, f1w[li], preferred_element_type=f32) + f1b[li]
            h1 = jnp.maximum(h1, 0.0)
            h2 = jnp.dot(h1, f2w[li], preferred_element_type=f32) + f2b
            x = x + h2

        return layer_norm(x, lnf[lnf_base:lnf_base + 1, :],
                          lnf[lnf_base + 1:lnf_base + 2, :])

    # ---------- modality projections (Conv1d k=1, no bias) ----------
    ol, oa, ov = orig_dims
    off_a = _ru8(ol)
    off_v = off_a + _ru8(oa)
    xl = jnp.dot(xl_ref[...], wproj_ref[0:ol, :], preferred_element_type=f32)
    xa = jnp.dot(xa_ref[...], wproj_ref[off_a:off_a + oa, :], preferred_element_type=f32)
    xv = jnp.dot(xv_ref[...], wproj_ref[off_v:off_v + ov, :], preferred_element_type=f32)

    # ---------- embed scale + positional embeddings (packed constant slab) ----------
    p_a = 0
    p_v = p_a + _ru8(RA)
    p_l = p_v + _ru8(RV)
    p_m = p_l + _ru8(RL)
    pe_a = pe_ref[p_a:p_a + RA, 0:D]
    pe_v = pe_ref[p_v:p_v + RV, 0:D]
    pe_l = pe_ref[p_l:p_l + RL, 0:D]
    pe_m = pe_ref[p_m:p_m + RL, 0:CD]

    s30 = f32(math.sqrt(D))
    s60 = f32(math.sqrt(CD))
    xq_l = s30 * xl + pe_l                                        # (RL, 30)
    xk_a = s30 * xa + pe_a                                        # (RA, 30)
    xk_v = s30 * xv + pe_v                                        # (RV, 30)

    mask_a = block_mask(RL, Ll, RA, La, pad_ref[0:1, 0:RA])
    mask_v = block_mask(RL, Ll, RV, Lv, pad_ref[1:2, 0:RV])
    mask_l = block_mask(RL, Ll, RL, Ll, pad_ref[2:3, 0:RL])

    # ---------- two cross-modal encoder stacks ----------
    h_la = run_encoder(xq_l, xk_a, mask_a, c_w4, c_f1w, c_f2w, c_vec, c_f1b, c_lnf,
                       layer_base=0, lnf_base=0, n_layers=n_cross,
                       hmasks=hm_d, qmasks=qm_d)
    h_lv = run_encoder(xq_l, xk_v, mask_v, c_w4, c_f1w, c_f2w, c_vec, c_f1b, c_lnf,
                       layer_base=n_cross, lnf_base=2, n_layers=n_cross,
                       hmasks=hm_d, qmasks=qm_d)

    # "concat" along lanes via identity-embedding matmuls (MXU, no lane relayout).
    r = jax.lax.broadcasted_iota(jnp.int32, (D, CD), 0)
    c = jax.lax.broadcasted_iota(jnp.int32, (D, CD), 1)
    e_lo = jnp.where(c == r, f32(1.0), f32(0.0))
    e_hi = jnp.where(c == r + D, f32(1.0), f32(0.0))
    h_cat = (jnp.dot(h_la, e_lo, preferred_element_type=f32) +
             jnp.dot(h_lv, e_hi, preferred_element_type=f32))     # (RL, 60)

    # ---------- memory (self-attention) encoder stack ----------
    x_mem = s60 * h_cat + pe_m
    h_mem = run_encoder(x_mem, None, mask_l, m_w4, m_f1w, m_f2w, m_vec, m_f1b, m_lnf,
                        layer_base=0, lnf_base=0, n_layers=n_mem,
                        hmasks=hm_cd, qmasks=qm_cd)               # (RL, 60)

    # ---------- last-timestep row select via a tiny selection matmul ----------
    rr = jax.lax.broadcasted_iota(jnp.int32, (B, RL), 0)
    cc = jax.lax.broadcasted_iota(jnp.int32, (B, RL), 1)
    sel = jnp.where(cc == (rr + 1) * Ll - 1, f32(1.0), f32(0.0))
    last = jnp.dot(sel, h_mem, preferred_element_type=f32)        # (B, 60)

    # ---------- output head: proj1 -> relu -> proj2 -> +residual -> out_layer ----------
    h = jnp.dot(last, hw_ref[0], preferred_element_type=f32) + hb_ref[0:1, :]
    h = jnp.maximum(h, 0.0)
    h = jnp.dot(h, hw_ref[1], preferred_element_type=f32) + hb_ref[1:2, :]
    h = h + last
    y = jnp.dot(h, ow_ref[...], preferred_element_type=f32) + ob_ref[...]
    o_ref[...] = y.astype(o_ref.dtype)


# ----------------------------------------------------------------------------
# Parameters (packed / pre-transposed layouts decided at init time)
# ----------------------------------------------------------------------------

class HParams:
    orig_d_l, orig_d_a, orig_d_v = 20, 24, 28
    num_heads = 5          # 30 % 5 == 0 and 60 % 5 == 0
    layers = 2
    attn_dropout = attn_dropout_a = attn_dropout_v = 0.0
    relu_dropout = res_dropout = out_dropout = embed_dropout = 0.0
    attn_mask = False
    output_dim = 4


def init_params(key, hp):
    keys = iter(jax.random.split(key, 64))

    def w(shape, scale=0.05):
        return scale * jax.random.normal(next(keys), shape, jnp.float32)

    d, cd = 30, 60
    n_cross = max(hp.layers, -1)
    n_mem = max(hp.layers, 3)

    def encoder(D, n_layers):
        # vec rows: [ln0_g, ln0_b, bq, bk, bv, bo, ln1_g, ln1_b, fc2_b]
        vec = jnp.zeros((n_layers, 9, D), jnp.float32)
        vec = vec.at[:, 0, :].set(1.0).at[:, 6, :].set(1.0)
        return {
            "w4": w((n_layers * 4, D, D)),            # per layer: [wq, wk, wv, wo]
            "f1w": w((n_layers, D, 4 * D)),
            "f2w": w((n_layers, 4 * D, D)),
            "vec": vec,
            "f1b": jnp.zeros((n_layers, 1, 4 * D), jnp.float32),
            "lnf": jnp.concatenate([jnp.ones((1, D), jnp.float32),
                                    jnp.zeros((1, D), jnp.float32)], axis=0),
        }

    enc_la, enc_lv = encoder(d, n_cross), encoder(d, n_cross)
    enc_mem = encoder(cd, n_mem)

    # Packed Conv1d(k=1) projection weights, stored pre-transposed (in, out),
    # stacked at 8-aligned row offsets.
    ol, oa, ov = hp.orig_d_l, hp.orig_d_a, hp.orig_d_v
    off_a = _ru8(ol)
    off_v = off_a + _ru8(oa)
    wproj = jnp.zeros((off_v + _ru8(ov), d), jnp.float32)
    wproj = wproj.at[0:ol].set(w((ol, d)))
    wproj = wproj.at[off_a:off_a + oa].set(w((oa, d)))
    wproj = wproj.at[off_v:off_v + ov].set(w((ov, d)))

    params = {
        "wproj": wproj,
        "head_w": w((2, cd, cd)),                     # [proj1_w, proj2_w]
        "head_b": jnp.zeros((2, cd), jnp.float32),    # [proj1_b, proj2_b]
        "out_w": w((cd, hp.output_dim)),
        "out_b": jnp.zeros((1, hp.output_dim), jnp.float32),
    }
    for k in enc_la:
        params["c_" + k] = jnp.concatenate([enc_la[k], enc_lv[k]], axis=0)
        params["m_" + k] = enc_mem[k]
    return params


# ----------------------------------------------------------------------------
# MULTModel forward: ONE pallas_call for the whole model
# ----------------------------------------------------------------------------

def mult_forward(params, x_l, x_a, x_v, mask_l, mask_a, mask_v, *, hp):
    # x_*: (B, L_*, orig_d_*); mask_*: (B, L_*) bool, True = padded key position.
    B, Ll, _ = x_l.shape
    La, Lv = x_a.shape[1], x_v.shape[1]
    D, CD = 30, 60
    RL, RA, RV = B * Ll, B * La, B * Lv

    # Flatten to (B*L, C) rows ordered b*L + l; no transposes needed anywhere.
    xl2 = x_l.reshape(RL, -1).astype(jnp.float32)
    xa2 = x_a.reshape(RA, -1).astype(jnp.float32)
    xv2 = x_v.reshape(RV, -1).astype(jnp.float32)

    pe = _packed_pos_embeddings(B, Ll, La, Lv, D, CD)             # trace-time constant

    # Packed key-padding rows (1.0 = pad); the block-diagonal part is built in-kernel.
    rk_max = max(RA, RV, RL)
    pads = jnp.ones((3, rk_max), jnp.float32)
    pads = pads.at[0, :RA].set(mask_a.reshape(RA).astype(jnp.float32))
    pads = pads.at[1, :RV].set(mask_v.reshape(RV).astype(jnp.float32))
    pads = pads.at[2, :RL].set(mask_l.reshape(RL).astype(jnp.float32))

    n_cross = params["c_f1w"].shape[0] // 2
    n_mem = params["m_f1w"].shape[0]

    kernel = functools.partial(
        _mult_kernel, num_heads=hp.num_heads, B=B, Ll=Ll, La=La, Lv=Lv,
        orig_dims=(hp.orig_d_l, hp.orig_d_a, hp.orig_d_v),
        n_cross=n_cross, n_mem=n_mem)

    inputs = [
        xl2, xa2, xv2, params["wproj"], pe, pads,
        params["c_w4"], params["c_f1w"], params["c_f2w"],
        params["c_vec"], params["c_f1b"], params["c_lnf"],
        params["m_w4"], params["m_f1w"], params["m_f2w"],
        params["m_vec"], params["m_f1b"], params["m_lnf"],
        params["head_w"], params["head_b"], params["out_w"], params["out_b"],
    ]
    vmem = pl.BlockSpec(memory_space=pltpu.MemorySpace.VMEM)
    return pl.pallas_call(
        kernel,
        out_shape=jax.ShapeDtypeStruct((B, hp.output_dim), jnp.float32),
        in_specs=[vmem] * len(inputs),
        out_specs=vmem,
        cost_estimate=pl.CostEstimate(flops=3_000_000, transcendentals=15_000,
                                      bytes_accessed=800_000),
    )(*inputs)


if __name__ == "__main__":
    hp = HParams()
    key = jax.random.PRNGKey(0)
    kp, kl, ka, kv = jax.random.split(key, 4)
    params = init_params(kp, hp)

    B, Ll, La, Lv = 2, 8, 10, 12
    x_l = jax.random.normal(kl, (B, Ll, hp.orig_d_l), jnp.float32)
    x_a = jax.random.normal(ka, (B, La, hp.orig_d_a), jnp.float32)
    x_v = jax.random.normal(kv, (B, Lv, hp.orig_d_v), jnp.float32)
    mask_l = jnp.zeros((B, Ll), bool).at[1, -1].set(True)
    mask_a = jnp.zeros((B, La), bool).at[0, -2:].set(True)
    mask_v = jnp.zeros((B, Lv), bool).at[1, -3:].set(True)

    fwd = jax.jit(functools.partial(mult_forward, hp=hp))
    out = fwd(params, x_l, x_a, x_v, mask_l, mask_a, mask_v)
    out = jax.block_until_ready(out)
    assert out.shape == (B, hp.output_dim), out.shape
    assert bool(jnp.all(jnp.isfinite(out)))
    print("KERNEL_OK")
</pallas_src>

<mosaic_0001>
module attributes {stable_mosaic.version = 11 : i64} {
  func.func @_mult_kernel(%arg0: memref<16x20xf32, #tpu.memory_space<vmem>>, %arg1: memref<20x24xf32, #tpu.memory_space<vmem>>, %arg2: memref<24x28xf32, #tpu.memory_space<vmem>>, %arg3: memref<80x30xf32, #tpu.memory_space<vmem>>, %arg4: memref<80x60xf32, #tpu.memory_space<vmem>>, %arg5: memref<3x24xf32, #tpu.memory_space<vmem>>, %arg6: memref<16x30x30xf32, #tpu.memory_space<vmem>>, %arg7: memref<4x30x120xf32, #tpu.memory_space<vmem>>, %arg8: memref<4x120x30xf32, #tpu.memory_space<vmem>>, %arg9: memref<4x9x30xf32, #tpu.memory_space<vmem>>, %arg10: memref<4x1x120xf32, #tpu.memory_space<vmem>>, %arg11: memref<4x30xf32, #tpu.memory_space<vmem>>, %arg12: memref<12x60x60xf32, #tpu.memory_space<vmem>>, %arg13: memref<3x60x240xf32, #tpu.memory_space<vmem>>, %arg14: memref<3x240x60xf32, #tpu.memory_space<vmem>>, %arg15: memref<3x9x60xf32, #tpu.memory_space<vmem>>, %arg16: memref<3x1x240xf32, #tpu.memory_space<vmem>>, %arg17: memref<2x60xf32, #tpu.memory_space<vmem>>, %arg18: memref<2x60x60xf32, #tpu.memory_space<vmem>>, %arg19: memref<2x60xf32, #tpu.memory_space<vmem>>, %arg20: memref<60x4xf32, #tpu.memory_space<vmem>>, %arg21: memref<1x4xf32, #tpu.memory_space<vmem>>, %arg22: memref<2x4xf32, #tpu.memory_space<vmem>>) attributes {dimension_semantics = [], scalar_prefetch = 0 : i64, scratch_operands = 0 : i64, tpu.core_type = #tpu.core_type<tc>} {
    %0 = tpu.iota {dimensions = array<i32: 1>} : vector<1x30xi32>
    %c0_i32 = arith.constant 0 : i32
    %1 = vector.broadcast %c0_i32 : i32 to vector<1x30xi32>
    %2 = arith.cmpi sge, %0, %1 : vector<1x30xi32>
    %c6_i32 = arith.constant 6 : i32
    %3 = vector.broadcast %c6_i32 : i32 to vector<1x30xi32>
    %4 = arith.cmpi slt, %0, %3 : vector<1x30xi32>
    %5 = arith.andi %2, %4 : vector<1x30xi1>
    %cst = arith.constant 1.000000e+00 : f32
    %cst_0 = arith.constant 0.000000e+00 : f32
    %6 = vector.broadcast %cst : f32 to vector<1x30xf32>
    %7 = vector.broadcast %cst_0 : f32 to vector<1x30xf32>
    %8 = arith.select %5, %6, %7 : vector<1x30xi1>, vector<1x30xf32>
    %c6_i32_1 = arith.constant 6 : i32
    %9 = vector.broadcast %c6_i32_1 : i32 to vector<1x30xi32>
    %10 = arith.cmpi sge, %0, %9 : vector<1x30xi32>
    %c12_i32 = arith.constant 12 : i32
    %11 = vector.broadcast %c12_i32 : i32 to vector<1x30xi32>
    %12 = arith.cmpi slt, %0, %11 : vector<1x30xi32>
    %13 = arith.andi %10, %12 : vector<1x30xi1>
    %cst_2 = arith.constant 1.000000e+00 : f32
    %cst_3 = arith.constant 0.000000e+00 : f32
    %14 = vector.broadcast %cst_2 : f32 to vector<1x30xf32>
    %15 = vector.broadcast %cst_3 : f32 to vector<1x30xf32>
    %16 = arith.select %13, %14, %15 : vector<1x30xi1>, vector<1x30xf32>
    %c12_i32_4 = arith.constant 12 : i32
    %17 = vector.broadcast %c12_i32_4 : i32 to vector<1x30xi32>
    %18 = arith.cmpi sge, %0, %17 : vector<1x30xi32>
    %c18_i32 = arith.constant 18 : i32
    %19 = vector.broadcast %c18_i32 : i32 to vector<1x30xi32>
    %20 = arith.cmpi slt, %0, %19 : vector<1x30xi32>
    %21 = arith.andi %18, %20 : vector<1x30xi1>
    %cst_5 = arith.constant 1.000000e+00 : f32
    %cst_6 = arith.constant 0.000000e+00 : f32
    %22 = vector.broadcast %cst_5 : f32 to vector<1x30xf32>
    %23 = vector.broadcast %cst_6 : f32 to vector<1x30xf32>
    %24 = arith.select %21, %22, %23 : vector<1x30xi1>, vector<1x30xf32>
    %c18_i32_7 = arith.constant 18 : i32
    %25 = vector.broadcast %c18_i32_7 : i32 to vector<1x30xi32>
    %26 = arith.cmpi sge, %0, %25 : vector<1x30xi32>
    %c24_i32 = arith.constant 24 : i32
    %27 = vector.broadcast %c24_i32 : i32 to vector<1x30xi32>
    %28 = arith.cmpi slt, %0, %27 : vector<1x30xi32>
    %29 = arith.andi %26, %28 : vector<1x30xi1>
    %cst_8 = arith.constant 1.000000e+00 : f32
    %cst_9 = arith.constant 0.000000e+00 : f32
    %30 = vector.broadcast %cst_8 : f32 to vector<1x30xf32>
    %31 = vector.broadcast %cst_9 : f32 to vector<1x30xf32>
    %32 = arith.select %29, %30, %31 : vector<1x30xi1>, vector<1x30xf32>
    %c24_i32_10 = arith.constant 24 : i32
    %33 = vector.broadcast %c24_i32_10 : i32 to vector<1x30xi32>
    %34 = arith.cmpi sge, %0, %33 : vector<1x30xi32>
    %c30_i32 = arith.constant 30 : i32
    %35 = vector.broadcast %c30_i32 : i32 to vector<1x30xi32>
    %36 = arith.cmpi slt, %0, %35 : vector<1x30xi32>
    %37 = arith.andi %34, %36 : vector<1x30xi1>
    %cst_11 = arith.constant 1.000000e+00 : f32
    %cst_12 = arith.constant 0.000000e+00 : f32
    %38 = vector.broadcast %cst_11 : f32 to vector<1x30xf32>
    %39 = vector.broadcast %cst_12 : f32 to vector<1x30xf32>
    %40 = arith.select %37, %38, %39 : vector<1x30xi1>, vector<1x30xf32>
    %cst_13 = arith.constant 0.408248305 : f32
    %41 = vector.broadcast %cst_13 : f32 to vector<1x30xf32>
    %42 = arith.mulf %8, %41 : vector<1x30xf32>
    %cst_14 = arith.constant 0.408248305 : f32
    %43 = vector.broadcast %cst_14 : f32 to vector<1x30xf32>
    %44 = arith.mulf %16, %43 : vector<1x30xf32>
    %cst_15 = arith.constant 0.408248305 : f32
    %45 = vector.broadcast %cst_15 : f32 to vector<1x30xf32>
    %46 = arith.mulf %24, %45 : vector<1x30xf32>
    %cst_16 = arith.constant 0.408248305 : f32
    %47 = vector.broadcast %cst_16 : f32 to vector<1x30xf32>
    %48 = arith.mulf %32, %47 : vector<1x30xf32>
    %cst_17 = arith.constant 0.408248305 : f32
    %49 = vector.broadcast %cst_17 : f32 to vector<1x30xf32>
    %50 = arith.mulf %40, %49 : vector<1x30xf32>
    %51 = tpu.iota {dimensions = array<i32: 1>} : vector<1x60xi32>
    %c0_i32_18 = arith.constant 0 : i32
    %52 = vector.broadcast %c0_i32_18 : i32 to vector<1x60xi32>
    %53 = arith.cmpi sge, %51, %52 : vector<1x60xi32>
    %c12_i32_19 = arith.constant 12 : i32
    %54 = vector.broadcast %c12_i32_19 : i32 to vector<1x60xi32>
    %55 = arith.cmpi slt, %51, %54 : vector<1x60xi32>
    %56 = arith.andi %53, %55 : vector<1x60xi1>
    %cst_20 = arith.constant 1.000000e+00 : f32
    %cst_21 = arith.constant 0.000000e+00 : f32
    %57 = vector.broadcast %cst_20 : f32 to vector<1x60xf32>
    %58 = vector.broadcast %cst_21 : f32 to vector<1x60xf32>
    %59 = arith.select %56, %57, %58 : vector<1x60xi1>, vector<1x60xf32>
    %c12_i32_22 = arith.constant 12 : i32
    %60 = vector.broadcast %c12_i32_22 : i32 to vector<1x60xi32>
    %61 = arith.cmpi sge, %51, %60 : vector<1x60xi32>
    %c24_i32_23 = arith.constant 24 : i32
    %62 = vector.broadcast %c24_i32_23 : i32 to vector<1x60xi32>
    %63 = arith.cmpi slt, %51, %62 : vector<1x60xi32>
    %64 = arith.andi %61, %63 : vector<1x60xi1>
    %cst_24 = arith.constant 1.000000e+00 : f32
    %cst_25 = arith.constant 0.000000e+00 : f32
    %65 = vector.broadcast %cst_24 : f32 to vector<1x60xf32>
    %66 = vector.broadcast %cst_25 : f32 to vector<1x60xf32>
    %67 = arith.select %64, %65, %66 : vector<1x60xi1>, vector<1x60xf32>
    %c24_i32_26 = arith.constant 24 : i32
    %68 = vector.broadcast %c24_i32_26 : i32 to vector<1x60xi32>
    %69 = arith.cmpi sge, %51, %68 : vector<1x60xi32>
    %c36_i32 = arith.constant 36 : i32
    %70 = vector.broadcast %c36_i32 : i32 to vector<1x60xi32>
    %71 = arith.cmpi slt, %51, %70 : vector<1x60xi32>
    %72 = arith.andi %69, %71 : vector<1x60xi1>
    %cst_27 = arith.constant 1.000000e+00 : f32
    %cst_28 = arith.constant 0.000000e+00 : f32
    %73 = vector.broadcast %cst_27 : f32 to vector<1x60xf32>
    %74 = vector.broadcast %cst_28 : f32 to vector<1x60xf32>
    %75 = arith.select %72, %73, %74 : vector<1x60xi1>, vector<1x60xf32>
    %c36_i32_29 = arith.constant 36 : i32
    %76 = vector.broadcast %c36_i32_29 : i32 to vector<1x60xi32>
    %77 = arith.cmpi sge, %51, %76 : vector<1x60xi32>
    %c48_i32 = arith.constant 48 : i32
    %78 = vector.broadcast %c48_i32 : i32 to vector<1x60xi32>
    %79 = arith.cmpi slt, %51, %78 : vector<1x60xi32>
    %80 = arith.andi %77, %79 : vector<1x60xi1>
    %cst_30 = arith.constant 1.000000e+00 : f32
    %cst_31 = arith.constant 0.000000e+00 : f32
    %81 = vector.broadcast %cst_30 : f32 to vector<1x60xf32>
    %82 = vector.broadcast %cst_31 : f32 to vector<1x60xf32>
    %83 = arith.select %80, %81, %82 : vector<1x60xi1>, vector<1x60xf32>
    %c48_i32_32 = arith.constant 48 : i32
    %84 = vector.broadcast %c48_i32_32 : i32 to vector<1x60xi32>
    %85 = arith.cmpi sge, %51, %84 : vector<1x60xi32>
    %c60_i32 = arith.constant 60 : i32
    %86 = vector.broadcast %c60_i32 : i32 to vector<1x60xi32>
    %87 = arith.cmpi slt, %51, %86 : vector<1x60xi32>
    %88 = arith.andi %85, %87 : vector<1x60xi1>
    %cst_33 = arith.constant 1.000000e+00 : f32
    %cst_34 = arith.constant 0.000000e+00 : f32
    %89 = vector.broadcast %cst_33 : f32 to vector<1x60xf32>
    %90 = vector.broadcast %cst_34 : f32 to vector<1x60xf32>
    %91 = arith.select %88, %89, %90 : vector<1x60xi1>, vector<1x60xf32>
    %cst_35 = arith.constant 0.288675129 : f32
    %92 = vector.broadcast %cst_35 : f32 to vector<1x60xf32>
    %93 = arith.mulf %59, %92 : vector<1x60xf32>
    %cst_36 = arith.constant 0.288675129 : f32
    %94 = vector.broadcast %cst_36 : f32 to vector<1x60xf32>
    %95 = arith.mulf %67, %94 : vector<1x60xf32>
    %cst_37 = arith.constant 0.288675129 : f32
    %96 = vector.broadcast %cst_37 : f32 to vector<1x60xf32>
    %97 = arith.mulf %75, %96 : vector<1x60xf32>
    %cst_38 = arith.constant 0.288675129 : f32
    %98 = vector.broadcast %cst_38 : f32 to vector<1x60xf32>
    %99 = arith.mulf %83, %98 : vector<1x60xf32>
    %cst_39 = arith.constant 0.288675129 : f32
    %100 = vector.broadcast %cst_39 : f32 to vector<1x60xf32>
    %101 = arith.mulf %91, %100 : vector<1x60xf32>
    %c0 = arith.constant 0 : index
    %c0_40 = arith.constant 0 : index
    %102 = vector.load %arg0[%c0, %c0_40] : memref<16x20xf32, #tpu.memory_space<vmem>>, vector<16x20xf32>
    %c0_41 = arith.constant 0 : index
    %c0_42 = arith.constant 0 : index
    %103 = vector.load %arg3[%c0_41, %c0_42] : memref<80x30xf32, #tpu.memory_space<vmem>>, vector<20x30xf32>
    %cst_43 = arith.constant dense<0.000000e+00> : vector<16x30xf32>
    %104 = tpu.matmul %102, %103, %cst_43 {dimension_numbers = #tpu.dot_dimension_numbers<[1], [0], [0], [1], [0, 0, 1, 1], [], []>} : vector<16x20xf32>, vector<20x30xf32>, vector<16x30xf32> -> vector<16x30xf32>
    %c0_44 = arith.constant 0 : index
    %c0_45 = arith.constant 0 : index
    %105 = vector.load %arg1[%c0_44, %c0_45] : memref<20x24xf32, #tpu.memory_space<vmem>>, vector<20x24xf32>
    %c24 = arith.constant 24 : index
    %c0_46 = arith.constant 0 : index
    %106 = vector.load %arg3[%c24, %c0_46] : memref<80x30xf32, #tpu.memory_space<vmem>>, vector<24x30xf32>
    %cst_47 = arith.constant dense<0.000000e+00> : vector<20x30xf32>
    %107 = tpu.matmul %105, %106, %cst_47 {dimension_numbers = #tpu.dot_dimension_numbers<[1], [0], [0], [1], [0, 0, 1, 1], [], []>} : vector<20x24xf32>, vector<24x30xf32>, vector<20x30xf32> -> vector<20x30xf32>
    %c0_48 = arith.constant 0 : index
    %c0_49 = arith.constant 0 : index
    %108 = vector.load %arg2[%c0_48, %c0_49] : memref<24x28xf32, #tpu.memory_space<vmem>>, vector<24x28xf32>
    %c48 = arith.constant 48 : index
    %c0_50 = arith.constant 0 : index
    %109 = vector.load %arg3[%c48, %c0_50] : memref<80x30xf32, #tpu.memory_space<vmem>>, vector<28x30xf32>
    %cst_51 = arith.constant dense<0.000000e+00> : vector<24x30xf32>
    %110 = tpu.matmul %108, %109, %cst_51 {dimension_numbers = #tpu.dot_dimension_numbers<[1], [0], [0], [1], [0, 0, 1, 1], [], []>} : vector<24x28xf32>, vector<28x30xf32>, vector<24x30xf32> -> vector<24x30xf32>
    %c0_52 = arith.constant 0 : index
    %c0_53 = arith.constant 0 : index
    %111 = vector.load %arg4[%c0_52, %c0_53] : memref<80x60xf32, #tpu.memory_space<vmem>>, vector<20x30xf32>
    %c24_54 = arith.constant 24 : index
    %c0_55 = arith.constant 0 : index
    %112 = vector.load %arg4[%c24_54, %c0_55] : memref<80x60xf32, #tpu.memory_space<vmem>>, vector<24x30xf32>
    %c48_56 = arith.constant 48 : index
    %c0_57 = arith.constant 0 : index
    %113 = vector.load %arg4[%c48_56, %c0_57] : memref<80x60xf32, #tpu.memory_space<vmem>>, vector<16x30xf32>
    %c64 = arith.constant 64 : index
    %c0_58 = arith.constant 0 : index
    %114 = vector.load %arg4[%c64, %c0_58] : memref<80x60xf32, #tpu.memory_space<vmem>>, vector<16x60xf32>
    %cst_59 = arith.constant 5.47722578 : f32
    %115 = vector.broadcast %cst_59 : f32 to vector<16x30xf32>
    %116 = arith.mulf %115, %104 : vector<16x30xf32>
    %117 = arith.addf %116, %113 : vector<16x30xf32>
    %cst_60 = arith.constant 5.47722578 : f32
    %118 = vector.broadcast %cst_60 : f32 to vector<20x30xf32>
    %119 = arith.mulf %118, %107 : vector<20x30xf32>
    %120 = arith.addf %119, %111 : vector<20x30xf32>
    %cst_61 = arith.constant 5.47722578 : f32
    %121 = vector.broadcast %cst_61 : f32 to vector<24x30xf32>
    %122 = arith.mulf %121, %110 : vector<24x30xf32>
    %123 = arith.addf %122, %112 : vector<24x30xf32>
    %c0_62 = arith.constant 0 : index
    %c0_63 = arith.constant 0 : index
    %124 = vector.load %arg5[%c0_62, %c0_63] : memref<3x24xf32, #tpu.memory_space<vmem>>, vector<1x20xf32>
    %125 = tpu.iota {dimensions = array<i32: 0>} : vector<16x20xi32>
    %126 = tpu.iota {dimensions = array<i32: 1>} : vector<16x20xi32>
    %c0_i32_64 = arith.constant 0 : i32
    %127 = vector.broadcast %c0_i32_64 : i32 to vector<16x20xi32>
    %128 = arith.cmpi sge, %125, %127 : vector<16x20xi32>
    %c8_i32 = arith.constant 8 : i32
    %129 = vector.broadcast %c8_i32 : i32 to vector<16x20xi32>
    %130 = arith.cmpi slt, %125, %129 : vector<16x20xi32>
    %131 = arith.andi %128, %130 : vector<16x20xi1>
    %c0_i32_65 = arith.constant 0 : i32
    %132 = vector.broadcast %c0_i32_65 : i32 to vector<16x20xi32>
    %133 = arith.cmpi sge, %126, %132 : vector<16x20xi32>
    %134 = arith.andi %131, %133 : vector<16x20xi1>
    %c10_i32 = arith.constant 10 : i32
    %135 = vector.broadcast %c10_i32 : i32 to vector<16x20xi32>
    %136 = arith.cmpi slt, %126, %135 : vector<16x20xi32>
    %137 = arith.andi %134, %136 : vector<16x20xi1>
    %c8_i32_66 = arith.constant 8 : i32
    %138 = vector.broadcast %c8_i32_66 : i32 to vector<16x20xi32>
    %139 = arith.cmpi sge, %125, %138 : vector<16x20xi32>
    %c16_i32 = arith.constant 16 : i32
    %140 = vector.broadcast %c16_i32 : i32 to vector<16x20xi32>
    %141 = arith.cmpi slt, %125, %140 : vector<16x20xi32>
    %142 = arith.andi %139, %141 : vector<16x20xi1>
    %c10_i32_67 = arith.constant 10 : i32
    %143 = vector.broadcast %c10_i32_67 : i32 to vector<16x20xi32>
    %144 = arith.cmpi sge, %126, %143 : vector<16x20xi32>
    %145 = arith.andi %142, %144 : vector<16x20xi1>
    %c20_i32 = arith.constant 20 : i32
    %146 = vector.broadcast %c20_i32 : i32 to vector<16x20xi32>
    %147 = arith.cmpi slt, %126, %146 : vector<16x20xi32>
    %148 = arith.andi %145, %147 : vector<16x20xi1>
    %149 = arith.ori %137, %148 : vector<16x20xi1>
    %cst_68 = arith.constant 0.000000e+00 : f32
    %cst_69 = arith.constant -1.000000e+09 : f32
    %150 = vector.broadcast %cst_68 : f32 to vector<16x20xf32>
    %151 = vector.broadcast %cst_69 : f32 to vector<16x20xf32>
    %152 = arith.select %149, %150, %151 : vector<16x20xi1>, vector<16x20xf32>
    %cst_70 = arith.constant -1.000000e+09 : f32
    %153 = vector.broadcast %cst_70 : f32 to vector<1x20xf32>
    %154 = arith.mulf %124, %153 : vector<1x20xf32>
    %155 = vector.broadcast %154 : vector<1x20xf32> to vector<16x20xf32>
    %156 = arith.addf %152, %155 : vector<16x20xf32>
    %c1 = arith.constant 1 : index
    %c0_71 = arith.constant 0 : index
    %157 = vector.load %arg5[%c1, %c0_71] : memref<3x24xf32, #tpu.memory_space<vmem>>, vector<1x24xf32>
    %158 = tpu.iota {dimensions = array<i32: 0>} : vector<16x24xi32>
    %159 = tpu.iota {dimensions = array<i32: 1>} : vector<16x24xi32>
    %c0_i32_72 = arith.constant 0 : i32
    %160 = vector.broadcast %c0_i32_72 : i32 to vector<16x24xi32>
    %161 = arith.cmpi sge, %158, %160 : vector<16x24xi32>
    %c8_i32_73 = arith.constant 8 : i32
    %162 = vector.broadcast %c8_i32_73 : i32 to vector<16x24xi32>
    %163 = arith.cmpi slt, %158, %162 : vector<16x24xi32>
    %164 = arith.andi %161, %163 : vector<16x24xi1>
    %c0_i32_74 = arith.constant 0 : i32
    %165 = vector.broadcast %c0_i32_74 : i32 to vector<16x24xi32>
    %166 = arith.cmpi sge, %159, %165 : vector<16x24xi32>
    %167 = arith.andi %164, %166 : vector<16x24xi1>
    %c12_i32_75 = arith.constant 12 : i32
    %168 = vector.broadcast %c12_i32_75 : i32 to vector<16x24xi32>
    %169 = arith.cmpi slt, %159, %168 : vector<16x24xi32>
    %170 = arith.andi %167, %169 : vector<16x24xi1>
    %c8_i32_76 = arith.constant 8 : i32
    %171 = vector.broadcast %c8_i32_76 : i32 to vector<16x24xi32>
    %172 = arith.cmpi sge, %158, %171 : vector<16x24xi32>
    %c16_i32_77 = arith.constant 16 : i32
    %173 = vector.broadcast %c16_i32_77 : i32 to vector<16x24xi32>
    %174 = arith.cmpi slt, %158, %173 : vector<16x24xi32>
    %175 = arith.andi %172, %174 : vector<16x24xi1>
    %c12_i32_78 = arith.constant 12 : i32
    %176 = vector.broadcast %c12_i32_78 : i32 to vector<16x24xi32>
    %177 = arith.cmpi sge, %159, %176 : vector<16x24xi32>
    %178 = arith.andi %175, %177 : vector<16x24xi1>
    %c24_i32_79 = arith.constant 24 : i32
    %179 = vector.broadcast %c24_i32_79 : i32 to vector<16x24xi32>
    %180 = arith.cmpi slt, %159, %179 : vector<16x24xi32>
    %181 = arith.andi %178, %180 : vector<16x24xi1>
    %182 = arith.ori %170, %181 : vector<16x24xi1>
    %cst_80 = arith.constant 0.000000e+00 : f32
    %cst_81 = arith.constant -1.000000e+09 : f32
    %183 = vector.broadcast %cst_80 : f32 to vector<16x24xf32>
    %184 = vector.broadcast %cst_81 : f32 to vector<16x24xf32>
    %185 = arith.select %182, %183, %184 : vector<16x24xi1>, vector<16x24xf32>
    %cst_82 = arith.constant -1.000000e+09 : f32
    %186 = vector.broadcast %cst_82 : f32 to vector<1x24xf32>
    %187 = arith.mulf %157, %186 : vector<1x24xf32>
    %188 = vector.broadcast %187 : vector<1x24xf32> to vector<16x24xf32>
    %189 = arith.addf %185, %188 : vector<16x24xf32>
    %c2 = arith.constant 2 : index
    %c0_83 = arith.constant 0 : index
    %190 = vector.load %arg5[%c2, %c0_83] : memref<3x24xf32, #tpu.memory_space<vmem>>, vector<1x16xf32>
    %191 = tpu.iota {dimensions = array<i32: 0>} : vector<16x16xi32>
    %192 = tpu.iota {dimensions = array<i32: 1>} : vector<16x16xi32>
    %c0_i32_84 = arith.constant 0 : i32
    %193 = vector.broadcast %c0_i32_84 : i32 to vector<16x16xi32>
    %194 = arith.cmpi sge, %191, %193 : vector<16x16xi32>
    %c8_i32_85 = arith.constant 8 : i32
    %195 = vector.broadcast %c8_i32_85 : i32 to vector<16x16xi32>
    %196 = arith.cmpi slt, %191, %195 : vector<16x16xi32>
    %197 = arith.andi %194, %196 : vector<16x16xi1>
    %c0_i32_86 = arith.constant 0 : i32
    %198 = vector.broadcast %c0_i32_86 : i32 to vector<16x16xi32>
    %199 = arith.cmpi sge, %192, %198 : vector<16x16xi32>
    %200 = arith.andi %197, %199 : vector<16x16xi1>
    %c8_i32_87 = arith.constant 8 : i32
    %201 = vector.broadcast %c8_i32_87 : i32 to vector<16x16xi32>
    %202 = arith.cmpi slt, %192, %201 : vector<16x16xi32>
    %203 = arith.andi %200, %202 : vector<16x16xi1>
    %c8_i32_88 = arith.constant 8 : i32
    %204 = vector.broadcast %c8_i32_88 : i32 to vector<16x16xi32>
    %205 = arith.cmpi sge, %191, %204 : vector<16x16xi32>
    %c16_i32_89 = arith.constant 16 : i32
    %206 = vector.broadcast %c16_i32_89 : i32 to vector<16x16xi32>
    %207 = arith.cmpi slt, %191, %206 : vector<16x16xi32>
    %208 = arith.andi %205, %207 : vector<16x16xi1>
    %c8_i32_90 = arith.constant 8 : i32
    %209 = vector.broadcast %c8_i32_90 : i32 to vector<16x16xi32>
    %210 = arith.cmpi sge, %192, %209 : vector<16x16xi32>
    %211 = arith.andi %208, %210 : vector<16x16xi1>
    %c16_i32_91 = arith.constant 16 : i32
    %212 = vector.broadcast %c16_i32_91 : i32 to vector<16x16xi32>
    %213 = arith.cmpi slt, %192, %212 : vector<16x16xi32>
    %214 = arith.andi %211, %213 : vector<16x16xi1>
    %215 = arith.ori %203, %214 : vector<16x16xi1>
    %cst_92 = arith.constant 0.000000e+00 : f32
    %cst_93 = arith.constant -1.000000e+09 : f32
    %216 = vector.broadcast %cst_92 : f32 to vector<16x16xf32>
    %217 = vector.broadcast %cst_93 : f32 to vector<16x16xf32>
    %218 = arith.select %215, %216, %217 : vector<16x16xi1>, vector<16x16xf32>
    %cst_94 = arith.constant -1.000000e+09 : f32
    %219 = vector.broadcast %cst_94 : f32 to vector<1x16xf32>
    %220 = arith.mulf %190, %219 : vector<1x16xf32>
    %221 = vector.broadcast %220 : vector<1x16xf32> to vector<16x16xf32>
    %222 = arith.addf %218, %221 : vector<16x16xf32>
    %cst_95 = arith.constant dense<0.000000e+00> : vector<20xf32>
    %223 = vector.multi_reduction <add>, %120, %cst_95 [1] : vector<20x30xf32> to vector<20xf32>
    %224 = vector.shape_cast %223 : vector<20xf32> to vector<20x1xf32>
    %cst_96 = arith.constant 3.000000e+01 : f32
    %225 = vector.broadcast %cst_96 : f32 to vector<20x1xf32>
    %226 = arith.divf %224, %225 : vector<20x1xf32>
    %227 = vector.broadcast %226 : vector<20x1xf32> to vector<20x30xf32>
    %228 = arith.subf %120, %227 : vector<20x30xf32>
    %229 = arith.mulf %228, %228 : vector<20x30xf32>
    %cst_97 = arith.constant dense<0.000000e+00> : vector<20xf32>
    %230 = vector.multi_reduction <add>, %229, %cst_97 [1] : vector<20x30xf32> to vector<20xf32>
    %231 = vector.shape_cast %230 : vector<20xf32> to vector<20x1xf32>
    %cst_98 = arith.constant 3.000000e+01 : f32
    %232 = vector.broadcast %cst_98 : f32 to vector<20x1xf32>
    %233 = arith.divf %231, %232 : vector<20x1xf32>
    %cst_99 = arith.constant 9.99999974E-6 : f32
    %234 = vector.broadcast %cst_99 : f32 to vector<20x1xf32>
    %235 = arith.addf %233, %234 : vector<20x1xf32>
    %236 = math.rsqrt %235 : vector<20x1xf32>
    %237 = vector.broadcast %236 : vector<20x1xf32> to vector<20x30xf32>
    %238 = arith.mulf %228, %237 : vector<20x30xf32>
    %c0_100 = arith.constant 0 : index
    %c0_101 = arith.constant 0 : index
    %c0_102 = arith.constant 0 : index
    %239 = vector.load %arg9[%c0_100, %c0_101, %c0_102] : memref<4x9x30xf32, #tpu.memory_space<vmem>>, vector<1x1x30xf32>
    %240 = vector.shape_cast %239 : vector<1x1x30xf32> to vector<1x30xf32>
    %c0_103 = arith.constant 0 : index
    %c1_104 = arith.constant 1 : index
    %c0_105 = arith.constant 0 : index
    %241 = vector.load %arg9[%c0_103, %c1_104, %c0_105] : memref<4x9x30xf32, #tpu.memory_space<vmem>>, vector<1x1x30xf32>
    %242 = vector.shape_cast %241 : vector<1x1x30xf32> to vector<1x30xf32>
    %c0_106 = arith.constant 0 : index
    %c2_107 = arith.constant 2 : index
    %c0_108 = arith.constant 0 : index
    %243 = vector.load %arg9[%c0_106, %c2_107, %c0_108] : memref<4x9x30xf32, #tpu.memory_space<vmem>>, vector<1x1x30xf32>
    %244 = vector.shape_cast %243 : vector<1x1x30xf32> to vector<1x30xf32>
    %c0_109 = arith.constant 0 : index
    %c3 = arith.constant 3 : index
    %c0_110 = arith.constant 0 : index
    %245 = vector.load %arg9[%c0_109, %c3, %c0_110] : memref<4x9x30xf32, #tpu.memory_space<vmem>>, vector<1x1x30xf32>
    %246 = vector.shape_cast %245 : vector<1x1x30xf32> to vector<1x30xf32>
    %c0_111 = arith.constant 0 : index
    %c4 = arith.constant 4 : index
    %c0_112 = arith.constant 0 : index
    %247 = vector.load %arg9[%c0_111, %c4, %c0_112] : memref<4x9x30xf32, #tpu.memory_space<vmem>>, vector<1x1x30xf32>
    %248 = vector.shape_cast %247 : vector<1x1x30xf32> to vector<1x30xf32>
    %c0_113 = arith.constant 0 : index
    %c5 = arith.constant 5 : index
    %c0_114 = arith.constant 0 : index
    %249 = vector.load %arg9[%c0_113, %c5, %c0_114] : memref<4x9x30xf32, #tpu.memory_space<vmem>>, vector<1x1x30xf32>
    %250 = vector.shape_cast %249 : vector<1x1x30xf32> to vector<1x30xf32>
    %c0_115 = arith.constant 0 : index
    %c6 = arith.constant 6 : index
    %c0_116 = arith.constant 0 : index
    %251 = vector.load %arg9[%c0_115, %c6, %c0_116] : memref<4x9x30xf32, #tpu.memory_space<vmem>>, vector<1x1x30xf32>
    %252 = vector.shape_cast %251 : vector<1x1x30xf32> to vector<1x30xf32>
    %c0_117 = arith.constant 0 : index
    %c7 = arith.constant 7 : index
    %c0_118 = arith.constant 0 : index
    %253 = vector.load %arg9[%c0_117, %c7, %c0_118] : memref<4x9x30xf32, #tpu.memory_space<vmem>>, vector<1x1x30xf32>
    %254 = vector.shape_cast %253 : vector<1x1x30xf32> to vector<1x30xf32>
    %c0_119 = arith.constant 0 : index
    %c8 = arith.constant 8 : index
    %c0_120 = arith.constant 0 : index
    %255 = vector.load %arg9[%c0_119, %c8, %c0_120] : memref<4x9x30xf32, #tpu.memory_space<vmem>>, vector<1x1x30xf32>
    %256 = vector.shape_cast %255 : vector<1x1x30xf32> to vector<1x30xf32>
    %cst_121 = arith.constant dense<0.000000e+00> : vector<16xf32>
    %257 = vector.multi_reduction <add>, %117, %cst_121 [1] : vector<16x30xf32> to vector<16xf32>
    %258 = vector.shape_cast %257 : vector<16xf32> to vector<16x1xf32>
    %cst_122 = arith.constant 3.000000e+01 : f32
    %259 = vector.broadcast %cst_122 : f32 to vector<16x1xf32>
    %260 = arith.divf %258, %259 : vector<16x1xf32>
    %261 = vector.broadcast %260 : vector<16x1xf32> to vector<16x30xf32>
    %262 = arith.subf %117, %261 : vector<16x30xf32>
    %263 = arith.mulf %262, %262 : vector<16x30xf32>
    %cst_123 = arith.constant dense<0.000000e+00> : vector<16xf32>
    %264 = vector.multi_reduction <add>, %263, %cst_123 [1] : vector<16x30xf32> to vector<16xf32>
    %265 = vector.shape_cast %264 : vector<16xf32> to vector<16x1xf32>
    %cst_124 = arith.constant 3.000000e+01 : f32
    %266 = vector.broadcast %cst_124 : f32 to vector<16x1xf32>
    %267 = arith.divf %265, %266 : vector<16x1xf32>
    %cst_125 = arith.constant 9.99999974E-6 : f32
    %268 = vector.broadcast %cst_125 : f32 to vector<16x1xf32>
    %269 = arith.addf %267, %268 : vector<16x1xf32>
    %270 = math.rsqrt %269 : vector<16x1xf32>
    %271 = vector.broadcast %270 : vector<16x1xf32> to vector<16x30xf32>
    %272 = arith.mulf %262, %271 : vector<16x30xf32>
    %273 = vector.broadcast %240 : vector<1x30xf32> to vector<16x30xf32>
    %274 = arith.mulf %272, %273 : vector<16x30xf32>
    %275 = vector.broadcast %242 : vector<1x30xf32> to vector<16x30xf32>
    %276 = arith.addf %274, %275 : vector<16x30xf32>
    %277 = vector.broadcast %240 : vector<1x30xf32> to vector<20x30xf32>
    %278 = arith.mulf %238, %277 : vector<20x30xf32>
    %279 = vector.broadcast %242 : vector<1x30xf32> to vector<20x30xf32>
    %280 = arith.addf %278, %279 : vector<20x30xf32>
    %c0_126 = arith.constant 0 : index
    %c0_127 = arith.constant 0 : index
    %c0_128 = arith.constant 0 : index
    %281 = vector.load %arg6[%c0_126, %c0_127, %c0_128] : memref<16x30x30xf32, #tpu.memory_space<vmem>>, vector<1x30x30xf32>
    %282 = vector.shape_cast %281 : vector<1x30x30xf32> to vector<30x30xf32>
    %cst_129 = arith.constant dense<0.000000e+00> : vector<16x30xf32>
    %283 = tpu.matmul %276, %282, %cst_129 {dimension_numbers = #tpu.dot_dimension_numbers<[1], [0], [0], [1], [0, 0, 1, 1], [], []>} : vector<16x30xf32>, vector<30x30xf32>, vector<16x30xf32> -> vector<16x30xf32>
    %284 = vector.broadcast %244 : vector<1x30xf32> to vector<16x30xf32>
    %285 = arith.addf %283, %284 : vector<16x30xf32>
    %c1_130 = arith.constant 1 : index
    %c0_131 = arith.constant 0 : index
    %c0_132 = arith.constant 0 : index
    %286 = vector.load %arg6[%c1_130, %c0_131, %c0_132] : memref<16x30x30xf32, #tpu.memory_space<vmem>>, vector<1x30x30xf32>
    %287 = vector.shape_cast %286 : vector<1x30x30xf32> to vector<30x30xf32>
    %cst_133 = arith.constant dense<0.000000e+00> : vector<20x30xf32>
    %288 = tpu.matmul %280, %287, %cst_133 {dimension_numbers = #tpu.dot_dimension_numbers<[1], [0], [0], [1], [0, 0, 1, 1], [], []>} : vector<20x30xf32>, vector<30x30xf32>, vector<20x30xf32> -> vector<20x30xf32>
    %289 = vector.broadcast %246 : vector<1x30xf32> to vector<20x30xf32>
    %290 = arith.addf %288, %289 : vector<20x30xf32>
    %c2_134 = arith.constant 2 : index
    %c0_135 = arith.constant 0 : index
    %c0_136 = arith.constant 0 : index
    %291 = vector.load %arg6[%c2_134, %c0_135, %c0_136] : memref<16x30x30xf32, #tpu.memory_space<vmem>>, vector<1x30x30xf32>
    %292 = vector.shape_cast %291 : vector<1x30x30xf32> to vector<30x30xf32>
    %cst_137 = arith.constant dense<0.000000e+00> : vector<20x30xf32>
    %293 = tpu.matmul %280, %292, %cst_137 {dimension_numbers = #tpu.dot_dimension_numbers<[1], [0], [0], [1], [0, 0, 1, 1], [], []>} : vector<20x30xf32>, vector<30x30xf32>, vector<20x30xf32> -> vector<20x30xf32>
    %294 = vector.broadcast %248 : vector<1x30xf32> to vector<20x30xf32>
    %295 = arith.addf %293, %294 : vector<20x30xf32>
    %296 = vector.broadcast %42 : vector<1x30xf32> to vector<16x30xf32>
    %297 = arith.mulf %285, %296 : vector<16x30xf32>
    %cst_138 = arith.constant dense<0.000000e+00> : vector<16x20xf32>
    %298 = tpu.matmul %297, %290, %cst_138 {dimension_numbers = #tpu.dot_dimension_numbers<[1], [1], [0], [0], [0, 0, 1, 0], [], []>} : vector<16x30xf32>, vector<20x30xf32>, vector<16x20xf32> -> vector<16x20xf32>
    %299 = arith.addf %298, %156 : vector<16x20xf32>
    %cst_139 = arith.constant dense<0xFF800000> : vector<16xf32>
    %300 = vector.multi_reduction <maximumf>, %299, %cst_139 [1] : vector<16x20xf32> to vector<16xf32>
    %301 = vector.shape_cast %300 : vector<16xf32> to vector<16x1xf32>
    %302 = vector.broadcast %301 : vector<16x1xf32> to vector<16x20xf32>
    %303 = arith.subf %299, %302 : vector<16x20xf32>
    %304 = math.exp %303 : vector<16x20xf32>
    %cst_140 = arith.constant dense<0.000000e+00> : vector<16xf32>
    %305 = vector.multi_reduction <add>, %304, %cst_140 [1] : vector<16x20xf32> to vector<16xf32>
    %306 = vector.shape_cast %305 : vector<16xf32> to vector<16x1xf32>
    %307 = tpu.reciprocal %306 {approx = true} : vector<16x1xf32> -> vector<16x1xf32>
    %308 = vector.broadcast %307 : vector<16x1xf32> to vector<16x20xf32>
    %309 = arith.mulf %304, %308 : vector<16x20xf32>
    %310 = vector.broadcast %8 : vector<1x30xf32> to vector<20x30xf32>
    %311 = arith.mulf %295, %310 : vector<20x30xf32>
    %cst_141 = arith.constant dense<0.000000e+00> : vector<16x30xf32>
    %312 = tpu.matmul %309, %311, %cst_141 {dimension_numbers = #tpu.dot_dimension_numbers<[1], [0], [0], [1], [0, 0, 1, 1], [], []>} : vector<16x20xf32>, vector<20x30xf32>, vector<16x30xf32> -> vector<16x30xf32>
    %313 = vector.broadcast %44 : vector<1x30xf32> to vector<16x30xf32>
    %314 = arith.mulf %285, %313 : vector<16x30xf32>
    %cst_142 = arith.constant dense<0.000000e+00> : vector<16x20xf32>
    %315 = tpu.matmul %314, %290, %cst_142 {dimension_numbers = #tpu.dot_dimension_numbers<[1], [1], [0], [0], [0, 0, 1, 0], [], []>} : vector<16x30xf32>, vector<20x30xf32>, vector<16x20xf32> -> vector<16x20xf32>
    %316 = arith.addf %315, %156 : vector<16x20xf32>
    %cst_143 = arith.constant dense<0xFF800000> : vector<16xf32>
    %317 = vector.multi_reduction <maximumf>, %316, %cst_143 [1] : vector<16x20xf32> to vector<16xf32>
    %318 = vector.shape_cast %317 : vector<16xf32> to vector<16x1xf32>
    %319 = vector.broadcast %318 : vector<16x1xf32> to vector<16x20xf32>
    %320 = arith.subf %316, %319 : vector<16x20xf32>
    %321 = math.exp %320 : vector<16x20xf32>
    %cst_144 = arith.constant dense<0.000000e+00> : vector<16xf32>
    %322 = vector.multi_reduction <add>, %321, %cst_144 [1] : vector<16x20xf32> to vector<16xf32>
    %323 = vector.shape_cast %322 : vector<16xf32> to vector<16x1xf32>
    %324 = tpu.reciprocal %323 {approx = true} : vector<16x1xf32> -> vector<16x1xf32>
    %325 = vector.broadcast %324 : vector<16x1xf32> to vector<16x20xf32>
    %326 = arith.mulf %321, %325 : vector<16x20xf32>
    %327 = vector.broadcast %16 : vector<1x30xf32> to vector<20x30xf32>
    %328 = arith.mulf %295, %327 : vector<20x30xf32>
    %cst_145 = arith.constant dense<0.000000e+00> : vector<16x30xf32>
    %329 = tpu.matmul %326, %328, %cst_145 {dimension_numbers = #tpu.dot_dimension_numbers<[1], [0], [0], [1], [0, 0, 1, 1], [], []>} : vector<16x20xf32>, vector<20x30xf32>, vector<16x30xf32> -> vector<16x30xf32>
    %330 = arith.addf %312, %329 : vector<16x30xf32>
    %331 = vector.broadcast %46 : vector<1x30xf32> to vector<16x30xf32>
    %332 = arith.mulf %285, %331 : vector<16x30xf32>
    %cst_146 = arith.constant dense<0.000000e+00> : vector<16x20xf32>
    %333 = tpu.matmul %332, %290, %cst_146 {dimension_numbers = #tpu.dot_dimension_numbers<[1], [1], [0], [0], [0, 0, 1, 0], [], []>} : vector<16x30xf32>, vector<20x30xf32>, vector<16x20xf32> -> vector<16x20xf32>
    %334 = arith.addf %333, %156 : vector<16x20xf32>
    %cst_147 = arith.constant dense<0xFF800000> : vector<16xf32>
    %335 = vector.multi_reduction <maximumf>, %334, %cst_147 [1] : vector<16x20xf32> to vector<16xf32>
    %336 = vector.shape_cast %335 : vector<16xf32> to vector<16x1xf32>
    %337 = vector.broadcast %336 : vector<16x1xf32> to vector<16x20xf32>
    %338 = arith.subf %334, %337 : vector<16x20xf32>
    %339 = math.exp %338 : vector<16x20xf32>
    %cst_148 = arith.constant dense<0.000000e+00> : vector<16xf32>
    %340 = vector.multi_reduction <add>, %339, %cst_148 [1] : vector<16x20xf32> to vector<16xf32>
    %341 = vector.shape_cast %340 : vector<16xf32> to vector<16x1xf32>
    %342 = tpu.reciprocal %341 {approx = true} : vector<16x1xf32> -> vector<16x1xf32>
    %343 = vector.broadcast %342 : vector<16x1xf32> to vector<16x20xf32>
    %344 = arith.mulf %339, %343 : vector<16x20xf32>
    %345 = vector.broadcast %24 : vector<1x30xf32> to vector<20x30xf32>
    %346 = arith.mulf %295, %345 : vector<20x30xf32>
    %cst_149 = arith.constant dense<0.000000e+00> : vector<16x30xf32>
    %347 = tpu.matmul %344, %346, %cst_149 {dimension_numbers = #tpu.dot_dimension_numbers<[1], [0], [0], [1], [0, 0, 1, 1], [], []>} : vector<16x20xf32>, vector<20x30xf32>, vector<16x30xf32> -> vector<16x30xf32>
    %348 = arith.addf %330, %347 : vector<16x30xf32>
    %349 = vector.broadcast %48 : vector<1x30xf32> to vector<16x30xf32>
    %350 = arith.mulf %285, %349 : vector<16x30xf32>
    %cst_150 = arith.constant dense<0.000000e+00> : vector<16x20xf32>
    %351 = tpu.matmul %350, %290, %cst_150 {dimension_numbers = #tpu.dot_dimension_numbers<[1], [1], [0], [0], [0, 0, 1, 0], [], []>} : vector<16x30xf32>, vector<20x30xf32>, vector<16x20xf32> -> vector<16x20xf32>
    %352 = arith.addf %351, %156 : vector<16x20xf32>
    %cst_151 = arith.constant dense<0xFF800000> : vector<16xf32>
    %353 = vector.multi_reduction <maximumf>, %352, %cst_151 [1] : vector<16x20xf32> to vector<16xf32>
    %354 = vector.shape_cast %353 : vector<16xf32> to vector<16x1xf32>
    %355 = vector.broadcast %354 : vector<16x1xf32> to vector<16x20xf32>
    %356 = arith.subf %352, %355 : vector<16x20xf32>
    %357 = math.exp %356 : vector<16x20xf32>
    %cst_152 = arith.constant dense<0.000000e+00> : vector<16xf32>
    %358 = vector.multi_reduction <add>, %357, %cst_152 [1] : vector<16x20xf32> to vector<16xf32>
    %359 = vector.shape_cast %358 : vector<16xf32> to vector<16x1xf32>
    %360 = tpu.reciprocal %359 {approx = true} : vector<16x1xf32> -> vector<16x1xf32>
    %361 = vector.broadcast %360 : vector<16x1xf32> to vector<16x20xf32>
    %362 = arith.mulf %357, %361 : vector<16x20xf32>
    %363 = vector.broadcast %32 : vector<1x30xf32> to vector<20x30xf32>
    %364 = arith.mulf %295, %363 : vector<20x30xf32>
    %cst_153 = arith.constant dense<0.000000e+00> : vector<16x30xf32>
    %365 = tpu.matmul %362, %364, %cst_153 {dimension_numbers = #tpu.dot_dimension_numbers<[1], [0], [0], [1], [0, 0, 1, 1], [], []>} : vector<16x20xf32>, vector<20x30xf32>, vector<16x30xf32> -> vector<16x30xf32>
    %366 = arith.addf %348, %365 : vector<16x30xf32>
    %367 = vector.broadcast %50 : vector<1x30xf32> to vector<16x30xf32>
    %368 = arith.mulf %285, %367 : vector<16x30xf32>
    %cst_154 = arith.constant dense<0.000000e+00> : vector<16x20xf32>
    %369 = tpu.matmul %368, %290, %cst_154 {dimension_numbers = #tpu.dot_dimension_numbers<[1], [1], [0], [0], [0, 0, 1, 0], [], []>} : vector<16x30xf32>, vector<20x30xf32>, vector<16x20xf32> -> vector<16x20xf32>
    %370 = arith.addf %369, %156 : vector<16x20xf32>
    %cst_155 = arith.constant dense<0xFF800000> : vector<16xf32>
    %371 = vector.multi_reduction <maximumf>, %370, %cst_155 [1] : vector<16x20xf32> to vector<16xf32>
    %372 = vector.shape_cast %371 : vector<16xf32> to vector<16x1xf32>
    %373 = vector.broadcast %372 : vector<16x1xf32> to vector<16x20xf32>
    %374 = arith.subf %370, %373 : vector<16x20xf32>
    %375 = math.exp %374 : vector<16x20xf32>
    %cst_156 = arith.constant dense<0.000000e+00> : vector<16xf32>
    %376 = vector.multi_reduction <add>, %375, %cst_156 [1] : vector<16x20xf32> to vector<16xf32>
    %377 = vector.shape_cast %376 : vector<16xf32> to vector<16x1xf32>
    %378 = tpu.reciprocal %377 {approx = true} : vector<16x1xf32> -> vector<16x1xf32>
    %379 = vector.broadcast %378 : vector<16x1xf32> to vector<16x20xf32>
    %380 = arith.mulf %375, %379 : vector<16x20xf32>
    %381 = vector.broadcast %40 : vector<1x30xf32> to vector<20x30xf32>
    %382 = arith.mulf %295, %381 : vector<20x30xf32>
    %cst_157 = arith.constant dense<0.000000e+00> : vector<16x30xf32>
    %383 = tpu.matmul %380, %382, %cst_157 {dimension_numbers = #tpu.dot_dimension_numbers<[1], [0], [0], [1], [0, 0, 1, 1], [], []>} : vector<16x20xf32>, vector<20x30xf32>, vector<16x30xf32> -> vector<16x30xf32>
    %384 = arith.addf %366, %383 : vector<16x30xf32>
    %c3_158 = arith.constant 3 : index
    %c0_159 = arith.constant 0 : index
    %c0_160 = arith.constant 0 : index
    %385 = vector.load %arg6[%c3_158, %c0_159, %c0_160] : memref<16x30x30xf32, #tpu.memory_space<vmem>>, vector<1x30x30xf32>
    %386 = vector.shape_cast %385 : vector<1x30x30xf32> to vector<30x30xf32>
    %cst_161 = arith.constant dense<0.000000e+00> : vector<16x30xf32>
    %387 = tpu.matmul %384, %386, %cst_161 {dimension_numbers = #tpu.dot_dimension_numbers<[1], [0], [0], [1], [0, 0, 1, 1], [], []>} : vector<16x30xf32>, vector<30x30xf32>, vector<16x30xf32> -> vector<16x30xf32>
    %388 = vector.broadcast %250 : vector<1x30xf32> to vector<16x30xf32>
    %389 = arith.addf %387, %388 : vector<16x30xf32>
    %390 = arith.addf %117, %389 : vector<16x30xf32>
    %cst_162 = arith.constant dense<0.000000e+00> : vector<16xf32>
    %391 = vector.multi_reduction <add>, %390, %cst_162 [1] : vector<16x30xf32> to vector<16xf32>
    %392 = vector.shape_cast %391 : vector<16xf32> to vector<16x1xf32>
    %cst_163 = arith.constant 3.000000e+01 : f32
    %393 = vector.broadcast %cst_163 : f32 to vector<16x1xf32>
    %394 = arith.divf %392, %393 : vector<16x1xf32>
    %395 = vector.broadcast %394 : vector<16x1xf32> to vector<16x30xf32>
    %396 = arith.subf %390, %395 : vector<16x30xf32>
    %397 = arith.mulf %396, %396 : vector<16x30xf32>
    %cst_164 = arith.constant dense<0.000000e+00> : vector<16xf32>
    %398 = vector.multi_reduction <add>, %397, %cst_164 [1] : vector<16x30xf32> to vector<16xf32>
    %399 = vector.shape_cast %398 : vector<16xf32> to vector<16x1xf32>
    %cst_165 = arith.constant 3.000000e+01 : f32
    %400 = vector.broadcast %cst_165 : f32 to vector<16x1xf32>
    %401 = arith.divf %399, %400 : vector<16x1xf32>
    %cst_166 = arith.constant 9.99999974E-6 : f32
    %402 = vector.broadcast %cst_166 : f32 to vector<16x1xf32>
    %403 = arith.addf %401, %402 : vector<16x1xf32>
    %404 = math.rsqrt %403 : vector<16x1xf32>
    %405 = vector.broadcast %404 : vector<16x1xf32> to vector<16x30xf32>
    %406 = arith.mulf %396, %405 : vector<16x30xf32>
    %407 = vector.broadcast %252 : vector<1x30xf32> to vector<16x30xf32>
    %408 = arith.mulf %406, %407 : vector<16x30xf32>
    %409 = vector.broadcast %254 : vector<1x30xf32> to vector<16x30xf32>
    %410 = arith.addf %408, %409 : vector<16x30xf32>
    %c0_167 = arith.constant 0 : index
    %c0_168 = arith.constant 0 : index
    %c0_169 = arith.constant 0 : index
    %411 = vector.load %arg7[%c0_167, %c0_168, %c0_169] : memref<4x30x120xf32, #tpu.memory_space<vmem>>, vector<1x30x120xf32>
    %412 = vector.shape_cast %411 : vector<1x30x120xf32> to vector<30x120xf32>
    %cst_170 = arith.constant dense<0.000000e+00> : vector<16x120xf32>
    %413 = tpu.matmul %410, %412, %cst_170 {dimension_numbers = #tpu.dot_dimension_numbers<[1], [0], [0], [1], [0, 0, 1, 1], [], []>} : vector<16x30xf32>, vector<30x120xf32>, vector<16x120xf32> -> vector<16x120xf32>
    %c0_171 = arith.constant 0 : index
    %c0_172 = arith.constant 0 : index
    %c0_173 = arith.constant 0 : index
    %414 = vector.load %arg10[%c0_171, %c0_172, %c0_173] : memref<4x1x120xf32, #tpu.memory_space<vmem>>, vector<1x1x120xf32>
    %415 = vector.shape_cast %414 : vector<1x1x120xf32> to vector<1x120xf32>
    %416 = vector.broadcast %415 : vector<1x120xf32> to vector<16x120xf32>
    %417 = arith.addf %413, %416 : vector<16x120xf32>
    %cst_174 = arith.constant 0.000000e+00 : f32
    %418 = vector.broadcast %cst_174 : f32 to vector<16x120xf32>
    %419 = arith.maximumf %417, %418 : vector<16x120xf32>
    %c0_175 = arith.constant 0 : index
    %c0_176 = arith.constant 0 : index
    %c0_177 = arith.constant 0 : index
    %420 = vector.load %arg8[%c0_175, %c0_176, %c0_177] : memref<4x120x30xf32, #tpu.memory_space<vmem>>, vector<1x120x30xf32>
    %421 = vector.shape_cast %420 : vector<1x120x30xf32> to vector<120x30xf32>
    %cst_178 = arith.constant dense<0.000000e+00> : vector<16x30xf32>
    %422 = tpu.matmul %419, %421, %cst_178 {dimension_numbers = #tpu.dot_dimension_numbers<[1], [0], [0], [1], [0, 0, 1, 1], [], []>} : vector<16x120xf32>, vector<120x30xf32>, vector<16x30xf32> -> vector<16x30xf32>
    %423 = vector.broadcast %256 : vector<1x30xf32> to vector<16x30xf32>
    %424 = arith.addf %422, %423 : vector<16x30xf32>
    %425 = arith.addf %390, %424 : vector<16x30xf32>
    %c1_179 = arith.constant 1 : index
    %c0_180 = arith.constant 0 : index
    %c0_181 = arith.constant 0 : index
    %426 = vector.load %arg9[%c1_179, %c0_180, %c0_181] : memref<4x9x30xf32, #tpu.memory_space<vmem>>, vector<1x1x30xf32>
    %427 = vector.shape_cast %426 : vector<1x1x30xf32> to vector<1x30xf32>
    %c1_182 = arith.constant 1 : index
    %c1_183 = arith.constant 1 : index
    %c0_184 = arith.constant 0 : index
    %428 = vector.load %arg9[%c1_182, %c1_183, %c0_184] : memref<4x9x30xf32, #tpu.memory_space<vmem>>, vector<1x1x30xf32>
    %429 = vector.shape_cast %428 : vector<1x1x30xf32> to vector<1x30xf32>
    %c1_185 = arith.constant 1 : index
    %c2_186 = arith.constant 2 : index
    %c0_187 = arith.constant 0 : index
    %430 = vector.load %arg9[%c1_185, %c2_186, %c0_187] : memref<4x9x30xf32, #tpu.memory_space<vmem>>, vector<1x1x30xf32>
    %431 = vector.shape_cast %430 : vector<1x1x30xf32> to vector<1x30xf32>
    %c1_188 = arith.constant 1 : index
    %c3_189 = arith.constant 3 : index
    %c0_190 = arith.constant 0 : index
    %432 = vector.load %arg9[%c1_188, %c3_189, %c0_190] : memref<4x9x30xf32, #tpu.memory_space<vmem>>, vector<1x1x30xf32>
    %433 = vector.shape_cast %432 : vector<1x1x30xf32> to vector<1x30xf32>
    %c1_191 = arith.constant 1 : index
    %c4_192 = arith.constant 4 : index
    %c0_193 = arith.constant 0 : index
    %434 = vector.load %arg9[%c1_191, %c4_192, %c0_193] : memref<4x9x30xf32, #tpu.memory_space<vmem>>, vector<1x1x30xf32>
    %435 = vector.shape_cast %434 : vector<1x1x30xf32> to vector<1x30xf32>
    %c1_194 = arith.constant 1 : index
    %c5_195 = arith.constant 5 : index
    %c0_196 = arith.constant 0 : index
    %436 = vector.load %arg9[%c1_194, %c5_195, %c0_196] : memref<4x9x30xf32, #tpu.memory_space<vmem>>, vector<1x1x30xf32>
    %437 = vector.shape_cast %436 : vector<1x1x30xf32> to vector<1x30xf32>
    %c1_197 = arith.constant 1 : index
    %c6_198 = arith.constant 6 : index
    %c0_199 = arith.constant 0 : index
    %438 = vector.load %arg9[%c1_197, %c6_198, %c0_199] : memref<4x9x30xf32, #tpu.memory_space<vmem>>, vector<1x1x30xf32>
    %439 = vector.shape_cast %438 : vector<1x1x30xf32> to vector<1x30xf32>
    %c1_200 = arith.constant 1 : index
    %c7_201 = arith.constant 7 : index
    %c0_202 = arith.constant 0 : index
    %440 = vector.load %arg9[%c1_200, %c7_201, %c0_202] : memref<4x9x30xf32, #tpu.memory_space<vmem>>, vector<1x1x30xf32>
    %441 = vector.shape_cast %440 : vector<1x1x30xf32> to vector<1x30xf32>
    %c1_203 = arith.constant 1 : index
    %c8_204 = arith.constant 8 : index
    %c0_205 = arith.constant 0 : index
    %442 = vector.load %arg9[%c1_203, %c8_204, %c0_205] : memref<4x9x30xf32, #tpu.memory_space<vmem>>, vector<1x1x30xf32>
    %443 = vector.shape_cast %442 : vector<1x1x30xf32> to vector<1x30xf32>
    %cst_206 = arith.constant dense<0.000000e+00> : vector<16xf32>
    %444 = vector.multi_reduction <add>, %425, %cst_206 [1] : vector<16x30xf32> to vector<16xf32>
    %445 = vector.shape_cast %444 : vector<16xf32> to vector<16x1xf32>
    %cst_207 = arith.constant 3.000000e+01 : f32
    %446 = vector.broadcast %cst_207 : f32 to vector<16x1xf32>
    %447 = arith.divf %445, %446 : vector<16x1xf32>
    %448 = vector.broadcast %447 : vector<16x1xf32> to vector<16x30xf32>
    %449 = arith.subf %425, %448 : vector<16x30xf32>
    %450 = arith.mulf %449, %449 : vector<16x30xf32>
    %cst_208 = arith.constant dense<0.000000e+00> : vector<16xf32>
    %451 = vector.multi_reduction <add>, %450, %cst_208 [1] : vector<16x30xf32> to vector<16xf32>
    %452 = vector.shape_cast %451 : vector<16xf32> to vector<16x1xf32>
    %cst_209 = arith.constant 3.000000e+01 : f32
    %453 = vector.broadcast %cst_209 : f32 to vector<16x1xf32>
    %454 = arith.divf %452, %453 : vector<16x1xf32>
    %cst_210 = arith.constant 9.99999974E-6 : f32
    %455 = vector.broadcast %cst_210 : f32 to vector<16x1xf32>
    %456 = arith.addf %454, %455 : vector<16x1xf32>
    %457 = math.rsqrt %456 : vector<16x1xf32>
    %458 = vector.broadcast %457 : vector<16x1xf32> to vector<16x30xf32>
    %459 = arith.mulf %449, %458 : vector<16x30xf32>
    %460 = vector.broadcast %427 : vector<1x30xf32> to vector<16x30xf32>
    %461 = arith.mulf %459, %460 : vector<16x30xf32>
    %462 = vector.broadcast %429 : vector<1x30xf32> to vector<16x30xf32>
    %463 = arith.addf %461, %462 : vector<16x30xf32>
    %464 = vector.broadcast %427 : vector<1x30xf32> to vector<20x30xf32>
    %465 = arith.mulf %238, %464 : vector<20x30xf32>
    %466 = vector.broadcast %429 : vector<1x30xf32> to vector<20x30xf32>
    %467 = arith.addf %465, %466 : vector<20x30xf32>
    %c4_211 = arith.constant 4 : index
    %c0_212 = arith.constant 0 : index
    %c0_213 = arith.constant 0 : index
    %468 = vector.load %arg6[%c4_211, %c0_212, %c0_213] : memref<16x30x30xf32, #tpu.memory_space<vmem>>, vector<1x30x30xf32>
    %469 = vector.shape_cast %468 : vector<1x30x30xf32> to vector<30x30xf32>
    %cst_214 = arith.constant dense<0.000000e+00> : vector<16x30xf32>
    %470 = tpu.matmul %463, %469, %cst_214 {dimension_numbers = #tpu.dot_dimension_numbers<[1], [0], [0], [1], [0, 0, 1, 1], [], []>} : vector<16x30xf32>, vector<30x30xf32>, vector<16x30xf32> -> vector<16x30xf32>
    %471 = vector.broadcast %431 : vector<1x30xf32> to vector<16x30xf32>
    %472 = arith.addf %470, %471 : vector<16x30xf32>
    %c5_215 = arith.constant 5 : index
    %c0_216 = arith.constant 0 : index
    %c0_217 = arith.constant 0 : index
    %473 = vector.load %arg6[%c5_215, %c0_216, %c0_217] : memref<16x30x30xf32, #tpu.memory_space<vmem>>, vector<1x30x30xf32>
    %474 = vector.shape_cast %473 : vector<1x30x30xf32> to vector<30x30xf32>
    %cst_218 = arith.constant dense<0.000000e+00> : vector<20x30xf32>
    %475 = tpu.matmul %467, %474, %cst_218 {dimension_numbers = #tpu.dot_dimension_numbers<[1], [0], [0], [1], [0, 0, 1, 1], [], []>} : vector<20x30xf32>, vector<30x30xf32>, vector<20x30xf32> -> vector<20x30xf32>
    %476 = vector.broadcast %433 : vector<1x30xf32> to vector<20x30xf32>
    %477 = arith.addf %475, %476 : vector<20x30xf32>
    %c6_219 = arith.constant 6 : index
    %c0_220 = arith.constant 0 : index
    %c0_221 = arith.constant 0 : index
    %478 = vector.load %arg6[%c6_219, %c0_220, %c0_221] : memref<16x30x30xf32, #tpu.memory_space<vmem>>, vector<1x30x30xf32>
    %479 = vector.shape_cast %478 : vector<1x30x30xf32> to vector<30x30xf32>
    %cst_222 = arith.constant dense<0.000000e+00> : vector<20x30xf32>
    %480 = tpu.matmul %467, %479, %cst_222 {dimension_numbers = #tpu.dot_dimension_numbers<[1], [0], [0], [1], [0, 0, 1, 1], [], []>} : vector<20x30xf32>, vector<30x30xf32>, vector<20x30xf32> -> vector<20x30xf32>
    %481 = vector.broadcast %435 : vector<1x30xf32> to vector<20x30xf32>
    %482 = arith.addf %480, %481 : vector<20x30xf32>
    %483 = vector.broadcast %42 : vector<1x30xf32> to vector<16x30xf32>
    %484 = arith.mulf %472, %483 : vector<16x30xf32>
    %cst_223 = arith.constant dense<0.000000e+00> : vector<16x20xf32>
    %485 = tpu.matmul %484, %477, %cst_223 {dimension_numbers = #tpu.dot_dimension_numbers<[1], [1], [0], [0], [0, 0, 1, 0], [], []>} : vector<16x30xf32>, vector<20x30xf32>, vector<16x20xf32> -> vector<16x20xf32>
    %486 = arith.addf %485, %156 : vector<16x20xf32>
    %cst_224 = arith.constant dense<0xFF800000> : vector<16xf32>
    %487 = vector.multi_reduction <maximumf>, %486, %cst_224 [1] : vector<16x20xf32> to vector<16xf32>
    %488 = vector.shape_cast %487 : vector<16xf32> to vector<16x1xf32>
    %489 = vector.broadcast %488 : vector<16x1xf32> to vector<16x20xf32>
    %490 = arith.subf %486, %489 : vector<16x20xf32>
    %491 = math.exp %490 : vector<16x20xf32>
    %cst_225 = arith.constant dense<0.000000e+00> : vector<16xf32>
    %492 = vector.multi_reduction <add>, %491, %cst_225 [1] : vector<16x20xf32> to vector<16xf32>
    %493 = vector.shape_cast %492 : vector<16xf32> to vector<16x1xf32>
    %494 = tpu.reciprocal %493 {approx = true} : vector<16x1xf32> -> vector<16x1xf32>
    %495 = vector.broadcast %494 : vector<16x1xf32> to vector<16x20xf32>
    %496 = arith.mulf %491, %495 : vector<16x20xf32>
    %497 = vector.broadcast %8 : vector<1x30xf32> to vector<20x30xf32>
    %498 = arith.mulf %482, %497 : vector<20x30xf32>
    %cst_226 = arith.constant dense<0.000000e+00> : vector<16x30xf32>
    %499 = tpu.matmul %496, %498, %cst_226 {dimension_numbers = #tpu.dot_dimension_numbers<[1], [0], [0], [1], [0, 0, 1, 1], [], []>} : vector<16x20xf32>, vector<20x30xf32>, vector<16x30xf32> -> vector<16x30xf32>
    %500 = vector.broadcast %44 : vector<1x30xf32> to vector<16x30xf32>
    %501 = arith.mulf %472, %500 : vector<16x30xf32>
    %cst_227 = arith.constant dense<0.000000e+00> : vector<16x20xf32>
    %502 = tpu.matmul %501, %477, %cst_227 {dimension_numbers = #tpu.dot_dimension_numbers<[1], [1], [0], [0], [0, 0, 1, 0], [], []>} : vector<16x30xf32>, vector<20x30xf32>, vector<16x20xf32> -> vector<16x20xf32>
    %503 = arith.addf %502, %156 : vector<16x20xf32>
    %cst_228 = arith.constant dense<0xFF800000> : vector<16xf32>
    %504 = vector.multi_reduction <maximumf>, %503, %cst_228 [1] : vector<16x20xf32> to vector<16xf32>
    %505 = vector.shape_cast %504 : vector<16xf32> to vector<16x1xf32>
    %506 = vector.broadcast %505 : vector<16x1xf32> to vector<16x20xf32>
    %507 = arith.subf %503, %506 : vector<16x20xf32>
    %508 = math.exp %507 : vector<16x20xf32>
    %cst_229 = arith.constant dense<0.000000e+00> : vector<16xf32>
    %509 = vector.multi_reduction <add>, %508, %cst_229 [1] : vector<16x20xf32> to vector<16xf32>
    %510 = vector.shape_cast %509 : vector<16xf32> to vector<16x1xf32>
    %511 = tpu.reciprocal %510 {approx = true} : vector<16x1xf32> -> vector<16x1xf32>
    %512 = vector.broadcast %511 : vector<16x1xf32> to vector<16x20xf32>
    %513 = arith.mulf %508, %512 : vector<16x20xf32>
    %514 = vector.broadcast %16 : vector<1x30xf32> to vector<20x30xf32>
    %515 = arith.mulf %482, %514 : vector<20x30xf32>
    %cst_230 = arith.constant dense<0.000000e+00> : vector<16x30xf32>
    %516 = tpu.matmul %513, %515, %cst_230 {dimension_numbers = #tpu.dot_dimension_numbers<[1], [0], [0], [1], [0, 0, 1, 1], [], []>} : vector<16x20xf32>, vector<20x30xf32>, vector<16x30xf32> -> vector<16x30xf32>
    %517 = arith.addf %499, %516 : vector<16x30xf32>
    %518 = vector.broadcast %46 : vector<1x30xf32> to vector<16x30xf32>
    %519 = arith.mulf %472, %518 : vector<16x30xf32>
    %cst_231 = arith.constant dense<0.000000e+00> : vector<16x20xf32>
    %520 = tpu.matmul %519, %477, %cst_231 {dimension_numbers = #tpu.dot_dimension_numbers<[1], [1], [0], [0], [0, 0, 1, 0], [], []>} : vector<16x30xf32>, vector<20x30xf32>, vector<16x20xf32> -> vector<16x20xf32>
    %521 = arith.addf %520, %156 : vector<16x20xf32>
    %cst_232 = arith.constant dense<0xFF800000> : vector<16xf32>
    %522 = vector.multi_reduction <maximumf>, %521, %cst_232 [1] : vector<16x20xf32> to vector<16xf32>
    %523 = vector.shape_cast %522 : vector<16xf32> to vector<16x1xf32>
    %524 = vector.broadcast %523 : vector<16x1xf32> to vector<16x20xf32>
    %525 = arith.subf %521, %524 : vector<16x20xf32>
    %526 = math.exp %525 : vector<16x20xf32>
    %cst_233 = arith.constant dense<0.000000e+00> : vector<16xf32>
    %527 = vector.multi_reduction <add>, %526, %cst_233 [1] : vector<16x20xf32> to vector<16xf32>
    %528 = vector.shape_cast %527 : vector<16xf32> to vector<16x1xf32>
    %529 = tpu.reciprocal %528 {approx = true} : vector<16x1xf32> -> vector<16x1xf32>
    %530 = vector.broadcast %529 : vector<16x1xf32> to vector<16x20xf32>
    %531 = arith.mulf %526, %530 : vector<16x20xf32>
    %532 = vector.broadcast %24 : vector<1x30xf32> to vector<20x30xf32>
    %533 = arith.mulf %482, %532 : vector<20x30xf32>
    %cst_234 = arith.constant dense<0.000000e+00> : vector<16x30xf32>
    %534 = tpu.matmul %531, %533, %cst_234 {dimension_numbers = #tpu.dot_dimension_numbers<[1], [0], [0], [1], [0, 0, 1, 1], [], []>} : vector<16x20xf32>, vector<20x30xf32>, vector<16x30xf32> -> vector<16x30xf32>
    %535 = arith.addf %517, %534 : vector<16x30xf32>
    %536 = vector.broadcast %48 : vector<1x30xf32> to vector<16x30xf32>
    %537 = arith.mulf %472, %536 : vector<16x30xf32>
    %cst_235 = arith.constant dense<0.000000e+00> : vector<16x20xf32>
    %538 = tpu.matmul %537, %477, %cst_235 {dimension_numbers = #tpu.dot_dimension_numbers<[1], [1], [0], [0], [0, 0, 1, 0], [], []>} : vector<16x30xf32>, vector<20x30xf32>, vector<16x20xf32> -> vector<16x20xf32>
    %539 = arith.addf %538, %156 : vector<16x20xf32>
    %cst_236 = arith.constant dense<0xFF800000> : vector<16xf32>
    %540 = vector.multi_reduction <maximumf>, %539, %cst_236 [1] : vector<16x20xf32> to vector<16xf32>
    %541 = vector.shape_cast %540 : vector<16xf32> to vector<16x1xf32>
    %542 = vector.broadcast %541 : vector<16x1xf32> to vector<16x20xf32>
    %543 = arith.subf %539, %542 : vector<16x20xf32>
    %544 = math.exp %543 : vector<16x20xf32>
    %cst_237 = arith.constant dense<0.000000e+00> : vector<16xf32>
    %545 = vector.multi_reduction <add>, %544, %cst_237 [1] : vector<16x20xf32> to vector<16xf32>
    %546 = vector.shape_cast %545 : vector<16xf32> to vector<16x1xf32>
    %547 = tpu.reciprocal %546 {approx = true} : vector<16x1xf32> -> vector<16x1xf32>
    %548 = vector.broadcast %547 : vector<16x1xf32> to vector<16x20xf32>
    %549 = arith.mulf %544, %548 : vector<16x20xf32>
    %550 = vector.broadcast %32 : vector<1x30xf32> to vector<20x30xf32>
    %551 = arith.mulf %482, %550 : vector<20x30xf32>
    %cst_238 = arith.constant dense<0.000000e+00> : vector<16x30xf32>
    %552 = tpu.matmul %549, %551, %cst_238 {dimension_numbers = #tpu.dot_dimension_numbers<[1], [0], [0], [1], [0, 0, 1, 1], [], []>} : vector<16x20xf32>, vector<20x30xf32>, vector<16x30xf32> -> vector<16x30xf32>
    %553 = arith.addf %535, %552 : vector<16x30xf32>
    %554 = vector.broadcast %50 : vector<1x30xf32> to vector<16x30xf32>
    %555 = arith.mulf %472, %554 : vector<16x30xf32>
    %cst_239 = arith.constant dense<0.000000e+00> : vector<16x20xf32>
    %556 = tpu.matmul %555, %477, %cst_239 {dimension_numbers = #tpu.dot_dimension_numbers<[1], [1], [0], [0], [0, 0, 1, 0], [], []>} : vector<16x30xf32>, vector<20x30xf32>, vector<16x20xf32> -> vector<16x20xf32>
    %557 = arith.addf %556, %156 : vector<16x20xf32>
    %cst_240 = arith.constant dense<0xFF800000> : vector<16xf32>
    %558 = vector.multi_reduction <maximumf>, %557, %cst_240 [1] : vector<16x20xf32> to vector<16xf32>
    %559 = vector.shape_cast %558 : vector<16xf32> to vector<16x1xf32>
    %560 = vector.broadcast %559 : vector<16x1xf32> to vector<16x20xf32>
    %561 = arith.subf %557, %560 : vector<16x20xf32>
    %562 = math.exp %561 : vector<16x20xf32>
    %cst_241 = arith.constant dense<0.000000e+00> : vector<16xf32>
    %563 = vector.multi_reduction <add>, %562, %cst_241 [1] : vector<16x20xf32> to vector<16xf32>
    %564 = vector.shape_cast %563 : vector<16xf32> to vector<16x1xf32>
    %565 = tpu.reciprocal %564 {approx = true} : vector<16x1xf32> -> vector<16x1xf32>
    %566 = vector.broadcast %565 : vector<16x1xf32> to vector<16x20xf32>
    %567 = arith.mulf %562, %566 : vector<16x20xf32>
    %568 = vector.broadcast %40 : vector<1x30xf32> to vector<20x30xf32>
    %569 = arith.mulf %482, %568 : vector<20x30xf32>
    %cst_242 = arith.constant dense<0.000000e+00> : vector<16x30xf32>
    %570 = tpu.matmul %567, %569, %cst_242 {dimension_numbers = #tpu.dot_dimension_numbers<[1], [0], [0], [1], [0, 0, 1, 1], [], []>} : vector<16x20xf32>, vector<20x30xf32>, vector<16x30xf32> -> vector<16x30xf32>
    %571 = arith.addf %553, %570 : vector<16x30xf32>
    %c7_243 = arith.constant 7 : index
    %c0_244 = arith.constant 0 : index
    %c0_245 = arith.constant 0 : index
    %572 = vector.load %arg6[%c7_243, %c0_244, %c0_245] : memref<16x30x30xf32, #tpu.memory_space<vmem>>, vector<1x30x30xf32>
    %573 = vector.shape_cast %572 : vector<1x30x30xf32> to vector<30x30xf32>
    %cst_246 = arith.constant dense<0.000000e+00> : vector<16x30xf32>
    %574 = tpu.matmul %571, %573, %cst_246 {dimension_numbers = #tpu.dot_dimension_numbers<[1], [0], [0], [1], [0, 0, 1, 1], [], []>} : vector<16x30xf32>, vector<30x30xf32>, vector<16x30xf32> -> vector<16x30xf32>
    %575 = vector.broadcast %437 : vector<1x30xf32> to vector<16x30xf32>
    %576 = arith.addf %574, %575 : vector<16x30xf32>
    %577 = arith.addf %425, %576 : vector<16x30xf32>
    %cst_247 = arith.constant dense<0.000000e+00> : vector<16xf32>
    %578 = vector.multi_reduction <add>, %577, %cst_247 [1] : vector<16x30xf32> to vector<16xf32>
    %579 = vector.shape_cast %578 : vector<16xf32> to vector<16x1xf32>
    %cst_248 = arith.constant 3.000000e+01 : f32
    %580 = vector.broadcast %cst_248 : f32 to vector<16x1xf32>
    %581 = arith.divf %579, %580 : vector<16x1xf32>
    %582 = vector.broadcast %581 : vector<16x1xf32> to vector<16x30xf32>
    %583 = arith.subf %577, %582 : vector<16x30xf32>
    %584 = arith.mulf %583, %583 : vector<16x30xf32>
    %cst_249 = arith.constant dense<0.000000e+00> : vector<16xf32>
    %585 = vector.multi_reduction <add>, %584, %cst_249 [1] : vector<16x30xf32> to vector<16xf32>
    %586 = vector.shape_cast %585 : vector<16xf32> to vector<16x1xf32>
    %cst_250 = arith.constant 3.000000e+01 : f32
    %587 = vector.broadcast %cst_250 : f32 to vector<16x1xf32>
    %588 = arith.divf %586, %587 : vector<16x1xf32>
    %cst_251 = arith.constant 9.99999974E-6 : f32
    %589 = vector.broadcast %cst_251 : f32 to vector<16x1xf32>
    %590 = arith.addf %588, %589 : vector<16x1xf32>
    %591 = math.rsqrt %590 : vector<16x1xf32>
    %592 = vector.broadcast %591 : vector<16x1xf32> to vector<16x30xf32>
    %593 = arith.mulf %583, %592 : vector<16x30xf32>
    %594 = vector.broadcast %439 : vector<1x30xf32> to vector<16x30xf32>
    %595 = arith.mulf %593, %594 : vector<16x30xf32>
    %596 = vector.broadcast %441 : vector<1x30xf32> to vector<16x30xf32>
    %597 = arith.addf %595, %596 : vector<16x30xf32>
    %c1_252 = arith.constant 1 : index
    %c0_253 = arith.constant 0 : index
    %c0_254 = arith.constant 0 : index
    %598 = vector.load %arg7[%c1_252, %c0_253, %c0_254] : memref<4x30x120xf32, #tpu.memory_space<vmem>>, vector<1x30x120xf32>
    %599 = vector.shape_cast %598 : vector<1x30x120xf32> to vector<30x120xf32>
    %cst_255 = arith.constant dense<0.000000e+00> : vector<16x120xf32>
    %600 = tpu.matmul %597, %599, %cst_255 {dimension_numbers = #tpu.dot_dimension_numbers<[1], [0], [0], [1], [0, 0, 1, 1], [], []>} : vector<16x30xf32>, vector<30x120xf32>, vector<16x120xf32> -> vector<16x120xf32>
    %c1_256 = arith.constant 1 : index
    %c0_257 = arith.constant 0 : index
    %c0_258 = arith.constant 0 : index
    %601 = vector.load %arg10[%c1_256, %c0_257, %c0_258] : memref<4x1x120xf32, #tpu.memory_space<vmem>>, vector<1x1x120xf32>
    %602 = vector.shape_cast %601 : vector<1x1x120xf32> to vector<1x120xf32>
    %603 = vector.broadcast %602 : vector<1x120xf32> to vector<16x120xf32>
    %604 = arith.addf %600, %603 : vector<16x120xf32>
    %cst_259 = arith.constant 0.000000e+00 : f32
    %605 = vector.broadcast %cst_259 : f32 to vector<16x120xf32>
    %606 = arith.maximumf %604, %605 : vector<16x120xf32>
    %c1_260 = arith.constant 1 : index
    %c0_261 = arith.constant 0 : index
    %c0_262 = arith.constant 0 : index
    %607 = vector.load %arg8[%c1_260, %c0_261, %c0_262] : memref<4x120x30xf32, #tpu.memory_space<vmem>>, vector<1x120x30xf32>
    %608 = vector.shape_cast %607 : vector<1x120x30xf32> to vector<120x30xf32>
    %cst_263 = arith.constant dense<0.000000e+00> : vector<16x30xf32>
    %609 = tpu.matmul %606, %608, %cst_263 {dimension_numbers = #tpu.dot_dimension_numbers<[1], [0], [0], [1], [0, 0, 1, 1], [], []>} : vector<16x120xf32>, vector<120x30xf32>, vector<16x30xf32> -> vector<16x30xf32>
    %610 = vector.broadcast %443 : vector<1x30xf32> to vector<16x30xf32>
    %611 = arith.addf %609, %610 : vector<16x30xf32>
    %612 = arith.addf %577, %611 : vector<16x30xf32>
    %c0_264 = arith.constant 0 : index
    %c0_265 = arith.constant 0 : index
    %613 = vector.load %arg11[%c0_264, %c0_265] : memref<4x30xf32, #tpu.memory_space<vmem>>, vector<1x30xf32>
    %c1_266 = arith.constant 1 : index
    %c0_267 = arith.constant 0 : index
    %614 = vector.load %arg11[%c1_266, %c0_267] : memref<4x30xf32, #tpu.memory_space<vmem>>, vector<1x30xf32>
    %cst_268 = arith.constant dense<0.000000e+00> : vector<16xf32>
    %615 = vector.multi_reduction <add>, %612, %cst_268 [1] : vector<16x30xf32> to vector<16xf32>
    %616 = vector.shape_cast %615 : vector<16xf32> to vector<16x1xf32>
    %cst_269 = arith.constant 3.000000e+01 : f32
    %617 = vector.broadcast %cst_269 : f32 to vector<16x1xf32>
    %618 = arith.divf %616, %617 : vector<16x1xf32>
    %619 = vector.broadcast %618 : vector<16x1xf32> to vector<16x30xf32>
    %620 = arith.subf %612, %619 : vector<16x30xf32>
    %621 = arith.mulf %620, %620 : vector<16x30xf32>
    %cst_270 = arith.constant dense<0.000000e+00> : vector<16xf32>
    %622 = vector.multi_reduction <add>, %621, %cst_270 [1] : vector<16x30xf32> to vector<16xf32>
    %623 = vector.shape_cast %622 : vector<16xf32> to vector<16x1xf32>
    %cst_271 = arith.constant 3.000000e+01 : f32
    %624 = vector.broadcast %cst_271 : f32 to vector<16x1xf32>
    %625 = arith.divf %623, %624 : vector<16x1xf32>
    %cst_272 = arith.constant 9.99999974E-6 : f32
    %626 = vector.broadcast %cst_272 : f32 to vector<16x1xf32>
    %627 = arith.addf %625, %626 : vector<16x1xf32>
    %628 = math.rsqrt %627 : vector<16x1xf32>
    %629 = vector.broadcast %628 : vector<16x1xf32> to vector<16x30xf32>
    %630 = arith.mulf %620, %629 : vector<16x30xf32>
    %631 = vector.broadcast %613 : vector<1x30xf32> to vector<16x30xf32>
    %632 = arith.mulf %630, %631 : vector<16x30xf32>
    %633 = vector.broadcast %614 : vector<1x30xf32> to vector<16x30xf32>
    %634 = arith.addf %632, %633 : vector<16x30xf32>
    %cst_273 = arith.constant dense<0.000000e+00> : vector<24xf32>
    %635 = vector.multi_reduction <add>, %123, %cst_273 [1] : vector<24x30xf32> to vector<24xf32>
    %636 = vector.shape_cast %635 : vector<24xf32> to vector<24x1xf32>
    %cst_274 = arith.constant 3.000000e+01 : f32
    %637 = vector.broadcast %cst_274 : f32 to vector<24x1xf32>
    %638 = arith.divf %636, %637 : vector<24x1xf32>
    %639 = vector.broadcast %638 : vector<24x1xf32> to vector<24x30xf32>
    %640 = arith.subf %123, %639 : vector<24x30xf32>
    %641 = arith.mulf %640, %640 : vector<24x30xf32>
    %cst_275 = arith.constant dense<0.000000e+00> : vector<24xf32>
    %642 = vector.multi_reduction <add>, %641, %cst_275 [1] : vector<24x30xf32> to vector<24xf32>
    %643 = vector.shape_cast %642 : vector<24xf32> to vector<24x1xf32>
    %cst_276 = arith.constant 3.000000e+01 : f32
    %644 = vector.broadcast %cst_276 : f32 to vector<24x1xf32>
    %645 = arith.divf %643, %644 : vector<24x1xf32>
    %cst_277 = arith.constant 9.99999974E-6 : f32
    %646 = vector.broadcast %cst_277 : f32 to vector<24x1xf32>
    %647 = arith.addf %645, %646 : vector<24x1xf32>
    %648 = math.rsqrt %647 : vector<24x1xf32>
    %649 = vector.broadcast %648 : vector<24x1xf32> to vector<24x30xf32>
    %650 = arith.mulf %640, %649 : vector<24x30xf32>
    %c2_278 = arith.constant 2 : index
    %c0_279 = arith.constant 0 : index
    %c0_280 = arith.constant 0 : index
    %651 = vector.load %arg9[%c2_278, %c0_279, %c0_280] : memref<4x9x30xf32, #tpu.memory_space<vmem>>, vector<1x1x30xf32>
    %652 = vector.shape_cast %651 : vector<1x1x30xf32> to vector<1x30xf32>
    %c2_281 = arith.constant 2 : index
    %c1_282 = arith.constant 1 : index
    %c0_283 = arith.constant 0 : index
    %653 = vector.load %arg9[%c2_281, %c1_282, %c0_283] : memref<4x9x30xf32, #tpu.memory_space<vmem>>, vector<1x1x30xf32>
    %654 = vector.shape_cast %653 : vector<1x1x30xf32> to vector<1x30xf32>
    %c2_284 = arith.constant 2 : index
    %c2_285 = arith.constant 2 : index
    %c0_286 = arith.constant 0 : index
    %655 = vector.load %arg9[%c2_284, %c2_285, %c0_286] : memref<4x9x30xf32, #tpu.memory_space<vmem>>, vector<1x1x30xf32>
    %656 = vector.shape_cast %655 : vector<1x1x30xf32> to vector<1x30xf32>
    %c2_287 = arith.constant 2 : index
    %c3_288 = arith.constant 3 : index
    %c0_289 = arith.constant 0 : index
    %657 = vector.load %arg9[%c2_287, %c3_288, %c0_289] : memref<4x9x30xf32, #tpu.memory_space<vmem>>, vector<1x1x30xf32>
    %658 = vector.shape_cast %657 : vector<1x1x30xf32> to vector<1x30xf32>
    %c2_290 = arith.constant 2 : index
    %c4_291 = arith.constant 4 : index
    %c0_292 = arith.constant 0 : index
    %659 = vector.load %arg9[%c2_290, %c4_291, %c0_292] : memref<4x9x30xf32, #tpu.memory_space<vmem>>, vector<1x1x30xf32>
    %660 = vector.shape_cast %659 : vector<1x1x30xf32> to vector<1x30xf32>
    %c2_293 = arith.constant 2 : index
    %c5_294 = arith.constant 5 : index
    %c0_295 = arith.constant 0 : index
    %661 = vector.load %arg9[%c2_293, %c5_294, %c0_295] : memref<4x9x30xf32, #tpu.memory_space<vmem>>, vector<1x1x30xf32>
    %662 = vector.shape_cast %661 : vector<1x1x30xf32> to vector<1x30xf32>
    %c2_296 = arith.constant 2 : index
    %c6_297 = arith.constant 6 : index
    %c0_298 = arith.constant 0 : index
    %663 = vector.load %arg9[%c2_296, %c6_297, %c0_298] : memref<4x9x30xf32, #tpu.memory_space<vmem>>, vector<1x1x30xf32>
    %664 = vector.shape_cast %663 : vector<1x1x30xf32> to vector<1x30xf32>
    %c2_299 = arith.constant 2 : index
    %c7_300 = arith.constant 7 : index
    %c0_301 = arith.constant 0 : index
    %665 = vector.load %arg9[%c2_299, %c7_300, %c0_301] : memref<4x9x30xf32, #tpu.memory_space<vmem>>, vector<1x1x30xf32>
    %666 = vector.shape_cast %665 : vector<1x1x30xf32> to vector<1x30xf32>
    %c2_302 = arith.constant 2 : index
    %c8_303 = arith.constant 8 : index
    %c0_304 = arith.constant 0 : index
    %667 = vector.load %arg9[%c2_302, %c8_303, %c0_304] : memref<4x9x30xf32, #tpu.memory_space<vmem>>, vector<1x1x30xf32>
    %668 = vector.shape_cast %667 : vector<1x1x30xf32> to vector<1x30xf32>
    %cst_305 = arith.constant dense<0.000000e+00> : vector<16xf32>
    %669 = vector.multi_reduction <add>, %117, %cst_305 [1] : vector<16x30xf32> to vector<16xf32>
    %670 = vector.shape_cast %669 : vector<16xf32> to vector<16x1xf32>
    %cst_306 = arith.constant 3.000000e+01 : f32
    %671 = vector.broadcast %cst_306 : f32 to vector<16x1xf32>
    %672 = arith.divf %670, %671 : vector<16x1xf32>
    %673 = vector.broadcast %672 : vector<16x1xf32> to vector<16x30xf32>
    %674 = arith.subf %117, %673 : vector<16x30xf32>
    %675 = arith.mulf %674, %674 : vector<16x30xf32>
    %cst_307 = arith.constant dense<0.000000e+00> : vector<16xf32>
    %676 = vector.multi_reduction <add>, %675, %cst_307 [1] : vector<16x30xf32> to vector<16xf32>
    %677 = vector.shape_cast %676 : vector<16xf32> to vector<16x1xf32>
    %cst_308 = arith.constant 3.000000e+01 : f32
    %678 = vector.broadcast %cst_308 : f32 to vector<16x1xf32>
    %679 = arith.divf %677, %678 : vector<16x1xf32>
    %cst_309 = arith.constant 9.99999974E-6 : f32
    %680 = vector.broadcast %cst_309 : f32 to vector<16x1xf32>
    %681 = arith.addf %679, %680 : vector<16x1xf32>
    %682 = math.rsqrt %681 : vector<16x1xf32>
    %683 = vector.broadcast %682 : vector<16x1xf32> to vector<16x30xf32>
    %684 = arith.mulf %674, %683 : vector<16x30xf32>
    %685 = vector.broadcast %652 : vector<1x30xf32> to vector<16x30xf32>
    %686 = arith.mulf %684, %685 : vector<16x30xf32>
    %687 = vector.broadcast %654 : vector<1x30xf32> to vector<16x30xf32>
    %688 = arith.addf %686, %687 : vector<16x30xf32>
    %689 = vector.broadcast %652 : vector<1x30xf32> to vector<24x30xf32>
    %690 = arith.mulf %650, %689 : vector<24x30xf32>
    %691 = vector.broadcast %654 : vector<1x30xf32> to vector<24x30xf32>
    %692 = arith.addf %690, %691 : vector<24x30xf32>
    %c8_310 = arith.constant 8 : index
    %c0_311 = arith.constant 0 : index
    %c0_312 = arith.constant 0 : index
    %693 = vector.load %arg6[%c8_310, %c0_311, %c0_312] : memref<16x30x30xf32, #tpu.memory_space<vmem>>, vector<1x30x30xf32>
    %694 = vector.shape_cast %693 : vector<1x30x30xf32> to vector<30x30xf32>
    %cst_313 = arith.constant dense<0.000000e+00> : vector<16x30xf32>
    %695 = tpu.matmul %688, %694, %cst_313 {dimension_numbers = #tpu.dot_dimension_numbers<[1], [0], [0], [1], [0, 0, 1, 1], [], []>} : vector<16x30xf32>, vector<30x30xf32>, vector<16x30xf32> -> vector<16x30xf32>
    %696 = vector.broadcast %656 : vector<1x30xf32> to vector<16x30xf32>
    %697 = arith.addf %695, %696 : vector<16x30xf32>
    %c9 = arith.constant 9 : index
    %c0_314 = arith.constant 0 : index
    %c0_315 = arith.constant 0 : index
    %698 = vector.load %arg6[%c9, %c0_314, %c0_315] : memref<16x30x30xf32, #tpu.memory_space<vmem>>, vector<1x30x30xf32>
    %699 = vector.shape_cast %698 : vector<1x30x30xf32> to vector<30x30xf32>
    %cst_316 = arith.constant dense<0.000000e+00> : vector<24x30xf32>
    %700 = tpu.matmul %692, %699, %cst_316 {dimension_numbers = #tpu.dot_dimension_numbers<[1], [0], [0], [1], [0, 0, 1, 1], [], []>} : vector<24x30xf32>, vector<30x30xf32>, vector<24x30xf32> -> vector<24x30xf32>
    %701 = vector.broadcast %658 : vector<1x30xf32> to vector<24x30xf32>
    %702 = arith.addf %700, %701 : vector<24x30xf32>
    %c10 = arith.constant 10 : index
    %c0_317 = arith.constant 0 : index
    %c0_318 = arith.constant 0 : index
    %703 = vector.load %arg6[%c10, %c0_317, %c0_318] : memref<16x30x30xf32, #tpu.memory_space<vmem>>, vector<1x30x30xf32>
    %704 = vector.shape_cast %703 : vector<1x30x30xf32> to vector<30x30xf32>
    %cst_319 = arith.constant dense<0.000000e+00> : vector<24x30xf32>
    %705 = tpu.matmul %692, %704, %cst_319 {dimension_numbers = #tpu.dot_dimension_numbers<[1], [0], [0], [1], [0, 0, 1, 1], [], []>} : vector<24x30xf32>, vector<30x30xf32>, vector<24x30xf32> -> vector<24x30xf32>
    %706 = vector.broadcast %660 : vector<1x30xf32> to vector<24x30xf32>
    %707 = arith.addf %705, %706 : vector<24x30xf32>
    %708 = vector.broadcast %42 : vector<1x30xf32> to vector<16x30xf32>
    %709 = arith.mulf %697, %708 : vector<16x30xf32>
    %cst_320 = arith.constant dense<0.000000e+00> : vector<16x24xf32>
    %710 = tpu.matmul %709, %702, %cst_320 {dimension_numbers = #tpu.dot_dimension_numbers<[1], [1], [0], [0], [0, 0, 1, 0], [], []>} : vector<16x30xf32>, vector<24x30xf32>, vector<16x24xf32> -> vector<16x24xf32>
    %711 = arith.addf %710, %189 : vector<16x24xf32>
    %cst_321 = arith.constant dense<0xFF800000> : vector<16xf32>
    %712 = vector.multi_reduction <maximumf>, %711, %cst_321 [1] : vector<16x24xf32> to vector<16xf32>
    %713 = vector.shape_cast %712 : vector<16xf32> to vector<16x1xf32>
    %714 = vector.broadcast %713 : vector<16x1xf32> to vector<16x24xf32>
    %715 = arith.subf %711, %714 : vector<16x24xf32>
    %716 = math.exp %715 : vector<16x24xf32>
    %cst_322 = arith.constant dense<0.000000e+00> : vector<16xf32>
    %717 = vector.multi_reduction <add>, %716, %cst_322 [1] : vector<16x24xf32> to vector<16xf32>
    %718 = vector.shape_cast %717 : vector<16xf32> to vector<16x1xf32>
    %719 = tpu.reciprocal %718 {approx = true} : vector<16x1xf32> -> vector<16x1xf32>
    %720 = vector.broadcast %719 : vector<16x1xf32> to vector<16x24xf32>
    %721 = arith.mulf %716, %720 : vector<16x24xf32>
    %722 = vector.broadcast %8 : vector<1x30xf32> to vector<24x30xf32>
    %723 = arith.mulf %707, %722 : vector<24x30xf32>
    %cst_323 = arith.constant dense<0.000000e+00> : vector<16x30xf32>
    %724 = tpu.matmul %721, %723, %cst_323 {dimension_numbers = #tpu.dot_dimension_numbers<[1], [0], [0], [1], [0, 0, 1, 1], [], []>} : vector<16x24xf32>, vector<24x30xf32>, vector<16x30xf32> -> vector<16x30xf32>
    %725 = vector.broadcast %44 : vector<1x30xf32> to vector<16x30xf32>
    %726 = arith.mulf %697, %725 : vector<16x30xf32>
    %cst_324 = arith.constant dense<0.000000e+00> : vector<16x24xf32>
    %727 = tpu.matmul %726, %702, %cst_324 {dimension_numbers = #tpu.dot_dimension_numbers<[1], [1], [0], [0], [0, 0, 1, 0], [], []>} : vector<16x30xf32>, vector<24x30xf32>, vector<16x24xf32> -> vector<16x24xf32>
    %728 = arith.addf %727, %189 : vector<16x24xf32>
    %cst_325 = arith.constant dense<0xFF800000> : vector<16xf32>
    %729 = vector.multi_reduction <maximumf>, %728, %cst_325 [1] : vector<16x24xf32> to vector<16xf32>
    %730 = vector.shape_cast %729 : vector<16xf32> to vector<16x1xf32>
    %731 = vector.broadcast %730 : vector<16x1xf32> to vector<16x24xf32>
    %732 = arith.subf %728, %731 : vector<16x24xf32>
    %733 = math.exp %732 : vector<16x24xf32>
    %cst_326 = arith.constant dense<0.000000e+00> : vector<16xf32>
    %734 = vector.multi_reduction <add>, %733, %cst_326 [1] : vector<16x24xf32> to vector<16xf32>
    %735 = vector.shape_cast %734 : vector<16xf32> to vector<16x1xf32>
    %736 = tpu.reciprocal %735 {approx = true} : vector<16x1xf32> -> vector<16x1xf32>
    %737 = vector.broadcast %736 : vector<16x1xf32> to vector<16x24xf32>
    %738 = arith.mulf %733, %737 : vector<16x24xf32>
    %739 = vector.broadcast %16 : vector<1x30xf32> to vector<24x30xf32>
    %740 = arith.mulf %707, %739 : vector<24x30xf32>
    %cst_327 = arith.constant dense<0.000000e+00> : vector<16x30xf32>
    %741 = tpu.matmul %738, %740, %cst_327 {dimension_numbers = #tpu.dot_dimension_numbers<[1], [0], [0], [1], [0, 0, 1, 1], [], []>} : vector<16x24xf32>, vector<24x30xf32>, vector<16x30xf32> -> vector<16x30xf32>
    %742 = arith.addf %724, %741 : vector<16x30xf32>
    %743 = vector.broadcast %46 : vector<1x30xf32> to vector<16x30xf32>
    %744 = arith.mulf %697, %743 : vector<16x30xf32>
    %cst_328 = arith.constant dense<0.000000e+00> : vector<16x24xf32>
    %745 = tpu.matmul %744, %702, %cst_328 {dimension_numbers = #tpu.dot_dimension_numbers<[1], [1], [0], [0], [0, 0, 1, 0], [], []>} : vector<16x30xf32>, vector<24x30xf32>, vector<16x24xf32> -> vector<16x24xf32>
    %746 = arith.addf %745, %189 : vector<16x24xf32>
    %cst_329 = arith.constant dense<0xFF800000> : vector<16xf32>
    %747 = vector.multi_reduction <maximumf>, %746, %cst_329 [1] : vector<16x24xf32> to vector<16xf32>
    %748 = vector.shape_cast %747 : vector<16xf32> to vector<16x1xf32>
    %749 = vector.broadcast %748 : vector<16x1xf32> to vector<16x24xf32>
    %750 = arith.subf %746, %749 : vector<16x24xf32>
    %751 = math.exp %750 : vector<16x24xf32>
    %cst_330 = arith.constant dense<0.000000e+00> : vector<16xf32>
    %752 = vector.multi_reduction <add>, %751, %cst_330 [1] : vector<16x24xf32> to vector<16xf32>
    %753 = vector.shape_cast %752 : vector<16xf32> to vector<16x1xf32>
    %754 = tpu.reciprocal %753 {approx = true} : vector<16x1xf32> -> vector<16x1xf32>
    %755 = vector.broadcast %754 : vector<16x1xf32> to vector<16x24xf32>
    %756 = arith.mulf %751, %755 : vector<16x24xf32>
    %757 = vector.broadcast %24 : vector<1x30xf32> to vector<24x30xf32>
    %758 = arith.mulf %707, %757 : vector<24x30xf32>
    %cst_331 = arith.constant dense<0.000000e+00> : vector<16x30xf32>
    %759 = tpu.matmul %756, %758, %cst_331 {dimension_numbers = #tpu.dot_dimension_numbers<[1], [0], [0], [1], [0, 0, 1, 1], [], []>} : vector<16x24xf32>, vector<24x30xf32>, vector<16x30xf32> -> vector<16x30xf32>
    %760 = arith.addf %742, %759 : vector<16x30xf32>
    %761 = vector.broadcast %48 : vector<1x30xf32> to vector<16x30xf32>
    %762 = arith.mulf %697, %761 : vector<16x30xf32>
    %cst_332 = arith.constant dense<0.000000e+00> : vector<16x24xf32>
    %763 = tpu.matmul %762, %702, %cst_332 {dimension_numbers = #tpu.dot_dimension_numbers<[1], [1], [0], [0], [0, 0, 1, 0], [], []>} : vector<16x30xf32>, vector<24x30xf32>, vector<16x24xf32> -> vector<16x24xf32>
    %764 = arith.addf %763, %189 : vector<16x24xf32>
    %cst_333 = arith.constant dense<0xFF800000> : vector<16xf32>
    %765 = vector.multi_reduction <maximumf>, %764, %cst_333 [1] : vector<16x24xf32> to vector<16xf32>
    %766 = vector.shape_cast %765 : vector<16xf32> to vector<16x1xf32>
    %767 = vector.broadcast %766 : vector<16x1xf32> to vector<16x24xf32>
    %768 = arith.subf %764, %767 : vector<16x24xf32>
    %769 = math.exp %768 : vector<16x24xf32>
    %cst_334 = arith.constant dense<0.000000e+00> : vector<16xf32>
    %770 = vector.multi_reduction <add>, %769, %cst_334 [1] : vector<16x24xf32> to vector<16xf32>
    %771 = vector.shape_cast %770 : vector<16xf32> to vector<16x1xf32>
    %772 = tpu.reciprocal %771 {approx = true} : vector<16x1xf32> -> vector<16x1xf32>
    %773 = vector.broadcast %772 : vector<16x1xf32> to vector<16x24xf32>
    %774 = arith.mulf %769, %773 : vector<16x24xf32>
    %775 = vector.broadcast %32 : vector<1x30xf32> to vector<24x30xf32>
    %776 = arith.mulf %707, %775 : vector<24x30xf32>
    %cst_335 = arith.constant dense<0.000000e+00> : vector<16x30xf32>
    %777 = tpu.matmul %774, %776, %cst_335 {dimension_numbers = #tpu.dot_dimension_numbers<[1], [0], [0], [1], [0, 0, 1, 1], [], []>} : vector<16x24xf32>, vector<24x30xf32>, vector<16x30xf32> -> vector<16x30xf32>
    %778 = arith.addf %760, %777 : vector<16x30xf32>
    %779 = vector.broadcast %50 : vector<1x30xf32> to vector<16x30xf32>
    %780 = arith.mulf %697, %779 : vector<16x30xf32>
    %cst_336 = arith.constant dense<0.000000e+00> : vector<16x24xf32>
    %781 = tpu.matmul %780, %702, %cst_336 {dimension_numbers = #tpu.dot_dimension_numbers<[1], [1], [0], [0], [0, 0, 1, 0], [], []>} : vector<16x30xf32>, vector<24x30xf32>, vector<16x24xf32> -> vector<16x24xf32>
    %782 = arith.addf %781, %189 : vector<16x24xf32>
    %cst_337 = arith.constant dense<0xFF800000> : vector<16xf32>
    %783 = vector.multi_reduction <maximumf>, %782, %cst_337 [1] : vector<16x24xf32> to vector<16xf32>
    %784 = vector.shape_cast %783 : vector<16xf32> to vector<16x1xf32>
    %785 = vector.broadcast %784 : vector<16x1xf32> to vector<16x24xf32>
    %786 = arith.subf %782, %785 : vector<16x24xf32>
    %787 = math.exp %786 : vector<16x24xf32>
    %cst_338 = arith.constant dense<0.000000e+00> : vector<16xf32>
    %788 = vector.multi_reduction <add>, %787, %cst_338 [1] : vector<16x24xf32> to vector<16xf32>
    %789 = vector.shape_cast %788 : vector<16xf32> to vector<16x1xf32>
    %790 = tpu.reciprocal %789 {approx = true} : vector<16x1xf32> -> vector<16x1xf32>
    %791 = vector.broadcast %790 : vector<16x1xf32> to vector<16x24xf32>
    %792 = arith.mulf %787, %791 : vector<16x24xf32>
    %793 = vector.broadcast %40 : vector<1x30xf32> to vector<24x30xf32>
    %794 = arith.mulf %707, %793 : vector<24x30xf32>
    %cst_339 = arith.constant dense<0.000000e+00> : vector<16x30xf32>
    %795 = tpu.matmul %792, %794, %cst_339 {dimension_numbers = #tpu.dot_dimension_numbers<[1], [0], [0], [1], [0, 0, 1, 1], [], []>} : vector<16x24xf32>, vector<24x30xf32>, vector<16x30xf32> -> vector<16x30xf32>
    %796 = arith.addf %778, %795 : vector<16x30xf32>
    %c11 = arith.constant 11 : index
    %c0_340 = arith.constant 0 : index
    %c0_341 = arith.constant 0 : index
    %797 = vector.load %arg6[%c11, %c0_340, %c0_341] : memref<16x30x30xf32, #tpu.memory_space<vmem>>, vector<1x30x30xf32>
    %798 = vector.shape_cast %797 : vector<1x30x30xf32> to vector<30x30xf32>
    %cst_342 = arith.constant dense<0.000000e+00> : vector<16x30xf32>
    %799 = tpu.matmul %796, %798, %cst_342 {dimension_numbers = #tpu.dot_dimension_numbers<[1], [0], [0], [1], [0, 0, 1, 1], [], []>} : vector<16x30xf32>, vector<30x30xf32>, vector<16x30xf32> -> vector<16x30xf32>
    %800 = vector.broadcast %662 : vector<1x30xf32> to vector<16x30xf32>
    %801 = arith.addf %799, %800 : vector<16x30xf32>
    %802 = arith.addf %117, %801 : vector<16x30xf32>
    %cst_343 = arith.constant dense<0.000000e+00> : vector<16xf32>
    %803 = vector.multi_reduction <add>, %802, %cst_343 [1] : vector<16x30xf32> to vector<16xf32>
    %804 = vector.shape_cast %803 : vector<16xf32> to vector<16x1xf32>
    %cst_344 = arith.constant 3.000000e+01 : f32
    %805 = vector.broadcast %cst_344 : f32 to vector<16x1xf32>
    %806 = arith.divf %804, %805 : vector<16x1xf32>
    %807 = vector.broadcast %806 : vector<16x1xf32> to vector<16x30xf32>
    %808 = arith.subf %802, %807 : vector<16x30xf32>
    %809 = arith.mulf %808, %808 : vector<16x30xf32>
    %cst_345 = arith.constant dense<0.000000e+00> : vector<16xf32>
    %810 = vector.multi_reduction <add>, %809, %cst_345 [1] : vector<16x30xf32> to vector<16xf32>
    %811 = vector.shape_cast %810 : vector<16xf32> to vector<16x1xf32>
    %cst_346 = arith.constant 3.000000e+01 : f32
    %812 = vector.broadcast %cst_346 : f32 to vector<16x1xf32>
    %813 = arith.divf %811, %812 : vector<16x1xf32>
    %cst_347 = arith.constant 9.99999974E-6 : f32
    %814 = vector.broadcast %cst_347 : f32 to vector<16x1xf32>
    %815 = arith.addf %813, %814 : vector<16x1xf32>
    %816 = math.rsqrt %815 : vector<16x1xf32>
    %817 = vector.broadcast %816 : vector<16x1xf32> to vector<16x30xf32>
    %818 = arith.mulf %808, %817 : vector<16x30xf32>
    %819 = vector.broadcast %664 : vector<1x30xf32> to vector<16x30xf32>
    %820 = arith.mulf %818, %819 : vector<16x30xf32>
    %821 = vector.broadcast %666 : vector<1x30xf32> to vector<16x30xf32>
    %822 = arith.addf %820, %821 : vector<16x30xf32>
    %c2_348 = arith.constant 2 : index
    %c0_349 = arith.constant 0 : index
    %c0_350 = arith.constant 0 : index
    %823 = vector.load %arg7[%c2_348, %c0_349, %c0_350] : memref<4x30x120xf32, #tpu.memory_space<vmem>>, vector<1x30x120xf32>
    %824 = vector.shape_cast %823 : vector<1x30x120xf32> to vector<30x120xf32>
    %cst_351 = arith.constant dense<0.000000e+00> : vector<16x120xf32>
    %825 = tpu.matmul %822, %824, %cst_351 {dimension_numbers = #tpu.dot_dimension_numbers<[1], [0], [0], [1], [0, 0, 1, 1], [], []>} : vector<16x30xf32>, vector<30x120xf32>, vector<16x120xf32> -> vector<16x120xf32>
    %c2_352 = arith.constant 2 : index
    %c0_353 = arith.constant 0 : index
    %c0_354 = arith.constant 0 : index
    %826 = vector.load %arg10[%c2_352, %c0_353, %c0_354] : memref<4x1x120xf32, #tpu.memory_space<vmem>>, vector<1x1x120xf32>
    %827 = vector.shape_cast %826 : vector<1x1x120xf32> to vector<1x120xf32>
    %828 = vector.broadcast %827 : vector<1x120xf32> to vector<16x120xf32>
    %829 = arith.addf %825, %828 : vector<16x120xf32>
    %cst_355 = arith.constant 0.000000e+00 : f32
    %830 = vector.broadcast %cst_355 : f32 to vector<16x120xf32>
    %831 = arith.maximumf %829, %830 : vector<16x120xf32>
    %c2_356 = arith.constant 2 : index
    %c0_357 = arith.constant 0 : index
    %c0_358 = arith.constant 0 : index
    %832 = vector.load %arg8[%c2_356, %c0_357, %c0_358] : memref<4x120x30xf32, #tpu.memory_space<vmem>>, vector<1x120x30xf32>
    %833 = vector.shape_cast %832 : vector<1x120x30xf32> to vector<120x30xf32>
    %cst_359 = arith.constant dense<0.000000e+00> : vector<16x30xf32>
    %834 = tpu.matmul %831, %833, %cst_359 {dimension_numbers = #tpu.dot_dimension_numbers<[1], [0], [0], [1], [0, 0, 1, 1], [], []>} : vector<16x120xf32>, vector<120x30xf32>, vector<16x30xf32> -> vector<16x30xf32>
    %835 = vector.broadcast %668 : vector<1x30xf32> to vector<16x30xf32>
    %836 = arith.addf %834, %835 : vector<16x30xf32>
    %837 = arith.addf %802, %836 : vector<16x30xf32>
    %c3_360 = arith.constant 3 : index
    %c0_361 = arith.constant 0 : index
    %c0_362 = arith.constant 0 : index
    %838 = vector.load %arg9[%c3_360, %c0_361, %c0_362] : memref<4x9x30xf32, #tpu.memory_space<vmem>>, vector<1x1x30xf32>
    %839 = vector.shape_cast %838 : vector<1x1x30xf32> to vector<1x30xf32>
    %c3_363 = arith.constant 3 : index
    %c1_364 = arith.constant 1 : index
    %c0_365 = arith.constant 0 : index
    %840 = vector.load %arg9[%c3_363, %c1_364, %c0_365] : memref<4x9x30xf32, #tpu.memory_space<vmem>>, vector<1x1x30xf32>
    %841 = vector.shape_cast %840 : vector<1x1x30xf32> to vector<1x30xf32>
    %c3_366 = arith.constant 3 : index
    %c2_367 = arith.constant 2 : index
    %c0_368 = arith.constant 0 : index
    %842 = vector.load %arg9[%c3_366, %c2_367, %c0_368] : memref<4x9x30xf32, #tpu.memory_space<vmem>>, vector<1x1x30xf32>
    %843 = vector.shape_cast %842 : vector<1x1x30xf32> to vector<1x30xf32>
    %c3_369 = arith.constant 3 : index
    %c3_370 = arith.constant 3 : index
    %c0_371 = arith.constant 0 : index
    %844 = vector.load %arg9[%c3_369, %c3_370, %c0_371] : memref<4x9x30xf32, #tpu.memory_space<vmem>>, vector<1x1x30xf32>
    %845 = vector.shape_cast %844 : vector<1x1x30xf32> to vector<1x30xf32>
    %c3_372 = arith.constant 3 : index
    %c4_373 = arith.constant 4 : index
    %c0_374 = arith.constant 0 : index
    %846 = vector.load %arg9[%c3_372, %c4_373, %c0_374] : memref<4x9x30xf32, #tpu.memory_space<vmem>>, vector<1x1x30xf32>
    %847 = vector.shape_cast %846 : vector<1x1x30xf32> to vector<1x30xf32>
    %c3_375 = arith.constant 3 : index
    %c5_376 = arith.constant 5 : index
    %c0_377 = arith.constant 0 : index
    %848 = vector.load %arg9[%c3_375, %c5_376, %c0_377] : memref<4x9x30xf32, #tpu.memory_space<vmem>>, vector<1x1x30xf32>
    %849 = vector.shape_cast %848 : vector<1x1x30xf32> to vector<1x30xf32>
    %c3_378 = arith.constant 3 : index
    %c6_379 = arith.constant 6 : index
    %c0_380 = arith.constant 0 : index
    %850 = vector.load %arg9[%c3_378, %c6_379, %c0_380] : memref<4x9x30xf32, #tpu.memory_space<vmem>>, vector<1x1x30xf32>
    %851 = vector.shape_cast %850 : vector<1x1x30xf32> to vector<1x30xf32>
    %c3_381 = arith.constant 3 : index
    %c7_382 = arith.constant 7 : index
    %c0_383 = arith.constant 0 : index
    %852 = vector.load %arg9[%c3_381, %c7_382, %c0_383] : memref<4x9x30xf32, #tpu.memory_space<vmem>>, vector<1x1x30xf32>
    %853 = vector.shape_cast %852 : vector<1x1x30xf32> to vector<1x30xf32>
    %c3_384 = arith.constant 3 : index
    %c8_385 = arith.constant 8 : index
    %c0_386 = arith.constant 0 : index
    %854 = vector.load %arg9[%c3_384, %c8_385, %c0_386] : memref<4x9x30xf32, #tpu.memory_space<vmem>>, vector<1x1x30xf32>
    %855 = vector.shape_cast %854 : vector<1x1x30xf32> to vector<1x30xf32>
    %cst_387 = arith.constant dense<0.000000e+00> : vector<16xf32>
    %856 = vector.multi_reduction <add>, %837, %cst_387 [1] : vector<16x30xf32> to vector<16xf32>
    %857 = vector.shape_cast %856 : vector<16xf32> to vector<16x1xf32>
    %cst_388 = arith.constant 3.000000e+01 : f32
    %858 = vector.broadcast %cst_388 : f32 to vector<16x1xf32>
    %859 = arith.divf %857, %858 : vector<16x1xf32>
    %860 = vector.broadcast %859 : vector<16x1xf32> to vector<16x30xf32>
    %861 = arith.subf %837, %860 : vector<16x30xf32>
    %862 = arith.mulf %861, %861 : vector<16x30xf32>
    %cst_389 = arith.constant dense<0.000000e+00> : vector<16xf32>
    %863 = vector.multi_reduction <add>, %862, %cst_389 [1] : vector<16x30xf32> to vector<16xf32>
    %864 = vector.shape_cast %863 : vector<16xf32> to vector<16x1xf32>
    %cst_390 = arith.constant 3.000000e+01 : f32
    %865 = vector.broadcast %cst_390 : f32 to vector<16x1xf32>
    %866 = arith.divf %864, %865 : vector<16x1xf32>
    %cst_391 = arith.constant 9.99999974E-6 : f32
    %867 = vector.broadcast %cst_391 : f32 to vector<16x1xf32>
    %868 = arith.addf %866, %867 : vector<16x1xf32>
    %869 = math.rsqrt %868 : vector<16x1xf32>
    %870 = vector.broadcast %869 : vector<16x1xf32> to vector<16x30xf32>
    %871 = arith.mulf %861, %870 : vector<16x30xf32>
    %872 = vector.broadcast %839 : vector<1x30xf32> to vector<16x30xf32>
    %873 = arith.mulf %871, %872 : vector<16x30xf32>
    %874 = vector.broadcast %841 : vector<1x30xf32> to vector<16x30xf32>
    %875 = arith.addf %873, %874 : vector<16x30xf32>
    %876 = vector.broadcast %839 : vector<1x30xf32> to vector<24x30xf32>
    %877 = arith.mulf %650, %876 : vector<24x30xf32>
    %878 = vector.broadcast %841 : vector<1x30xf32> to vector<24x30xf32>
    %879 = arith.addf %877, %878 : vector<24x30xf32>
    %c12 = arith.constant 12 : index
    %c0_392 = arith.constant 0 : index
    %c0_393 = arith.constant 0 : index
    %880 = vector.load %arg6[%c12, %c0_392, %c0_393] : memref<16x30x30xf32, #tpu.memory_space<vmem>>, vector<1x30x30xf32>
    %881 = vector.shape_cast %880 : vector<1x30x30xf32> to vector<30x30xf32>
    %cst_394 = arith.constant dense<0.000000e+00> : vector<16x30xf32>
    %882 = tpu.matmul %875, %881, %cst_394 {dimension_numbers = #tpu.dot_dimension_numbers<[1], [0], [0], [1], [0, 0, 1, 1], [], []>} : vector<16x30xf32>, vector<30x30xf32>, vector<16x30xf32> -> vector<16x30xf32>
    %883 = vector.broadcast %843 : vector<1x30xf32> to vector<16x30xf32>
    %884 = arith.addf %882, %883 : vector<16x30xf32>
    %c13 = arith.constant 13 : index
    %c0_395 = arith.constant 0 : index
    %c0_396 = arith.constant 0 : index
    %885 = vector.load %arg6[%c13, %c0_395, %c0_396] : memref<16x30x30xf32, #tpu.memory_space<vmem>>, vector<1x30x30xf32>
    %886 = vector.shape_cast %885 : vector<1x30x30xf32> to vector<30x30xf32>
    %cst_397 = arith.constant dense<0.000000e+00> : vector<24x30xf32>
    %887 = tpu.matmul %879, %886, %cst_397 {dimension_numbers = #tpu.dot_dimension_numbers<[1], [0], [0], [1], [0, 0, 1, 1], [], []>} : vector<24x30xf32>, vector<30x30xf32>, vector<24x30xf32> -> vector<24x30xf32>
    %888 = vector.broadcast %845 : vector<1x30xf32> to vector<24x30xf32>
    %889 = arith.addf %887, %888 : vector<24x30xf32>
    %c14 = arith.constant 14 : index
    %c0_398 = arith.constant 0 : index
    %c0_399 = arith.constant 0 : index
    %890 = vector.load %arg6[%c14, %c0_398, %c0_399] : memref<16x30x30xf32, #tpu.memory_space<vmem>>, vector<1x30x30xf32>
    %891 = vector.shape_cast %890 : vector<1x30x30xf32> to vector<30x30xf32>
    %cst_400 = arith.constant dense<0.000000e+00> : vector<24x30xf32>
    %892 = tpu.matmul %879, %891, %cst_400 {dimension_numbers = #tpu.dot_dimension_numbers<[1], [0], [0], [1], [0, 0, 1, 1], [], []>} : vector<24x30xf32>, vector<30x30xf32>, vector<24x30xf32> -> vector<24x30xf32>
    %893 = vector.broadcast %847 : vector<1x30xf32> to vector<24x30xf32>
    %894 = arith.addf %892, %893 : vector<24x30xf32>
    %895 = vector.broadcast %42 : vector<1x30xf32> to vector<16x30xf32>
    %896 = arith.mulf %884, %895 : vector<16x30xf32>
    %cst_401 = arith.constant dense<0.000000e+00> : vector<16x24xf32>
    %897 = tpu.matmul %896, %889, %cst_401 {dimension_numbers = #tpu.dot_dimension_numbers<[1], [1], [0], [0], [0, 0, 1, 0], [], []>} : vector<16x30xf32>, vector<24x30xf32>, vector<16x24xf32> -> vector<16x24xf32>
    %898 = arith.addf %897, %189 : vector<16x24xf32>
    %cst_402 = arith.constant dense<0xFF800000> : vector<16xf32>
    %899 = vector.multi_reduction <maximumf>, %898, %cst_402 [1] : vector<16x24xf32> to vector<16xf32>
    %900 = vector.shape_cast %899 : vector<16xf32> to vector<16x1xf32>
    %901 = vector.broadcast %900 : vector<16x1xf32> to vector<16x24xf32>
    %902 = arith.subf %898, %901 : vector<16x24xf32>
    %903 = math.exp %902 : vector<16x24xf32>
    %cst_403 = arith.constant dense<0.000000e+00> : vector<16xf32>
    %904 = vector.multi_reduction <add>, %903, %cst_403 [1] : vector<16x24xf32> to vector<16xf32>
    %905 = vector.shape_cast %904 : vector<16xf32> to vector<16x1xf32>
    %906 = tpu.reciprocal %905 {approx = true} : vector<16x1xf32> -> vector<16x1xf32>
    %907 = vector.broadcast %906 : vector<16x1xf32> to vector<16x24xf32>
    %908 = arith.mulf %903, %907 : vector<16x24xf32>
    %909 = vector.broadcast %8 : vector<1x30xf32> to vector<24x30xf32>
    %910 = arith.mulf %894, %909 : vector<24x30xf32>
    %cst_404 = arith.constant dense<0.000000e+00> : vector<16x30xf32>
    %911 = tpu.matmul %908, %910, %cst_404 {dimension_numbers = #tpu.dot_dimension_numbers<[1], [0], [0], [1], [0, 0, 1, 1], [], []>} : vector<16x24xf32>, vector<24x30xf32>, vector<16x30xf32> -> vector<16x30xf32>
    %912 = vector.broadcast %44 : vector<1x30xf32> to vector<16x30xf32>
    %913 = arith.mulf %884, %912 : vector<16x30xf32>
    %cst_405 = arith.constant dense<0.000000e+00> : vector<16x24xf32>
    %914 = tpu.matmul %913, %889, %cst_405 {dimension_numbers = #tpu.dot_dimension_numbers<[1], [1], [0], [0], [0, 0, 1, 0], [], []>} : vector<16x30xf32>, vector<24x30xf32>, vector<16x24xf32> -> vector<16x24xf32>
    %915 = arith.addf %914, %189 : vector<16x24xf32>
    %cst_406 = arith.constant dense<0xFF800000> : vector<16xf32>
    %916 = vector.multi_reduction <maximumf>, %915, %cst_406 [1] : vector<16x24xf32> to vector<16xf32>
    %917 = vector.shape_cast %916 : vector<16xf32> to vector<16x1xf32>
    %918 = vector.broadcast %917 : vector<16x1xf32> to vector<16x24xf32>
    %919 = arith.subf %915, %918 : vector<16x24xf32>
    %920 = math.exp %919 : vector<16x24xf32>
    %cst_407 = arith.constant dense<0.000000e+00> : vector<16xf32>
    %921 = vector.multi_reduction <add>, %920, %cst_407 [1] : vector<16x24xf32> to vector<16xf32>
    %922 = vector.shape_cast %921 : vector<16xf32> to vector<16x1xf32>
    %923 = tpu.reciprocal %922 {approx = true} : vector<16x1xf32> -> vector<16x1xf32>
    %924 = vector.broadcast %923 : vector<16x1xf32> to vector<16x24xf32>
    %925 = arith.mulf %920, %924 : vector<16x24xf32>
    %926 = vector.broadcast %16 : vector<1x30xf32> to vector<24x30xf32>
    %927 = arith.mulf %894, %926 : vector<24x30xf32>
    %cst_408 = arith.constant dense<0.000000e+00> : vector<16x30xf32>
    %928 = tpu.matmul %925, %927, %cst_408 {dimension_numbers = #tpu.dot_dimension_numbers<[1], [0], [0], [1], [0, 0, 1, 1], [], []>} : vector<16x24xf32>, vector<24x30xf32>, vector<16x30xf32> -> vector<16x30xf32>
    %929 = arith.addf %911, %928 : vector<16x30xf32>
    %930 = vector.broadcast %46 : vector<1x30xf32> to vector<16x30xf32>
    %931 = arith.mulf %884, %930 : vector<16x30xf32>
    %cst_409 = arith.constant dense<0.000000e+00> : vector<16x24xf32>
    %932 = tpu.matmul %931, %889, %cst_409 {dimension_numbers = #tpu.dot_dimension_numbers<[1], [1], [0], [0], [0, 0, 1, 0], [], []>} : vector<16x30xf32>, vector<24x30xf32>, vector<16x24xf32> -> vector<16x24xf32>
    %933 = arith.addf %932, %189 : vector<16x24xf32>
    %cst_410 = arith.constant dense<0xFF800000> : vector<16xf32>
    %934 = vector.multi_reduction <maximumf>, %933, %cst_410 [1] : vector<16x24xf32> to vector<16xf32>
    %935 = vector.shape_cast %934 : vector<16xf32> to vector<16x1xf32>
    %936 = vector.broadcast %935 : vector<16x1xf32> to vector<16x24xf32>
    %937 = arith.subf %933, %936 : vector<16x24xf32>
    %938 = math.exp %937 : vector<16x24xf32>
    %cst_411 = arith.constant dense<0.000000e+00> : vector<16xf32>
    %939 = vector.multi_reduction <add>, %938, %cst_411 [1] : vector<16x24xf32> to vector<16xf32>
    %940 = vector.shape_cast %939 : vector<16xf32> to vector<16x1xf32>
    %941 = tpu.reciprocal %940 {approx = true} : vector<16x1xf32> -> vector<16x1xf32>
    %942 = vector.broadcast %941 : vector<16x1xf32> to vector<16x24xf32>
    %943 = arith.mulf %938, %942 : vector<16x24xf32>
    %944 = vector.broadcast %24 : vector<1x30xf32> to vector<24x30xf32>
    %945 = arith.mulf %894, %944 : vector<24x30xf32>
    %cst_412 = arith.constant dense<0.000000e+00> : vector<16x30xf32>
    %946 = tpu.matmul %943, %945, %cst_412 {dimension_numbers = #tpu.dot_dimension_numbers<[1], [0], [0], [1], [0, 0, 1, 1], [], []>} : vector<16x24xf32>, vector<24x30xf32>, vector<16x30xf32> -> vector<16x30xf32>
    %947 = arith.addf %929, %946 : vector<16x30xf32>
    %948 = vector.broadcast %48 : vector<1x30xf32> to vector<16x30xf32>
    %949 = arith.mulf %884, %948 : vector<16x30xf32>
    %cst_413 = arith.constant dense<0.000000e+00> : vector<16x24xf32>
    %950 = tpu.matmul %949, %889, %cst_413 {dimension_numbers = #tpu.dot_dimension_numbers<[1], [1], [0], [0], [0, 0, 1, 0], [], []>} : vector<16x30xf32>, vector<24x30xf32>, vector<16x24xf32> -> vector<16x24xf32>
    %951 = arith.addf %950, %189 : vector<16x24xf32>
    %cst_414 = arith.constant dense<0xFF800000> : vector<16xf32>
    %952 = vector.multi_reduction <maximumf>, %951, %cst_414 [1] : vector<16x24xf32> to vector<16xf32>
    %953 = vector.shape_cast %952 : vector<16xf32> to vector<16x1xf32>
    %954 = vector.broadcast %953 : vector<16x1xf32> to vector<16x24xf32>
    %955 = arith.subf %951, %954 : vector<16x24xf32>
    %956 = math.exp %955 : vector<16x24xf32>
    %cst_415 = arith.constant dense<0.000000e+00> : vector<16xf32>
    %957 = vector.multi_reduction <add>, %956, %cst_415 [1] : vector<16x24xf32> to vector<16xf32>
    %958 = vector.shape_cast %957 : vector<16xf32> to vector<16x1xf32>
    %959 = tpu.reciprocal %958 {approx = true} : vector<16x1xf32> -> vector<16x1xf32>
    %960 = vector.broadcast %959 : vector<16x1xf32> to vector<16x24xf32>
    %961 = arith.mulf %956, %960 : vector<16x24xf32>
    %962 = vector.broadcast %32 : vector<1x30xf32> to vector<24x30xf32>
    %963 = arith.mulf %894, %962 : vector<24x30xf32>
    %cst_416 = arith.constant dense<0.000000e+00> : vector<16x30xf32>
    %964 = tpu.matmul %961, %963, %cst_416 {dimension_numbers = #tpu.dot_dimension_numbers<[1], [0], [0], [1], [0, 0, 1, 1], [], []>} : vector<16x24xf32>, vector<24x30xf32>, vector<16x30xf32> -> vector<16x30xf32>
    %965 = arith.addf %947, %964 : vector<16x30xf32>
    %966 = vector.broadcast %50 : vector<1x30xf32> to vector<16x30xf32>
    %967 = arith.mulf %884, %966 : vector<16x30xf32>
    %cst_417 = arith.constant dense<0.000000e+00> : vector<16x24xf32>
    %968 = tpu.matmul %967, %889, %cst_417 {dimension_numbers = #tpu.dot_dimension_numbers<[1], [1], [0], [0], [0, 0, 1, 0], [], []>} : vector<16x30xf32>, vector<24x30xf32>, vector<16x24xf32> -> vector<16x24xf32>
    %969 = arith.addf %968, %189 : vector<16x24xf32>
    %cst_418 = arith.constant dense<0xFF800000> : vector<16xf32>
    %970 = vector.multi_reduction <maximumf>, %969, %cst_418 [1] : vector<16x24xf32> to vector<16xf32>
    %971 = vector.shape_cast %970 : vector<16xf32> to vector<16x1xf32>
    %972 = vector.broadcast %971 : vector<16x1xf32> to vector<16x24xf32>
    %973 = arith.subf %969, %972 : vector<16x24xf32>
    %974 = math.exp %973 : vector<16x24xf32>
    %cst_419 = arith.constant dense<0.000000e+00> : vector<16xf32>
    %975 = vector.multi_reduction <add>, %974, %cst_419 [1] : vector<16x24xf32> to vector<16xf32>
    %976 = vector.shape_cast %975 : vector<16xf32> to vector<16x1xf32>
    %977 = tpu.reciprocal %976 {approx = true} : vector<16x1xf32> -> vector<16x1xf32>
    %978 = vector.broadcast %977 : vector<16x1xf32> to vector<16x24xf32>
    %979 = arith.mulf %974, %978 : vector<16x24xf32>
    %980 = vector.broadcast %40 : vector<1x30xf32> to vector<24x30xf32>
    %981 = arith.mulf %894, %980 : vector<24x30xf32>
    %cst_420 = arith.constant dense<0.000000e+00> : vector<16x30xf32>
    %982 = tpu.matmul %979, %981, %cst_420 {dimension_numbers = #tpu.dot_dimension_numbers<[1], [0], [0], [1], [0, 0, 1, 1], [], []>} : vector<16x24xf32>, vector<24x30xf32>, vector<16x30xf32> -> vector<16x30xf32>
    %983 = arith.addf %965, %982 : vector<16x30xf32>
    %c15 = arith.constant 15 : index
    %c0_421 = arith.constant 0 : index
    %c0_422 = arith.constant 0 : index
    %984 = vector.load %arg6[%c15, %c0_421, %c0_422] : memref<16x30x30xf32, #tpu.memory_space<vmem>>, vector<1x30x30xf32>
    %985 = vector.shape_cast %984 : vector<1x30x30xf32> to vector<30x30xf32>
    %cst_423 = arith.constant dense<0.000000e+00> : vector<16x30xf32>
    %986 = tpu.matmul %983, %985, %cst_423 {dimension_numbers = #tpu.dot_dimension_numbers<[1], [0], [0], [1], [0, 0, 1, 1], [], []>} : vector<16x30xf32>, vector<30x30xf32>, vector<16x30xf32> -> vector<16x30xf32>
    %987 = vector.broadcast %849 : vector<1x30xf32> to vector<16x30xf32>
    %988 = arith.addf %986, %987 : vector<16x30xf32>
    %989 = arith.addf %837, %988 : vector<16x30xf32>
    %cst_424 = arith.constant dense<0.000000e+00> : vector<16xf32>
    %990 = vector.multi_reduction <add>, %989, %cst_424 [1] : vector<16x30xf32> to vector<16xf32>
    %991 = vector.shape_cast %990 : vector<16xf32> to vector<16x1xf32>
    %cst_425 = arith.constant 3.000000e+01 : f32
    %992 = vector.broadcast %cst_425 : f32 to vector<16x1xf32>
    %993 = arith.divf %991, %992 : vector<16x1xf32>
    %994 = vector.broadcast %993 : vector<16x1xf32> to vector<16x30xf32>
    %995 = arith.subf %989, %994 : vector<16x30xf32>
    %996 = arith.mulf %995, %995 : vector<16x30xf32>
    %cst_426 = arith.constant dense<0.000000e+00> : vector<16xf32>
    %997 = vector.multi_reduction <add>, %996, %cst_426 [1] : vector<16x30xf32> to vector<16xf32>
    %998 = vector.shape_cast %997 : vector<16xf32> to vector<16x1xf32>
    %cst_427 = arith.constant 3.000000e+01 : f32
    %999 = vector.broadcast %cst_427 : f32 to vector<16x1xf32>
    %1000 = arith.divf %998, %999 : vector<16x1xf32>
    %cst_428 = arith.constant 9.99999974E-6 : f32
    %1001 = vector.broadcast %cst_428 : f32 to vector<16x1xf32>
    %1002 = arith.addf %1000, %1001 : vector<16x1xf32>
    %1003 = math.rsqrt %1002 : vector<16x1xf32>
    %1004 = vector.broadcast %1003 : vector<16x1xf32> to vector<16x30xf32>
    %1005 = arith.mulf %995, %1004 : vector<16x30xf32>
    %1006 = vector.broadcast %851 : vector<1x30xf32> to vector<16x30xf32>
    %1007 = arith.mulf %1005, %1006 : vector<16x30xf32>
    %1008 = vector.broadcast %853 : vector<1x30xf32> to vector<16x30xf32>
    %1009 = arith.addf %1007, %1008 : vector<16x30xf32>
    %c3_429 = arith.constant 3 : index
    %c0_430 = arith.constant 0 : index
    %c0_431 = arith.constant 0 : index
    %1010 = vector.load %arg7[%c3_429, %c0_430, %c0_431] : memref<4x30x120xf32, #tpu.memory_space<vmem>>, vector<1x30x120xf32>
    %1011 = vector.shape_cast %1010 : vector<1x30x120xf32> to vector<30x120xf32>
    %cst_432 = arith.constant dense<0.000000e+00> : vector<16x120xf32>
    %1012 = tpu.matmul %1009, %1011, %cst_432 {dimension_numbers = #tpu.dot_dimension_numbers<[1], [0], [0], [1], [0, 0, 1, 1], [], []>} : vector<16x30xf32>, vector<30x120xf32>, vector<16x120xf32> -> vector<16x120xf32>
    %c3_433 = arith.constant 3 : index
    %c0_434 = arith.constant 0 : index
    %c0_435 = arith.constant 0 : index
    %1013 = vector.load %arg10[%c3_433, %c0_434, %c0_435] : memref<4x1x120xf32, #tpu.memory_space<vmem>>, vector<1x1x120xf32>
    %1014 = vector.shape_cast %1013 : vector<1x1x120xf32> to vector<1x120xf32>
    %1015 = vector.broadcast %1014 : vector<1x120xf32> to vector<16x120xf32>
    %1016 = arith.addf %1012, %1015 : vector<16x120xf32>
    %cst_436 = arith.constant 0.000000e+00 : f32
    %1017 = vector.broadcast %cst_436 : f32 to vector<16x120xf32>
    %1018 = arith.maximumf %1016, %1017 : vector<16x120xf32>
    %c3_437 = arith.constant 3 : index
    %c0_438 = arith.constant 0 : index
    %c0_439 = arith.constant 0 : index
    %1019 = vector.load %arg8[%c3_437, %c0_438, %c0_439] : memref<4x120x30xf32, #tpu.memory_space<vmem>>, vector<1x120x30xf32>
    %1020 = vector.shape_cast %1019 : vector<1x120x30xf32> to vector<120x30xf32>
    %cst_440 = arith.constant dense<0.000000e+00> : vector<16x30xf32>
    %1021 = tpu.matmul %1018, %1020, %cst_440 {dimension_numbers = #tpu.dot_dimension_numbers<[1], [0], [0], [1], [0, 0, 1, 1], [], []>} : vector<16x120xf32>, vector<120x30xf32>, vector<16x30xf32> -> vector<16x30xf32>
    %1022 = vector.broadcast %855 : vector<1x30xf32> to vector<16x30xf32>
    %1023 = arith.addf %1021, %1022 : vector<16x30xf32>
    %1024 = arith.addf %989, %1023 : vector<16x30xf32>
    %c2_441 = arith.constant 2 : index
    %c0_442 = arith.constant 0 : index
    %1025 = vector.load %arg11[%c2_441, %c0_442] : memref<4x30xf32, #tpu.memory_space<vmem>>, vector<1x30xf32>
    %c3_443 = arith.constant 3 : index
    %c0_444 = arith.constant 0 : index
    %1026 = vector.load %arg11[%c3_443, %c0_444] : memref<4x30xf32, #tpu.memory_space<vmem>>, vector<1x30xf32>
    %cst_445 = arith.constant dense<0.000000e+00> : vector<16xf32>
    %1027 = vector.multi_reduction <add>, %1024, %cst_445 [1] : vector<16x30xf32> to vector<16xf32>
    %1028 = vector.shape_cast %1027 : vector<16xf32> to vector<16x1xf32>
    %cst_446 = arith.constant 3.000000e+01 : f32
    %1029 = vector.broadcast %cst_446 : f32 to vector<16x1xf32>
    %1030 = arith.divf %1028, %1029 : vector<16x1xf32>
    %1031 = vector.broadcast %1030 : vector<16x1xf32> to vector<16x30xf32>
    %1032 = arith.subf %1024, %1031 : vector<16x30xf32>
    %1033 = arith.mulf %1032, %1032 : vector<16x30xf32>
    %cst_447 = arith.constant dense<0.000000e+00> : vector<16xf32>
    %1034 = vector.multi_reduction <add>, %1033, %cst_447 [1] : vector<16x30xf32> to vector<16xf32>
    %1035 = vector.shape_cast %1034 : vector<16xf32> to vector<16x1xf32>
    %cst_448 = arith.constant 3.000000e+01 : f32
    %1036 = vector.broadcast %cst_448 : f32 to vector<16x1xf32>
    %1037 = arith.divf %1035, %1036 : vector<16x1xf32>
    %cst_449 = arith.constant 9.99999974E-6 : f32
    %1038 = vector.broadcast %cst_449 : f32 to vector<16x1xf32>
    %1039 = arith.addf %1037, %1038 : vector<16x1xf32>
    %1040 = math.rsqrt %1039 : vector<16x1xf32>
    %1041 = vector.broadcast %1040 : vector<16x1xf32> to vector<16x30xf32>
    %1042 = arith.mulf %1032, %1041 : vector<16x30xf32>
    %1043 = vector.broadcast %1025 : vector<1x30xf32> to vector<16x30xf32>
    %1044 = arith.mulf %1042, %1043 : vector<16x30xf32>
    %1045 = vector.broadcast %1026 : vector<1x30xf32> to vector<16x30xf32>
    %1046 = arith.addf %1044, %1045 : vector<16x30xf32>
    %1047 = tpu.iota {dimensions = array<i32: 0>} : vector<30x60xi32>
    %1048 = tpu.iota {dimensions = array<i32: 1>} : vector<30x60xi32>
    %1049 = arith.cmpi eq, %1048, %1047 : vector<30x60xi32>
    %cst_450 = arith.constant 1.000000e+00 : f32
    %cst_451 = arith.constant 0.000000e+00 : f32
    %1050 = vector.broadcast %cst_450 : f32 to vector<30x60xf32>
    %1051 = vector.broadcast %cst_451 : f32 to vector<30x60xf32>
    %1052 = arith.select %1049, %1050, %1051 : vector<30x60xi1>, vector<30x60xf32>
    %c30_i32_452 = arith.constant 30 : i32
    %1053 = vector.broadcast %c30_i32_452 : i32 to vector<30x60xi32>
    %1054 = arith.addi %1047, %1053 : vector<30x60xi32>
    %1055 = arith.cmpi eq, %1048, %1054 : vector<30x60xi32>
    %cst_453 = arith.constant 1.000000e+00 : f32
    %cst_454 = arith.constant 0.000000e+00 : f32
    %1056 = vector.broadcast %cst_453 : f32 to vector<30x60xf32>
    %1057 = vector.broadcast %cst_454 : f32 to vector<30x60xf32>
    %1058 = arith.select %1055, %1056, %1057 : vector<30x60xi1>, vector<30x60xf32>
    %cst_455 = arith.constant dense<0.000000e+00> : vector<16x60xf32>
    %1059 = tpu.matmul %634, %1052, %cst_455 {dimension_numbers = #tpu.dot_dimension_numbers<[1], [0], [0], [1], [0, 0, 1, 1], [], []>} : vector<16x30xf32>, vector<30x60xf32>, vector<16x60xf32> -> vector<16x60xf32>
    %cst_456 = arith.constant dense<0.000000e+00> : vector<16x60xf32>
    %1060 = tpu.matmul %1046, %1058, %cst_456 {dimension_numbers = #tpu.dot_dimension_numbers<[1], [0], [0], [1], [0, 0, 1, 1], [], []>} : vector<16x30xf32>, vector<30x60xf32>, vector<16x60xf32> -> vector<16x60xf32>
    %1061 = arith.addf %1059, %1060 : vector<16x60xf32>
    %cst_457 = arith.constant 7.74596691 : f32
    %1062 = vector.broadcast %cst_457 : f32 to vector<16x60xf32>
    %1063 = arith.mulf %1062, %1061 : vector<16x60xf32>
    %1064 = arith.addf %1063, %114 : vector<16x60xf32>
    %c0_458 = arith.constant 0 : index
    %c0_459 = arith.constant 0 : index
    %c0_460 = arith.constant 0 : index
    %1065 = vector.load %arg15[%c0_458, %c0_459, %c0_460] : memref<3x9x60xf32, #tpu.memory_space<vmem>>, vector<1x1x60xf32>
    %1066 = vector.shape_cast %1065 : vector<1x1x60xf32> to vector<1x60xf32>
    %c0_461 = arith.constant 0 : index
    %c1_462 = arith.constant 1 : index
    %c0_463 = arith.constant 0 : index
    %1067 = vector.load %arg15[%c0_461, %c1_462, %c0_463] : memref<3x9x60xf32, #tpu.memory_space<vmem>>, vector<1x1x60xf32>
    %1068 = vector.shape_cast %1067 : vector<1x1x60xf32> to vector<1x60xf32>
    %c0_464 = arith.constant 0 : index
    %c2_465 = arith.constant 2 : index
    %c0_466 = arith.constant 0 : index
    %1069 = vector.load %arg15[%c0_464, %c2_465, %c0_466] : memref<3x9x60xf32, #tpu.memory_space<vmem>>, vector<1x1x60xf32>
    %1070 = vector.shape_cast %1069 : vector<1x1x60xf32> to vector<1x60xf32>
    %c0_467 = arith.constant 0 : index
    %c3_468 = arith.constant 3 : index
    %c0_469 = arith.constant 0 : index
    %1071 = vector.load %arg15[%c0_467, %c3_468, %c0_469] : memref<3x9x60xf32, #tpu.memory_space<vmem>>, vector<1x1x60xf32>
    %1072 = vector.shape_cast %1071 : vector<1x1x60xf32> to vector<1x60xf32>
    %c0_470 = arith.constant 0 : index
    %c4_471 = arith.constant 4 : index
    %c0_472 = arith.constant 0 : index
    %1073 = vector.load %arg15[%c0_470, %c4_471, %c0_472] : memref<3x9x60xf32, #tpu.memory_space<vmem>>, vector<1x1x60xf32>
    %1074 = vector.shape_cast %1073 : vector<1x1x60xf32> to vector<1x60xf32>
    %c0_473 = arith.constant 0 : index
    %c5_474 = arith.constant 5 : index
    %c0_475 = arith.constant 0 : index
    %1075 = vector.load %arg15[%c0_473, %c5_474, %c0_475] : memref<3x9x60xf32, #tpu.memory_space<vmem>>, vector<1x1x60xf32>
    %1076 = vector.shape_cast %1075 : vector<1x1x60xf32> to vector<1x60xf32>
    %c0_476 = arith.constant 0 : index
    %c6_477 = arith.constant 6 : index
    %c0_478 = arith.constant 0 : index
    %1077 = vector.load %arg15[%c0_476, %c6_477, %c0_478] : memref<3x9x60xf32, #tpu.memory_space<vmem>>, vector<1x1x60xf32>
    %1078 = vector.shape_cast %1077 : vector<1x1x60xf32> to vector<1x60xf32>
    %c0_479 = arith.constant 0 : index
    %c7_480 = arith.constant 7 : index
    %c0_481 = arith.constant 0 : index
    %1079 = vector.load %arg15[%c0_479, %c7_480, %c0_481] : memref<3x9x60xf32, #tpu.memory_space<vmem>>, vector<1x1x60xf32>
    %1080 = vector.shape_cast %1079 : vector<1x1x60xf32> to vector<1x60xf32>
    %c0_482 = arith.constant 0 : index
    %c8_483 = arith.constant 8 : index
    %c0_484 = arith.constant 0 : index
    %1081 = vector.load %arg15[%c0_482, %c8_483, %c0_484] : memref<3x9x60xf32, #tpu.memory_space<vmem>>, vector<1x1x60xf32>
    %1082 = vector.shape_cast %1081 : vector<1x1x60xf32> to vector<1x60xf32>
    %cst_485 = arith.constant dense<0.000000e+00> : vector<16xf32>
    %1083 = vector.multi_reduction <add>, %1064, %cst_485 [1] : vector<16x60xf32> to vector<16xf32>
    %1084 = vector.shape_cast %1083 : vector<16xf32> to vector<16x1xf32>
    %cst_486 = arith.constant 6.000000e+01 : f32
    %1085 = vector.broadcast %cst_486 : f32 to vector<16x1xf32>
    %1086 = arith.divf %1084, %1085 : vector<16x1xf32>
    %1087 = vector.broadcast %1086 : vector<16x1xf32> to vector<16x60xf32>
    %1088 = arith.subf %1064, %1087 : vector<16x60xf32>
    %1089 = arith.mulf %1088, %1088 : vector<16x60xf32>
    %cst_487 = arith.constant dense<0.000000e+00> : vector<16xf32>
    %1090 = vector.multi_reduction <add>, %1089, %cst_487 [1] : vector<16x60xf32> to vector<16xf32>
    %1091 = vector.shape_cast %1090 : vector<16xf32> to vector<16x1xf32>
    %cst_488 = arith.constant 6.000000e+01 : f32
    %1092 = vector.broadcast %cst_488 : f32 to vector<16x1xf32>
    %1093 = arith.divf %1091, %1092 : vector<16x1xf32>
    %cst_489 = arith.constant 9.99999974E-6 : f32
    %1094 = vector.broadcast %cst_489 : f32 to vector<16x1xf32>
    %1095 = arith.addf %1093, %1094 : vector<16x1xf32>
    %1096 = math.rsqrt %1095 : vector<16x1xf32>
    %1097 = vector.broadcast %1096 : vector<16x1xf32> to vector<16x60xf32>
    %1098 = arith.mulf %1088, %1097 : vector<16x60xf32>
    %1099 = vector.broadcast %1066 : vector<1x60xf32> to vector<16x60xf32>
    %1100 = arith.mulf %1098, %1099 : vector<16x60xf32>
    %1101 = vector.broadcast %1068 : vector<1x60xf32> to vector<16x60xf32>
    %1102 = arith.addf %1100, %1101 : vector<16x60xf32>
    %c0_490 = arith.constant 0 : index
    %c0_491 = arith.constant 0 : index
    %c0_492 = arith.constant 0 : index
    %1103 = vector.load %arg12[%c0_490, %c0_491, %c0_492] : memref<12x60x60xf32, #tpu.memory_space<vmem>>, vector<1x60x60xf32>
    %1104 = vector.shape_cast %1103 : vector<1x60x60xf32> to vector<60x60xf32>
    %cst_493 = arith.constant dense<0.000000e+00> : vector<16x60xf32>
    %1105 = tpu.matmul %1102, %1104, %cst_493 {dimension_numbers = #tpu.dot_dimension_numbers<[1], [0], [0], [1], [0, 0, 1, 1], [], []>} : vector<16x60xf32>, vector<60x60xf32>, vector<16x60xf32> -> vector<16x60xf32>
    %1106 = vector.broadcast %1070 : vector<1x60xf32> to vector<16x60xf32>
    %1107 = arith.addf %1105, %1106 : vector<16x60xf32>
    %c1_494 = arith.constant 1 : index
    %c0_495 = arith.constant 0 : index
    %c0_496 = arith.constant 0 : index
    %1108 = vector.load %arg12[%c1_494, %c0_495, %c0_496] : memref<12x60x60xf32, #tpu.memory_space<vmem>>, vector<1x60x60xf32>
    %1109 = vector.shape_cast %1108 : vector<1x60x60xf32> to vector<60x60xf32>
    %cst_497 = arith.constant dense<0.000000e+00> : vector<16x60xf32>
    %1110 = tpu.matmul %1102, %1109, %cst_497 {dimension_numbers = #tpu.dot_dimension_numbers<[1], [0], [0], [1], [0, 0, 1, 1], [], []>} : vector<16x60xf32>, vector<60x60xf32>, vector<16x60xf32> -> vector<16x60xf32>
    %1111 = vector.broadcast %1072 : vector<1x60xf32> to vector<16x60xf32>
    %1112 = arith.addf %1110, %1111 : vector<16x60xf32>
    %c2_498 = arith.constant 2 : index
    %c0_499 = arith.constant 0 : index
    %c0_500 = arith.constant 0 : index
    %1113 = vector.load %arg12[%c2_498, %c0_499, %c0_500] : memref<12x60x60xf32, #tpu.memory_space<vmem>>, vector<1x60x60xf32>
    %1114 = vector.shape_cast %1113 : vector<1x60x60xf32> to vector<60x60xf32>
    %cst_501 = arith.constant dense<0.000000e+00> : vector<16x60xf32>
    %1115 = tpu.matmul %1102, %1114, %cst_501 {dimension_numbers = #tpu.dot_dimension_numbers<[1], [0], [0], [1], [0, 0, 1, 1], [], []>} : vector<16x60xf32>, vector<60x60xf32>, vector<16x60xf32> -> vector<16x60xf32>
    %1116 = vector.broadcast %1074 : vector<1x60xf32> to vector<16x60xf32>
    %1117 = arith.addf %1115, %1116 : vector<16x60xf32>
    %1118 = vector.broadcast %93 : vector<1x60xf32> to vector<16x60xf32>
    %1119 = arith.mulf %1107, %1118 : vector<16x60xf32>
    %cst_502 = arith.constant dense<0.000000e+00> : vector<16x16xf32>
    %1120 = tpu.matmul %1119, %1112, %cst_502 {dimension_numbers = #tpu.dot_dimension_numbers<[1], [1], [0], [0], [0, 0, 1, 0], [], []>} : vector<16x60xf32>, vector<16x60xf32>, vector<16x16xf32> -> vector<16x16xf32>
    %1121 = arith.addf %1120, %222 : vector<16x16xf32>
    %cst_503 = arith.constant dense<0xFF800000> : vector<16xf32>
    %1122 = vector.multi_reduction <maximumf>, %1121, %cst_503 [1] : vector<16x16xf32> to vector<16xf32>
    %1123 = vector.shape_cast %1122 : vector<16xf32> to vector<16x1xf32>
    %1124 = vector.broadcast %1123 : vector<16x1xf32> to vector<16x16xf32>
    %1125 = arith.subf %1121, %1124 : vector<16x16xf32>
    %1126 = math.exp %1125 : vector<16x16xf32>
    %cst_504 = arith.constant dense<0.000000e+00> : vector<16xf32>
    %1127 = vector.multi_reduction <add>, %1126, %cst_504 [1] : vector<16x16xf32> to vector<16xf32>
    %1128 = vector.shape_cast %1127 : vector<16xf32> to vector<16x1xf32>
    %1129 = tpu.reciprocal %1128 {approx = true} : vector<16x1xf32> -> vector<16x1xf32>
    %1130 = vector.broadcast %1129 : vector<16x1xf32> to vector<16x16xf32>
    %1131 = arith.mulf %1126, %1130 : vector<16x16xf32>
    %1132 = vector.broadcast %59 : vector<1x60xf32> to vector<16x60xf32>
    %1133 = arith.mulf %1117, %1132 : vector<16x60xf32>
    %cst_505 = arith.constant dense<0.000000e+00> : vector<16x60xf32>
    %1134 = tpu.matmul %1131, %1133, %cst_505 {dimension_numbers = #tpu.dot_dimension_numbers<[1], [0], [0], [1], [0, 0, 1, 1], [], []>} : vector<16x16xf32>, vector<16x60xf32>, vector<16x60xf32> -> vector<16x60xf32>
    %1135 = vector.broadcast %95 : vector<1x60xf32> to vector<16x60xf32>
    %1136 = arith.mulf %1107, %1135 : vector<16x60xf32>
    %cst_506 = arith.constant dense<0.000000e+00> : vector<16x16xf32>
    %1137 = tpu.matmul %1136, %1112, %cst_506 {dimension_numbers = #tpu.dot_dimension_numbers<[1], [1], [0], [0], [0, 0, 1, 0], [], []>} : vector<16x60xf32>, vector<16x60xf32>, vector<16x16xf32> -> vector<16x16xf32>
    %1138 = arith.addf %1137, %222 : vector<16x16xf32>
    %cst_507 = arith.constant dense<0xFF800000> : vector<16xf32>
    %1139 = vector.multi_reduction <maximumf>, %1138, %cst_507 [1] : vector<16x16xf32> to vector<16xf32>
    %1140 = vector.shape_cast %1139 : vector<16xf32> to vector<16x1xf32>
    %1141 = vector.broadcast %1140 : vector<16x1xf32> to vector<16x16xf32>
    %1142 = arith.subf %1138, %1141 : vector<16x16xf32>
    %1143 = math.exp %1142 : vector<16x16xf32>
    %cst_508 = arith.constant dense<0.000000e+00> : vector<16xf32>
    %1144 = vector.multi_reduction <add>, %1143, %cst_508 [1] : vector<16x16xf32> to vector<16xf32>
    %1145 = vector.shape_cast %1144 : vector<16xf32> to vector<16x1xf32>
    %1146 = tpu.reciprocal %1145 {approx = true} : vector<16x1xf32> -> vector<16x1xf32>
    %1147 = vector.broadcast %1146 : vector<16x1xf32> to vector<16x16xf32>
    %1148 = arith.mulf %1143, %1147 : vector<16x16xf32>
    %1149 = vector.broadcast %67 : vector<1x60xf32> to vector<16x60xf32>
    %1150 = arith.mulf %1117, %1149 : vector<16x60xf32>
    %cst_509 = arith.constant dense<0.000000e+00> : vector<16x60xf32>
    %1151 = tpu.matmul %1148, %1150, %cst_509 {dimension_numbers = #tpu.dot_dimension_numbers<[1], [0], [0], [1], [0, 0, 1, 1], [], []>} : vector<16x16xf32>, vector<16x60xf32>, vector<16x60xf32> -> vector<16x60xf32>
    %1152 = arith.addf %1134, %1151 : vector<16x60xf32>
    %1153 = vector.broadcast %97 : vector<1x60xf32> to vector<16x60xf32>
    %1154 = arith.mulf %1107, %1153 : vector<16x60xf32>
    %cst_510 = arith.constant dense<0.000000e+00> : vector<16x16xf32>
    %1155 = tpu.matmul %1154, %1112, %cst_510 {dimension_numbers = #tpu.dot_dimension_numbers<[1], [1], [0], [0], [0, 0, 1, 0], [], []>} : vector<16x60xf32>, vector<16x60xf32>, vector<16x16xf32> -> vector<16x16xf32>
    %1156 = arith.addf %1155, %222 : vector<16x16xf32>
    %cst_511 = arith.constant dense<0xFF800000> : vector<16xf32>
    %1157 = vector.multi_reduction <maximumf>, %1156, %cst_511 [1] : vector<16x16xf32> to vector<16xf32>
    %1158 = vector.shape_cast %1157 : vector<16xf32> to vector<16x1xf32>
    %1159 = vector.broadcast %1158 : vector<16x1xf32> to vector<16x16xf32>
    %1160 = arith.subf %1156, %1159 : vector<16x16xf32>
    %1161 = math.exp %1160 : vector<16x16xf32>
    %cst_512 = arith.constant dense<0.000000e+00> : vector<16xf32>
    %1162 = vector.multi_reduction <add>, %1161, %cst_512 [1] : vector<16x16xf32> to vector<16xf32>
    %1163 = vector.shape_cast %1162 : vector<16xf32> to vector<16x1xf32>
    %1164 = tpu.reciprocal %1163 {approx = true} : vector<16x1xf32> -> vector<16x1xf32>
    %1165 = vector.broadcast %1164 : vector<16x1xf32> to vector<16x16xf32>
    %1166 = arith.mulf %1161, %1165 : vector<16x16xf32>
    %1167 = vector.broadcast %75 : vector<1x60xf32> to vector<16x60xf32>
    %1168 = arith.mulf %1117, %1167 : vector<16x60xf32>
    %cst_513 = arith.constant dense<0.000000e+00> : vector<16x60xf32>
    %1169 = tpu.matmul %1166, %1168, %cst_513 {dimension_numbers = #tpu.dot_dimension_numbers<[1], [0], [0], [1], [0, 0, 1, 1], [], []>} : vector<16x16xf32>, vector<16x60xf32>, vector<16x60xf32> -> vector<16x60xf32>
    %1170 = arith.addf %1152, %1169 : vector<16x60xf32>
    %1171 = vector.broadcast %99 : vector<1x60xf32> to vector<16x60xf32>
    %1172 = arith.mulf %1107, %1171 : vector<16x60xf32>
    %cst_514 = arith.constant dense<0.000000e+00> : vector<16x16xf32>
    %1173 = tpu.matmul %1172, %1112, %cst_514 {dimension_numbers = #tpu.dot_dimension_numbers<[1], [1], [0], [0], [0, 0, 1, 0], [], []>} : vector<16x60xf32>, vector<16x60xf32>, vector<16x16xf32> -> vector<16x16xf32>
    %1174 = arith.addf %1173, %222 : vector<16x16xf32>
    %cst_515 = arith.constant dense<0xFF800000> : vector<16xf32>
    %1175 = vector.multi_reduction <maximumf>, %1174, %cst_515 [1] : vector<16x16xf32> to vector<16xf32>
    %1176 = vector.shape_cast %1175 : vector<16xf32> to vector<16x1xf32>
    %1177 = vector.broadcast %1176 : vector<16x1xf32> to vector<16x16xf32>
    %1178 = arith.subf %1174, %1177 : vector<16x16xf32>
    %1179 = math.exp %1178 : vector<16x16xf32>
    %cst_516 = arith.constant dense<0.000000e+00> : vector<16xf32>
    %1180 = vector.multi_reduction <add>, %1179, %cst_516 [1] : vector<16x16xf32> to vector<16xf32>
    %1181 = vector.shape_cast %1180 : vector<16xf32> to vector<16x1xf32>
    %1182 = tpu.reciprocal %1181 {approx = true} : vector<16x1xf32> -> vector<16x1xf32>
    %1183 = vector.broadcast %1182 : vector<16x1xf32> to vector<16x16xf32>
    %1184 = arith.mulf %1179, %1183 : vector<16x16xf32>
    %1185 = vector.broadcast %83 : vector<1x60xf32> to vector<16x60xf32>
    %1186 = arith.mulf %1117, %1185 : vector<16x60xf32>
    %cst_517 = arith.constant dense<0.000000e+00> : vector<16x60xf32>
    %1187 = tpu.matmul %1184, %1186, %cst_517 {dimension_numbers = #tpu.dot_dimension_numbers<[1], [0], [0], [1], [0, 0, 1, 1], [], []>} : vector<16x16xf32>, vector<16x60xf32>, vector<16x60xf32> -> vector<16x60xf32>
    %1188 = arith.addf %1170, %1187 : vector<16x60xf32>
    %1189 = vector.broadcast %101 : vector<1x60xf32> to vector<16x60xf32>
    %1190 = arith.mulf %1107, %1189 : vector<16x60xf32>
    %cst_518 = arith.constant dense<0.000000e+00> : vector<16x16xf32>
    %1191 = tpu.matmul %1190, %1112, %cst_518 {dimension_numbers = #tpu.dot_dimension_numbers<[1], [1], [0], [0], [0, 0, 1, 0], [], []>} : vector<16x60xf32>, vector<16x60xf32>, vector<16x16xf32> -> vector<16x16xf32>
    %1192 = arith.addf %1191, %222 : vector<16x16xf32>
    %cst_519 = arith.constant dense<0xFF800000> : vector<16xf32>
    %1193 = vector.multi_reduction <maximumf>, %1192, %cst_519 [1] : vector<16x16xf32> to vector<16xf32>
    %1194 = vector.shape_cast %1193 : vector<16xf32> to vector<16x1xf32>
    %1195 = vector.broadcast %1194 : vector<16x1xf32> to vector<16x16xf32>
    %1196 = arith.subf %1192, %1195 : vector<16x16xf32>
    %1197 = math.exp %1196 : vector<16x16xf32>
    %cst_520 = arith.constant dense<0.000000e+00> : vector<16xf32>
    %1198 = vector.multi_reduction <add>, %1197, %cst_520 [1] : vector<16x16xf32> to vector<16xf32>
    %1199 = vector.shape_cast %1198 : vector<16xf32> to vector<16x1xf32>
    %1200 = tpu.reciprocal %1199 {approx = true} : vector<16x1xf32> -> vector<16x1xf32>
    %1201 = vector.broadcast %1200 : vector<16x1xf32> to vector<16x16xf32>
    %1202 = arith.mulf %1197, %1201 : vector<16x16xf32>
    %1203 = vector.broadcast %91 : vector<1x60xf32> to vector<16x60xf32>
    %1204 = arith.mulf %1117, %1203 : vector<16x60xf32>
    %cst_521 = arith.constant dense<0.000000e+00> : vector<16x60xf32>
    %1205 = tpu.matmul %1202, %1204, %cst_521 {dimension_numbers = #tpu.dot_dimension_numbers<[1], [0], [0], [1], [0, 0, 1, 1], [], []>} : vector<16x16xf32>, vector<16x60xf32>, vector<16x60xf32> -> vector<16x60xf32>
    %1206 = arith.addf %1188, %1205 : vector<16x60xf32>
    %c3_522 = arith.constant 3 : index
    %c0_523 = arith.constant 0 : index
    %c0_524 = arith.constant 0 : index
    %1207 = vector.load %arg12[%c3_522, %c0_523, %c0_524] : memref<12x60x60xf32, #tpu.memory_space<vmem>>, vector<1x60x60xf32>
    %1208 = vector.shape_cast %1207 : vector<1x60x60xf32> to vector<60x60xf32>
    %cst_525 = arith.constant dense<0.000000e+00> : vector<16x60xf32>
    %1209 = tpu.matmul %1206, %1208, %cst_525 {dimension_numbers = #tpu.dot_dimension_numbers<[1], [0], [0], [1], [0, 0, 1, 1], [], []>} : vector<16x60xf32>, vector<60x60xf32>, vector<16x60xf32> -> vector<16x60xf32>
    %1210 = vector.broadcast %1076 : vector<1x60xf32> to vector<16x60xf32>
    %1211 = arith.addf %1209, %1210 : vector<16x60xf32>
    %1212 = arith.addf %1064, %1211 : vector<16x60xf32>
    %cst_526 = arith.constant dense<0.000000e+00> : vector<16xf32>
    %1213 = vector.multi_reduction <add>, %1212, %cst_526 [1] : vector<16x60xf32> to vector<16xf32>
    %1214 = vector.shape_cast %1213 : vector<16xf32> to vector<16x1xf32>
    %cst_527 = arith.constant 6.000000e+01 : f32
    %1215 = vector.broadcast %cst_527 : f32 to vector<16x1xf32>
    %1216 = arith.divf %1214, %1215 : vector<16x1xf32>
    %1217 = vector.broadcast %1216 : vector<16x1xf32> to vector<16x60xf32>
    %1218 = arith.subf %1212, %1217 : vector<16x60xf32>
    %1219 = arith.mulf %1218, %1218 : vector<16x60xf32>
    %cst_528 = arith.constant dense<0.000000e+00> : vector<16xf32>
    %1220 = vector.multi_reduction <add>, %1219, %cst_528 [1] : vector<16x60xf32> to vector<16xf32>
    %1221 = vector.shape_cast %1220 : vector<16xf32> to vector<16x1xf32>
    %cst_529 = arith.constant 6.000000e+01 : f32
    %1222 = vector.broadcast %cst_529 : f32 to vector<16x1xf32>
    %1223 = arith.divf %1221, %1222 : vector<16x1xf32>
    %cst_530 = arith.constant 9.99999974E-6 : f32
    %1224 = vector.broadcast %cst_530 : f32 to vector<16x1xf32>
    %1225 = arith.addf %1223, %1224 : vector<16x1xf32>
    %1226 = math.rsqrt %1225 : vector<16x1xf32>
    %1227 = vector.broadcast %1226 : vector<16x1xf32> to vector<16x60xf32>
    %1228 = arith.mulf %1218, %1227 : vector<16x60xf32>
    %1229 = vector.broadcast %1078 : vector<1x60xf32> to vector<16x60xf32>
    %1230 = arith.mulf %1228, %1229 : vector<16x60xf32>
    %1231 = vector.broadcast %1080 : vector<1x60xf32> to vector<16x60xf32>
    %1232 = arith.addf %1230, %1231 : vector<16x60xf32>
    %c0_531 = arith.constant 0 : index
    %c0_532 = arith.constant 0 : index
    %c0_533 = arith.constant 0 : index
    %1233 = vector.load %arg13[%c0_531, %c0_532, %c0_533] : memref<3x60x240xf32, #tpu.memory_space<vmem>>, vector<1x60x240xf32>
    %1234 = vector.shape_cast %1233 : vector<1x60x240xf32> to vector<60x240xf32>
    %cst_534 = arith.constant dense<0.000000e+00> : vector<16x240xf32>
    %1235 = tpu.matmul %1232, %1234, %cst_534 {dimension_numbers = #tpu.dot_dimension_numbers<[1], [0], [0], [1], [0, 0, 1, 1], [], []>} : vector<16x60xf32>, vector<60x240xf32>, vector<16x240xf32> -> vector<16x240xf32>
    %c0_535 = arith.constant 0 : index
    %c0_536 = arith.constant 0 : index
    %c0_537 = arith.constant 0 : index
    %1236 = vector.load %arg16[%c0_535, %c0_536, %c0_537] : memref<3x1x240xf32, #tpu.memory_space<vmem>>, vector<1x1x240xf32>
    %1237 = vector.shape_cast %1236 : vector<1x1x240xf32> to vector<1x240xf32>
    %1238 = vector.broadcast %1237 : vector<1x240xf32> to vector<16x240xf32>
    %1239 = arith.addf %1235, %1238 : vector<16x240xf32>
    %cst_538 = arith.constant 0.000000e+00 : f32
    %1240 = vector.broadcast %cst_538 : f32 to vector<16x240xf32>
    %1241 = arith.maximumf %1239, %1240 : vector<16x240xf32>
    %c0_539 = arith.constant 0 : index
    %c0_540 = arith.constant 0 : index
    %c0_541 = arith.constant 0 : index
    %1242 = vector.load %arg14[%c0_539, %c0_540, %c0_541] : memref<3x240x60xf32, #tpu.memory_space<vmem>>, vector<1x240x60xf32>
    %1243 = vector.shape_cast %1242 : vector<1x240x60xf32> to vector<240x60xf32>
    %cst_542 = arith.constant dense<0.000000e+00> : vector<16x60xf32>
    %1244 = tpu.matmul %1241, %1243, %cst_542 {dimension_numbers = #tpu.dot_dimension_numbers<[1], [0], [0], [1], [0, 0, 1, 1], [], []>} : vector<16x240xf32>, vector<240x60xf32>, vector<16x60xf32> -> vector<16x60xf32>
    %1245 = vector.broadcast %1082 : vector<1x60xf32> to vector<16x60xf32>
    %1246 = arith.addf %1244, %1245 : vector<16x60xf32>
    %1247 = arith.addf %1212, %1246 : vector<16x60xf32>
    %c1_543 = arith.constant 1 : index
    %c0_544 = arith.constant 0 : index
    %c0_545 = arith.constant 0 : index
    %1248 = vector.load %arg15[%c1_543, %c0_544, %c0_545] : memref<3x9x60xf32, #tpu.memory_space<vmem>>, vector<1x1x60xf32>
    %1249 = vector.shape_cast %1248 : vector<1x1x60xf32> to vector<1x60xf32>
    %c1_546 = arith.constant 1 : index
    %c1_547 = arith.constant 1 : index
    %c0_548 = arith.constant 0 : index
    %1250 = vector.load %arg15[%c1_546, %c1_547, %c0_548] : memref<3x9x60xf32, #tpu.memory_space<vmem>>, vector<1x1x60xf32>
    %1251 = vector.shape_cast %1250 : vector<1x1x60xf32> to vector<1x60xf32>
    %c1_549 = arith.constant 1 : index
    %c2_550 = arith.constant 2 : index
    %c0_551 = arith.constant 0 : index
    %1252 = vector.load %arg15[%c1_549, %c2_550, %c0_551] : memref<3x9x60xf32, #tpu.memory_space<vmem>>, vector<1x1x60xf32>
    %1253 = vector.shape_cast %1252 : vector<1x1x60xf32> to vector<1x60xf32>
    %c1_552 = arith.constant 1 : index
    %c3_553 = arith.constant 3 : index
    %c0_554 = arith.constant 0 : index
    %1254 = vector.load %arg15[%c1_552, %c3_553, %c0_554] : memref<3x9x60xf32, #tpu.memory_space<vmem>>, vector<1x1x60xf32>
    %1255 = vector.shape_cast %1254 : vector<1x1x60xf32> to vector<1x60xf32>
    %c1_555 = arith.constant 1 : index
    %c4_556 = arith.constant 4 : index
    %c0_557 = arith.constant 0 : index
    %1256 = vector.load %arg15[%c1_555, %c4_556, %c0_557] : memref<3x9x60xf32, #tpu.memory_space<vmem>>, vector<1x1x60xf32>
    %1257 = vector.shape_cast %1256 : vector<1x1x60xf32> to vector<1x60xf32>
    %c1_558 = arith.constant 1 : index
    %c5_559 = arith.constant 5 : index
    %c0_560 = arith.constant 0 : index
    %1258 = vector.load %arg15[%c1_558, %c5_559, %c0_560] : memref<3x9x60xf32, #tpu.memory_space<vmem>>, vector<1x1x60xf32>
    %1259 = vector.shape_cast %1258 : vector<1x1x60xf32> to vector<1x60xf32>
    %c1_561 = arith.constant 1 : index
    %c6_562 = arith.constant 6 : index
    %c0_563 = arith.constant 0 : index
    %1260 = vector.load %arg15[%c1_561, %c6_562, %c0_563] : memref<3x9x60xf32, #tpu.memory_space<vmem>>, vector<1x1x60xf32>
    %1261 = vector.shape_cast %1260 : vector<1x1x60xf32> to vector<1x60xf32>
    %c1_564 = arith.constant 1 : index
    %c7_565 = arith.constant 7 : index
    %c0_566 = arith.constant 0 : index
    %1262 = vector.load %arg15[%c1_564, %c7_565, %c0_566] : memref<3x9x60xf32, #tpu.memory_space<vmem>>, vector<1x1x60xf32>
    %1263 = vector.shape_cast %1262 : vector<1x1x60xf32> to vector<1x60xf32>
    %c1_567 = arith.constant 1 : index
    %c8_568 = arith.constant 8 : index
    %c0_569 = arith.constant 0 : index
    %1264 = vector.load %arg15[%c1_567, %c8_568, %c0_569] : memref<3x9x60xf32, #tpu.memory_space<vmem>>, vector<1x1x60xf32>
    %1265 = vector.shape_cast %1264 : vector<1x1x60xf32> to vector<1x60xf32>
    %cst_570 = arith.constant dense<0.000000e+00> : vector<16xf32>
    %1266 = vector.multi_reduction <add>, %1247, %cst_570 [1] : vector<16x60xf32> to vector<16xf32>
    %1267 = vector.shape_cast %1266 : vector<16xf32> to vector<16x1xf32>
    %cst_571 = arith.constant 6.000000e+01 : f32
    %1268 = vector.broadcast %cst_571 : f32 to vector<16x1xf32>
    %1269 = arith.divf %1267, %1268 : vector<16x1xf32>
    %1270 = vector.broadcast %1269 : vector<16x1xf32> to vector<16x60xf32>
    %1271 = arith.subf %1247, %1270 : vector<16x60xf32>
    %1272 = arith.mulf %1271, %1271 : vector<16x60xf32>
    %cst_572 = arith.constant dense<0.000000e+00> : vector<16xf32>
    %1273 = vector.multi_reduction <add>, %1272, %cst_572 [1] : vector<16x60xf32> to vector<16xf32>
    %1274 = vector.shape_cast %1273 : vector<16xf32> to vector<16x1xf32>
    %cst_573 = arith.constant 6.000000e+01 : f32
    %1275 = vector.broadcast %cst_573 : f32 to vector<16x1xf32>
    %1276 = arith.divf %1274, %1275 : vector<16x1xf32>
    %cst_574 = arith.constant 9.99999974E-6 : f32
    %1277 = vector.broadcast %cst_574 : f32 to vector<16x1xf32>
    %1278 = arith.addf %1276, %1277 : vector<16x1xf32>
    %1279 = math.rsqrt %1278 : vector<16x1xf32>
    %1280 = vector.broadcast %1279 : vector<16x1xf32> to vector<16x60xf32>
    %1281 = arith.mulf %1271, %1280 : vector<16x60xf32>
    %1282 = vector.broadcast %1249 : vector<1x60xf32> to vector<16x60xf32>
    %1283 = arith.mulf %1281, %1282 : vector<16x60xf32>
    %1284 = vector.broadcast %1251 : vector<1x60xf32> to vector<16x60xf32>
    %1285 = arith.addf %1283, %1284 : vector<16x60xf32>
    %c4_575 = arith.constant 4 : index
    %c0_576 = arith.constant 0 : index
    %c0_577 = arith.constant 0 : index
    %1286 = vector.load %arg12[%c4_575, %c0_576, %c0_577] : memref<12x60x60xf32, #tpu.memory_space<vmem>>, vector<1x60x60xf32>
    %1287 = vector.shape_cast %1286 : vector<1x60x60xf32> to vector<60x60xf32>
    %cst_578 = arith.constant dense<0.000000e+00> : vector<16x60xf32>
    %1288 = tpu.matmul %1285, %1287, %cst_578 {dimension_numbers = #tpu.dot_dimension_numbers<[1], [0], [0], [1], [0, 0, 1, 1], [], []>} : vector<16x60xf32>, vector<60x60xf32>, vector<16x60xf32> -> vector<16x60xf32>
    %1289 = vector.broadcast %1253 : vector<1x60xf32> to vector<16x60xf32>
    %1290 = arith.addf %1288, %1289 : vector<16x60xf32>
    %c5_579 = arith.constant 5 : index
    %c0_580 = arith.constant 0 : index
    %c0_581 = arith.constant 0 : index
    %1291 = vector.load %arg12[%c5_579, %c0_580, %c0_581] : memref<12x60x60xf32, #tpu.memory_space<vmem>>, vector<1x60x60xf32>
    %1292 = vector.shape_cast %1291 : vector<1x60x60xf32> to vector<60x60xf32>
    %cst_582 = arith.constant dense<0.000000e+00> : vector<16x60xf32>
    %1293 = tpu.matmul %1285, %1292, %cst_582 {dimension_numbers = #tpu.dot_dimension_numbers<[1], [0], [0], [1], [0, 0, 1, 1], [], []>} : vector<16x60xf32>, vector<60x60xf32>, vector<16x60xf32> -> vector<16x60xf32>
    %1294 = vector.broadcast %1255 : vector<1x60xf32> to vector<16x60xf32>
    %1295 = arith.addf %1293, %1294 : vector<16x60xf32>
    %c6_583 = arith.constant 6 : index
    %c0_584 = arith.constant 0 : index
    %c0_585 = arith.constant 0 : index
    %1296 = vector.load %arg12[%c6_583, %c0_584, %c0_585] : memref<12x60x60xf32, #tpu.memory_space<vmem>>, vector<1x60x60xf32>
    %1297 = vector.shape_cast %1296 : vector<1x60x60xf32> to vector<60x60xf32>
    %cst_586 = arith.constant dense<0.000000e+00> : vector<16x60xf32>
    %1298 = tpu.matmul %1285, %1297, %cst_586 {dimension_numbers = #tpu.dot_dimension_numbers<[1], [0], [0], [1], [0, 0, 1, 1], [], []>} : vector<16x60xf32>, vector<60x60xf32>, vector<16x60xf32> -> vector<16x60xf32>
    %1299 = vector.broadcast %1257 : vector<1x60xf32> to vector<16x60xf32>
    %1300 = arith.addf %1298, %1299 : vector<16x60xf32>
    %1301 = vector.broadcast %93 : vector<1x60xf32> to vector<16x60xf32>
    %1302 = arith.mulf %1290, %1301 : vector<16x60xf32>
    %cst_587 = arith.constant dense<0.000000e+00> : vector<16x16xf32>
    %1303 = tpu.matmul %1302, %1295, %cst_587 {dimension_numbers = #tpu.dot_dimension_numbers<[1], [1], [0], [0], [0, 0, 1, 0], [], []>} : vector<16x60xf32>, vector<16x60xf32>, vector<16x16xf32> -> vector<16x16xf32>
    %1304 = arith.addf %1303, %222 : vector<16x16xf32>
    %cst_588 = arith.constant dense<0xFF800000> : vector<16xf32>
    %1305 = vector.multi_reduction <maximumf>, %1304, %cst_588 [1] : vector<16x16xf32> to vector<16xf32>
    %1306 = vector.shape_cast %1305 : vector<16xf32> to vector<16x1xf32>
    %1307 = vector.broadcast %1306 : vector<16x1xf32> to vector<16x16xf32>
    %1308 = arith.subf %1304, %1307 : vector<16x16xf32>
    %1309 = math.exp %1308 : vector<16x16xf32>
    %cst_589 = arith.constant dense<0.000000e+00> : vector<16xf32>
    %1310 = vector.multi_reduction <add>, %1309, %cst_589 [1] : vector<16x16xf32> to vector<16xf32>
    %1311 = vector.shape_cast %1310 : vector<16xf32> to vector<16x1xf32>
    %1312 = tpu.reciprocal %1311 {approx = true} : vector<16x1xf32> -> vector<16x1xf32>
    %1313 = vector.broadcast %1312 : vector<16x1xf32> to vector<16x16xf32>
    %1314 = arith.mulf %1309, %1313 : vector<16x16xf32>
    %1315 = vector.broadcast %59 : vector<1x60xf32> to vector<16x60xf32>
    %1316 = arith.mulf %1300, %1315 : vector<16x60xf32>
    %cst_590 = arith.constant dense<0.000000e+00> : vector<16x60xf32>
    %1317 = tpu.matmul %1314, %1316, %cst_590 {dimension_numbers = #tpu.dot_dimension_numbers<[1], [0], [0], [1], [0, 0, 1, 1], [], []>} : vector<16x16xf32>, vector<16x60xf32>, vector<16x60xf32> -> vector<16x60xf32>
    %1318 = vector.broadcast %95 : vector<1x60xf32> to vector<16x60xf32>
    %1319 = arith.mulf %1290, %1318 : vector<16x60xf32>
    %cst_591 = arith.constant dense<0.000000e+00> : vector<16x16xf32>
    %1320 = tpu.matmul %1319, %1295, %cst_591 {dimension_numbers = #tpu.dot_dimension_numbers<[1], [1], [0], [0], [0, 0, 1, 0], [], []>} : vector<16x60xf32>, vector<16x60xf32>, vector<16x16xf32> -> vector<16x16xf32>
    %1321 = arith.addf %1320, %222 : vector<16x16xf32>
    %cst_592 = arith.constant dense<0xFF800000> : vector<16xf32>
    %1322 = vector.multi_reduction <maximumf>, %1321, %cst_592 [1] : vector<16x16xf32> to vector<16xf32>
    %1323 = vector.shape_cast %1322 : vector<16xf32> to vector<16x1xf32>
    %1324 = vector.broadcast %1323 : vector<16x1xf32> to vector<16x16xf32>
    %1325 = arith.subf %1321, %1324 : vector<16x16xf32>
    %1326 = math.exp %1325 : vector<16x16xf32>
    %cst_593 = arith.constant dense<0.000000e+00> : vector<16xf32>
    %1327 = vector.multi_reduction <add>, %1326, %cst_593 [1] : vector<16x16xf32> to vector<16xf32>
    %1328 = vector.shape_cast %1327 : vector<16xf32> to vector<16x1xf32>
    %1329 = tpu.reciprocal %1328 {approx = true} : vector<16x1xf32> -> vector<16x1xf32>
    %1330 = vector.broadcast %1329 : vector<16x1xf32> to vector<16x16xf32>
    %1331 = arith.mulf %1326, %1330 : vector<16x16xf32>
    %1332 = vector.broadcast %67 : vector<1x60xf32> to vector<16x60xf32>
    %1333 = arith.mulf %1300, %1332 : vector<16x60xf32>
    %cst_594 = arith.constant dense<0.000000e+00> : vector<16x60xf32>
    %1334 = tpu.matmul %1331, %1333, %cst_594 {dimension_numbers = #tpu.dot_dimension_numbers<[1], [0], [0], [1], [0, 0, 1, 1], [], []>} : vector<16x16xf32>, vector<16x60xf32>, vector<16x60xf32> -> vector<16x60xf32>
    %1335 = arith.addf %1317, %1334 : vector<16x60xf32>
    %1336 = vector.broadcast %97 : vector<1x60xf32> to vector<16x60xf32>
    %1337 = arith.mulf %1290, %1336 : vector<16x60xf32>
    %cst_595 = arith.constant dense<0.000000e+00> : vector<16x16xf32>
    %1338 = tpu.matmul %1337, %1295, %cst_595 {dimension_numbers = #tpu.dot_dimension_numbers<[1], [1], [0], [0], [0, 0, 1, 0], [], []>} : vector<16x60xf32>, vector<16x60xf32>, vector<16x16xf32> -> vector<16x16xf32>
    %1339 = arith.addf %1338, %222 : vector<16x16xf32>
    %cst_596 = arith.constant dense<0xFF800000> : vector<16xf32>
    %1340 = vector.multi_reduction <maximumf>, %1339, %cst_596 [1] : vector<16x16xf32> to vector<16xf32>
    %1341 = vector.shape_cast %1340 : vector<16xf32> to vector<16x1xf32>
    %1342 = vector.broadcast %1341 : vector<16x1xf32> to vector<16x16xf32>
    %1343 = arith.subf %1339, %1342 : vector<16x16xf32>
    %1344 = math.exp %1343 : vector<16x16xf32>
    %cst_597 = arith.constant dense<0.000000e+00> : vector<16xf32>
    %1345 = vector.multi_reduction <add>, %1344, %cst_597 [1] : vector<16x16xf32> to vector<16xf32>
    %1346 = vector.shape_cast %1345 : vector<16xf32> to vector<16x1xf32>
    %1347 = tpu.reciprocal %1346 {approx = true} : vector<16x1xf32> -> vector<16x1xf32>
    %1348 = vector.broadcast %1347 : vector<16x1xf32> to vector<16x16xf32>
    %1349 = arith.mulf %1344, %1348 : vector<16x16xf32>
    %1350 = vector.broadcast %75 : vector<1x60xf32> to vector<16x60xf32>
    %1351 = arith.mulf %1300, %1350 : vector<16x60xf32>
    %cst_598 = arith.constant dense<0.000000e+00> : vector<16x60xf32>
    %1352 = tpu.matmul %1349, %1351, %cst_598 {dimension_numbers = #tpu.dot_dimension_numbers<[1], [0], [0], [1], [0, 0, 1, 1], [], []>} : vector<16x16xf32>, vector<16x60xf32>, vector<16x60xf32> -> vector<16x60xf32>
    %1353 = arith.addf %1335, %1352 : vector<16x60xf32>
    %1354 = vector.broadcast %99 : vector<1x60xf32> to vector<16x60xf32>
    %1355 = arith.mulf %1290, %1354 : vector<16x60xf32>
    %cst_599 = arith.constant dense<0.000000e+00> : vector<16x16xf32>
    %1356 = tpu.matmul %1355, %1295, %cst_599 {dimension_numbers = #tpu.dot_dimension_numbers<[1], [1], [0], [0], [0, 0, 1, 0], [], []>} : vector<16x60xf32>, vector<16x60xf32>, vector<16x16xf32> -> vector<16x16xf32>
    %1357 = arith.addf %1356, %222 : vector<16x16xf32>
    %cst_600 = arith.constant dense<0xFF800000> : vector<16xf32>
    %1358 = vector.multi_reduction <maximumf>, %1357, %cst_600 [1] : vector<16x16xf32> to vector<16xf32>
    %1359 = vector.shape_cast %1358 : vector<16xf32> to vector<16x1xf32>
    %1360 = vector.broadcast %1359 : vector<16x1xf32> to vector<16x16xf32>
    %1361 = arith.subf %1357, %1360 : vector<16x16xf32>
    %1362 = math.exp %1361 : vector<16x16xf32>
    %cst_601 = arith.constant dense<0.000000e+00> : vector<16xf32>
    %1363 = vector.multi_reduction <add>, %1362, %cst_601 [1] : vector<16x16xf32> to vector<16xf32>
    %1364 = vector.shape_cast %1363 : vector<16xf32> to vector<16x1xf32>
    %1365 = tpu.reciprocal %1364 {approx = true} : vector<16x1xf32> -> vector<16x1xf32>
    %1366 = vector.broadcast %1365 : vector<16x1xf32> to vector<16x16xf32>
    %1367 = arith.mulf %1362, %1366 : vector<16x16xf32>
    %1368 = vector.broadcast %83 : vector<1x60xf32> to vector<16x60xf32>
    %1369 = arith.mulf %1300, %1368 : vector<16x60xf32>
    %cst_602 = arith.constant dense<0.000000e+00> : vector<16x60xf32>
    %1370 = tpu.matmul %1367, %1369, %cst_602 {dimension_numbers = #tpu.dot_dimension_numbers<[1], [0], [0], [1], [0, 0, 1, 1], [], []>} : vector<16x16xf32>, vector<16x60xf32>, vector<16x60xf32> -> vector<16x60xf32>
    %1371 = arith.addf %1353, %1370 : vector<16x60xf32>
    %1372 = vector.broadcast %101 : vector<1x60xf32> to vector<16x60xf32>
    %1373 = arith.mulf %1290, %1372 : vector<16x60xf32>
    %cst_603 = arith.constant dense<0.000000e+00> : vector<16x16xf32>
    %1374 = tpu.matmul %1373, %1295, %cst_603 {dimension_numbers = #tpu.dot_dimension_numbers<[1], [1], [0], [0], [0, 0, 1, 0], [], []>} : vector<16x60xf32>, vector<16x60xf32>, vector<16x16xf32> -> vector<16x16xf32>
    %1375 = arith.addf %1374, %222 : vector<16x16xf32>
    %cst_604 = arith.constant dense<0xFF800000> : vector<16xf32>
    %1376 = vector.multi_reduction <maximumf>, %1375, %cst_604 [1] : vector<16x16xf32> to vector<16xf32>
    %1377 = vector.shape_cast %1376 : vector<16xf32> to vector<16x1xf32>
    %1378 = vector.broadcast %1377 : vector<16x1xf32> to vector<16x16xf32>
    %1379 = arith.subf %1375, %1378 : vector<16x16xf32>
    %1380 = math.exp %1379 : vector<16x16xf32>
    %cst_605 = arith.constant dense<0.000000e+00> : vector<16xf32>
    %1381 = vector.multi_reduction <add>, %1380, %cst_605 [1] : vector<16x16xf32> to vector<16xf32>
    %1382 = vector.shape_cast %1381 : vector<16xf32> to vector<16x1xf32>
    %1383 = tpu.reciprocal %1382 {approx = true} : vector<16x1xf32> -> vector<16x1xf32>
    %1384 = vector.broadcast %1383 : vector<16x1xf32> to vector<16x16xf32>
    %1385 = arith.mulf %1380, %1384 : vector<16x16xf32>
    %1386 = vector.broadcast %91 : vector<1x60xf32> to vector<16x60xf32>
    %1387 = arith.mulf %1300, %1386 : vector<16x60xf32>
    %cst_606 = arith.constant dense<0.000000e+00> : vector<16x60xf32>
    %1388 = tpu.matmul %1385, %1387, %cst_606 {dimension_numbers = #tpu.dot_dimension_numbers<[1], [0], [0], [1], [0, 0, 1, 1], [], []>} : vector<16x16xf32>, vector<16x60xf32>, vector<16x60xf32> -> vector<16x60xf32>
    %1389 = arith.addf %1371, %1388 : vector<16x60xf32>
    %c7_607 = arith.constant 7 : index
    %c0_608 = arith.constant 0 : index
    %c0_609 = arith.constant 0 : index
    %1390 = vector.load %arg12[%c7_607, %c0_608, %c0_609] : memref<12x60x60xf32, #tpu.memory_space<vmem>>, vector<1x60x60xf32>
    %1391 = vector.shape_cast %1390 : vector<1x60x60xf32> to vector<60x60xf32>
    %cst_610 = arith.constant dense<0.000000e+00> : vector<16x60xf32>
    %1392 = tpu.matmul %1389, %1391, %cst_610 {dimension_numbers = #tpu.dot_dimension_numbers<[1], [0], [0], [1], [0, 0, 1, 1], [], []>} : vector<16x60xf32>, vector<60x60xf32>, vector<16x60xf32> -> vector<16x60xf32>
    %1393 = vector.broadcast %1259 : vector<1x60xf32> to vector<16x60xf32>
    %1394 = arith.addf %1392, %1393 : vector<16x60xf32>
    %1395 = arith.addf %1247, %1394 : vector<16x60xf32>
    %cst_611 = arith.constant dense<0.000000e+00> : vector<16xf32>
    %1396 = vector.multi_reduction <add>, %1395, %cst_611 [1] : vector<16x60xf32> to vector<16xf32>
    %1397 = vector.shape_cast %1396 : vector<16xf32> to vector<16x1xf32>
    %cst_612 = arith.constant 6.000000e+01 : f32
    %1398 = vector.broadcast %cst_612 : f32 to vector<16x1xf32>
    %1399 = arith.divf %1397, %1398 : vector<16x1xf32>
    %1400 = vector.broadcast %1399 : vector<16x1xf32> to vector<16x60xf32>
    %1401 = arith.subf %1395, %1400 : vector<16x60xf32>
    %1402 = arith.mulf %1401, %1401 : vector<16x60xf32>
    %cst_613 = arith.constant dense<0.000000e+00> : vector<16xf32>
    %1403 = vector.multi_reduction <add>, %1402, %cst_613 [1] : vector<16x60xf32> to vector<16xf32>
    %1404 = vector.shape_cast %1403 : vector<16xf32> to vector<16x1xf32>
    %cst_614 = arith.constant 6.000000e+01 : f32
    %1405 = vector.broadcast %cst_614 : f32 to vector<16x1xf32>
    %1406 = arith.divf %1404, %1405 : vector<16x1xf32>
    %cst_615 = arith.constant 9.99999974E-6 : f32
    %1407 = vector.broadcast %cst_615 : f32 to vector<16x1xf32>
    %1408 = arith.addf %1406, %1407 : vector<16x1xf32>
    %1409 = math.rsqrt %1408 : vector<16x1xf32>
    %1410 = vector.broadcast %1409 : vector<16x1xf32> to vector<16x60xf32>
    %1411 = arith.mulf %1401, %1410 : vector<16x60xf32>
    %1412 = vector.broadcast %1261 : vector<1x60xf32> to vector<16x60xf32>
    %1413 = arith.mulf %1411, %1412 : vector<16x60xf32>
    %1414 = vector.broadcast %1263 : vector<1x60xf32> to vector<16x60xf32>
    %1415 = arith.addf %1413, %1414 : vector<16x60xf32>
    %c1_616 = arith.constant 1 : index
    %c0_617 = arith.constant 0 : index
    %c0_618 = arith.constant 0 : index
    %1416 = vector.load %arg13[%c1_616, %c0_617, %c0_618] : memref<3x60x240xf32, #tpu.memory_space<vmem>>, vector<1x60x240xf32>
    %1417 = vector.shape_cast %1416 : vector<1x60x240xf32> to vector<60x240xf32>
    %cst_619 = arith.constant dense<0.000000e+00> : vector<16x240xf32>
    %1418 = tpu.matmul %1415, %1417, %cst_619 {dimension_numbers = #tpu.dot_dimension_numbers<[1], [0], [0], [1], [0, 0, 1, 1], [], []>} : vector<16x60xf32>, vector<60x240xf32>, vector<16x240xf32> -> vector<16x240xf32>
    %c1_620 = arith.constant 1 : index
    %c0_621 = arith.constant 0 : index
    %c0_622 = arith.constant 0 : index
    %1419 = vector.load %arg16[%c1_620, %c0_621, %c0_622] : memref<3x1x240xf32, #tpu.memory_space<vmem>>, vector<1x1x240xf32>
    %1420 = vector.shape_cast %1419 : vector<1x1x240xf32> to vector<1x240xf32>
    %1421 = vector.broadcast %1420 : vector<1x240xf32> to vector<16x240xf32>
    %1422 = arith.addf %1418, %1421 : vector<16x240xf32>
    %cst_623 = arith.constant 0.000000e+00 : f32
    %1423 = vector.broadcast %cst_623 : f32 to vector<16x240xf32>
    %1424 = arith.maximumf %1422, %1423 : vector<16x240xf32>
    %c1_624 = arith.constant 1 : index
    %c0_625 = arith.constant 0 : index
    %c0_626 = arith.constant 0 : index
    %1425 = vector.load %arg14[%c1_624, %c0_625, %c0_626] : memref<3x240x60xf32, #tpu.memory_space<vmem>>, vector<1x240x60xf32>
    %1426 = vector.shape_cast %1425 : vector<1x240x60xf32> to vector<240x60xf32>
    %cst_627 = arith.constant dense<0.000000e+00> : vector<16x60xf32>
    %1427 = tpu.matmul %1424, %1426, %cst_627 {dimension_numbers = #tpu.dot_dimension_numbers<[1], [0], [0], [1], [0, 0, 1, 1], [], []>} : vector<16x240xf32>, vector<240x60xf32>, vector<16x60xf32> -> vector<16x60xf32>
    %1428 = vector.broadcast %1265 : vector<1x60xf32> to vector<16x60xf32>
    %1429 = arith.addf %1427, %1428 : vector<16x60xf32>
    %1430 = arith.addf %1395, %1429 : vector<16x60xf32>
    %c2_628 = arith.constant 2 : index
    %c0_629 = arith.constant 0 : index
    %c0_630 = arith.constant 0 : index
    %1431 = vector.load %arg15[%c2_628, %c0_629, %c0_630] : memref<3x9x60xf32, #tpu.memory_space<vmem>>, vector<1x1x60xf32>
    %1432 = vector.shape_cast %1431 : vector<1x1x60xf32> to vector<1x60xf32>
    %c2_631 = arith.constant 2 : index
    %c1_632 = arith.constant 1 : index
    %c0_633 = arith.constant 0 : index
    %1433 = vector.load %arg15[%c2_631, %c1_632, %c0_633] : memref<3x9x60xf32, #tpu.memory_space<vmem>>, vector<1x1x60xf32>
    %1434 = vector.shape_cast %1433 : vector<1x1x60xf32> to vector<1x60xf32>
    %c2_634 = arith.constant 2 : index
    %c2_635 = arith.constant 2 : index
    %c0_636 = arith.constant 0 : index
    %1435 = vector.load %arg15[%c2_634, %c2_635, %c0_636] : memref<3x9x60xf32, #tpu.memory_space<vmem>>, vector<1x1x60xf32>
    %1436 = vector.shape_cast %1435 : vector<1x1x60xf32> to vector<1x60xf32>
    %c2_637 = arith.constant 2 : index
    %c3_638 = arith.constant 3 : index
    %c0_639 = arith.constant 0 : index
    %1437 = vector.load %arg15[%c2_637, %c3_638, %c0_639] : memref<3x9x60xf32, #tpu.memory_space<vmem>>, vector<1x1x60xf32>
    %1438 = vector.shape_cast %1437 : vector<1x1x60xf32> to vector<1x60xf32>
    %c2_640 = arith.constant 2 : index
    %c4_641 = arith.constant 4 : index
    %c0_642 = arith.constant 0 : index
    %1439 = vector.load %arg15[%c2_640, %c4_641, %c0_642] : memref<3x9x60xf32, #tpu.memory_space<vmem>>, vector<1x1x60xf32>
    %1440 = vector.shape_cast %1439 : vector<1x1x60xf32> to vector<1x60xf32>
    %c2_643 = arith.constant 2 : index
    %c5_644 = arith.constant 5 : index
    %c0_645 = arith.constant 0 : index
    %1441 = vector.load %arg15[%c2_643, %c5_644, %c0_645] : memref<3x9x60xf32, #tpu.memory_space<vmem>>, vector<1x1x60xf32>
    %1442 = vector.shape_cast %1441 : vector<1x1x60xf32> to vector<1x60xf32>
    %c2_646 = arith.constant 2 : index
    %c6_647 = arith.constant 6 : index
    %c0_648 = arith.constant 0 : index
    %1443 = vector.load %arg15[%c2_646, %c6_647, %c0_648] : memref<3x9x60xf32, #tpu.memory_space<vmem>>, vector<1x1x60xf32>
    %1444 = vector.shape_cast %1443 : vector<1x1x60xf32> to vector<1x60xf32>
    %c2_649 = arith.constant 2 : index
    %c7_650 = arith.constant 7 : index
    %c0_651 = arith.constant 0 : index
    %1445 = vector.load %arg15[%c2_649, %c7_650, %c0_651] : memref<3x9x60xf32, #tpu.memory_space<vmem>>, vector<1x1x60xf32>
    %1446 = vector.shape_cast %1445 : vector<1x1x60xf32> to vector<1x60xf32>
    %c2_652 = arith.constant 2 : index
    %c8_653 = arith.constant 8 : index
    %c0_654 = arith.constant 0 : index
    %1447 = vector.load %arg15[%c2_652, %c8_653, %c0_654] : memref<3x9x60xf32, #tpu.memory_space<vmem>>, vector<1x1x60xf32>
    %1448 = vector.shape_cast %1447 : vector<1x1x60xf32> to vector<1x60xf32>
    %cst_655 = arith.constant dense<0.000000e+00> : vector<16xf32>
    %1449 = vector.multi_reduction <add>, %1430, %cst_655 [1] : vector<16x60xf32> to vector<16xf32>
    %1450 = vector.shape_cast %1449 : vector<16xf32> to vector<16x1xf32>
    %cst_656 = arith.constant 6.000000e+01 : f32
    %1451 = vector.broadcast %cst_656 : f32 to vector<16x1xf32>
    %1452 = arith.divf %1450, %1451 : vector<16x1xf32>
    %1453 = vector.broadcast %1452 : vector<16x1xf32> to vector<16x60xf32>
    %1454 = arith.subf %1430, %1453 : vector<16x60xf32>
    %1455 = arith.mulf %1454, %1454 : vector<16x60xf32>
    %cst_657 = arith.constant dense<0.000000e+00> : vector<16xf32>
    %1456 = vector.multi_reduction <add>, %1455, %cst_657 [1] : vector<16x60xf32> to vector<16xf32>
    %1457 = vector.shape_cast %1456 : vector<16xf32> to vector<16x1xf32>
    %cst_658 = arith.constant 6.000000e+01 : f32
    %1458 = vector.broadcast %cst_658 : f32 to vector<16x1xf32>
    %1459 = arith.divf %1457, %1458 : vector<16x1xf32>
    %cst_659 = arith.constant 9.99999974E-6 : f32
    %1460 = vector.broadcast %cst_659 : f32 to vector<16x1xf32>
    %1461 = arith.addf %1459, %1460 : vector<16x1xf32>
    %1462 = math.rsqrt %1461 : vector<16x1xf32>
    %1463 = vector.broadcast %1462 : vector<16x1xf32> to vector<16x60xf32>
    %1464 = arith.mulf %1454, %1463 : vector<16x60xf32>
    %1465 = vector.broadcast %1432 : vector<1x60xf32> to vector<16x60xf32>
    %1466 = arith.mulf %1464, %1465 : vector<16x60xf32>
    %1467 = vector.broadcast %1434 : vector<1x60xf32> to vector<16x60xf32>
    %1468 = arith.addf %1466, %1467 : vector<16x60xf32>
    %c8_660 = arith.constant 8 : index
    %c0_661 = arith.constant 0 : index
    %c0_662 = arith.constant 0 : index
    %1469 = vector.load %arg12[%c8_660, %c0_661, %c0_662] : memref<12x60x60xf32, #tpu.memory_space<vmem>>, vector<1x60x60xf32>
    %1470 = vector.shape_cast %1469 : vector<1x60x60xf32> to vector<60x60xf32>
    %cst_663 = arith.constant dense<0.000000e+00> : vector<16x60xf32>
    %1471 = tpu.matmul %1468, %1470, %cst_663 {dimension_numbers = #tpu.dot_dimension_numbers<[1], [0], [0], [1], [0, 0, 1, 1], [], []>} : vector<16x60xf32>, vector<60x60xf32>, vector<16x60xf32> -> vector<16x60xf32>
    %1472 = vector.broadcast %1436 : vector<1x60xf32> to vector<16x60xf32>
    %1473 = arith.addf %1471, %1472 : vector<16x60xf32>
    %c9_664 = arith.constant 9 : index
    %c0_665 = arith.constant 0 : index
    %c0_666 = arith.constant 0 : index
    %1474 = vector.load %arg12[%c9_664, %c0_665, %c0_666] : memref<12x60x60xf32, #tpu.memory_space<vmem>>, vector<1x60x60xf32>
    %1475 = vector.shape_cast %1474 : vector<1x60x60xf32> to vector<60x60xf32>
    %cst_667 = arith.constant dense<0.000000e+00> : vector<16x60xf32>
    %1476 = tpu.matmul %1468, %1475, %cst_667 {dimension_numbers = #tpu.dot_dimension_numbers<[1], [0], [0], [1], [0, 0, 1, 1], [], []>} : vector<16x60xf32>, vector<60x60xf32>, vector<16x60xf32> -> vector<16x60xf32>
    %1477 = vector.broadcast %1438 : vector<1x60xf32> to vector<16x60xf32>
    %1478 = arith.addf %1476, %1477 : vector<16x60xf32>
    %c10_668 = arith.constant 10 : index
    %c0_669 = arith.constant 0 : index
    %c0_670 = arith.constant 0 : index
    %1479 = vector.load %arg12[%c10_668, %c0_669, %c0_670] : memref<12x60x60xf32, #tpu.memory_space<vmem>>, vector<1x60x60xf32>
    %1480 = vector.shape_cast %1479 : vector<1x60x60xf32> to vector<60x60xf32>
    %cst_671 = arith.constant dense<0.000000e+00> : vector<16x60xf32>
    %1481 = tpu.matmul %1468, %1480, %cst_671 {dimension_numbers = #tpu.dot_dimension_numbers<[1], [0], [0], [1], [0, 0, 1, 1], [], []>} : vector<16x60xf32>, vector<60x60xf32>, vector<16x60xf32> -> vector<16x60xf32>
    %1482 = vector.broadcast %1440 : vector<1x60xf32> to vector<16x60xf32>
    %1483 = arith.addf %1481, %1482 : vector<16x60xf32>
    %1484 = vector.broadcast %93 : vector<1x60xf32> to vector<16x60xf32>
    %1485 = arith.mulf %1473, %1484 : vector<16x60xf32>
    %cst_672 = arith.constant dense<0.000000e+00> : vector<16x16xf32>
    %1486 = tpu.matmul %1485, %1478, %cst_672 {dimension_numbers = #tpu.dot_dimension_numbers<[1], [1], [0], [0], [0, 0, 1, 0], [], []>} : vector<16x60xf32>, vector<16x60xf32>, vector<16x16xf32> -> vector<16x16xf32>
    %1487 = arith.addf %1486, %222 : vector<16x16xf32>
    %cst_673 = arith.constant dense<0xFF800000> : vector<16xf32>
    %1488 = vector.multi_reduction <maximumf>, %1487, %cst_673 [1] : vector<16x16xf32> to vector<16xf32>
    %1489 = vector.shape_cast %1488 : vector<16xf32> to vector<16x1xf32>
    %1490 = vector.broadcast %1489 : vector<16x1xf32> to vector<16x16xf32>
    %1491 = arith.subf %1487, %1490 : vector<16x16xf32>
    %1492 = math.exp %1491 : vector<16x16xf32>
    %cst_674 = arith.constant dense<0.000000e+00> : vector<16xf32>
    %1493 = vector.multi_reduction <add>, %1492, %cst_674 [1] : vector<16x16xf32> to vector<16xf32>
    %1494 = vector.shape_cast %1493 : vector<16xf32> to vector<16x1xf32>
    %1495 = tpu.reciprocal %1494 {approx = true} : vector<16x1xf32> -> vector<16x1xf32>
    %1496 = vector.broadcast %1495 : vector<16x1xf32> to vector<16x16xf32>
    %1497 = arith.mulf %1492, %1496 : vector<16x16xf32>
    %1498 = vector.broadcast %59 : vector<1x60xf32> to vector<16x60xf32>
    %1499 = arith.mulf %1483, %1498 : vector<16x60xf32>
    %cst_675 = arith.constant dense<0.000000e+00> : vector<16x60xf32>
    %1500 = tpu.matmul %1497, %1499, %cst_675 {dimension_numbers = #tpu.dot_dimension_numbers<[1], [0], [0], [1], [0, 0, 1, 1], [], []>} : vector<16x16xf32>, vector<16x60xf32>, vector<16x60xf32> -> vector<16x60xf32>
    %1501 = vector.broadcast %95 : vector<1x60xf32> to vector<16x60xf32>
    %1502 = arith.mulf %1473, %1501 : vector<16x60xf32>
    %cst_676 = arith.constant dense<0.000000e+00> : vector<16x16xf32>
    %1503 = tpu.matmul %1502, %1478, %cst_676 {dimension_numbers = #tpu.dot_dimension_numbers<[1], [1], [0], [0], [0, 0, 1, 0], [], []>} : vector<16x60xf32>, vector<16x60xf32>, vector<16x16xf32> -> vector<16x16xf32>
    %1504 = arith.addf %1503, %222 : vector<16x16xf32>
    %cst_677 = arith.constant dense<0xFF800000> : vector<16xf32>
    %1505 = vector.multi_reduction <maximumf>, %1504, %cst_677 [1] : vector<16x16xf32> to vector<16xf32>
    %1506 = vector.shape_cast %1505 : vector<16xf32> to vector<16x1xf32>
    %1507 = vector.broadcast %1506 : vector<16x1xf32> to vector<16x16xf32>
    %1508 = arith.subf %1504, %1507 : vector<16x16xf32>
    %1509 = math.exp %1508 : vector<16x16xf32>
    %cst_678 = arith.constant dense<0.000000e+00> : vector<16xf32>
    %1510 = vector.multi_reduction <add>, %1509, %cst_678 [1] : vector<16x16xf32> to vector<16xf32>
    %1511 = vector.shape_cast %1510 : vector<16xf32> to vector<16x1xf32>
    %1512 = tpu.reciprocal %1511 {approx = true} : vector<16x1xf32> -> vector<16x1xf32>
    %1513 = vector.broadcast %1512 : vector<16x1xf32> to vector<16x16xf32>
    %1514 = arith.mulf %1509, %1513 : vector<16x16xf32>
    %1515 = vector.broadcast %67 : vector<1x60xf32> to vector<16x60xf32>
    %1516 = arith.mulf %1483, %1515 : vector<16x60xf32>
    %cst_679 = arith.constant dense<0.000000e+00> : vector<16x60xf32>
    %1517 = tpu.matmul %1514, %1516, %cst_679 {dimension_numbers = #tpu.dot_dimension_numbers<[1], [0], [0], [1], [0, 0, 1, 1], [], []>} : vector<16x16xf32>, vector<16x60xf32>, vector<16x60xf32> -> vector<16x60xf32>
    %1518 = arith.addf %1500, %1517 : vector<16x60xf32>
    %1519 = vector.broadcast %97 : vector<1x60xf32> to vector<16x60xf32>
    %1520 = arith.mulf %1473, %1519 : vector<16x60xf32>
    %cst_680 = arith.constant dense<0.000000e+00> : vector<16x16xf32>
    %1521 = tpu.matmul %1520, %1478, %cst_680 {dimension_numbers = #tpu.dot_dimension_numbers<[1], [1], [0], [0], [0, 0, 1, 0], [], []>} : vector<16x60xf32>, vector<16x60xf32>, vector<16x16xf32> -> vector<16x16xf32>
    %1522 = arith.addf %1521, %222 : vector<16x16xf32>
    %cst_681 = arith.constant dense<0xFF800000> : vector<16xf32>
    %1523 = vector.multi_reduction <maximumf>, %1522, %cst_681 [1] : vector<16x16xf32> to vector<16xf32>
    %1524 = vector.shape_cast %1523 : vector<16xf32> to vector<16x1xf32>
    %1525 = vector.broadcast %1524 : vector<16x1xf32> to vector<16x16xf32>
    %1526 = arith.subf %1522, %1525 : vector<16x16xf32>
    %1527 = math.exp %1526 : vector<16x16xf32>
    %cst_682 = arith.constant dense<0.000000e+00> : vector<16xf32>
    %1528 = vector.multi_reduction <add>, %1527, %cst_682 [1] : vector<16x16xf32> to vector<16xf32>
    %1529 = vector.shape_cast %1528 : vector<16xf32> to vector<16x1xf32>
    %1530 = tpu.reciprocal %1529 {approx = true} : vector<16x1xf32> -> vector<16x1xf32>
    %1531 = vector.broadcast %1530 : vector<16x1xf32> to vector<16x16xf32>
    %1532 = arith.mulf %1527, %1531 : vector<16x16xf32>
    %1533 = vector.broadcast %75 : vector<1x60xf32> to vector<16x60xf32>
    %1534 = arith.mulf %1483, %1533 : vector<16x60xf32>
    %cst_683 = arith.constant dense<0.000000e+00> : vector<16x60xf32>
    %1535 = tpu.matmul %1532, %1534, %cst_683 {dimension_numbers = #tpu.dot_dimension_numbers<[1], [0], [0], [1], [0, 0, 1, 1], [], []>} : vector<16x16xf32>, vector<16x60xf32>, vector<16x60xf32> -> vector<16x60xf32>
    %1536 = arith.addf %1518, %1535 : vector<16x60xf32>
    %1537 = vector.broadcast %99 : vector<1x60xf32> to vector<16x60xf32>
    %1538 = arith.mulf %1473, %1537 : vector<16x60xf32>
    %cst_684 = arith.constant dense<0.000000e+00> : vector<16x16xf32>
    %1539 = tpu.matmul %1538, %1478, %cst_684 {dimension_numbers = #tpu.dot_dimension_numbers<[1], [1], [0], [0], [0, 0, 1, 0], [], []>} : vector<16x60xf32>, vector<16x60xf32>, vector<16x16xf32> -> vector<16x16xf32>
    %1540 = arith.addf %1539, %222 : vector<16x16xf32>
    %cst_685 = arith.constant dense<0xFF800000> : vector<16xf32>
    %1541 = vector.multi_reduction <maximumf>, %1540, %cst_685 [1] : vector<16x16xf32> to vector<16xf32>
    %1542 = vector.shape_cast %1541 : vector<16xf32> to vector<16x1xf32>
    %1543 = vector.broadcast %1542 : vector<16x1xf32> to vector<16x16xf32>
    %1544 = arith.subf %1540, %1543 : vector<16x16xf32>
    %1545 = math.exp %1544 : vector<16x16xf32>
    %cst_686 = arith.constant dense<0.000000e+00> : vector<16xf32>
    %1546 = vector.multi_reduction <add>, %1545, %cst_686 [1] : vector<16x16xf32> to vector<16xf32>
    %1547 = vector.shape_cast %1546 : vector<16xf32> to vector<16x1xf32>
    %1548 = tpu.reciprocal %1547 {approx = true} : vector<16x1xf32> -> vector<16x1xf32>
    %1549 = vector.broadcast %1548 : vector<16x1xf32> to vector<16x16xf32>
    %1550 = arith.mulf %1545, %1549 : vector<16x16xf32>
    %1551 = vector.broadcast %83 : vector<1x60xf32> to vector<16x60xf32>
    %1552 = arith.mulf %1483, %1551 : vector<16x60xf32>
    %cst_687 = arith.constant dense<0.000000e+00> : vector<16x60xf32>
    %1553 = tpu.matmul %1550, %1552, %cst_687 {dimension_numbers = #tpu.dot_dimension_numbers<[1], [0], [0], [1], [0, 0, 1, 1], [], []>} : vector<16x16xf32>, vector<16x60xf32>, vector<16x60xf32> -> vector<16x60xf32>
    %1554 = arith.addf %1536, %1553 : vector<16x60xf32>
    %1555 = vector.broadcast %101 : vector<1x60xf32> to vector<16x60xf32>
    %1556 = arith.mulf %1473, %1555 : vector<16x60xf32>
    %cst_688 = arith.constant dense<0.000000e+00> : vector<16x16xf32>
    %1557 = tpu.matmul %1556, %1478, %cst_688 {dimension_numbers = #tpu.dot_dimension_numbers<[1], [1], [0], [0], [0, 0, 1, 0], [], []>} : vector<16x60xf32>, vector<16x60xf32>, vector<16x16xf32> -> vector<16x16xf32>
    %1558 = arith.addf %1557, %222 : vector<16x16xf32>
    %cst_689 = arith.constant dense<0xFF800000> : vector<16xf32>
    %1559 = vector.multi_reduction <maximumf>, %1558, %cst_689 [1] : vector<16x16xf32> to vector<16xf32>
    %1560 = vector.shape_cast %1559 : vector<16xf32> to vector<16x1xf32>
    %1561 = vector.broadcast %1560 : vector<16x1xf32> to vector<16x16xf32>
    %1562 = arith.subf %1558, %1561 : vector<16x16xf32>
    %1563 = math.exp %1562 : vector<16x16xf32>
    %cst_690 = arith.constant dense<0.000000e+00> : vector<16xf32>
    %1564 = vector.multi_reduction <add>, %1563, %cst_690 [1] : vector<16x16xf32> to vector<16xf32>
    %1565 = vector.shape_cast %1564 : vector<16xf32> to vector<16x1xf32>
    %1566 = tpu.reciprocal %1565 {approx = true} : vector<16x1xf32> -> vector<16x1xf32>
    %1567 = vector.broadcast %1566 : vector<16x1xf32> to vector<16x16xf32>
    %1568 = arith.mulf %1563, %1567 : vector<16x16xf32>
    %1569 = vector.broadcast %91 : vector<1x60xf32> to vector<16x60xf32>
    %1570 = arith.mulf %1483, %1569 : vector<16x60xf32>
    %cst_691 = arith.constant dense<0.000000e+00> : vector<16x60xf32>
    %1571 = tpu.matmul %1568, %1570, %cst_691 {dimension_numbers = #tpu.dot_dimension_numbers<[1], [0], [0], [1], [0, 0, 1, 1], [], []>} : vector<16x16xf32>, vector<16x60xf32>, vector<16x60xf32> -> vector<16x60xf32>
    %1572 = arith.addf %1554, %1571 : vector<16x60xf32>
    %c11_692 = arith.constant 11 : index
    %c0_693 = arith.constant 0 : index
    %c0_694 = arith.constant 0 : index
    %1573 = vector.load %arg12[%c11_692, %c0_693, %c0_694] : memref<12x60x60xf32, #tpu.memory_space<vmem>>, vector<1x60x60xf32>
    %1574 = vector.shape_cast %1573 : vector<1x60x60xf32> to vector<60x60xf32>
    %cst_695 = arith.constant dense<0.000000e+00> : vector<16x60xf32>
    %1575 = tpu.matmul %1572, %1574, %cst_695 {dimension_numbers = #tpu.dot_dimension_numbers<[1], [0], [0], [1], [0, 0, 1, 1], [], []>} : vector<16x60xf32>, vector<60x60xf32>, vector<16x60xf32> -> vector<16x60xf32>
    %1576 = vector.broadcast %1442 : vector<1x60xf32> to vector<16x60xf32>
    %1577 = arith.addf %1575, %1576 : vector<16x60xf32>
    %1578 = arith.addf %1430, %1577 : vector<16x60xf32>
    %cst_696 = arith.constant dense<0.000000e+00> : vector<16xf32>
    %1579 = vector.multi_reduction <add>, %1578, %cst_696 [1] : vector<16x60xf32> to vector<16xf32>
    %1580 = vector.shape_cast %1579 : vector<16xf32> to vector<16x1xf32>
    %cst_697 = arith.constant 6.000000e+01 : f32
    %1581 = vector.broadcast %cst_697 : f32 to vector<16x1xf32>
    %1582 = arith.divf %1580, %1581 : vector<16x1xf32>
    %1583 = vector.broadcast %1582 : vector<16x1xf32> to vector<16x60xf32>
    %1584 = arith.subf %1578, %1583 : vector<16x60xf32>
    %1585 = arith.mulf %1584, %1584 : vector<16x60xf32>
    %cst_698 = arith.constant dense<0.000000e+00> : vector<16xf32>
    %1586 = vector.multi_reduction <add>, %1585, %cst_698 [1] : vector<16x60xf32> to vector<16xf32>
    %1587 = vector.shape_cast %1586 : vector<16xf32> to vector<16x1xf32>
    %cst_699 = arith.constant 6.000000e+01 : f32
    %1588 = vector.broadcast %cst_699 : f32 to vector<16x1xf32>
    %1589 = arith.divf %1587, %1588 : vector<16x1xf32>
    %cst_700 = arith.constant 9.99999974E-6 : f32
    %1590 = vector.broadcast %cst_700 : f32 to vector<16x1xf32>
    %1591 = arith.addf %1589, %1590 : vector<16x1xf32>
    %1592 = math.rsqrt %1591 : vector<16x1xf32>
    %1593 = vector.broadcast %1592 : vector<16x1xf32> to vector<16x60xf32>
    %1594 = arith.mulf %1584, %1593 : vector<16x60xf32>
    %1595 = vector.broadcast %1444 : vector<1x60xf32> to vector<16x60xf32>
    %1596 = arith.mulf %1594, %1595 : vector<16x60xf32>
    %1597 = vector.broadcast %1446 : vector<1x60xf32> to vector<16x60xf32>
    %1598 = arith.addf %1596, %1597 : vector<16x60xf32>
    %c2_701 = arith.constant 2 : index
    %c0_702 = arith.constant 0 : index
    %c0_703 = arith.constant 0 : index
    %1599 = vector.load %arg13[%c2_701, %c0_702, %c0_703] : memref<3x60x240xf32, #tpu.memory_space<vmem>>, vector<1x60x240xf32>
    %1600 = vector.shape_cast %1599 : vector<1x60x240xf32> to vector<60x240xf32>
    %cst_704 = arith.constant dense<0.000000e+00> : vector<16x240xf32>
    %1601 = tpu.matmul %1598, %1600, %cst_704 {dimension_numbers = #tpu.dot_dimension_numbers<[1], [0], [0], [1], [0, 0, 1, 1], [], []>} : vector<16x60xf32>, vector<60x240xf32>, vector<16x240xf32> -> vector<16x240xf32>
    %c2_705 = arith.constant 2 : index
    %c0_706 = arith.constant 0 : index
    %c0_707 = arith.constant 0 : index
    %1602 = vector.load %arg16[%c2_705, %c0_706, %c0_707] : memref<3x1x240xf32, #tpu.memory_space<vmem>>, vector<1x1x240xf32>
    %1603 = vector.shape_cast %1602 : vector<1x1x240xf32> to vector<1x240xf32>
    %1604 = vector.broadcast %1603 : vector<1x240xf32> to vector<16x240xf32>
    %1605 = arith.addf %1601, %1604 : vector<16x240xf32>
    %cst_708 = arith.constant 0.000000e+00 : f32
    %1606 = vector.broadcast %cst_708 : f32 to vector<16x240xf32>
    %1607 = arith.maximumf %1605, %1606 : vector<16x240xf32>
    %c2_709 = arith.constant 2 : index
    %c0_710 = arith.constant 0 : index
    %c0_711 = arith.constant 0 : index
    %1608 = vector.load %arg14[%c2_709, %c0_710, %c0_711] : memref<3x240x60xf32, #tpu.memory_space<vmem>>, vector<1x240x60xf32>
    %1609 = vector.shape_cast %1608 : vector<1x240x60xf32> to vector<240x60xf32>
    %cst_712 = arith.constant dense<0.000000e+00> : vector<16x60xf32>
    %1610 = tpu.matmul %1607, %1609, %cst_712 {dimension_numbers = #tpu.dot_dimension_numbers<[1], [0], [0], [1], [0, 0, 1, 1], [], []>} : vector<16x240xf32>, vector<240x60xf32>, vector<16x60xf32> -> vector<16x60xf32>
    %1611 = vector.broadcast %1448 : vector<1x60xf32> to vector<16x60xf32>
    %1612 = arith.addf %1610, %1611 : vector<16x60xf32>
    %1613 = arith.addf %1578, %1612 : vector<16x60xf32>
    %c0_713 = arith.constant 0 : index
    %c0_714 = arith.constant 0 : index
    %1614 = vector.load %arg17[%c0_713, %c0_714] : memref<2x60xf32, #tpu.memory_space<vmem>>, vector<1x60xf32>
    %c1_715 = arith.constant 1 : index
    %c0_716 = arith.constant 0 : index
    %1615 = vector.load %arg17[%c1_715, %c0_716] : memref<2x60xf32, #tpu.memory_space<vmem>>, vector<1x60xf32>
    %cst_717 = arith.constant dense<0.000000e+00> : vector<16xf32>
    %1616 = vector.multi_reduction <add>, %1613, %cst_717 [1] : vector<16x60xf32> to vector<16xf32>
    %1617 = vector.shape_cast %1616 : vector<16xf32> to vector<16x1xf32>
    %cst_718 = arith.constant 6.000000e+01 : f32
    %1618 = vector.broadcast %cst_718 : f32 to vector<16x1xf32>
    %1619 = arith.divf %1617, %1618 : vector<16x1xf32>
    %1620 = vector.broadcast %1619 : vector<16x1xf32> to vector<16x60xf32>
    %1621 = arith.subf %1613, %1620 : vector<16x60xf32>
    %1622 = arith.mulf %1621, %1621 : vector<16x60xf32>
    %cst_719 = arith.constant dense<0.000000e+00> : vector<16xf32>
    %1623 = vector.multi_reduction <add>, %1622, %cst_719 [1] : vector<16x60xf32> to vector<16xf32>
    %1624 = vector.shape_cast %1623 : vector<16xf32> to vector<16x1xf32>
    %cst_720 = arith.constant 6.000000e+01 : f32
    %1625 = vector.broadcast %cst_720 : f32 to vector<16x1xf32>
    %1626 = arith.divf %1624, %1625 : vector<16x1xf32>
    %cst_721 = arith.constant 9.99999974E-6 : f32
    %1627 = vector.broadcast %cst_721 : f32 to vector<16x1xf32>
    %1628 = arith.addf %1626, %1627 : vector<16x1xf32>
    %1629 = math.rsqrt %1628 : vector<16x1xf32>
    %1630 = vector.broadcast %1629 : vector<16x1xf32> to vector<16x60xf32>
    %1631 = arith.mulf %1621, %1630 : vector<16x60xf32>
    %1632 = vector.broadcast %1614 : vector<1x60xf32> to vector<16x60xf32>
    %1633 = arith.mulf %1631, %1632 : vector<16x60xf32>
    %1634 = vector.broadcast %1615 : vector<1x60xf32> to vector<16x60xf32>
    %1635 = arith.addf %1633, %1634 : vector<16x60xf32>
    %1636 = tpu.iota {dimensions = array<i32: 0>} : vector<2x16xi32>
    %1637 = tpu.iota {dimensions = array<i32: 1>} : vector<2x16xi32>
    %c1_i32 = arith.constant 1 : i32
    %1638 = vector.broadcast %c1_i32 : i32 to vector<2x16xi32>
    %1639 = arith.addi %1636, %1638 : vector<2x16xi32>
    %c8_i32_722 = arith.constant 8 : i32
    %1640 = vector.broadcast %c8_i32_722 : i32 to vector<2x16xi32>
    %1641 = arith.muli %1639, %1640 : vector<2x16xi32>
    %c1_i32_723 = arith.constant 1 : i32
    %1642 = vector.broadcast %c1_i32_723 : i32 to vector<2x16xi32>
    %1643 = arith.subi %1641, %1642 : vector<2x16xi32>
    %1644 = arith.cmpi eq, %1637, %1643 : vector<2x16xi32>
    %cst_724 = arith.constant 1.000000e+00 : f32
    %cst_725 = arith.constant 0.000000e+00 : f32
    %1645 = vector.broadcast %cst_724 : f32 to vector<2x16xf32>
    %1646 = vector.broadcast %cst_725 : f32 to vector<2x16xf32>
    %1647 = arith.select %1644, %1645, %1646 : vector<2x16xi1>, vector<2x16xf32>
    %cst_726 = arith.constant dense<0.000000e+00> : vector<2x60xf32>
    %1648 = tpu.matmul %1647, %1635, %cst_726 {dimension_numbers = #tpu.dot_dimension_numbers<[1], [0], [0], [1], [0, 0, 1, 1], [], []>} : vector<2x16xf32>, vector<16x60xf32>, vector<2x60xf32> -> vector<2x60xf32>
    %c0_727 = arith.constant 0 : index
    %c0_728 = arith.constant 0 : index
    %c0_729 = arith.constant 0 : index
    %1649 = vector.load %arg18[%c0_727, %c0_728, %c0_729] : memref<2x60x60xf32, #tpu.memory_space<vmem>>, vector<1x60x60xf32>
    %1650 = vector.shape_cast %1649 : vector<1x60x60xf32> to vector<60x60xf32>
    %cst_730 = arith.constant dense<0.000000e+00> : vector<2x60xf32>
    %1651 = tpu.matmul %1648, %1650, %cst_730 {dimension_numbers = #tpu.dot_dimension_numbers<[1], [0], [0], [1], [0, 0, 1, 1], [], []>} : vector<2x60xf32>, vector<60x60xf32>, vector<2x60xf32> -> vector<2x60xf32>
    %c0_731 = arith.constant 0 : index
    %c0_732 = arith.constant 0 : index
    %1652 = vector.load %arg19[%c0_731, %c0_732] : memref<2x60xf32, #tpu.memory_space<vmem>>, vector<1x60xf32>
    %1653 = vector.broadcast %1652 : vector<1x60xf32> to vector<2x60xf32>
    %1654 = arith.addf %1651, %1653 : vector<2x60xf32>
    %cst_733 = arith.constant 0.000000e+00 : f32
    %1655 = vector.broadcast %cst_733 : f32 to vector<2x60xf32>
    %1656 = arith.maximumf %1654, %1655 : vector<2x60xf32>
    %c1_734 = arith.constant 1 : index
    %c0_735 = arith.constant 0 : index
    %c0_736 = arith.constant 0 : index
    %1657 = vector.load %arg18[%c1_734, %c0_735, %c0_736] : memref<2x60x60xf32, #tpu.memory_space<vmem>>, vector<1x60x60xf32>
    %1658 = vector.shape_cast %1657 : vector<1x60x60xf32> to vector<60x60xf32>
    %cst_737 = arith.constant dense<0.000000e+00> : vector<2x60xf32>
    %1659 = tpu.matmul %1656, %1658, %cst_737 {dimension_numbers = #tpu.dot_dimension_numbers<[1], [0], [0], [1], [0, 0, 1, 1], [], []>} : vector<2x60xf32>, vector<60x60xf32>, vector<2x60xf32> -> vector<2x60xf32>
    %c1_738 = arith.constant 1 : index
    %c0_739 = arith.constant 0 : index
    %1660 = vector.load %arg19[%c1_738, %c0_739] : memref<2x60xf32, #tpu.memory_space<vmem>>, vector<1x60xf32>
    %1661 = vector.broadcast %1660 : vector<1x60xf32> to vector<2x60xf32>
    %1662 = arith.addf %1659, %1661 : vector<2x60xf32>
    %1663 = arith.addf %1662, %1648 : vector<2x60xf32>
    %c0_740 = arith.constant 0 : index
    %c0_741 = arith.constant 0 : index
    %1664 = vector.load %arg20[%c0_740, %c0_741] : memref<60x4xf32, #tpu.memory_space<vmem>>, vector<60x4xf32>
    %cst_742 = arith.constant dense<0.000000e+00> : vector<2x4xf32>
    %1665 = tpu.matmul %1663, %1664, %cst_742 {dimension_numbers = #tpu.dot_dimension_numbers<[1], [0], [0], [1], [0, 0, 1, 1], [], []>} : vector<2x60xf32>, vector<60x4xf32>, vector<2x4xf32> -> vector<2x4xf32>
    %c0_743 = arith.constant 0 : index
    %c0_744 = arith.constant 0 : index
    %1666 = vector.load %arg21[%c0_743, %c0_744] : memref<1x4xf32, #tpu.memory_space<vmem>>, vector<1x4xf32>
    %1667 = vector.broadcast %1666 : vector<1x4xf32> to vector<2x4xf32>
    %1668 = arith.addf %1665, %1667 : vector<2x4xf32>
    %c0_745 = arith.constant 0 : index
    %c0_746 = arith.constant 0 : index
    %1669 = vector.load %arg22[%c0_745, %c0_746] : memref<2x4xf32, #tpu.memory_space<vmem>>, vector<2x4xf32>
    tpu.vector_store %arg22[%c0_745, %c0_746], %1668 {strides = array<i32>} : memref<2x4xf32, #tpu.memory_space<vmem>>, vector<2x4xf32>,
    return
  }
}

</mosaic_0001>

<llo_original>
// kernel: mult_forward.1
$region0: #{mult_forward.1}
  #allocation0 [shape = 'u32[]', space=smem, size = 0x4, offset = 0x4, fixed_abs, tag = 'smem constant byte address 0x4 - core index']
  #allocation1 [shape = 'u32[72,128]{1,0:T(1,128)}', space=vmem, size = 0x9000, scoped, tag = 'internal scratch']
  %s0 = inlined_call_operand.vmem [shape: f32[16,20], index: 0, kind: input, shape index: {}]
  %s1 = inlined_call_operand.vmem [shape: f32[20,24], index: 1, kind: input, shape index: {}]
  %s2 = inlined_call_operand.vmem [shape: f32[24,28], index: 2, kind: input, shape index: {}]
  %s3 = inlined_call_operand.vmem [shape: f32[80,30], index: 3, kind: input, shape index: {}]
  %s4 = inlined_call_operand.vmem [shape: f32[80,60], index: 4, kind: input, shape index: {}]
  %s5 = inlined_call_operand.vmem [shape: f32[3,24], index: 5, kind: input, shape index: {}]
  %s6 = inlined_call_operand.vmem [shape: f32[16,30,30], index: 6, kind: input, shape index: {}]
  %s7 = inlined_call_operand.vmem [shape: f32[4,30,120], index: 7, kind: input, shape index: {}]
  %s8 = inlined_call_operand.vmem [shape: f32[4,120,30], index: 8, kind: input, shape index: {}]
  %s9 = inlined_call_operand.vmem [shape: f32[4,9,30], index: 9, kind: input, shape index: {}]
  %s10 = inlined_call_operand.vmem [shape: f32[4,1,120], index: 10, kind: input, shape index: {}]
  %s11 = inlined_call_operand.vmem [shape: f32[4,30], index: 11, kind: input, shape index: {}]
  %s12 = inlined_call_operand.vmem [shape: f32[12,60,60], index: 12, kind: input, shape index: {}]
  %s13 = inlined_call_operand.vmem [shape: f32[3,60,240], index: 13, kind: input, shape index: {}]
  %s14 = inlined_call_operand.vmem [shape: f32[3,240,60], index: 14, kind: input, shape index: {}]
  %s15 = inlined_call_operand.vmem [shape: f32[3,9,60], index: 15, kind: input, shape index: {}]
  %s16 = inlined_call_operand.vmem [shape: f32[3,1,240], index: 16, kind: input, shape index: {}]
  %s17 = inlined_call_operand.vmem [shape: f32[2,60], index: 17, kind: input, shape index: {}]
  %s18 = inlined_call_operand.vmem [shape: f32[2,60,60], index: 18, kind: input, shape index: {}]
  %s19 = inlined_call_operand.vmem [shape: f32[2,60], index: 19, kind: input, shape index: {}]
  %s20 = inlined_call_operand.vmem [shape: f32[60,4], index: 20, kind: input, shape index: {}]
  %s21 = inlined_call_operand.vmem [shape: f32[1,4], index: 21, kind: input, shape index: {}]
  %s22 = inlined_call_operand.hbm [shape: f32[2,4], index: 22, kind: output, shape index: {}]
  %s23 = sld [smem:[#allocation0]]
  $region98: #{mult_forward.1} parent=0
    _
  %s25 = ssub.s32 1, %s23
  %s26 = scalar_select 0, %s25, %s23
  $region1: #{mult_forward.1} parent=0
    #allocation2 [shape = 'u8[1024]{0}', space=vmem, size = 0x400, scoped, tag = 'output window, operand 0, single buffered']
    #allocation3 [shape = 's32[1]{0}', space=sflag, size = 0x4, scoped, tag = 'scoped memory for mult_forward.1']
    %27 = vsyncpa [#allocation3], 0
    // Predicated region
    $region2: #{mult_forward.1} parent=1 // pred_check
      _
    $region3: #{mult_forward.1} parent=1 // pred_check_branch
      %29 = sbr.rel (0) target = $region5
    $region4: #{mult_forward.1} parent=1 // pred_region
      _
    $region5: #{mult_forward.1} parent=1 // pred_fallthru
      _
    // Predicated region
    $region6: #{mult_forward.1} parent=1 // pred_check
      _
    $region7: #{mult_forward.1} parent=1 // pred_check_branch
      %31 = sbr.rel (0) target = $region9
    $region8: #{mult_forward.1} parent=1 // pred_region
      _
    $region9: #{mult_forward.1} parent=1 // pred_fallthru
      _
    // Predicated region
    $region10: #{mult_forward.1} parent=1 // pred_check
      _
    $region11: #{mult_forward.1} parent=1 // pred_check_branch
      %33 = sbr.rel (0) target = $region13
    $region12: #{mult_forward.1} parent=1 // pred_region
      _
    $region13: #{mult_forward.1} parent=1 // pred_fallthru
      _
    // Predicated region
    $region14: #{mult_forward.1} parent=1 // pred_check
      _
    $region15: #{mult_forward.1} parent=1 // pred_check_branch
      %35 = sbr.rel (0) target = $region17
    $region16: #{mult_forward.1} parent=1 // pred_region
      _
    $region17: #{mult_forward.1} parent=1 // pred_fallthru
      _
    // Predicated region
    $region18: #{mult_forward.1} parent=1 // pred_check
      _
    $region19: #{mult_forward.1} parent=1 // pred_check_branch
      %37 = sbr.rel (0) target = $region21
    $region20: #{mult_forward.1} parent=1 // pred_region
      _
    $region21: #{mult_forward.1} parent=1 // pred_fallthru
      _
    // Predicated region
    $region22: #{mult_forward.1} parent=1 // pred_check
      _
    $region23: #{mult_forward.1} parent=1 // pred_check_branch
      %39 = sbr.rel (0) target = $region25
    $region24: #{mult_forward.1} parent=1 // pred_region
      _
    $region25: #{mult_forward.1} parent=1 // pred_fallthru
      _
    // Predicated region
    $region26: #{mult_forward.1} parent=1 // pred_check
      _
    $region27: #{mult_forward.1} parent=1 // pred_check_branch
      %41 = sbr.rel (0) target = $region29
    $region28: #{mult_forward.1} parent=1 // pred_region
      _
    $region29: #{mult_forward.1} parent=1 // pred_fallthru
      _
    // Predicated region
    $region30: #{mult_forward.1} parent=1 // pred_check
      _
    $region31: #{mult_forward.1} parent=1 // pred_check_branch
      %43 = sbr.rel (0) target = $region33
    $region32: #{mult_forward.1} parent=1 // pred_region
      _
    $region33: #{mult_forward.1} parent=1 // pred_fallthru
      _
    // Predicated region
    $region34: #{mult_forward.1} parent=1 // pred_check
      _
    $region35: #{mult_forward.1} parent=1 // pred_check_branch
      %45 = sbr.rel (0) target = $region37
    $region36: #{mult_forward.1} parent=1 // pred_region
      _
    $region37: #{mult_forward.1} parent=1 // pred_fallthru
      _
    // Predicated region
    $region38: #{mult_forward.1} parent=1 // pred_check
      _
    $region39: #{mult_forward.1} parent=1 // pred_check_branch
      %47 = sbr.rel (0) target = $region41
    $region40: #{mult_forward.1} parent=1 // pred_region
      _
    $region41: #{mult_forward.1} parent=1 // pred_fallthru
      _
    // Predicated region
    $region42: #{mult_forward.1} parent=1 // pred_check
      _
    $region43: #{mult_forward.1} parent=1 // pred_check_branch
      %49 = sbr.rel (0) target = $region45
    $region44: #{mult_forward.1} parent=1 // pred_region
      _
    $region45: #{mult_forward.1} parent=1 // pred_fallthru
      _
    // Predicated region
    $region46: #{mult_forward.1} parent=1 // pred_check
      _
    $region47: #{mult_forward.1} parent=1 // pred_check_branch
      %51 = sbr.rel (0) target = $region49
    $region48: #{mult_forward.1} parent=1 // pred_region
      _
    $region49: #{mult_forward.1} parent=1 // pred_fallthru
      _
    // Predicated region
    $region50: #{mult_forward.1} parent=1 // pred_check
      _
    $region51: #{mult_forward.1} parent=1 // pred_check_branch
      %53 = sbr.rel (0) target = $region53
    $region52: #{mult_forward.1} parent=1 // pred_region
      _
    $region53: #{mult_forward.1} parent=1 // pred_fallthru
      _
    // Predicated region
    $region54: #{mult_forward.1} parent=1 // pred_check
      _
    $region55: #{mult_forward.1} parent=1 // pred_check_branch
      %55 = sbr.rel (0) target = $region57
    $region56: #{mult_forward.1} parent=1 // pred_region
      _
    $region57: #{mult_forward.1} parent=1 // pred_fallthru
      _
    // Predicated region
    $region58: #{mult_forward.1} parent=1 // pred_check
      _
    $region59: #{mult_forward.1} parent=1 // pred_check_branch
      %57 = sbr.rel (0) target = $region61
    $region60: #{mult_forward.1} parent=1 // pred_region
      _
    $region61: #{mult_forward.1} parent=1 // pred_fallthru
      _
    // Predicated region
    $region62: #{mult_forward.1} parent=1 // pred_check
      _
    $region63: #{mult_forward.1} parent=1 // pred_check_branch
      %59 = sbr.rel (0) target = $region65
    $region64: #{mult_forward.1} parent=1 // pred_region
      _
    $region65: #{mult_forward.1} parent=1 // pred_fallthru
      _
    // Predicated region
    $region66: #{mult_forward.1} parent=1 // pred_check
      _
    $region67: #{mult_forward.1} parent=1 // pred_check_branch
      %61 = sbr.rel (0) target = $region69
    $region68: #{mult_forward.1} parent=1 // pred_region
      _
    $region69: #{mult_forward.1} parent=1 // pred_fallthru
      _
    // Predicated region
    $region70: #{mult_forward.1} parent=1 // pred_check
      _
    $region71: #{mult_forward.1} parent=1 // pred_check_branch
      %63 = sbr.rel (0) target = $region73
    $region72: #{mult_forward.1} parent=1 // pred_region
      _
    $region73: #{mult_forward.1} parent=1 // pred_fallthru
      _
    // Predicated region
    $region74: #{mult_forward.1} parent=1 // pred_check
      _
    $region75: #{mult_forward.1} parent=1 // pred_check_branch
      %65 = sbr.rel (0) target = $region77
    $region76: #{mult_forward.1} parent=1 // pred_region
      _
    $region77: #{mult_forward.1} parent=1 // pred_fallthru
      _
    // Predicated region
    $region78: #{mult_forward.1} parent=1 // pred_check
      _
    $region79: #{mult_forward.1} parent=1 // pred_check_branch
      %67 = sbr.rel (0) target = $region81
    $region80: #{mult_forward.1} parent=1 // pred_region
      _
    $region81: #{mult_forward.1} parent=1 // pred_fallthru
      _
    // Predicated region
    $region82: #{mult_forward.1} parent=1 // pred_check
      _
    $region83: #{mult_forward.1} parent=1 // pred_check_branch
      %69 = sbr.rel (0) target = $region85
    $region84: #{mult_forward.1} parent=1 // pred_region
      _
    $region85: #{mult_forward.1} parent=1 // pred_fallthru
      _
    // Predicated region
    $region86: #{mult_forward.1} parent=1 // pred_check
      _
    $region87: #{mult_forward.1} parent=1 // pred_check_branch
      %71 = sbr.rel (0) target = $region89
    $region88: #{mult_forward.1} parent=1 // pred_region
      _
    $region89: #{mult_forward.1} parent=1 // pred_fallthru
      _
    %v72 = vlaneseq
    %v73 = vand.u32 %v72, 127
    %vm74 = vcmp.ge.s32.totalorder %v73, 0
    %vm75 = vcmp.lt.s32.totalorder %v73, 6
    %vm76 = vmand %vm74, %vm75
    %v77 = vsel %vm76, 1.0, 0.0
    %vm78 = vcmp.ge.s32.totalorder %v73, 6
    %vm79 = vcmp.lt.s32.totalorder %v73, 12
    %vm80 = vmand %vm78, %vm79
    %v81 = vsel %vm80, 1.0, 0.0
    %vm82 = vcmp.ge.s32.totalorder %v73, 12
    %vm83 = vcmp.lt.s32.totalorder %v73, 18
    %vm84 = vmand %vm82, %vm83
    %v85 = vsel %vm84, 1.0, 0.0
    %vm86 = vcmp.ge.s32.totalorder %v73, 18
    %vm87 = vcmp.lt.s32.totalorder %v73, 24
    %vm88 = vmand %vm86, %vm87
    %v89 = vsel %vm88, 1.0, 0.0
    %vm90 = vcmp.ge.s32.totalorder %v73, 24
    %vm91 = vcmp.lt.s32.totalorder %v73, 30
    %vm92 = vmand %vm90, %vm91
    %v93 = vsel %vm92, 1.0, 0.0
    %v94 = vmul.f32 %v77, 0.4082483
    %v95 = vmul.f32 %v81, 0.4082483
    %v96 = vmul.f32 %v85, 0.4082483
    %v97 = vmul.f32 %v89, 0.4082483
    %v98 = vmul.f32 %v93, 0.4082483
    %vm99 = vmand %vm74, %vm79
    %v100 = vsel %vm99, 1.0, 0.0
    %vm101 = vmand %vm82, %vm87
    %v102 = vsel %vm101, 1.0, 0.0
    %vm103 = vcmp.lt.s32.totalorder %v73, 36
    %vm104 = vmand %vm90, %vm103
    %v105 = vsel %vm104, 1.0, 0.0
    %vm106 = vcmp.ge.s32.totalorder %v73, 36
    %vm107 = vcmp.lt.s32.totalorder %v73, 48
    %vm108 = vmand %vm106, %vm107
    %v109 = vsel %vm108, 1.0, 0.0
    %vm110 = vcmp.ge.s32.totalorder %v73, 48
    %vm111 = vcmp.lt.s32.totalorder %v73, 60
    %vm112 = vmand %vm110, %vm111
    %v113 = vsel %vm112, 1.0, 0.0
    %v114 = vmul.f32 %v100, 0.28867513
    %v115 = vmul.f32 %v102, 0.28867513
    %v116 = vmul.f32 %v105, 0.28867513
    %v117 = vmul.f32 %v109, 0.28867513
    %v118 = vmul.f32 %v113, 0.28867513
    %v119 = vld [vmem:[%s0] sm:$0xff]
    %v120 = vld [vmem:[%s0 + $0x8] sm:$0xff]
    %v121 = vld [vmem:[%s3] sm:$0xff]
    %v122 = vld [vmem:[%s3 + $0x8] sm:$0xff]
    %v123 = vld [vmem:[%s3 + $0x10] sm:$0xf]
    %vm124 = vcmask 162816
    %v126 = vsel %vm124, %v119, 0
    %v129 = vsel %vm124, %v120, 0
    %vm131 = vcmask 1043456
    %v133 = vsel %vm131, %v123, 0
    %135 = vmatpush.msra.mxu0 0.0
    %136 = vmatpush.msra.mxu0 0.0
    %137 = vmatpush.msra.mxu0 0.0
    %138 = vmatpush.msra.mxu0 0.0
    %139 = vmatpush.msra.mxu0 0.0
    %140 = vmatpush.msra.mxu0 0.0
    %141 = vmatpush.msra.mxu0 0.0
    %142 = vmatpush.msra.mxu0 0.0
    %143 = vmatpush.msra.mxu0 0.0
    %144 = vmatpush.msra.mxu0 0.0
    %145 = vmatpush.msra.mxu0 0.0
    %146 = vmatpush.msra.mxu0 0.0
    %147 = vmatpush.msra.mxu0 0.0
    %148 = vmatpush.msra.mxu0 %v133
    %149 = vmatpush.msra.mxu0 %v122
    %150 = vmatpush.msra.mxu0 %v121
    %151 = vmatmul.f32.gmra.mxu0 %v126
    %v152 = vpop.f32.mrf.mxu0
    %v153 = vadd.f32 0.0, %v152
    %154 = vmatmul.f32.gmra.mxu0 %v129
    %v155 = vpop.f32.mrf.mxu0
    %v156 = vadd.f32 0.0, %v155
    %157 = vdwg.mxu0
    %v158 = vld [vmem:[%s1] sm:$0xff]
    %v159 = vld [vmem:[%s1 + $0x8] sm:$0xff]
    %v160 = vld [vmem:[%s1 + $0x10] sm:$0xf]
    %v161 = vld [vmem:[%s3 + $0x18] sm:$0xff]
    %v162 = vld [vmem:[%s3 + $0x20] sm:$0xff]
    %v163 = vld [vmem:[%s3 + $0x28] sm:$0xff]
    %vm164 = vcmask 195584
    %v166 = vsel %vm164, %v158, 0
    %v169 = vsel %vm164, %v159, 0
    %v172 = vsel %vm164, %v160, 0
    %174 = vmatpush.msra.mxu0 0.0
    %175 = vmatpush.msra.mxu0 0.0
    %176 = vmatpush.msra.mxu0 0.0
    %177 = vmatpush.msra.mxu0 0.0
    %178 = vmatpush.msra.mxu0 0.0
    %179 = vmatpush.msra.mxu0 0.0
    %180 = vmatpush.msra.mxu0 0.0
    %181 = vmatpush.msra.mxu0 0.0
    %182 = vmatpush.msra.mxu0 0.0
    %183 = vmatpush.msra.mxu0 0.0
    %184 = vmatpush.msra.mxu0 0.0
    %185 = vmatpush.msra.mxu0 0.0
    %186 = vmatpush.msra.mxu0 0.0
    %187 = vmatpush.msra.mxu0 %v163
    %188 = vmatpush.msra.mxu0 %v162
    %189 = vmatpush.msra.mxu0 %v161
    %190 = vmatmul.f32.gmra.mxu0 %v166
    %v191 = vpop.f32.mrf.mxu0
    %v192 = vadd.f32 0.0, %v191
    %193 = vmatmul.f32.gmra.mxu0 %v169
    %v194 = vpop.f32.mrf.mxu0
    %v195 = vadd.f32 0.0, %v194
    %196 = vmatmul.f32.gmra.mxu0 %v172
    %v197 = vpop.f32.mrf.mxu0
    %v198 = vadd.f32 0.0, %v197
    %199 = vdwg.mxu0
    %v200 = vld [vmem:[%s2] sm:$0xff]
    %v201 = vld [vmem:[%s2 + $0x8] sm:$0xff]
    %v202 = vld [vmem:[%s2 + $0x10] sm:$0xff]
    %v203 = vld [vmem:[%s3 + $0x30] sm:$0xff]
    %v204 = vld [vmem:[%s3 + $0x38] sm:$0xff]
    %v205 = vld [vmem:[%s3 + $0x40] sm:$0xff]
    %v206 = vld [vmem:[%s3 + $0x48] sm:$0xf]
    %vm207 = vcmask 228352
    %v209 = vsel %vm207, %v200, 0
    %v212 = vsel %vm207, %v201, 0
    %v215 = vsel %vm207, %v202, 0
    %v218 = vsel %vm131, %v206, 0
    %220 = vmatpush.msra.mxu0 0.0
    %221 = vmatpush.msra.mxu0 0.0
    %222 = vmatpush.msra.mxu0 0.0
    %223 = vmatpush.msra.mxu0 0.0
    %224 = vmatpush.msra.mxu0 0.0
    %225 = vmatpush.msra.mxu0 0.0
    %226 = vmatpush.msra.mxu0 0.0
    %227 = vmatpush.msra.mxu0 0.0
    %228 = vmatpush.msra.mxu0 0.0
    %229 = vmatpush.msra.mxu0 0.0
    %230 = vmatpush.msra.mxu0 0.0
    %231 = vmatpush.msra.mxu0 0.0
    %232 = vmatpush.msra.mxu0 %v218
    %233 = vmatpush.msra.mxu0 %v205
    %234 = vmatpush.msra.mxu0 %v204
    %235 = vmatpush.msra.mxu0 %v203
    %236 = vmatmul.f32.gmra.mxu0 %v209
    %v237 = vpop.f32.mrf.mxu0
    %v238 = vadd.f32 0.0, %v237
    %239 = vmatmul.f32.gmra.mxu0 %v212
    %v240 = vpop.f32.mrf.mxu0
    %v241 = vadd.f32 0.0, %v240
    %242 = vmatmul.f32.gmra.mxu0 %v215
    %v243 = vpop.f32.mrf.mxu0
    %v244 = vadd.f32 0.0, %v243
    %245 = vdwg.mxu0
    %v246 = vld [vmem:[%s4] sm:$0xff]
    %v247 = vld [vmem:[%s4 + $0x8] sm:$0xff]
    %v248 = vld [vmem:[%s4 + $0x10] sm:$0xf]
    %v249 = vld [vmem:[%s4 + $0x18] sm:$0xff]
    %v250 = vld [vmem:[%s4 + $0x20] sm:$0xff]
    %v251 = vld [vmem:[%s4 + $0x28] sm:$0xff]
    %v252 = vld [vmem:[%s4 + $0x30] sm:$0xff]
    %v253 = vld [vmem:[%s4 + $0x38] sm:$0xff]
    %v254 = vld [vmem:[%s4 + $0x40] sm:$0xff]
    %v255 = vld [vmem:[%s4 + $0x48] sm:$0xff]
    %v256 = vmul.f32 %v153, 5.477226
    %v257 = vmul.f32 %v156, 5.477226
    %v258 = vadd.f32 %v256, %v252
    %v259 = vadd.f32 %v257, %v253
    %v260 = vmul.f32 %v192, 5.477226
    %v261 = vmul.f32 %v195, 5.477226
    %v262 = vmul.f32 %v198, 5.477226
    %v263 = vadd.f32 %v260, %v246
    %v264 = vadd.f32 %v261, %v247
    %v265 = vadd.f32 %v262, %v248
    %v266 = vmul.f32 %v238, 5.477226
    %v267 = vmul.f32 %v241, 5.477226
    %v268 = vmul.f32 %v244, 5.477226
    %v269 = vadd.f32 %v266, %v249
    %v270 = vadd.f32 %v267, %v250
    %v271 = vadd.f32 %v268, %v251
    %v272 = vld [vmem:[%s5] sm:$0x1]
    %v273 = vlaneseq
    %v274 = vshrl.u32 %v273, 7
    %v275 = vadd.s32 %v274, 8
    %vm276 = vcmp.ge.s32.totalorder %v274, 0
    %vm277 = vcmp.ge.s32.totalorder %v275, 0
    %vm278 = vcmp.lt.s32.totalorder %v274, 8
    %vm279 = vcmp.lt.s32.totalorder %v275, 8
    %vm280 = vmand %vm276, %vm278
    %vm281 = vmand %vm277, %vm279
    %vm282 = vmand %vm280, %vm74
    %vm283 = vmand %vm281, %vm74
    %vm284 = vcmp.lt.s32.totalorder %v73, 10
    %vm285 = vmand %vm282, %vm284
    %vm286 = vmand %vm283, %vm284
    %vm287 = vcmp.ge.s32.totalorder %v274, 8
    %vm288 = vcmp.ge.s32.totalorder %v275, 8
    %vm289 = vcmp.lt.s32.totalorder %v274, 16
    %vm290 = vcmp.lt.s32.totalorder %v275, 16
    %vm291 = vmand %vm287, %vm289
    %vm292 = vmand %vm288, %vm290
    %vm293 = vcmp.ge.s32.totalorder %v73, 10
    %vm294 = vmand %vm291, %vm293
    %vm295 = vmand %vm292, %vm293
    %vm296 = vcmp.lt.s32.totalorder %v73, 20
    %vm297 = vmand %vm294, %vm296
    %vm298 = vmand %vm295, %vm296
    %vm299 = vmor %vm285, %vm297
    %vm300 = vmor %vm286, %vm298
    %v301 = vsel %vm299, 0.0, -1e+09
    %v302 = vsel %vm300, 0.0, -1e+09
    %v303 = vmul.f32 %v272, -1e+09
    %v304 = vperm.slane %v303, 0
    %v305 = vadd.f32 %v301, %v304
    %v306 = vadd.f32 %v302, %v304
    %v307 = vld [vmem:[%s5 + $0x1] sm:$0x1]
    %vm308 = vmand %vm282, %vm79
    %vm309 = vmand %vm283, %vm79
    %vm310 = vmand %vm291, %vm82
    %vm311 = vmand %vm292, %vm82
    %vm312 = vmand %vm310, %vm87
    %vm313 = vmand %vm311, %vm87
    %vm314 = vmor %vm308, %vm312
    %vm315 = vmor %vm309, %vm313
    %v316 = vsel %vm314, 0.0, -1e+09
    %v317 = vsel %vm315, 0.0, -1e+09
    %v318 = vmul.f32 %v307, -1e+09
    %v319 = vperm.slane %v318, 0
    %v320 = vadd.f32 %v316, %v319
    %v321 = vadd.f32 %v317, %v319
    %v322 = vld [vmem:[%s5 + $0x2] sm:$0x1]
    %vm323 = vcmp.lt.s32.totalorder %v73, 8
    %vm324 = vmand %vm282, %vm323
    %vm325 = vmand %vm283, %vm323
    %vm326 = vcmp.ge.s32.totalorder %v73, 8
    %vm327 = vmand %vm291, %vm326
    %vm328 = vmand %vm292, %vm326
    %vm329 = vcmp.lt.s32.totalorder %v73, 16
    %vm330 = vmand %vm327, %vm329
    %vm331 = vmand %vm328, %vm329
    %vm332 = vmor %vm324, %vm330
    %vm333 = vmor %vm325, %vm331
    %v334 = vsel %vm332, 0.0, -1e+09
    %v335 = vsel %vm333, 0.0, -1e+09
    %v336 = vmul.f32 %v322, -1e+09
    %v337 = vperm.slane %v336, 0
    %v338 = vadd.f32 %v334, %v337
    %v339 = vadd.f32 %v335, %v337
    %vm340 = vcmask 244736
    %v341 = vsel %vm340, %v263, 0.0
    %342 = vadd.xlane.f32.xlu0 %v341
    %v343 = vpop.xlane.xlu0 %342
    %v344 = vsel %vm340, %v264, 0.0
    %345 = vadd.xlane.f32.xlu0 %v344
    %v346 = vpop.xlane.xlu0 %345
    %vm347 = vcmask 240640
    %v348 = vsel %vm347, %v265, 0.0
    %349 = vadd.xlane.f32.xlu0 %v348
    %v350 = vpop.xlane.xlu0 %349
    %v351 = vrcp.pop 30.0
    %v352 = vmul.f32 30.0, %v351
    %v353 = vsub.f32 1.0, %v352
    %v354 = vmul.f32 %v351, %v353
    %v355 = vadd.f32 %v351, %v354
    %vm356 = vweird.f32 %v351
    %v357 = vsel %vm356, %v351, %v355
    %v358 = vmul.f32 %v343, %v357
    %v359 = vmul.f32 %v346, %v357
    %v360 = vmul.f32 %v350, %v357
    %v361 = vsub.f32 %v263, %v358
    %v362 = vsub.f32 %v264, %v359
    %v363 = vsub.f32 %v265, %v360
    %v364 = vmul.f32 %v361, %v361
    %v365 = vmul.f32 %v362, %v362
    %v366 = vmul.f32 %v363, %v363
    %v367 = vsel %vm340, %v364, 0.0
    %368 = vadd.xlane.f32.xlu0 %v367
    %v369 = vpop.xlane.xlu0 %368
    %v370 = vsel %vm340, %v365, 0.0
    %371 = vadd.xlane.f32.xlu0 %v370
    %v372 = vpop.xlane.xlu0 %371
    %v373 = vsel %vm347, %v366, 0.0
    %374 = vadd.xlane.f32.xlu0 %v373
    %v375 = vpop.xlane.xlu0 %374
    %v376 = vmul.f32 %v369, %v357
    %v377 = vmul.f32 %v372, %v357
    %v378 = vmul.f32 %v375, %v357
    %v379 = vadd.f32 %v376, 1e-05
    %v380 = vadd.f32 %v377, 1e-05
    %v381 = vadd.f32 %v378, 1e-05
    %v382 = vrsqrt.pop %v379
    %v383 = vmul.f32 %v382, %v379
    %v384 = vmul.f32 %v383, %v382
    %v385 = vmul.f32 0.5, %v384
    %v386 = vsub.f32 1.5, %v385
    %v387 = vmul.f32 %v382, %v386
    %vm388 = vweird.f32 %v379
    %vm389 = vweird.f32 %v382
    %vm390 = vmor %vm388, %vm389
    %v391 = vsel %vm390, %v382, %v387
    %v392 = vrsqrt.pop %v380
    %v393 = vmul.f32 %v392, %v380
    %v394 = vmul.f32 %v393, %v392
    %v395 = vmul.f32 0.5, %v394
    %v396 = vsub.f32 1.5, %v395
    %v397 = vmul.f32 %v392, %v396
    %vm398 = vweird.f32 %v380
    %vm399 = vweird.f32 %v392
    %vm400 = vmor %vm398, %vm399
    %v401 = vsel %vm400, %v392, %v397
    %v402 = vrsqrt.pop %v381
    %v403 = vmul.f32 %v402, %v381
    %v404 = vmul.f32 %v403, %v402
    %v405 = vmul.f32 0.5, %v404
    %v406 = vsub.f32 1.5, %v405
    %v407 = vmul.f32 %v402, %v406
    %vm408 = vweird.f32 %v381
    %vm409 = vweird.f32 %v402
    %vm410 = vmor %vm408, %vm409
    %v411 = vsel %vm410, %v402, %v407
    %v412 = vmul.f32 %v361, %v391
    %v413 = vmul.f32 %v362, %v401
    %v414 = vmul.f32 %v363, %v411
    %v415 = vld [vmem:[%s9] sm:$0x1]
    %v416 = vld [vmem:[%s9 + $0x1] sm:$0x1]
    %v417 = vld [vmem:[%s9 + $0x2] sm:$0x1]
    %v418 = vld [vmem:[%s9 + $0x3] sm:$0x1]
    %v419 = vld [vmem:[%s9 + $0x4] sm:$0x1]
    %v420 = vld [vmem:[%s9 + $0x5] sm:$0x1]
    %v421 = vld [vmem:[%s9 + $0x6] sm:$0x1]
    %v422 = vld [vmem:[%s9 + $0x7] sm:$0x1]
    %v423 = vld [vmem:[%s9 + $0x8] sm:$0x1]
    %v424 = vsel %vm340, %v258, 0.0
    %425 = vadd.xlane.f32.xlu0 %v424
    %v426 = vpop.xlane.xlu0 %425
    %v427 = vsel %vm340, %v259, 0.0
    %428 = vadd.xlane.f32.xlu0 %v427
    %v429 = vpop.xlane.xlu0 %428
    %v430 = vmul.f32 %v426, %v357
    %v431 = vmul.f32 %v429, %v357
    %v432 = vsub.f32 %v258, %v430
    %v433 = vsub.f32 %v259, %v431
    %v434 = vmul.f32 %v432, %v432
    %v435 = vmul.f32 %v433, %v433
    %v436 = vsel %vm340, %v434, 0.0
    %437 = vadd.xlane.f32.xlu0 %v436
    %v438 = vpop.xlane.xlu0 %437
    %v439 = vsel %vm340, %v435, 0.0
    %440 = vadd.xlane.f32.xlu0 %v439
    %v441 = vpop.xlane.xlu0 %440
    %v442 = vmul.f32 %v438, %v357
    %v443 = vmul.f32 %v441, %v357
    %v444 = vadd.f32 %v442, 1e-05
    %v445 = vadd.f32 %v443, 1e-05
    %v446 = vrsqrt.pop %v444
    %v447 = vmul.f32 %v446, %v444
    %v448 = vmul.f32 %v447, %v446
    %v449 = vmul.f32 0.5, %v448
    %v450 = vsub.f32 1.5, %v449
    %v451 = vmul.f32 %v446, %v450
    %vm452 = vweird.f32 %v444
    %vm453 = vweird.f32 %v446
    %vm454 = vmor %vm452, %vm453
    %v455 = vsel %vm454, %v446, %v451
    %v456 = vrsqrt.pop %v445
    %v457 = vmul.f32 %v456, %v445
    %v458 = vmul.f32 %v457, %v456
    %v459 = vmul.f32 0.5, %v458
    %v460 = vsub.f32 1.5, %v459
    %v461 = vmul.f32 %v456, %v460
    %vm462 = vweird.f32 %v445
    %vm463 = vweird.f32 %v456
    %vm464 = vmor %vm462, %vm463
    %v465 = vsel %vm464, %v456, %v461
    %v466 = vmul.f32 %v432, %v455
    %v467 = vmul.f32 %v433, %v465
    %v468 = vperm.slane %v415, 0
    %v469 = vmul.f32 %v466, %v468
    %v470 = vmul.f32 %v467, %v468
    %v471 = vperm.slane %v416, 0
    %v472 = vadd.f32 %v469, %v471
    %v473 = vadd.f32 %v470, %v471
    %v474 = vmul.f32 %v412, %v468
    %v475 = vmul.f32 %v413, %v468
    %v476 = vmul.f32 %v414, %v468
    %v477 = vadd.f32 %v474, %v471
    %v478 = vadd.f32 %v475, %v471
    %v479 = vadd.f32 %v476, %v471
    %v480 = vld [vmem:[%s6] sm:$0xff]
    %v481 = vld [vmem:[%s6 + $0x8] sm:$0xff]
    %v482 = vld [vmem:[%s6 + $0x10] sm:$0xff]
    %v483 = vld [vmem:[%s6 + $0x18] sm:$0x3f]
    %v484 = vperm.slane %v417, 0
    %v486 = vsel %vm340, %v472, 0
    %v489 = vsel %vm340, %v473, 0
    %vm491 = vcmask 1045504
    %v493 = vsel %vm491, %v483, 0
    %495 = vmatpush.msra.mxu0 0.0
    %496 = vmatpush.msra.mxu0 0.0
    %497 = vmatpush.msra.mxu0 0.0
    %498 = vmatpush.msra.mxu0 0.0
    %499 = vmatpush.msra.mxu0 0.0
    %500 = vmatpush.msra.mxu0 0.0
    %501 = vmatpush.msra.mxu0 0.0
    %502 = vmatpush.msra.mxu0 0.0
    %503 = vmatpush.msra.mxu0 0.0
    %504 = vmatpush.msra.mxu0 0.0
    %505 = vmatpush.msra.mxu0 0.0
    %506 = vmatpush.msra.mxu0 0.0
    %507 = vmatpush.msra.mxu0 %v493
    %508 = vmatpush.msra.mxu0 %v482
    %509 = vmatpush.msra.mxu0 %v481
    %510 = vmatpush.msra.mxu0 %v480
    %511 = vmatmul.f32.gmra.mxu0 %v486
    %v512 = vpop.f32.mrf.mxu0
    %v513 = vadd.f32 %v484, %v512
    %514 = vmatmul.f32.gmra.mxu0 %v489
    %v515 = vpop.f32.mrf.mxu0
    %v516 = vadd.f32 %v484, %v515
    %517 = vdwg.mxu0
    %s518 = scalar_lea.vmem %s6, 32
    %v519 = vld [vmem:[%s518] sm:$0xff]
    %v520 = vld [vmem:[%s518 + $0x8] sm:$0xff]
    %v521 = vld [vmem:[%s518 + $0x10] sm:$0xff]
    %v522 = vld [vmem:[%s518 + $0x18] sm:$0x3f]
    %v523 = vperm.slane %v418, 0
    %v525 = vsel %vm340, %v477, 0
    %v528 = vsel %vm340, %v478, 0
    %v531 = vsel %vm340, %v479, 0
    %v534 = vsel %vm491, %v522, 0
    %536 = vmatpush.msra.mxu0 0.0
    %537 = vmatpush.msra.mxu0 0.0
    %538 = vmatpush.msra.mxu0 0.0
    %539 = vmatpush.msra.mxu0 0.0
    %540 = vmatpush.msra.mxu0 0.0
    %541 = vmatpush.msra.mxu0 0.0
    %542 = vmatpush.msra.mxu0 0.0
    %543 = vmatpush.msra.mxu0 0.0
    %544 = vmatpush.msra.mxu0 0.0
    %545 = vmatpush.msra.mxu0 0.0
    %546 = vmatpush.msra.mxu0 0.0
    %547 = vmatpush.msra.mxu0 0.0
    %548 = vmatpush.msra.mxu0 %v534
    %549 = vmatpush.msra.mxu0 %v521
    %550 = vmatpush.msra.mxu0 %v520
    %551 = vmatpush.msra.mxu0 %v519
    %552 = vmatmul.f32.gmra.mxu0 %v525
    %v553 = vpop.f32.mrf.mxu0
    %v554 = vadd.f32 %v523, %v553
    %555 = vmatmul.f32.gmra.mxu0 %v528
    %v556 = vpop.f32.mrf.mxu0
    %v557 = vadd.f32 %v523, %v556
    %558 = vmatmul.f32.gmra.mxu0 %v531
    %v559 = vpop.f32.mrf.mxu0
    %v560 = vadd.f32 %v523, %v559
    %561 = vdwg.mxu0
    %s562 = scalar_lea.vmem %s6, 64
    %v563 = vld [vmem:[%s562] sm:$0xff]
    %v564 = vld [vmem:[%s562 + $0x8] sm:$0xff]
    %v565 = vld [vmem:[%s562 + $0x10] sm:$0xff]
    %v566 = vld [vmem:[%s562 + $0x18] sm:$0x3f]
    %v567 = vperm.slane %v419, 0
    %v569 = vsel %vm491, %v566, 0
    %571 = vmatpush.msra.mxu0 0.0
    %572 = vmatpush.msra.mxu0 0.0
    %573 = vmatpush.msra.mxu0 0.0
    %574 = vmatpush.msra.mxu0 0.0
    %575 = vmatpush.msra.mxu0 0.0
    %576 = vmatpush.msra.mxu0 0.0
    %577 = vmatpush.msra.mxu0 0.0
    %578 = vmatpush.msra.mxu0 0.0
    %579 = vmatpush.msra.mxu0 0.0
    %580 = vmatpush.msra.mxu0 0.0
    %581 = vmatpush.msra.mxu0 0.0
    %582 = vmatpush.msra.mxu0 0.0
    %583 = vmatpush.msra.mxu0 %v569
    %584 = vmatpush.msra.mxu0 %v565
    %585 = vmatpush.msra.mxu0 %v564
    %586 = vmatpush.msra.mxu0 %v563
    %587 = vmatmul.f32.gmra.mxu0 %v525
    %v588 = vpop.f32.mrf.mxu0
    %v589 = vadd.f32 %v567, %v588
    %590 = vmatmul.f32.gmra.mxu0 %v528
    %v591 = vpop.f32.mrf.mxu0
    %v592 = vadd.f32 %v567, %v591
    %593 = vmatmul.f32.gmra.mxu0 %v531
    %v594 = vpop.f32.mrf.mxu0
    %v595 = vadd.f32 %v567, %v594
    %596 = vdwg.mxu0
    %v597 = vmul.f32 %v513, %v94
    %v598 = vmul.f32 %v516, %v94
    %v600 = vsel %vm340, %v597, 0
    %v603 = vsel %vm340, %v598, 0
    %v606 = vsel %vm340, %v554, 0
    %v609 = vsel %vm340, %v557, 0
    %v612 = vsel %vm340, %v560, 0
    %614 = vmatpush.xpose.msra.mxu0 0.0
    %615 = vmatpush.xpose.msra.mxu0 0.0
    %616 = vmatpush.xpose.msra.mxu0 0.0
    %617 = vmatpush.xpose.msra.mxu0 0.0
    %618 = vmatpush.xpose.msra.mxu0 0.0
    %619 = vmatpush.xpose.msra.mxu0 0.0
    %620 = vmatpush.xpose.msra.mxu0 0.0
    %621 = vmatpush.xpose.msra.mxu0 0.0
    %622 = vmatpush.xpose.msra.mxu0 0.0
    %623 = vmatpush.xpose.msra.mxu0 0.0
    %624 = vmatpush.xpose.msra.mxu0 0.0
    %625 = vmatpush.xpose.msra.mxu0 0.0
    %626 = vmatpush.xpose.msra.mxu0 0.0
    %627 = vmatpush.xpose.msra.mxu0 %v612
    %628 = vmatpush.xpose.msra.mxu0 %v609
    %629 = vmatpush.xpose.msra.mxu0 %v606
    %630 = vmatmul.f32.gmra.mxu0 %v600
    %v631 = vpop.f32.mrf.mxu0
    %v632 = vadd.f32 %v305, %v631
    %633 = vmatmul.f32.gmra.mxu0 %v603
    %v634 = vpop.f32.mrf.mxu0
    %v635 = vadd.f32 %v306, %v634
    %636 = vdwg.mxu0
    %v637 = vsel %vm124, %v632, -inf
    %638 = vmax.xlane.f32.xlu0 %v637
    %v639 = vpop.xlane.xlu0 %638
    %v640 = vsel %vm124, %v635, -inf
    %641 = vmax.xlane.f32.xlu0 %v640
    %v642 = vpop.xlane.xlu0 %641
    %v643 = vsub.f32 %v632, %v639
    %v644 = vsub.f32 %v635, %v642
    %v645 = vmul.f32 %v643, 1.442695
    %v646 = vpow.pop %v645
    %v647 = vmul.f32 %v644, 1.442695
    %v648 = vpow.pop %v647
    %v649 = vsel %vm124, %v646, 0.0
    %650 = vadd.xlane.f32.xlu0 %v649
    %v651 = vpop.xlane.xlu0 %650
    %v652 = vsel %vm124, %v648, 0.0
    %653 = vadd.xlane.f32.xlu0 %v652
    %v654 = vpop.xlane.xlu0 %653
    %v655 = vrcp.pop %v651
    %v656 = vrcp.pop %v654
    %v657 = vmul.f32 %v646, %v655
    %v658 = vmul.f32 %v648, %v656
    %v659 = vmul.f32 %v589, %v77
    %v660 = vmul.f32 %v592, %v77
    %v661 = vmul.f32 %v595, %v77
    %v662 = vmul.f32 %v513, %v95
    %v663 = vmul.f32 %v516, %v95
    %v665 = vsel %vm340, %v662, 0
    %v668 = vsel %vm340, %v663, 0
    %670 = vmatpush.xpose.msra.mxu0 0.0
    %671 = vmatpush.xpose.msra.mxu0 0.0
    %672 = vmatpush.xpose.msra.mxu0 0.0
    %673 = vmatpush.xpose.msra.mxu0 0.0
    %674 = vmatpush.xpose.msra.mxu0 0.0
    %675 = vmatpush.xpose.msra.mxu0 0.0
    %676 = vmatpush.xpose.msra.mxu0 0.0
    %677 = vmatpush.xpose.msra.mxu0 0.0
    %678 = vmatpush.xpose.msra.mxu0 0.0
    %679 = vmatpush.xpose.msra.mxu0 0.0
    %680 = vmatpush.xpose.msra.mxu0 0.0
    %681 = vmatpush.xpose.msra.mxu0 0.0
    %682 = vmatpush.xpose.msra.mxu0 0.0
    %683 = vmatpush.xpose.msra.mxu0 %v612
    %684 = vmatpush.xpose.msra.mxu0 %v609
    %685 = vmatpush.xpose.msra.mxu0 %v606
    %686 = vmatmul.f32.gmra.mxu0 %v665
    %v687 = vpop.f32.mrf.mxu0
    %v688 = vadd.f32 %v305, %v687
    %689 = vmatmul.f32.gmra.mxu0 %v668
    %v690 = vpop.f32.mrf.mxu0
    %v691 = vadd.f32 %v306, %v690
    %692 = vdwg.mxu0
    %v693 = vsel %vm124, %v688, -inf
    %694 = vmax.xlane.f32.xlu0 %v693
    %v695 = vpop.xlane.xlu0 %694
    %v696 = vsel %vm124, %v691, -inf
    %697 = vmax.xlane.f32.xlu0 %v696
    %v698 = vpop.xlane.xlu0 %697
    %v699 = vsub.f32 %v688, %v695
    %v700 = vsub.f32 %v691, %v698
    %v701 = vmul.f32 %v699, 1.442695
    %v702 = vpow.pop %v701
    %v703 = vmul.f32 %v700, 1.442695
    %v704 = vpow.pop %v703
    %v705 = vsel %vm124, %v702, 0.0
    %706 = vadd.xlane.f32.xlu0 %v705
    %v707 = vpop.xlane.xlu0 %706
    %v708 = vsel %vm124, %v704, 0.0
    %709 = vadd.xlane.f32.xlu0 %v708
    %v710 = vpop.xlane.xlu0 %709
    %v711 = vrcp.pop %v707
    %v712 = vrcp.pop %v710
    %v713 = vmul.f32 %v702, %v711
    %v714 = vmul.f32 %v704, %v712
    %v715 = vmul.f32 %v589, %v81
    %v716 = vmul.f32 %v592, %v81
    %v717 = vmul.f32 %v595, %v81
    %v719 = vsel %vm124, %v713, 0
    %v722 = vsel %vm124, %v714, 0
    %v725 = vsel %vm131, %v717, 0
    %727 = vmatpush.msra.mxu0 0.0
    %728 = vmatpush.msra.mxu0 0.0
    %729 = vmatpush.msra.mxu0 0.0
    %730 = vmatpush.msra.mxu0 0.0
    %731 = vmatpush.msra.mxu0 0.0
    %732 = vmatpush.msra.mxu0 0.0
    %733 = vmatpush.msra.mxu0 0.0
    %734 = vmatpush.msra.mxu0 0.0
    %735 = vmatpush.msra.mxu0 0.0
    %736 = vmatpush.msra.mxu0 0.0
    %737 = vmatpush.msra.mxu0 0.0
    %738 = vmatpush.msra.mxu0 0.0
    %739 = vmatpush.msra.mxu0 0.0
    %740 = vmatpush.msra.mxu0 %v725
    %741 = vmatpush.msra.mxu0 %v716
    %742 = vmatpush.msra.mxu0 %v715
    %743 = vmatmul.f32.gmra.mxu0 %v719
    %v744 = vpop.f32.mrf.mxu0
    %v745 = vadd.f32 0.0, %v744
    %746 = vmatmul.f32.gmra.mxu0 %v722
    %v747 = vpop.f32.mrf.mxu0
    %v748 = vadd.f32 0.0, %v747
    %749 = vdwg.mxu0
    %v751 = vsel %vm124, %v657, 0
    %v754 = vsel %vm124, %v658, 0
    %v757 = vsel %vm131, %v661, 0
    %759 = vmatpush.msra.mxu0 0.0
    %760 = vmatpush.msra.mxu0 0.0
    %761 = vmatpush.msra.mxu0 0.0
    %762 = vmatpush.msra.mxu0 0.0
    %763 = vmatpush.msra.mxu0 0.0
    %764 = vmatpush.msra.mxu0 0.0
    %765 = vmatpush.msra.mxu0 0.0
    %766 = vmatpush.msra.mxu0 0.0
    %767 = vmatpush.msra.mxu0 0.0
    %768 = vmatpush.msra.mxu0 0.0
    %769 = vmatpush.msra.mxu0 0.0
    %770 = vmatpush.msra.mxu0 0.0
    %771 = vmatpush.msra.mxu0 0.0
    %772 = vmatpush.msra.mxu0 %v757
    %773 = vmatpush.msra.mxu0 %v660
    %774 = vmatpush.msra.mxu0 %v659
    %775 = vmatmul.f32.gmra.mxu0 %v751
    %v776 = vpop.f32.mrf.mxu0
    %v777 = vadd.f32 %v745, %v776
    %778 = vmatmul.f32.gmra.mxu0 %v754
    %v779 = vpop.f32.mrf.mxu0
    %v780 = vadd.f32 %v748, %v779
    %781 = vdwg.mxu0
    %v782 = vmul.f32 %v513, %v96
    %v783 = vmul.f32 %v516, %v96
    %v785 = vsel %vm340, %v782, 0
    %v788 = vsel %vm340, %v783, 0
    %790 = vmatpush.xpose.msra.mxu0 0.0
    %791 = vmatpush.xpose.msra.mxu0 0.0
    %792 = vmatpush.xpose.msra.mxu0 0.0
    %793 = vmatpush.xpose.msra.mxu0 0.0
    %794 = vmatpush.xpose.msra.mxu0 0.0
    %795 = vmatpush.xpose.msra.mxu0 0.0
    %796 = vmatpush.xpose.msra.mxu0 0.0
    %797 = vmatpush.xpose.msra.mxu0 0.0
    %798 = vmatpush.xpose.msra.mxu0 0.0
    %799 = vmatpush.xpose.msra.mxu0 0.0
    %800 = vmatpush.xpose.msra.mxu0 0.0
    %801 = vmatpush.xpose.msra.mxu0 0.0
    %802 = vmatpush.xpose.msra.mxu0 0.0
    %803 = vmatpush.xpose.msra.mxu0 %v612
    %804 = vmatpush.xpose.msra.mxu0 %v609
    %805 = vmatpush.xpose.msra.mxu0 %v606
    %806 = vmatmul.f32.gmra.mxu0 %v785
    %v807 = vpop.f32.mrf.mxu0
    %v808 = vadd.f32 %v305, %v807
    %809 = vmatmul.f32.gmra.mxu0 %v788
    %v810 = vpop.f32.mrf.mxu0
    %v811 = vadd.f32 %v306, %v810
    %812 = vdwg.mxu0
    %v813 = vsel %vm124, %v808, -inf
    %814 = vmax.xlane.f32.xlu0 %v813
    %v815 = vpop.xlane.xlu0 %814
    %v816 = vsel %vm124, %v811, -inf
    %817 = vmax.xlane.f32.xlu0 %v816
    %v818 = vpop.xlane.xlu0 %817
    %v819 = vsub.f32 %v808, %v815
    %v820 = vsub.f32 %v811, %v818
    %v821 = vmul.f32 %v819, 1.442695
    %v822 = vpow.pop %v821
    %v823 = vmul.f32 %v820, 1.442695
    %v824 = vpow.pop %v823
    %v825 = vsel %vm124, %v822, 0.0
    %826 = vadd.xlane.f32.xlu0 %v825
    %v827 = vpop.xlane.xlu0 %826
    %v828 = vsel %vm124, %v824, 0.0
    %829 = vadd.xlane.f32.xlu0 %v828
    %v830 = vpop.xlane.xlu0 %829
    %v831 = vrcp.pop %v827
    %v832 = vrcp.pop %v830
    %v833 = vmul.f32 %v822, %v831
    %v834 = vmul.f32 %v824, %v832
    %v835 = vmul.f32 %v589, %v85
    %v836 = vmul.f32 %v592, %v85
    %v837 = vmul.f32 %v595, %v85
    %v839 = vsel %vm124, %v833, 0
    %v842 = vsel %vm124, %v834, 0
    %v845 = vsel %vm131, %v837, 0
    %847 = vmatpush.msra.mxu0 0.0
    %848 = vmatpush.msra.mxu0 0.0
    %849 = vmatpush.msra.mxu0 0.0
    %850 = vmatpush.msra.mxu0 0.0
    %851 = vmatpush.msra.mxu0 0.0
    %852 = vmatpush.msra.mxu0 0.0
    %853 = vmatpush.msra.mxu0 0.0
    %854 = vmatpush.msra.mxu0 0.0
    %855 = vmatpush.msra.mxu0 0.0
    %856 = vmatpush.msra.mxu0 0.0
    %857 = vmatpush.msra.mxu0 0.0
    %858 = vmatpush.msra.mxu0 0.0
    %859 = vmatpush.msra.mxu0 0.0
    %860 = vmatpush.msra.mxu0 %v845
    %861 = vmatpush.msra.mxu0 %v836
    %862 = vmatpush.msra.mxu0 %v835
    %863 = vmatmul.f32.gmra.mxu0 %v839
    %v864 = vpop.f32.mrf.mxu0
    %v865 = vadd.f32 0.0, %v864
    %866 = vmatmul.f32.gmra.mxu0 %v842
    %v867 = vpop.f32.mrf.mxu0
    %v868 = vadd.f32 0.0, %v867
    %869 = vdwg.mxu0
    %v870 = vadd.f32 %v777, %v865
    %v871 = vadd.f32 %v780, %v868
    %v872 = vmul.f32 %v513, %v97
    %v873 = vmul.f32 %v516, %v97
    %v875 = vsel %vm340, %v872, 0
    %v878 = vsel %vm340, %v873, 0
    %880 = vmatpush.xpose.msra.mxu0 0.0
    %881 = vmatpush.xpose.msra.mxu0 0.0
    %882 = vmatpush.xpose.msra.mxu0 0.0
    %883 = vmatpush.xpose.msra.mxu0 0.0
    %884 = vmatpush.xpose.msra.mxu0 0.0
    %885 = vmatpush.xpose.msra.mxu0 0.0
    %886 = vmatpush.xpose.msra.mxu0 0.0
    %887 = vmatpush.xpose.msra.mxu0 0.0
    %888 = vmatpush.xpose.msra.mxu0 0.0
    %889 = vmatpush.xpose.msra.mxu0 0.0
    %890 = vmatpush.xpose.msra.mxu0 0.0
    %891 = vmatpush.xpose.msra.mxu0 0.0
    %892 = vmatpush.xpose.msra.mxu0 0.0
    %893 = vmatpush.xpose.msra.mxu0 %v612
    %894 = vmatpush.xpose.msra.mxu0 %v609
    %895 = vmatpush.xpose.msra.mxu0 %v606
    %896 = vmatmul.f32.gmra.mxu0 %v875
    %v897 = vpop.f32.mrf.mxu0
    %v898 = vadd.f32 %v305, %v897
    %899 = vmatmul.f32.gmra.mxu0 %v878
    %v900 = vpop.f32.mrf.mxu0
    %v901 = vadd.f32 %v306, %v900
    %902 = vdwg.mxu0
    %v903 = vsel %vm124, %v898, -inf
    %904 = vmax.xlane.f32.xlu0 %v903
    %v905 = vpop.xlane.xlu0 %904
    %v906 = vsel %vm124, %v901, -inf
    %907 = vmax.xlane.f32.xlu0 %v906
    %v908 = vpop.xlane.xlu0 %907
    %v909 = vsub.f32 %v898, %v905
    %v910 = vsub.f32 %v901, %v908
    %v911 = vmul.f32 %v909, 1.442695
    %v912 = vpow.pop %v911
    %v913 = vmul.f32 %v910, 1.442695
    %v914 = vpow.pop %v913
    %v915 = vsel %vm124, %v912, 0.0
    %916 = vadd.xlane.f32.xlu0 %v915
    %v917 = vpop.xlane.xlu0 %916
    %v918 = vsel %vm124, %v914, 0.0
    %919 = vadd.xlane.f32.xlu0 %v918
    %v920 = vpop.xlane.xlu0 %919
    %v921 = vrcp.pop %v917
    %v922 = vrcp.pop %v920
    %v923 = vmul.f32 %v912, %v921
    %v924 = vmul.f32 %v914, %v922
    %v925 = vmul.f32 %v589, %v89
    %v926 = vmul.f32 %v592, %v89
    %v927 = vmul.f32 %v595, %v89
    %v929 = vsel %vm124, %v923, 0
    %v932 = vsel %vm124, %v924, 0
    %v935 = vsel %vm131, %v927, 0
    %937 = vmatpush.msra.mxu0 0.0
    %938 = vmatpush.msra.mxu0 0.0
    %939 = vmatpush.msra.mxu0 0.0
    %940 = vmatpush.msra.mxu0 0.0
    %941 = vmatpush.msra.mxu0 0.0
    %942 = vmatpush.msra.mxu0 0.0
    %943 = vmatpush.msra.mxu0 0.0
    %944 = vmatpush.msra.mxu0 0.0
    %945 = vmatpush.msra.mxu0 0.0
    %946 = vmatpush.msra.mxu0 0.0
    %947 = vmatpush.msra.mxu0 0.0
    %948 = vmatpush.msra.mxu0 0.0
    %949 = vmatpush.msra.mxu0 0.0
    %950 = vmatpush.msra.mxu0 %v935
    %951 = vmatpush.msra.mxu0 %v926
    %952 = vmatpush.msra.mxu0 %v925
    %953 = vmatmul.f32.gmra.mxu0 %v929
    %v954 = vpop.f32.mrf.mxu0
    %v955 = vadd.f32 0.0, %v954
    %956 = vmatmul.f32.gmra.mxu0 %v932
    %v957 = vpop.f32.mrf.mxu0
    %v958 = vadd.f32 0.0, %v957
    %959 = vdwg.mxu0
    %v960 = vadd.f32 %v870, %v955
    %v961 = vadd.f32 %v871, %v958
    %v962 = vmul.f32 %v513, %v98
    %v963 = vmul.f32 %v516, %v98
    %v965 = vsel %vm340, %v962, 0
    %v968 = vsel %vm340, %v963, 0
    %970 = vmatpush.xpose.msra.mxu0 0.0
    %971 = vmatpush.xpose.msra.mxu0 0.0
    %972 = vmatpush.xpose.msra.mxu0 0.0
    %973 = vmatpush.xpose.msra.mxu0 0.0
    %974 = vmatpush.xpose.msra.mxu0 0.0
    %975 = vmatpush.xpose.msra.mxu0 0.0
    %976 = vmatpush.xpose.msra.mxu0 0.0
    %977 = vmatpush.xpose.msra.mxu0 0.0
    %978 = vmatpush.xpose.msra.mxu0 0.0
    %979 = vmatpush.xpose.msra.mxu0 0.0
    %980 = vmatpush.xpose.msra.mxu0 0.0
    %981 = vmatpush.xpose.msra.mxu0 0.0
    %982 = vmatpush.xpose.msra.mxu0 0.0
    %983 = vmatpush.xpose.msra.mxu0 %v612
    %984 = vmatpush.xpose.msra.mxu0 %v609
    %985 = vmatpush.xpose.msra.mxu0 %v606
    %986 = vmatmul.f32.gmra.mxu0 %v965
    %v987 = vpop.f32.mrf.mxu0
    %v988 = vadd.f32 %v305, %v987
    %989 = vmatmul.f32.gmra.mxu0 %v968
    %v990 = vpop.f32.mrf.mxu0
    %v991 = vadd.f32 %v306, %v990
    %992 = vdwg.mxu0
    %v993 = vsel %vm124, %v988, -inf
    %994 = vmax.xlane.f32.xlu0 %v993
    %v995 = vpop.xlane.xlu0 %994
    %v996 = vsel %vm124, %v991, -inf
    %997 = vmax.xlane.f32.xlu0 %v996
    %v998 = vpop.xlane.xlu0 %997
    %v999 = vsub.f32 %v988, %v995
    %v1000 = vsub.f32 %v991, %v998
    %v1001 = vmul.f32 %v999, 1.442695
    %v1002 = vpow.pop %v1001
    %v1003 = vmul.f32 %v1000, 1.442695
    %v1004 = vpow.pop %v1003
    %v1005 = vsel %vm124, %v1002, 0.0
    %1006 = vadd.xlane.f32.xlu0 %v1005
    %v1007 = vpop.xlane.xlu0 %1006
    %v1008 = vsel %vm124, %v1004, 0.0
    %1009 = vadd.xlane.f32.xlu0 %v1008
    %v1010 = vpop.xlane.xlu0 %1009
    %v1011 = vrcp.pop %v1007
    %v1012 = vrcp.pop %v1010
    %v1013 = vmul.f32 %v1002, %v1011
    %v1014 = vmul.f32 %v1004, %v1012
    %v1015 = vmul.f32 %v589, %v93
    %v1016 = vmul.f32 %v592, %v93
    %v1017 = vmul.f32 %v595, %v93
    %v1019 = vsel %vm124, %v1013, 0
    %v1022 = vsel %vm124, %v1014, 0
    %v1025 = vsel %vm131, %v1017, 0
    %1027 = vmatpush.msra.mxu0 0.0
    %1028 = vmatpush.msra.mxu0 0.0
    %1029 = vmatpush.msra.mxu0 0.0
    %1030 = vmatpush.msra.mxu0 0.0
    %1031 = vmatpush.msra.mxu0 0.0
    %1032 = vmatpush.msra.mxu0 0.0
    %1033 = vmatpush.msra.mxu0 0.0
    %1034 = vmatpush.msra.mxu0 0.0
    %1035 = vmatpush.msra.mxu0 0.0
    %1036 = vmatpush.msra.mxu0 0.0
    %1037 = vmatpush.msra.mxu0 0.0
    %1038 = vmatpush.msra.mxu0 0.0
    %1039 = vmatpush.msra.mxu0 0.0
    %1040 = vmatpush.msra.mxu0 %v1025
    %1041 = vmatpush.msra.mxu0 %v1016
    %1042 = vmatpush.msra.mxu0 %v1015
    %1043 = vmatmul.f32.gmra.mxu0 %v1019
    %v1044 = vpop.f32.mrf.mxu0
    %v1045 = vadd.f32 0.0, %v1044
    %1046 = vmatmul.f32.gmra.mxu0 %v1022
    %v1047 = vpop.f32.mrf.mxu0
    %v1048 = vadd.f32 0.0, %v1047
    %1049 = vdwg.mxu0
    %v1050 = vadd.f32 %v960, %v1045
    %v1051 = vadd.f32 %v961, %v1048
    %s1052 = scalar_lea.vmem %s6, 96
    %v1053 = vld [vmem:[%s1052] sm:$0xff]
    %v1054 = vld [vmem:[%s1052 + $0x8] sm:$0xff]
    %v1055 = vld [vmem:[%s1052 + $0x10] sm:$0xff]
    %v1056 = vld [vmem:[%s1052 + $0x18] sm:$0x3f]
    %v1057 = vperm.slane %v420, 0
    %v1059 = vsel %vm340, %v1050, 0
    %v1062 = vsel %vm340, %v1051, 0
    %v1065 = vsel %vm491, %v1056, 0
    %1067 = vmatpush.msra.mxu0 0.0
    %1068 = vmatpush.msra.mxu0 0.0
    %1069 = vmatpush.msra.mxu0 0.0
    %1070 = vmatpush.msra.mxu0 0.0
    %1071 = vmatpush.msra.mxu0 0.0
    %1072 = vmatpush.msra.mxu0 0.0
    %1073 = vmatpush.msra.mxu0 0.0
    %1074 = vmatpush.msra.mxu0 0.0
    %1075 = vmatpush.msra.mxu0 0.0
    %1076 = vmatpush.msra.mxu0 0.0
    %1077 = vmatpush.msra.mxu0 0.0
    %1078 = vmatpush.msra.mxu0 0.0
    %1079 = vmatpush.msra.mxu0 %v1065
    %1080 = vmatpush.msra.mxu0 %v1055
    %1081 = vmatpush.msra.mxu0 %v1054
    %1082 = vmatpush.msra.mxu0 %v1053
    %1083 = vmatmul.f32.gmra.mxu0 %v1059
    %v1084 = vpop.f32.mrf.mxu0
    %v1085 = vadd.f32 %v1057, %v1084
    %1086 = vmatmul.f32.gmra.mxu0 %v1062
    %v1087 = vpop.f32.mrf.mxu0
    %v1088 = vadd.f32 %v1057, %v1087
    %1089 = vdwg.mxu0
    %v1090 = vadd.f32 %v258, %v1085
    %v1091 = vadd.f32 %v259, %v1088
    %v1092 = vsel %vm340, %v1090, 0.0
    %1093 = vadd.xlane.f32.xlu0 %v1092
    %v1094 = vpop.xlane.xlu0 %1093
    %v1095 = vsel %vm340, %v1091, 0.0
    %1096 = vadd.xlane.f32.xlu0 %v1095
    %v1097 = vpop.xlane.xlu0 %1096
    %v1098 = vmul.f32 %v1094, %v357
    %v1099 = vmul.f32 %v1097, %v357
    %v1100 = vsub.f32 %v1090, %v1098
    %v1101 = vsub.f32 %v1091, %v1099
    %v1102 = vmul.f32 %v1100, %v1100
    %v1103 = vmul.f32 %v1101, %v1101
    %v1104 = vsel %vm340, %v1102, 0.0
    %1105 = vadd.xlane.f32.xlu0 %v1104
    %v1106 = vpop.xlane.xlu0 %1105
    %v1107 = vsel %vm340, %v1103, 0.0
    %1108 = vadd.xlane.f32.xlu0 %v1107
    %v1109 = vpop.xlane.xlu0 %1108
    %v1110 = vmul.f32 %v1106, %v357
    %v1111 = vmul.f32 %v1109, %v357
    %v1112 = vadd.f32 %v1110, 1e-05
    %v1113 = vadd.f32 %v1111, 1e-05
    %v1114 = vrsqrt.pop %v1112
    %v1115 = vmul.f32 %v1114, %v1112
    %v1116 = vmul.f32 %v1115, %v1114
    %v1117 = vmul.f32 0.5, %v1116
    %v1118 = vsub.f32 1.5, %v1117
    %v1119 = vmul.f32 %v1114, %v1118
    %vm1120 = vweird.f32 %v1112
    %vm1121 = vweird.f32 %v1114
    %vm1122 = vmor %vm1120, %vm1121
    %v1123 = vsel %vm1122, %v1114, %v1119
    %v1124 = vrsqrt.pop %v1113
    %v1125 = vmul.f32 %v1124, %v1113
    %v1126 = vmul.f32 %v1125, %v1124
    %v1127 = vmul.f32 0.5, %v1126
    %v1128 = vsub.f32 1.5, %v1127
    %v1129 = vmul.f32 %v1124, %v1128
    %vm1130 = vweird.f32 %v1113
    %vm1131 = vweird.f32 %v1124
    %vm1132 = vmor %vm1130, %vm1131
    %v1133 = vsel %vm1132, %v1124, %v1129
    %v1134 = vmul.f32 %v1100, %v1123
    %v1135 = vmul.f32 %v1101, %v1133
    %v1136 = vperm.slane %v421, 0
    %v1137 = vmul.f32 %v1134, %v1136
    %v1138 = vmul.f32 %v1135, %v1136
    %v1139 = vperm.slane %v422, 0
    %v1140 = vadd.f32 %v1137, %v1139
    %v1141 = vadd.f32 %v1138, %v1139
    %v1142 = vld [vmem:[%s7] sm:$0xff]
    %v1143 = vld [vmem:[%s7 + $0x8] sm:$0xff]
    %v1144 = vld [vmem:[%s7 + $0x10] sm:$0xff]
    %v1145 = vld [vmem:[%s7 + $0x18] sm:$0x3f]
    %v1146 = vld [vmem:[%s10] sm:$0x1]
    %v1148 = vperm.slane %v1146, 0
    %v1151 = vsel %vm340, %v1140, 0
    %v1154 = vsel %vm340, %v1141, 0
    %v1157 = vsel %vm491, %v1145, 0
    %1159 = vmatpush.msra.mxu0 0.0
    %1160 = vmatpush.msra.mxu0 0.0
    %1161 = vmatpush.msra.mxu0 0.0
    %1162 = vmatpush.msra.mxu0 0.0
    %1163 = vmatpush.msra.mxu0 0.0
    %1164 = vmatpush.msra.mxu0 0.0
    %1165 = vmatpush.msra.mxu0 0.0
    %1166 = vmatpush.msra.mxu0 0.0
    %1167 = vmatpush.msra.mxu0 0.0
    %1168 = vmatpush.msra.mxu0 0.0
    %1169 = vmatpush.msra.mxu0 0.0
    %1170 = vmatpush.msra.mxu0 0.0
    %1171 = vmatpush.msra.mxu0 %v1157
    %1172 = vmatpush.msra.mxu0 %v1144
    %1173 = vmatpush.msra.mxu0 %v1143
    %1174 = vmatpush.msra.mxu0 %v1142
    %1175 = vmatmul.f32.gmra.mxu0 %v1151
    %v1176 = vpop.f32.mrf.mxu0
    %v1177 = vadd.f32 %v1148, %v1176
    %1178 = vmatmul.f32.gmra.mxu0 %v1154
    %v1179 = vpop.f32.mrf.mxu0
    %v1180 = vadd.f32 %v1148, %v1179
    %1181 = vdwg.mxu0
    %v1182 = vmax.f32 %v1177, 0.0
    %v1183 = vmax.f32 %v1180, 0.0
    %v1184 = vld [vmem:[%s8] sm:$0xff]
    %v1185 = vld [vmem:[%s8 + $0x8] sm:$0xff]
    %v1186 = vld [vmem:[%s8 + $0x10] sm:$0xff]
    %v1187 = vld [vmem:[%s8 + $0x18] sm:$0xff]
    %v1188 = vld [vmem:[%s8 + $0x20] sm:$0xff]
    %v1189 = vld [vmem:[%s8 + $0x28] sm:$0xff]
    %v1190 = vld [vmem:[%s8 + $0x30] sm:$0xff]
    %v1191 = vld [vmem:[%s8 + $0x38] sm:$0xff]
    %v1192 = vld [vmem:[%s8 + $0x40] sm:$0xff]
    %v1193 = vld [vmem:[%s8 + $0x48] sm:$0xff]
    %v1194 = vld [vmem:[%s8 + $0x50] sm:$0xff]
    %v1195 = vld [vmem:[%s8 + $0x58] sm:$0xff]
    %v1196 = vld [vmem:[%s8 + $0x60] sm:$0xff]
    %v1197 = vld [vmem:[%s8 + $0x68] sm:$0xff]
    %v1198 = vld [vmem:[%s8 + $0x70] sm:$0xff]
    %v1199 = vperm.slane %v423, 0
    %vm1200 = vcmask 982016
    %v1202 = vsel %vm1200, %v1182, 0
    %v1205 = vsel %vm1200, %v1183, 0
    %1207 = vmatpush.msra.mxu0 0.0
    %1208 = vmatpush.msra.mxu0 %v1198
    %1209 = vmatpush.msra.mxu0 %v1197
    %1210 = vmatpush.msra.mxu0 %v1196
    %1211 = vmatpush.msra.mxu0 %v1195
    %1212 = vmatpush.msra.mxu0 %v1194
    %1213 = vmatpush.msra.mxu0 %v1193
    %1214 = vmatpush.msra.mxu0 %v1192
    %1215 = vmatpush.msra.mxu0 %v1191
    %1216 = vmatpush.msra.mxu0 %v1190
    %1217 = vmatpush.msra.mxu0 %v1189
    %1218 = vmatpush.msra.mxu0 %v1188
    %1219 = vmatpush.msra.mxu0 %v1187
    %1220 = vmatpush.msra.mxu0 %v1186
    %1221 = vmatpush.msra.mxu0 %v1185
    %1222 = vmatpush.msra.mxu0 %v1184
    %1223 = vmatmul.f32.gmra.mxu0 %v1202
    %v1224 = vpop.f32.mrf.mxu0
    %v1225 = vadd.f32 %v1199, %v1224
    %1226 = vmatmul.f32.gmra.mxu0 %v1205
    %v1227 = vpop.f32.mrf.mxu0
    %v1228 = vadd.f32 %v1199, %v1227
    %1229 = vdwg.mxu0
    %v1230 = vadd.f32 %v1090, %v1225
    %v1231 = vadd.f32 %v1091, %v1228
    %s1232 = scalar_lea.vmem %s9, 16
    %v1233 = vld [vmem:[%s1232] sm:$0x1]
    %v1234 = vld [vmem:[%s1232 + $0x1] sm:$0x1]
    %v1235 = vld [vmem:[%s1232 + $0x2] sm:$0x1]
    %v1236 = vld [vmem:[%s1232 + $0x3] sm:$0x1]
    %v1237 = vld [vmem:[%s1232 + $0x4] sm:$0x1]
    %v1238 = vld [vmem:[%s1232 + $0x5] sm:$0x1]
    %v1239 = vld [vmem:[%s1232 + $0x6] sm:$0x1]
    %v1240 = vld [vmem:[%s1232 + $0x7] sm:$0x1]
    %v1241 = vld [vmem:[%s1232 + $0x8] sm:$0x1]
    %v1242 = vsel %vm340, %v1230, 0.0
    %1243 = vadd.xlane.f32.xlu0 %v1242
    %v1244 = vpop.xlane.xlu0 %1243
    %v1245 = vsel %vm340, %v1231, 0.0
    %1246 = vadd.xlane.f32.xlu0 %v1245
    %v1247 = vpop.xlane.xlu0 %1246
    %v1248 = vmul.f32 %v1244, %v357
    %v1249 = vmul.f32 %v1247, %v357
    %v1250 = vsub.f32 %v1230, %v1248
    %v1251 = vsub.f32 %v1231, %v1249
    %v1252 = vmul.f32 %v1250, %v1250
    %v1253 = vmul.f32 %v1251, %v1251
    %v1254 = vsel %vm340, %v1252, 0.0
    %1255 = vadd.xlane.f32.xlu0 %v1254
    %v1256 = vpop.xlane.xlu0 %1255
    %v1257 = vsel %vm340, %v1253, 0.0
    %1258 = vadd.xlane.f32.xlu0 %v1257
    %v1259 = vpop.xlane.xlu0 %1258
    %v1260 = vmul.f32 %v1256, %v357
    %v1261 = vmul.f32 %v1259, %v357
    %v1262 = vadd.f32 %v1260, 1e-05
    %v1263 = vadd.f32 %v1261, 1e-05
    %v1264 = vrsqrt.pop %v1262
    %v1265 = vmul.f32 %v1264, %v1262
    %v1266 = vmul.f32 %v1265, %v1264
    %v1267 = vmul.f32 0.5, %v1266
    %v1268 = vsub.f32 1.5, %v1267
    %v1269 = vmul.f32 %v1264, %v1268
    %vm1270 = vweird.f32 %v1262
    %vm1271 = vweird.f32 %v1264
    %vm1272 = vmor %vm1270, %vm1271
    %v1273 = vsel %vm1272, %v1264, %v1269
    %v1274 = vrsqrt.pop %v1263
    %v1275 = vmul.f32 %v1274, %v1263
    %v1276 = vmul.f32 %v1275, %v1274
    %v1277 = vmul.f32 0.5, %v1276
    %v1278 = vsub.f32 1.5, %v1277
    %v1279 = vmul.f32 %v1274, %v1278
    %vm1280 = vweird.f32 %v1263
    %vm1281 = vweird.f32 %v1274
    %vm1282 = vmor %vm1280, %vm1281
    %v1283 = vsel %vm1282, %v1274, %v1279
    %v1284 = vmul.f32 %v1250, %v1273
    %v1285 = vmul.f32 %v1251, %v1283
    %v1286 = vperm.slane %v1233, 0
    %v1287 = vmul.f32 %v1284, %v1286
    %v1288 = vmul.f32 %v1285, %v1286
    %v1289 = vperm.slane %v1234, 0
    %v1290 = vadd.f32 %v1287, %v1289
    %v1291 = vadd.f32 %v1288, %v1289
    %v1292 = vmul.f32 %v412, %v1286
    %v1293 = vmul.f32 %v413, %v1286
    %v1294 = vmul.f32 %v414, %v1286
    %v1295 = vadd.f32 %v1292, %v1289
    %v1296 = vadd.f32 %v1293, %v1289
    %v1297 = vadd.f32 %v1294, %v1289
    %s1298 = scalar_lea.vmem %s6, 128
    %v1299 = vld [vmem:[%s1298] sm:$0xff]
    %v1300 = vld [vmem:[%s1298 + $0x8] sm:$0xff]
    %v1301 = vld [vmem:[%s1298 + $0x10] sm:$0xff]
    %v1302 = vld [vmem:[%s1298 + $0x18] sm:$0x3f]
    %v1303 = vperm.slane %v1235, 0
    %v1305 = vsel %vm340, %v1290, 0
    %v1308 = vsel %vm340, %v1291, 0
    %v1311 = vsel %vm491, %v1302, 0
    %1313 = vmatpush.msra.mxu0 0.0
    %1314 = vmatpush.msra.mxu0 0.0
    %1315 = vmatpush.msra.mxu0 0.0
    %1316 = vmatpush.msra.mxu0 0.0
    %1317 = vmatpush.msra.mxu0 0.0
    %1318 = vmatpush.msra.mxu0 0.0
    %1319 = vmatpush.msra.mxu0 0.0
    %1320 = vmatpush.msra.mxu0 0.0
    %1321 = vmatpush.msra.mxu0 0.0
    %1322 = vmatpush.msra.mxu0 0.0
    %1323 = vmatpush.msra.mxu0 0.0
    %1324 = vmatpush.msra.mxu0 0.0
    %1325 = vmatpush.msra.mxu0 %v1311
    %1326 = vmatpush.msra.mxu0 %v1301
    %1327 = vmatpush.msra.mxu0 %v1300
    %1328 = vmatpush.msra.mxu0 %v1299
    %1329 = vmatmul.f32.gmra.mxu0 %v1305
    %v1330 = vpop.f32.mrf.mxu0
    %v1331 = vadd.f32 %v1303, %v1330
    %1332 = vmatmul.f32.gmra.mxu0 %v1308
    %v1333 = vpop.f32.mrf.mxu0
    %v1334 = vadd.f32 %v1303, %v1333
    %1335 = vdwg.mxu0
    %s1336 = scalar_lea.vmem %s6, 160
    %v1337 = vld [vmem:[%s1336] sm:$0xff]
    %v1338 = vld [vmem:[%s1336 + $0x8] sm:$0xff]
    %v1339 = vld [vmem:[%s1336 + $0x10] sm:$0xff]
    %v1340 = vld [vmem:[%s1336 + $0x18] sm:$0x3f]
    %v1341 = vperm.slane %v1236, 0
    %v1343 = vsel %vm340, %v1295, 0
    %v1346 = vsel %vm340, %v1296, 0
    %v1349 = vsel %vm340, %v1297, 0
    %v1352 = vsel %vm491, %v1340, 0
    %1354 = vmatpush.msra.mxu0 0.0
    %1355 = vmatpush.msra.mxu0 0.0
    %1356 = vmatpush.msra.mxu0 0.0
    %1357 = vmatpush.msra.mxu0 0.0
    %1358 = vmatpush.msra.mxu0 0.0
    %1359 = vmatpush.msra.mxu0 0.0
    %1360 = vmatpush.msra.mxu0 0.0
    %1361 = vmatpush.msra.mxu0 0.0
    %1362 = vmatpush.msra.mxu0 0.0
    %1363 = vmatpush.msra.mxu0 0.0
    %1364 = vmatpush.msra.mxu0 0.0
    %1365 = vmatpush.msra.mxu0 0.0
    %1366 = vmatpush.msra.mxu0 %v1352
    %1367 = vmatpush.msra.mxu0 %v1339
    %1368 = vmatpush.msra.mxu0 %v1338
    %1369 = vmatpush.msra.mxu0 %v1337
    %1370 = vmatmul.f32.gmra.mxu0 %v1343
    %v1371 = vpop.f32.mrf.mxu0
    %v1372 = vadd.f32 %v1341, %v1371
    %1373 = vmatmul.f32.gmra.mxu0 %v1346
    %v1374 = vpop.f32.mrf.mxu0
    %v1375 = vadd.f32 %v1341, %v1374
    %1376 = vmatmul.f32.gmra.mxu0 %v1349
    %v1377 = vpop.f32.mrf.mxu0
    %v1378 = vadd.f32 %v1341, %v1377
    %1379 = vdwg.mxu0
    %s1380 = scalar_lea.vmem %s6, 192
    %v1381 = vld [vmem:[%s1380] sm:$0xff]
    %v1382 = vld [vmem:[%s1380 + $0x8] sm:$0xff]
    %v1383 = vld [vmem:[%s1380 + $0x10] sm:$0xff]
    %v1384 = vld [vmem:[%s1380 + $0x18] sm:$0x3f]
    %v1385 = vperm.slane %v1237, 0
    %v1387 = vsel %vm491, %v1384, 0
    %1389 = vmatpush.msra.mxu0 0.0
    %1390 = vmatpush.msra.mxu0 0.0
    %1391 = vmatpush.msra.mxu0 0.0
    %1392 = vmatpush.msra.mxu0 0.0
    %1393 = vmatpush.msra.mxu0 0.0
    %1394 = vmatpush.msra.mxu0 0.0
    %1395 = vmatpush.msra.mxu0 0.0
    %1396 = vmatpush.msra.mxu0 0.0
    %1397 = vmatpush.msra.mxu0 0.0
    %1398 = vmatpush.msra.mxu0 0.0
    %1399 = vmatpush.msra.mxu0 0.0
    %1400 = vmatpush.msra.mxu0 0.0
    %1401 = vmatpush.msra.mxu0 %v1387
    %1402 = vmatpush.msra.mxu0 %v1383
    %1403 = vmatpush.msra.mxu0 %v1382
    %1404 = vmatpush.msra.mxu0 %v1381
    %1405 = vmatmul.f32.gmra.mxu0 %v1343
    %v1406 = vpop.f32.mrf.mxu0
    %v1407 = vadd.f32 %v1385, %v1406
    %1408 = vmatmul.f32.gmra.mxu0 %v1346
    %v1409 = vpop.f32.mrf.mxu0
    %v1410 = vadd.f32 %v1385, %v1409
    %1411 = vmatmul.f32.gmra.mxu0 %v1349
    %v1412 = vpop.f32.mrf.mxu0
    %v1413 = vadd.f32 %v1385, %v1412
    %1414 = vdwg.mxu0
    %v1415 = vmul.f32 %v1331, %v94
    %v1416 = vmul.f32 %v1334, %v94
    %v1418 = vsel %vm340, %v1415, 0
    %v1421 = vsel %vm340, %v1416, 0
    %v1424 = vsel %vm340, %v1372, 0
    %v1427 = vsel %vm340, %v1375, 0
    %v1430 = vsel %vm340, %v1378, 0
    %1432 = vmatpush.xpose.msra.mxu0 0.0
    %1433 = vmatpush.xpose.msra.mxu0 0.0
    %1434 = vmatpush.xpose.msra.mxu0 0.0
    %1435 = vmatpush.xpose.msra.mxu0 0.0
    %1436 = vmatpush.xpose.msra.mxu0 0.0
    %1437 = vmatpush.xpose.msra.mxu0 0.0
    %1438 = vmatpush.xpose.msra.mxu0 0.0
    %1439 = vmatpush.xpose.msra.mxu0 0.0
    %1440 = vmatpush.xpose.msra.mxu0 0.0
    %1441 = vmatpush.xpose.msra.mxu0 0.0
    %1442 = vmatpush.xpose.msra.mxu0 0.0
    %1443 = vmatpush.xpose.msra.mxu0 0.0
    %1444 = vmatpush.xpose.msra.mxu0 0.0
    %1445 = vmatpush.xpose.msra.mxu0 %v1430
    %1446 = vmatpush.xpose.msra.mxu0 %v1427
    %1447 = vmatpush.xpose.msra.mxu0 %v1424
    %1448 = vmatmul.f32.gmra.mxu0 %v1418
    %v1449 = vpop.f32.mrf.mxu0
    %v1450 = vadd.f32 %v305, %v1449
    %1451 = vmatmul.f32.gmra.mxu0 %v1421
    %v1452 = vpop.f32.mrf.mxu0
    %v1453 = vadd.f32 %v306, %v1452
    %1454 = vdwg.mxu0
    %v1455 = vsel %vm124, %v1450, -inf
    %1456 = vmax.xlane.f32.xlu0 %v1455
    %v1457 = vpop.xlane.xlu0 %1456
    %v1458 = vsel %vm124, %v1453, -inf
    %1459 = vmax.xlane.f32.xlu0 %v1458
    %v1460 = vpop.xlane.xlu0 %1459
    %v1461 = vsub.f32 %v1450, %v1457
    %v1462 = vsub.f32 %v1453, %v1460
    %v1463 = vmul.f32 %v1461, 1.442695
    %v1464 = vpow.pop %v1463
    %v1465 = vmul.f32 %v1462, 1.442695
    %v1466 = vpow.pop %v1465
    %v1467 = vsel %vm124, %v1464, 0.0
    %1468 = vadd.xlane.f32.xlu0 %v1467
    %v1469 = vpop.xlane.xlu0 %1468
    %v1470 = vsel %vm124, %v1466, 0.0
    %1471 = vadd.xlane.f32.xlu0 %v1470
    %v1472 = vpop.xlane.xlu0 %1471
    %v1473 = vrcp.pop %v1469
    %v1474 = vrcp.pop %v1472
    %v1475 = vmul.f32 %v1464, %v1473
    %v1476 = vmul.f32 %v1466, %v1474
    %v1477 = vmul.f32 %v1407, %v77
    %v1478 = vmul.f32 %v1410, %v77
    %v1479 = vmul.f32 %v1413, %v77
    %v1480 = vmul.f32 %v1331, %v95
    %v1481 = vmul.f32 %v1334, %v95
    %v1483 = vsel %vm340, %v1480, 0
    %v1486 = vsel %vm340, %v1481, 0
    %1488 = vmatpush.xpose.msra.mxu0 0.0
    %1489 = vmatpush.xpose.msra.mxu0 0.0
    %1490 = vmatpush.xpose.msra.mxu0 0.0
    %1491 = vmatpush.xpose.msra.mxu0 0.0
    %1492 = vmatpush.xpose.msra.mxu0 0.0
    %1493 = vmatpush.xpose.msra.mxu0 0.0
    %1494 = vmatpush.xpose.msra.mxu0 0.0
    %1495 = vmatpush.xpose.msra.mxu0 0.0
    %1496 = vmatpush.xpose.msra.mxu0 0.0
    %1497 = vmatpush.xpose.msra.mxu0 0.0
    %1498 = vmatpush.xpose.msra.mxu0 0.0
    %1499 = vmatpush.xpose.msra.mxu0 0.0
    %1500 = vmatpush.xpose.msra.mxu0 0.0
    %1501 = vmatpush.xpose.msra.mxu0 %v1430
    %1502 = vmatpush.xpose.msra.mxu0 %v1427
    %1503 = vmatpush.xpose.msra.mxu0 %v1424
    %1504 = vmatmul.f32.gmra.mxu0 %v1483
    %v1505 = vpop.f32.mrf.mxu0
    %v1506 = vadd.f32 %v305, %v1505
    %1507 = vmatmul.f32.gmra.mxu0 %v1486
    %v1508 = vpop.f32.mrf.mxu0
    %v1509 = vadd.f32 %v306, %v1508
    %1510 = vdwg.mxu0
    %v1511 = vsel %vm124, %v1506, -inf
    %1512 = vmax.xlane.f32.xlu0 %v1511
    %v1513 = vpop.xlane.xlu0 %1512
    %v1514 = vsel %vm124, %v1509, -inf
    %1515 = vmax.xlane.f32.xlu0 %v1514
    %v1516 = vpop.xlane.xlu0 %1515
    %v1517 = vsub.f32 %v1506, %v1513
    %v1518 = vsub.f32 %v1509, %v1516
    %v1519 = vmul.f32 %v1517, 1.442695
    %v1520 = vpow.pop %v1519
    %v1521 = vmul.f32 %v1518, 1.442695
    %v1522 = vpow.pop %v1521
    %v1523 = vsel %vm124, %v1520, 0.0
    %1524 = vadd.xlane.f32.xlu0 %v1523
    %v1525 = vpop.xlane.xlu0 %1524
    %v1526 = vsel %vm124, %v1522, 0.0
    %1527 = vadd.xlane.f32.xlu0 %v1526
    %v1528 = vpop.xlane.xlu0 %1527
    %v1529 = vrcp.pop %v1525
    %v1530 = vrcp.pop %v1528
    %v1531 = vmul.f32 %v1520, %v1529
    %v1532 = vmul.f32 %v1522, %v1530
    %v1533 = vmul.f32 %v1407, %v81
    %v1534 = vmul.f32 %v1410, %v81
    %v1535 = vmul.f32 %v1413, %v81
    %v1537 = vsel %vm124, %v1531, 0
    %v1540 = vsel %vm124, %v1532, 0
    %v1543 = vsel %vm131, %v1535, 0
    %1545 = vmatpush.msra.mxu0 0.0
    %1546 = vmatpush.msra.mxu0 0.0
    %1547 = vmatpush.msra.mxu0 0.0
    %1548 = vmatpush.msra.mxu0 0.0
    %1549 = vmatpush.msra.mxu0 0.0
    %1550 = vmatpush.msra.mxu0 0.0
    %1551 = vmatpush.msra.mxu0 0.0
    %1552 = vmatpush.msra.mxu0 0.0
    %1553 = vmatpush.msra.mxu0 0.0
    %1554 = vmatpush.msra.mxu0 0.0
    %1555 = vmatpush.msra.mxu0 0.0
    %1556 = vmatpush.msra.mxu0 0.0
    %1557 = vmatpush.msra.mxu0 0.0
    %1558 = vmatpush.msra.mxu0 %v1543
    %1559 = vmatpush.msra.mxu0 %v1534
    %1560 = vmatpush.msra.mxu0 %v1533
    %1561 = vmatmul.f32.gmra.mxu0 %v1537
    %v1562 = vpop.f32.mrf.mxu0
    %v1563 = vadd.f32 0.0, %v1562
    %1564 = vmatmul.f32.gmra.mxu0 %v1540
    %v1565 = vpop.f32.mrf.mxu0
    %v1566 = vadd.f32 0.0, %v1565
    %1567 = vdwg.mxu0
    %v1569 = vsel %vm124, %v1475, 0
    %v1572 = vsel %vm124, %v1476, 0
    %v1575 = vsel %vm131, %v1479, 0
    %1577 = vmatpush.msra.mxu0 0.0
    %1578 = vmatpush.msra.mxu0 0.0
    %1579 = vmatpush.msra.mxu0 0.0
    %1580 = vmatpush.msra.mxu0 0.0
    %1581 = vmatpush.msra.mxu0 0.0
    %1582 = vmatpush.msra.mxu0 0.0
    %1583 = vmatpush.msra.mxu0 0.0
    %1584 = vmatpush.msra.mxu0 0.0
    %1585 = vmatpush.msra.mxu0 0.0
    %1586 = vmatpush.msra.mxu0 0.0
    %1587 = vmatpush.msra.mxu0 0.0
    %1588 = vmatpush.msra.mxu0 0.0
    %1589 = vmatpush.msra.mxu0 0.0
    %1590 = vmatpush.msra.mxu0 %v1575
    %1591 = vmatpush.msra.mxu0 %v1478
    %1592 = vmatpush.msra.mxu0 %v1477
    %1593 = vmatmul.f32.gmra.mxu0 %v1569
    %v1594 = vpop.f32.mrf.mxu0
    %v1595 = vadd.f32 %v1563, %v1594
    %1596 = vmatmul.f32.gmra.mxu0 %v1572
    %v1597 = vpop.f32.mrf.mxu0
    %v1598 = vadd.f32 %v1566, %v1597
    %1599 = vdwg.mxu0
    %v1600 = vmul.f32 %v1331, %v96
    %v1601 = vmul.f32 %v1334, %v96
    %v1603 = vsel %vm340, %v1600, 0
    %v1606 = vsel %vm340, %v1601, 0
    %1608 = vmatpush.xpose.msra.mxu0 0.0
    %1609 = vmatpush.xpose.msra.mxu0 0.0
    %1610 = vmatpush.xpose.msra.mxu0 0.0
    %1611 = vmatpush.xpose.msra.mxu0 0.0
    %1612 = vmatpush.xpose.msra.mxu0 0.0
    %1613 = vmatpush.xpose.msra.mxu0 0.0
    %1614 = vmatpush.xpose.msra.mxu0 0.0
    %1615 = vmatpush.xpose.msra.mxu0 0.0
    %1616 = vmatpush.xpose.msra.mxu0 0.0
    %1617 = vmatpush.xpose.msra.mxu0 0.0
    %1618 = vmatpush.xpose.msra.mxu0 0.0
    %1619 = vmatpush.xpose.msra.mxu0 0.0
    %1620 = vmatpush.xpose.msra.mxu0 0.0
    %1621 = vmatpush.xpose.msra.mxu0 %v1430
    %1622 = vmatpush.xpose.msra.mxu0 %v1427
    %1623 = vmatpush.xpose.msra.mxu0 %v1424
    %1624 = vmatmul.f32.gmra.mxu0 %v1603
    %v1625 = vpop.f32.mrf.mxu0
    %v1626 = vadd.f32 %v305, %v1625
    %1627 = vmatmul.f32.gmra.mxu0 %v1606
    %v1628 = vpop.f32.mrf.mxu0
    %v1629 = vadd.f32 %v306, %v1628
    %1630 = vdwg.mxu0
    %v1631 = vsel %vm124, %v1626, -inf
    %1632 = vmax.xlane.f32.xlu0 %v1631
    %v1633 = vpop.xlane.xlu0 %1632
    %v1634 = vsel %vm124, %v1629, -inf
    %1635 = vmax.xlane.f32.xlu0 %v1634
    %v1636 = vpop.xlane.xlu0 %1635
    %v1637 = vsub.f32 %v1626, %v1633
    %v1638 = vsub.f32 %v1629, %v1636
    %v1639 = vmul.f32 %v1637, 1.442695
    %v1640 = vpow.pop %v1639
    %v1641 = vmul.f32 %v1638, 1.442695
    %v1642 = vpow.pop %v1641
    %v1643 = vsel %vm124, %v1640, 0.0
    %1644 = vadd.xlane.f32.xlu0 %v1643
    %v1645 = vpop.xlane.xlu0 %1644
    %v1646 = vsel %vm124, %v1642, 0.0
    %1647 = vadd.xlane.f32.xlu0 %v1646
    %v1648 = vpop.xlane.xlu0 %1647
    %v1649 = vrcp.pop %v1645
    %v1650 = vrcp.pop %v1648
    %v1651 = vmul.f32 %v1640, %v1649
    %v1652 = vmul.f32 %v1642, %v1650
    %v1653 = vmul.f32 %v1407, %v85
    %v1654 = vmul.f32 %v1410, %v85
    %v1655 = vmul.f32 %v1413, %v85
    %v1657 = vsel %vm124, %v1651, 0
    %v1660 = vsel %vm124, %v1652, 0
    %v1663 = vsel %vm131, %v1655, 0
    %1665 = vmatpush.msra.mxu0 0.0
    %1666 = vmatpush.msra.mxu0 0.0
    %1667 = vmatpush.msra.mxu0 0.0
    %1668 = vmatpush.msra.mxu0 0.0
    %1669 = vmatpush.msra.mxu0 0.0
    %1670 = vmatpush.msra.mxu0 0.0
    %1671 = vmatpush.msra.mxu0 0.0
    %1672 = vmatpush.msra.mxu0 0.0
    %1673 = vmatpush.msra.mxu0 0.0
    %1674 = vmatpush.msra.mxu0 0.0
    %1675 = vmatpush.msra.mxu0 0.0
    %1676 = vmatpush.msra.mxu0 0.0
    %1677 = vmatpush.msra.mxu0 0.0
    %1678 = vmatpush.msra.mxu0 %v1663
    %1679 = vmatpush.msra.mxu0 %v1654
    %1680 = vmatpush.msra.mxu0 %v1653
    %1681 = vmatmul.f32.gmra.mxu0 %v1657
    %v1682 = vpop.f32.mrf.mxu0
    %v1683 = vadd.f32 0.0, %v1682
    %1684 = vmatmul.f32.gmra.mxu0 %v1660
    %v1685 = vpop.f32.mrf.mxu0
    %v1686 = vadd.f32 0.0, %v1685
    %1687 = vdwg.mxu0
    %v1688 = vadd.f32 %v1595, %v1683
    %v1689 = vadd.f32 %v1598, %v1686
    %v1690 = vmul.f32 %v1331, %v97
    %v1691 = vmul.f32 %v1334, %v97
    %v1693 = vsel %vm340, %v1690, 0
    %v1696 = vsel %vm340, %v1691, 0
    %1698 = vmatpush.xpose.msra.mxu0 0.0
    %1699 = vmatpush.xpose.msra.mxu0 0.0
    %1700 = vmatpush.xpose.msra.mxu0 0.0
    %1701 = vmatpush.xpose.msra.mxu0 0.0
    %1702 = vmatpush.xpose.msra.mxu0 0.0
    %1703 = vmatpush.xpose.msra.mxu0 0.0
    %1704 = vmatpush.xpose.msra.mxu0 0.0
    %1705 = vmatpush.xpose.msra.mxu0 0.0
    %1706 = vmatpush.xpose.msra.mxu0 0.0
    %1707 = vmatpush.xpose.msra.mxu0 0.0
    %1708 = vmatpush.xpose.msra.mxu0 0.0
    %1709 = vmatpush.xpose.msra.mxu0 0.0
    %1710 = vmatpush.xpose.msra.mxu0 0.0
    %1711 = vmatpush.xpose.msra.mxu0 %v1430
    %1712 = vmatpush.xpose.msra.mxu0 %v1427
    %1713 = vmatpush.xpose.msra.mxu0 %v1424
    %1714 = vmatmul.f32.gmra.mxu0 %v1693
    %v1715 = vpop.f32.mrf.mxu0
    %v1716 = vadd.f32 %v305, %v1715
    %1717 = vmatmul.f32.gmra.mxu0 %v1696
    %v1718 = vpop.f32.mrf.mxu0
    %v1719 = vadd.f32 %v306, %v1718
    %1720 = vdwg.mxu0
    %v1721 = vsel %vm124, %v1716, -inf
    %1722 = vmax.xlane.f32.xlu0 %v1721
    %v1723 = vpop.xlane.xlu0 %1722
    %v1724 = vsel %vm124, %v1719, -inf
    %1725 = vmax.xlane.f32.xlu0 %v1724
    %v1726 = vpop.xlane.xlu0 %1725
    %v1727 = vsub.f32 %v1716, %v1723
    %v1728 = vsub.f32 %v1719, %v1726
    %v1729 = vmul.f32 %v1727, 1.442695
    %v1730 = vpow.pop %v1729
    %v1731 = vmul.f32 %v1728, 1.442695
    %v1732 = vpow.pop %v1731
    %v1733 = vsel %vm124, %v1730, 0.0
    %1734 = vadd.xlane.f32.xlu0 %v1733
    %v1735 = vpop.xlane.xlu0 %1734
    %v1736 = vsel %vm124, %v1732, 0.0
    %1737 = vadd.xlane.f32.xlu0 %v1736
    %v1738 = vpop.xlane.xlu0 %1737
    %v1739 = vrcp.pop %v1735
    %v1740 = vrcp.pop %v1738
    %v1741 = vmul.f32 %v1730, %v1739
    %v1742 = vmul.f32 %v1732, %v1740
    %v1743 = vmul.f32 %v1407, %v89
    %v1744 = vmul.f32 %v1410, %v89
    %v1745 = vmul.f32 %v1413, %v89
    %v1747 = vsel %vm124, %v1741, 0
    %v1750 = vsel %vm124, %v1742, 0
    %v1753 = vsel %vm131, %v1745, 0
    %1755 = vmatpush.msra.mxu0 0.0
    %1756 = vmatpush.msra.mxu0 0.0
    %1757 = vmatpush.msra.mxu0 0.0
    %1758 = vmatpush.msra.mxu0 0.0
    %1759 = vmatpush.msra.mxu0 0.0
    %1760 = vmatpush.msra.mxu0 0.0
    %1761 = vmatpush.msra.mxu0 0.0
    %1762 = vmatpush.msra.mxu0 0.0
    %1763 = vmatpush.msra.mxu0 0.0
    %1764 = vmatpush.msra.mxu0 0.0
    %1765 = vmatpush.msra.mxu0 0.0
    %1766 = vmatpush.msra.mxu0 0.0
    %1767 = vmatpush.msra.mxu0 0.0
    %1768 = vmatpush.msra.mxu0 %v1753
    %1769 = vmatpush.msra.mxu0 %v1744
    %1770 = vmatpush.msra.mxu0 %v1743
    %1771 = vmatmul.f32.gmra.mxu0 %v1747
    %v1772 = vpop.f32.mrf.mxu0
    %v1773 = vadd.f32 0.0, %v1772
    %1774 = vmatmul.f32.gmra.mxu0 %v1750
    %v1775 = vpop.f32.mrf.mxu0
    %v1776 = vadd.f32 0.0, %v1775
    %1777 = vdwg.mxu0
    %v1778 = vadd.f32 %v1688, %v1773
    %v1779 = vadd.f32 %v1689, %v1776
    %v1780 = vmul.f32 %v1331, %v98
    %v1781 = vmul.f32 %v1334, %v98
    %v1783 = vsel %vm340, %v1780, 0
    %v1786 = vsel %vm340, %v1781, 0
    %1788 = vmatpush.xpose.msra.mxu0 0.0
    %1789 = vmatpush.xpose.msra.mxu0 0.0
    %1790 = vmatpush.xpose.msra.mxu0 0.0
    %1791 = vmatpush.xpose.msra.mxu0 0.0
    %1792 = vmatpush.xpose.msra.mxu0 0.0
    %1793 = vmatpush.xpose.msra.mxu0 0.0
    %1794 = vmatpush.xpose.msra.mxu0 0.0
    %1795 = vmatpush.xpose.msra.mxu0 0.0
    %1796 = vmatpush.xpose.msra.mxu0 0.0
    %1797 = vmatpush.xpose.msra.mxu0 0.0
    %1798 = vmatpush.xpose.msra.mxu0 0.0
    %1799 = vmatpush.xpose.msra.mxu0 0.0
    %1800 = vmatpush.xpose.msra.mxu0 0.0
    %1801 = vmatpush.xpose.msra.mxu0 %v1430
    %1802 = vmatpush.xpose.msra.mxu0 %v1427
    %1803 = vmatpush.xpose.msra.mxu0 %v1424
    %1804 = vmatmul.f32.gmra.mxu0 %v1783
    %v1805 = vpop.f32.mrf.mxu0
    %v1806 = vadd.f32 %v305, %v1805
    %1807 = vmatmul.f32.gmra.mxu0 %v1786
    %v1808 = vpop.f32.mrf.mxu0
    %v1809 = vadd.f32 %v306, %v1808
    %1810 = vdwg.mxu0
    %v1811 = vsel %vm124, %v1806, -inf
    %1812 = vmax.xlane.f32.xlu0 %v1811
    %v1813 = vpop.xlane.xlu0 %1812
    %v1814 = vsel %vm124, %v1809, -inf
    %1815 = vmax.xlane.f32.xlu0 %v1814
    %v1816 = vpop.xlane.xlu0 %1815
    %v1817 = vsub.f32 %v1806, %v1813
    %v1818 = vsub.f32 %v1809, %v1816
    %v1819 = vmul.f32 %v1817, 1.442695
    %v1820 = vpow.pop %v1819
    %v1821 = vmul.f32 %v1818, 1.442695
    %v1822 = vpow.pop %v1821
    %v1823 = vsel %vm124, %v1820, 0.0
    %1824 = vadd.xlane.f32.xlu0 %v1823
    %v1825 = vpop.xlane.xlu0 %1824
    %v1826 = vsel %vm124, %v1822, 0.0
    %1827 = vadd.xlane.f32.xlu0 %v1826
    %v1828 = vpop.xlane.xlu0 %1827
    %v1829 = vrcp.pop %v1825
    %v1830 = vrcp.pop %v1828
    %v1831 = vmul.f32 %v1820, %v1829
    %v1832 = vmul.f32 %v1822, %v1830
    %v1833 = vmul.f32 %v1407, %v93
    %v1834 = vmul.f32 %v1410, %v93
    %v1835 = vmul.f32 %v1413, %v93
    %v1837 = vsel %vm124, %v1831, 0
    %v1840 = vsel %vm124, %v1832, 0
    %v1843 = vsel %vm131, %v1835, 0
    %1845 = vmatpush.msra.mxu0 0.0
    %1846 = vmatpush.msra.mxu0 0.0
    %1847 = vmatpush.msra.mxu0 0.0
    %1848 = vmatpush.msra.mxu0 0.0
    %1849 = vmatpush.msra.mxu0 0.0
    %1850 = vmatpush.msra.mxu0 0.0
    %1851 = vmatpush.msra.mxu0 0.0
    %1852 = vmatpush.msra.mxu0 0.0
    %1853 = vmatpush.msra.mxu0 0.0
    %1854 = vmatpush.msra.mxu0 0.0
    %1855 = vmatpush.msra.mxu0 0.0
    %1856 = vmatpush.msra.mxu0 0.0
    %1857 = vmatpush.msra.mxu0 0.0
    %1858 = vmatpush.msra.mxu0 %v1843
    %1859 = vmatpush.msra.mxu0 %v1834
    %1860 = vmatpush.msra.mxu0 %v1833
    %1861 = vmatmul.f32.gmra.mxu0 %v1837
    %v1862 = vpop.f32.mrf.mxu0
    %v1863 = vadd.f32 0.0, %v1862
    %1864 = vmatmul.f32.gmra.mxu0 %v1840
    %v1865 = vpop.f32.mrf.mxu0
    %v1866 = vadd.f32 0.0, %v1865
    %1867 = vdwg.mxu0
    %v1868 = vadd.f32 %v1778, %v1863
    %v1869 = vadd.f32 %v1779, %v1866
    %s1870 = scalar_lea.vmem %s6, 224
    %v1871 = vld [vmem:[%s1870] sm:$0xff]
    %v1872 = vld [vmem:[%s1870 + $0x8] sm:$0xff]
    %v1873 = vld [vmem:[%s1870 + $0x10] sm:$0xff]
    %v1874 = vld [vmem:[%s1870 + $0x18] sm:$0x3f]
    %v1875 = vperm.slane %v1238, 0
    %v1877 = vsel %vm340, %v1868, 0
    %v1880 = vsel %vm340, %v1869, 0
    %v1883 = vsel %vm491, %v1874, 0
    %1885 = vmatpush.msra.mxu0 0.0
    %1886 = vmatpush.msra.mxu0 0.0
    %1887 = vmatpush.msra.mxu0 0.0
    %1888 = vmatpush.msra.mxu0 0.0
    %1889 = vmatpush.msra.mxu0 0.0
    %1890 = vmatpush.msra.mxu0 0.0
    %1891 = vmatpush.msra.mxu0 0.0
    %1892 = vmatpush.msra.mxu0 0.0
    %1893 = vmatpush.msra.mxu0 0.0
    %1894 = vmatpush.msra.mxu0 0.0
    %1895 = vmatpush.msra.mxu0 0.0
    %1896 = vmatpush.msra.mxu0 0.0
    %1897 = vmatpush.msra.mxu0 %v1883
    %1898 = vmatpush.msra.mxu0 %v1873
    %1899 = vmatpush.msra.mxu0 %v1872
    %1900 = vmatpush.msra.mxu0 %v1871
    %1901 = vmatmul.f32.gmra.mxu0 %v1877
    %v1902 = vpop.f32.mrf.mxu0
    %v1903 = vadd.f32 %v1875, %v1902
    %1904 = vmatmul.f32.gmra.mxu0 %v1880
    %v1905 = vpop.f32.mrf.mxu0
    %v1906 = vadd.f32 %v1875, %v1905
    %1907 = vdwg.mxu0
    %v1908 = vadd.f32 %v1230, %v1903
    %v1909 = vadd.f32 %v1231, %v1906
    %v1910 = vsel %vm340, %v1908, 0.0
    %1911 = vadd.xlane.f32.xlu0 %v1910
    %v1912 = vpop.xlane.xlu0 %1911
    %v1913 = vsel %vm340, %v1909, 0.0
    %1914 = vadd.xlane.f32.xlu0 %v1913
    %v1915 = vpop.xlane.xlu0 %1914
    %v1916 = vmul.f32 %v1912, %v357
    %v1917 = vmul.f32 %v1915, %v357
    %v1918 = vsub.f32 %v1908, %v1916
    %v1919 = vsub.f32 %v1909, %v1917
    %v1920 = vmul.f32 %v1918, %v1918
    %v1921 = vmul.f32 %v1919, %v1919
    %v1922 = vsel %vm340, %v1920, 0.0
    %1923 = vadd.xlane.f32.xlu0 %v1922
    %v1924 = vpop.xlane.xlu0 %1923
    %v1925 = vsel %vm340, %v1921, 0.0
    %1926 = vadd.xlane.f32.xlu0 %v1925
    %v1927 = vpop.xlane.xlu0 %1926
    %v1928 = vmul.f32 %v1924, %v357
    %v1929 = vmul.f32 %v1927, %v357
    %v1930 = vadd.f32 %v1928, 1e-05
    %v1931 = vadd.f32 %v1929, 1e-05
    %v1932 = vrsqrt.pop %v1930
    %v1933 = vmul.f32 %v1932, %v1930
    %v1934 = vmul.f32 %v1933, %v1932
    %v1935 = vmul.f32 0.5, %v1934
    %v1936 = vsub.f32 1.5, %v1935
    %v1937 = vmul.f32 %v1932, %v1936
    %vm1938 = vweird.f32 %v1930
    %vm1939 = vweird.f32 %v1932
    %vm1940 = vmor %vm1938, %vm1939
    %v1941 = vsel %vm1940, %v1932, %v1937
    %v1942 = vrsqrt.pop %v1931
    %v1943 = vmul.f32 %v1942, %v1931
    %v1944 = vmul.f32 %v1943, %v1942
    %v1945 = vmul.f32 0.5, %v1944
    %v1946 = vsub.f32 1.5, %v1945
    %v1947 = vmul.f32 %v1942, %v1946
    %vm1948 = vweird.f32 %v1931
    %vm1949 = vweird.f32 %v1942
    %vm1950 = vmor %vm1948, %vm1949
    %v1951 = vsel %vm1950, %v1942, %v1947
    %v1952 = vmul.f32 %v1918, %v1941
    %v1953 = vmul.f32 %v1919, %v1951
    %v1954 = vperm.slane %v1239, 0
    %v1955 = vmul.f32 %v1952, %v1954
    %v1956 = vmul.f32 %v1953, %v1954
    %v1957 = vperm.slane %v1240, 0
    %v1958 = vadd.f32 %v1955, %v1957
    %v1959 = vadd.f32 %v1956, %v1957
    %s1960 = scalar_lea.vmem %s7, 32
    %v1961 = vld [vmem:[%s1960] sm:$0xff]
    %v1962 = vld [vmem:[%s1960 + $0x8] sm:$0xff]
    %v1963 = vld [vmem:[%s1960 + $0x10] sm:$0xff]
    %v1964 = vld [vmem:[%s1960 + $0x18] sm:$0x3f]
    %s1965 = scalar_lea.vmem %s10, 1
    %v1966 = vld [vmem:[%s1965] sm:$0x1]
    %v1968 = vperm.slane %v1966, 0
    %v1971 = vsel %vm340, %v1958, 0
    %v1974 = vsel %vm340, %v1959, 0
    %v1977 = vsel %vm491, %v1964, 0
    %1979 = vmatpush.msra.mxu0 0.0
    %1980 = vmatpush.msra.mxu0 0.0
    %1981 = vmatpush.msra.mxu0 0.0
    %1982 = vmatpush.msra.mxu0 0.0
    %1983 = vmatpush.msra.mxu0 0.0
    %1984 = vmatpush.msra.mxu0 0.0
    %1985 = vmatpush.msra.mxu0 0.0
    %1986 = vmatpush.msra.mxu0 0.0
    %1987 = vmatpush.msra.mxu0 0.0
    %1988 = vmatpush.msra.mxu0 0.0
    %1989 = vmatpush.msra.mxu0 0.0
    %1990 = vmatpush.msra.mxu0 0.0
    %1991 = vmatpush.msra.mxu0 %v1977
    %1992 = vmatpush.msra.mxu0 %v1963
    %1993 = vmatpush.msra.mxu0 %v1962
    %1994 = vmatpush.msra.mxu0 %v1961
    %1995 = vmatmul.f32.gmra.mxu0 %v1971
    %v1996 = vpop.f32.mrf.mxu0
    %v1997 = vadd.f32 %v1968, %v1996
    %1998 = vmatmul.f32.gmra.mxu0 %v1974
    %v1999 = vpop.f32.mrf.mxu0
    %v2000 = vadd.f32 %v1968, %v1999
    %2001 = vdwg.mxu0
    %v2002 = vmax.f32 %v1997, 0.0
    %v2003 = vmax.f32 %v2000, 0.0
    %s2004 = scalar_lea.vmem %s8, 120
    %v2005 = vld [vmem:[%s2004] sm:$0xff]
    %v2006 = vld [vmem:[%s2004 + $0x8] sm:$0xff]
    %v2007 = vld [vmem:[%s2004 + $0x10] sm:$0xff]
    %v2008 = vld [vmem:[%s2004 + $0x18] sm:$0xff]
    %v2009 = vld [vmem:[%s2004 + $0x20] sm:$0xff]
    %v2010 = vld [vmem:[%s2004 + $0x28] sm:$0xff]
    %v2011 = vld [vmem:[%s2004 + $0x30] sm:$0xff]
    %v2012 = vld [vmem:[%s2004 + $0x38] sm:$0xff]
    %v2013 = vld [vmem:[%s2004 + $0x40] sm:$0xff]
    %v2014 = vld [vmem:[%s2004 + $0x48] sm:$0xff]
    %v2015 = vld [vmem:[%s2004 + $0x50] sm:$0xff]
    %v2016 = vld [vmem:[%s2004 + $0x58] sm:$0xff]
    %v2017 = vld [vmem:[%s2004 + $0x60] sm:$0xff]
    %v2018 = vld [vmem:[%s2004 + $0x68] sm:$0xff]
    %v2019 = vld [vmem:[%s2004 + $0x70] sm:$0xff]
    %v2020 = vperm.slane %v1241, 0
    %v2022 = vsel %vm1200, %v2002, 0
    %v2025 = vsel %vm1200, %v2003, 0
    %2027 = vmatpush.msra.mxu0 0.0
    %2028 = vmatpush.msra.mxu0 %v2019
    %2029 = vmatpush.msra.mxu0 %v2018
    %2030 = vmatpush.msra.mxu0 %v2017
    %2031 = vmatpush.msra.mxu0 %v2016
    %2032 = vmatpush.msra.mxu0 %v2015
    %2033 = vmatpush.msra.mxu0 %v2014
    %2034 = vmatpush.msra.mxu0 %v2013
    %2035 = vmatpush.msra.mxu0 %v2012
    %2036 = vmatpush.msra.mxu0 %v2011
    %2037 = vmatpush.msra.mxu0 %v2010
    %2038 = vmatpush.msra.mxu0 %v2009
    %2039 = vmatpush.msra.mxu0 %v2008
    %2040 = vmatpush.msra.mxu0 %v2007
    %2041 = vmatpush.msra.mxu0 %v2006
    %2042 = vmatpush.msra.mxu0 %v2005
    %2043 = vmatmul.f32.gmra.mxu0 %v2022
    %v2044 = vpop.f32.mrf.mxu0
    %v2045 = vadd.f32 %v2020, %v2044
    %2046 = vmatmul.f32.gmra.mxu0 %v2025
    %v2047 = vpop.f32.mrf.mxu0
    %v2048 = vadd.f32 %v2020, %v2047
    %2049 = vdwg.mxu0
    %v2050 = vadd.f32 %v1908, %v2045
    %v2051 = vadd.f32 %v1909, %v2048
    %v2052 = vld [vmem:[%s11] sm:$0x1]
    %v2053 = vld [vmem:[%s11 + $0x1] sm:$0x1]
    %v2054 = vsel %vm340, %v2050, 0.0
    %2055 = vadd.xlane.f32.xlu0 %v2054
    %v2056 = vpop.xlane.xlu0 %2055
    %v2057 = vsel %vm340, %v2051, 0.0
    %2058 = vadd.xlane.f32.xlu0 %v2057
    %v2059 = vpop.xlane.xlu0 %2058
    %v2060 = vmul.f32 %v2056, %v357
    %v2061 = vmul.f32 %v2059, %v357
    %v2062 = vsub.f32 %v2050, %v2060
    %v2063 = vsub.f32 %v2051, %v2061
    %v2064 = vmul.f32 %v2062, %v2062
    %v2065 = vmul.f32 %v2063, %v2063
    %v2066 = vsel %vm340, %v2064, 0.0
    %2067 = vadd.xlane.f32.xlu0 %v2066
    %v2068 = vpop.xlane.xlu0 %2067
    %v2069 = vsel %vm340, %v2065, 0.0
    %2070 = vadd.xlane.f32.xlu0 %v2069
    %v2071 = vpop.xlane.xlu0 %2070
    %v2072 = vmul.f32 %v2068, %v357
    %v2073 = vmul.f32 %v2071, %v357
    %v2074 = vadd.f32 %v2072, 1e-05
    %v2075 = vadd.f32 %v2073, 1e-05
    %v2076 = vrsqrt.pop %v2074
    %v2077 = vmul.f32 %v2076, %v2074
    %v2078 = vmul.f32 %v2077, %v2076
    %v2079 = vmul.f32 0.5, %v2078
    %v2080 = vsub.f32 1.5, %v2079
    %v2081 = vmul.f32 %v2076, %v2080
    %vm2082 = vweird.f32 %v2074
    %vm2083 = vweird.f32 %v2076
    %vm2084 = vmor %vm2082, %vm2083
    %v2085 = vsel %vm2084, %v2076, %v2081
    %v2086 = vrsqrt.pop %v2075
    %v2087 = vmul.f32 %v2086, %v2075
    %v2088 = vmul.f32 %v2087, %v2086
    %v2089 = vmul.f32 0.5, %v2088
    %v2090 = vsub.f32 1.5, %v2089
    %v2091 = vmul.f32 %v2086, %v2090
    %vm2092 = vweird.f32 %v2075
    %vm2093 = vweird.f32 %v2086
    %vm2094 = vmor %vm2092, %vm2093
    %v2095 = vsel %vm2094, %v2086, %v2091
    %v2096 = vmul.f32 %v2062, %v2085
    %v2097 = vmul.f32 %v2063, %v2095
    %v2098 = vperm.slane %v2052, 0
    %v2099 = vmul.f32 %v2096, %v2098
    %v2100 = vmul.f32 %v2097, %v2098
    %v2101 = vperm.slane %v2053, 0
    %v2102 = vadd.f32 %v2099, %v2101
    %v2103 = vadd.f32 %v2100, %v2101
    %v2104 = vsel %vm340, %v269, 0.0
    %2105 = vadd.xlane.f32.xlu0 %v2104
    %v2106 = vpop.xlane.xlu0 %2105
    %v2107 = vsel %vm340, %v270, 0.0
    %2108 = vadd.xlane.f32.xlu0 %v2107
    %v2109 = vpop.xlane.xlu0 %2108
    %v2110 = vsel %vm340, %v271, 0.0
    %2111 = vadd.xlane.f32.xlu0 %v2110
    %v2112 = vpop.xlane.xlu0 %2111
    %v2113 = vmul.f32 %v2106, %v357
    %v2114 = vmul.f32 %v2109, %v357
    %v2115 = vmul.f32 %v2112, %v357
    %v2116 = vsub.f32 %v269, %v2113
    %v2117 = vsub.f32 %v270, %v2114
    %v2118 = vsub.f32 %v271, %v2115
    %v2119 = vmul.f32 %v2116, %v2116
    %v2120 = vmul.f32 %v2117, %v2117
    %v2121 = vmul.f32 %v2118, %v2118
    %v2122 = vsel %vm340, %v2119, 0.0
    %2123 = vadd.xlane.f32.xlu0 %v2122
    %v2124 = vpop.xlane.xlu0 %2123
    %v2125 = vsel %vm340, %v2120, 0.0
    %2126 = vadd.xlane.f32.xlu0 %v2125
    %v2127 = vpop.xlane.xlu0 %2126
    %v2128 = vsel %vm340, %v2121, 0.0
    %2129 = vadd.xlane.f32.xlu0 %v2128
    %v2130 = vpop.xlane.xlu0 %2129
    %v2131 = vmul.f32 %v2124, %v357
    %v2132 = vmul.f32 %v2127, %v357
    %v2133 = vmul.f32 %v2130, %v357
    %v2134 = vadd.f32 %v2131, 1e-05
    %v2135 = vadd.f32 %v2132, 1e-05
    %v2136 = vadd.f32 %v2133, 1e-05
    %v2137 = vrsqrt.pop %v2134
    %v2138 = vmul.f32 %v2137, %v2134
    %v2139 = vmul.f32 %v2138, %v2137
    %v2140 = vmul.f32 0.5, %v2139
    %v2141 = vsub.f32 1.5, %v2140
    %v2142 = vmul.f32 %v2137, %v2141
    %vm2143 = vweird.f32 %v2134
    %vm2144 = vweird.f32 %v2137
    %vm2145 = vmor %vm2143, %vm2144
    %v2146 = vsel %vm2145, %v2137, %v2142
    %v2147 = vrsqrt.pop %v2135
    %v2148 = vmul.f32 %v2147, %v2135
    %v2149 = vmul.f32 %v2148, %v2147
    %v2150 = vmul.f32 0.5, %v2149
    %v2151 = vsub.f32 1.5, %v2150
    %v2152 = vmul.f32 %v2147, %v2151
    %vm2153 = vweird.f32 %v2135
    %vm2154 = vweird.f32 %v2147
    %vm2155 = vmor %vm2153, %vm2154
    %v2156 = vsel %vm2155, %v2147, %v2152
    %v2157 = vrsqrt.pop %v2136
    %v2158 = vmul.f32 %v2157, %v2136
    %v2159 = vmul.f32 %v2158, %v2157
    %v2160 = vmul.f32 0.5, %v2159
    %v2161 = vsub.f32 1.5, %v2160
    %v2162 = vmul.f32 %v2157, %v2161
    %vm2163 = vweird.f32 %v2136
    %vm2164 = vweird.f32 %v2157
    %vm2165 = vmor %vm2163, %vm2164
    %v2166 = vsel %vm2165, %v2157, %v2162
    %v2167 = vmul.f32 %v2116, %v2146
    %v2168 = vmul.f32 %v2117, %v2156
    %v2169 = vmul.f32 %v2118, %v2166
    %s2170 = scalar_lea.vmem %s9, 32
    %v2171 = vld [vmem:[%s2170] sm:$0x1]
    %v2172 = vld [vmem:[%s2170 + $0x1] sm:$0x1]
    %v2173 = vld [vmem:[%s2170 + $0x2] sm:$0x1]
    %v2174 = vld [vmem:[%s2170 + $0x3] sm:$0x1]
    %v2175 = vld [vmem:[%s2170 + $0x4] sm:$0x1]
    %v2176 = vld [vmem:[%s2170 + $0x5] sm:$0x1]
    %v2177 = vld [vmem:[%s2170 + $0x6] sm:$0x1]
    %v2178 = vld [vmem:[%s2170 + $0x7] sm:$0x1]
    %v2179 = vld [vmem:[%s2170 + $0x8] sm:$0x1]
    %v2180 = vperm.slane %v2171, 0
    %v2181 = vmul.f32 %v466, %v2180
    %v2182 = vmul.f32 %v467, %v2180
    %v2183 = vperm.slane %v2172, 0
    %v2184 = vadd.f32 %v2181, %v2183
    %v2185 = vadd.f32 %v2182, %v2183
    %v2186 = vmul.f32 %v2167, %v2180
    %v2187 = vmul.f32 %v2168, %v2180
    %v2188 = vmul.f32 %v2169, %v2180
    %v2189 = vadd.f32 %v2186, %v2183
    %v2190 = vadd.f32 %v2187, %v2183
    %v2191 = vadd.f32 %v2188, %v2183
    %s2192 = scalar_lea.vmem %s6, 256
    %v2193 = vld [vmem:[%s2192] sm:$0xff]
    %v2194 = vld [vmem:[%s2192 + $0x8] sm:$0xff]
    %v2195 = vld [vmem:[%s2192 + $0x10] sm:$0xff]
    %v2196 = vld [vmem:[%s2192 + $0x18] sm:$0x3f]
    %v2197 = vperm.slane %v2173, 0
    %v2199 = vsel %vm340, %v2184, 0
    %v2202 = vsel %vm340, %v2185, 0
    %v2205 = vsel %vm491, %v2196, 0
    %2207 = vmatpush.msra.mxu0 0.0
    %2208 = vmatpush.msra.mxu0 0.0
    %2209 = vmatpush.msra.mxu0 0.0
    %2210 = vmatpush.msra.mxu0 0.0
    %2211 = vmatpush.msra.mxu0 0.0
    %2212 = vmatpush.msra.mxu0 0.0
    %2213 = vmatpush.msra.mxu0 0.0
    %2214 = vmatpush.msra.mxu0 0.0
    %2215 = vmatpush.msra.mxu0 0.0
    %2216 = vmatpush.msra.mxu0 0.0
    %2217 = vmatpush.msra.mxu0 0.0
    %2218 = vmatpush.msra.mxu0 0.0
    %2219 = vmatpush.msra.mxu0 %v2205
    %2220 = vmatpush.msra.mxu0 %v2195
    %2221 = vmatpush.msra.mxu0 %v2194
    %2222 = vmatpush.msra.mxu0 %v2193
    %2223 = vmatmul.f32.gmra.mxu0 %v2199
    %v2224 = vpop.f32.mrf.mxu0
    %v2225 = vadd.f32 %v2197, %v2224
    %2226 = vmatmul.f32.gmra.mxu0 %v2202
    %v2227 = vpop.f32.mrf.mxu0
    %v2228 = vadd.f32 %v2197, %v2227
    %2229 = vdwg.mxu0
    %s2230 = scalar_lea.vmem %s6, 288
    %v2231 = vld [vmem:[%s2230] sm:$0xff]
    %v2232 = vld [vmem:[%s2230 + $0x8] sm:$0xff]
    %v2233 = vld [vmem:[%s2230 + $0x10] sm:$0xff]
    %v2234 = vld [vmem:[%s2230 + $0x18] sm:$0x3f]
    %v2235 = vperm.slane %v2174, 0
    %v2237 = vsel %vm340, %v2189, 0
    %v2240 = vsel %vm340, %v2190, 0
    %v2243 = vsel %vm340, %v2191, 0
    %v2246 = vsel %vm491, %v2234, 0
    %2248 = vmatpush.msra.mxu0 0.0
    %2249 = vmatpush.msra.mxu0 0.0
    %2250 = vmatpush.msra.mxu0 0.0
    %2251 = vmatpush.msra.mxu0 0.0
    %2252 = vmatpush.msra.mxu0 0.0
    %2253 = vmatpush.msra.mxu0 0.0
    %2254 = vmatpush.msra.mxu0 0.0
    %2255 = vmatpush.msra.mxu0 0.0
    %2256 = vmatpush.msra.mxu0 0.0
    %2257 = vmatpush.msra.mxu0 0.0
    %2258 = vmatpush.msra.mxu0 0.0
    %2259 = vmatpush.msra.mxu0 0.0
    %2260 = vmatpush.msra.mxu0 %v2246
    %2261 = vmatpush.msra.mxu0 %v2233
    %2262 = vmatpush.msra.mxu0 %v2232
    %2263 = vmatpush.msra.mxu0 %v2231
    %2264 = vmatmul.f32.gmra.mxu0 %v2237
    %v2265 = vpop.f32.mrf.mxu0
    %v2266 = vadd.f32 %v2235, %v2265
    %2267 = vmatmul.f32.gmra.mxu0 %v2240
    %v2268 = vpop.f32.mrf.mxu0
    %v2269 = vadd.f32 %v2235, %v2268
    %2270 = vmatmul.f32.gmra.mxu0 %v2243
    %v2271 = vpop.f32.mrf.mxu0
    %v2272 = vadd.f32 %v2235, %v2271
    %2273 = vdwg.mxu0
    %s2274 = scalar_lea.vmem %s6, 320
    %v2275 = vld [vmem:[%s2274] sm:$0xff]
    %v2276 = vld [vmem:[%s2274 + $0x8] sm:$0xff]
    %v2277 = vld [vmem:[%s2274 + $0x10] sm:$0xff]
    %v2278 = vld [vmem:[%s2274 + $0x18] sm:$0x3f]
    %v2279 = vperm.slane %v2175, 0
    %v2281 = vsel %vm491, %v2278, 0
    %2283 = vmatpush.msra.mxu0 0.0
    %2284 = vmatpush.msra.mxu0 0.0
    %2285 = vmatpush.msra.mxu0 0.0
    %2286 = vmatpush.msra.mxu0 0.0
    %2287 = vmatpush.msra.mxu0 0.0
    %2288 = vmatpush.msra.mxu0 0.0
    %2289 = vmatpush.msra.mxu0 0.0
    %2290 = vmatpush.msra.mxu0 0.0
    %2291 = vmatpush.msra.mxu0 0.0
    %2292 = vmatpush.msra.mxu0 0.0
    %2293 = vmatpush.msra.mxu0 0.0
    %2294 = vmatpush.msra.mxu0 0.0
    %2295 = vmatpush.msra.mxu0 %v2281
    %2296 = vmatpush.msra.mxu0 %v2277
    %2297 = vmatpush.msra.mxu0 %v2276
    %2298 = vmatpush.msra.mxu0 %v2275
    %2299 = vmatmul.f32.gmra.mxu0 %v2237
    %v2300 = vpop.f32.mrf.mxu0
    %v2301 = vadd.f32 %v2279, %v2300
    %2302 = vmatmul.f32.gmra.mxu0 %v2240
    %v2303 = vpop.f32.mrf.mxu0
    %v2304 = vadd.f32 %v2279, %v2303
    %2305 = vmatmul.f32.gmra.mxu0 %v2243
    %v2306 = vpop.f32.mrf.mxu0
    %v2307 = vadd.f32 %v2279, %v2306
    %2308 = vdwg.mxu0
    %v2309 = vmul.f32 %v2225, %v94
    %v2310 = vmul.f32 %v2228, %v94
    %v2312 = vsel %vm340, %v2309, 0
    %v2315 = vsel %vm340, %v2310, 0
    %v2318 = vsel %vm340, %v2266, 0
    %v2321 = vsel %vm340, %v2269, 0
    %v2324 = vsel %vm340, %v2272, 0
    %2326 = vmatpush.xpose.msra.mxu0 0.0
    %2327 = vmatpush.xpose.msra.mxu0 0.0
    %2328 = vmatpush.xpose.msra.mxu0 0.0
    %2329 = vmatpush.xpose.msra.mxu0 0.0
    %2330 = vmatpush.xpose.msra.mxu0 0.0
    %2331 = vmatpush.xpose.msra.mxu0 0.0
    %2332 = vmatpush.xpose.msra.mxu0 0.0
    %2333 = vmatpush.xpose.msra.mxu0 0.0
    %2334 = vmatpush.xpose.msra.mxu0 0.0
    %2335 = vmatpush.xpose.msra.mxu0 0.0
    %2336 = vmatpush.xpose.msra.mxu0 0.0
    %2337 = vmatpush.xpose.msra.mxu0 0.0
    %2338 = vmatpush.xpose.msra.mxu0 0.0
    %2339 = vmatpush.xpose.msra.mxu0 %v2324
    %2340 = vmatpush.xpose.msra.mxu0 %v2321
    %2341 = vmatpush.xpose.msra.mxu0 %v2318
    %2342 = vmatmul.f32.gmra.mxu0 %v2312
    %v2343 = vpop.f32.mrf.mxu0
    %v2344 = vadd.f32 %v320, %v2343
    %2345 = vmatmul.f32.gmra.mxu0 %v2315
    %v2346 = vpop.f32.mrf.mxu0
    %v2347 = vadd.f32 %v321, %v2346
    %2348 = vdwg.mxu0
    %v2349 = vsel %vm164, %v2344, -inf
    %2350 = vmax.xlane.f32.xlu0 %v2349
    %v2351 = vpop.xlane.xlu0 %2350
    %v2352 = vsel %vm164, %v2347, -inf
    %2353 = vmax.xlane.f32.xlu0 %v2352
    %v2354 = vpop.xlane.xlu0 %2353
    %v2355 = vsub.f32 %v2344, %v2351
    %v2356 = vsub.f32 %v2347, %v2354
    %v2357 = vmul.f32 %v2355, 1.442695
    %v2358 = vpow.pop %v2357
    %v2359 = vmul.f32 %v2356, 1.442695
    %v2360 = vpow.pop %v2359
    %v2361 = vsel %vm164, %v2358, 0.0
    %2362 = vadd.xlane.f32.xlu0 %v2361
    %v2363 = vpop.xlane.xlu0 %2362
    %v2364 = vsel %vm164, %v2360, 0.0
    %2365 = vadd.xlane.f32.xlu0 %v2364
    %v2366 = vpop.xlane.xlu0 %2365
    %v2367 = vrcp.pop %v2363
    %v2368 = vrcp.pop %v2366
    %v2369 = vmul.f32 %v2358, %v2367
    %v2370 = vmul.f32 %v2360, %v2368
    %v2371 = vmul.f32 %v2301, %v77
    %v2372 = vmul.f32 %v2304, %v77
    %v2373 = vmul.f32 %v2307, %v77
    %v2374 = vmul.f32 %v2225, %v95
    %v2375 = vmul.f32 %v2228, %v95
    %v2377 = vsel %vm340, %v2374, 0
    %v2380 = vsel %vm340, %v2375, 0
    %2382 = vmatpush.xpose.msra.mxu0 0.0
    %2383 = vmatpush.xpose.msra.mxu0 0.0
    %2384 = vmatpush.xpose.msra.mxu0 0.0
    %2385 = vmatpush.xpose.msra.mxu0 0.0
    %2386 = vmatpush.xpose.msra.mxu0 0.0
    %2387 = vmatpush.xpose.msra.mxu0 0.0
    %2388 = vmatpush.xpose.msra.mxu0 0.0
    %2389 = vmatpush.xpose.msra.mxu0 0.0
    %2390 = vmatpush.xpose.msra.mxu0 0.0
    %2391 = vmatpush.xpose.msra.mxu0 0.0
    %2392 = vmatpush.xpose.msra.mxu0 0.0
    %2393 = vmatpush.xpose.msra.mxu0 0.0
    %2394 = vmatpush.xpose.msra.mxu0 0.0
    %2395 = vmatpush.xpose.msra.mxu0 %v2324
    %2396 = vmatpush.xpose.msra.mxu0 %v2321
    %2397 = vmatpush.xpose.msra.mxu0 %v2318
    %2398 = vmatmul.f32.gmra.mxu0 %v2377
    %v2399 = vpop.f32.mrf.mxu0
    %v2400 = vadd.f32 %v320, %v2399
    %2401 = vmatmul.f32.gmra.mxu0 %v2380
    %v2402 = vpop.f32.mrf.mxu0
    %v2403 = vadd.f32 %v321, %v2402
    %2404 = vdwg.mxu0
    %v2405 = vsel %vm164, %v2400, -inf
    %2406 = vmax.xlane.f32.xlu0 %v2405
    %v2407 = vpop.xlane.xlu0 %2406
    %v2408 = vsel %vm164, %v2403, -inf
    %2409 = vmax.xlane.f32.xlu0 %v2408
    %v2410 = vpop.xlane.xlu0 %2409
    %v2411 = vsub.f32 %v2400, %v2407
    %v2412 = vsub.f32 %v2403, %v2410
    %v2413 = vmul.f32 %v2411, 1.442695
    %v2414 = vpow.pop %v2413
    %v2415 = vmul.f32 %v2412, 1.442695
    %v2416 = vpow.pop %v2415
    %v2417 = vsel %vm164, %v2414, 0.0
    %2418 = vadd.xlane.f32.xlu0 %v2417
    %v2419 = vpop.xlane.xlu0 %2418
    %v2420 = vsel %vm164, %v2416, 0.0
    %2421 = vadd.xlane.f32.xlu0 %v2420
    %v2422 = vpop.xlane.xlu0 %2421
    %v2423 = vrcp.pop %v2419
    %v2424 = vrcp.pop %v2422
    %v2425 = vmul.f32 %v2414, %v2423
    %v2426 = vmul.f32 %v2416, %v2424
    %v2427 = vmul.f32 %v2301, %v81
    %v2428 = vmul.f32 %v2304, %v81
    %v2429 = vmul.f32 %v2307, %v81
    %v2431 = vsel %vm164, %v2425, 0
    %v2434 = vsel %vm164, %v2426, 0
    %2436 = vmatpush.msra.mxu0 0.0
    %2437 = vmatpush.msra.mxu0 0.0
    %2438 = vmatpush.msra.mxu0 0.0
    %2439 = vmatpush.msra.mxu0 0.0
    %2440 = vmatpush.msra.mxu0 0.0
    %2441 = vmatpush.msra.mxu0 0.0
    %2442 = vmatpush.msra.mxu0 0.0
    %2443 = vmatpush.msra.mxu0 0.0
    %2444 = vmatpush.msra.mxu0 0.0
    %2445 = vmatpush.msra.mxu0 0.0
    %2446 = vmatpush.msra.mxu0 0.0
    %2447 = vmatpush.msra.mxu0 0.0
    %2448 = vmatpush.msra.mxu0 0.0
    %2449 = vmatpush.msra.mxu0 %v2429
    %2450 = vmatpush.msra.mxu0 %v2428
    %2451 = vmatpush.msra.mxu0 %v2427
    %2452 = vmatmul.f32.gmra.mxu0 %v2431
    %v2453 = vpop.f32.mrf.mxu0
    %v2454 = vadd.f32 0.0, %v2453
    %2455 = vmatmul.f32.gmra.mxu0 %v2434
    %v2456 = vpop.f32.mrf.mxu0
    %v2457 = vadd.f32 0.0, %v2456
    %2458 = vdwg.mxu0
    %v2460 = vsel %vm164, %v2369, 0
    %v2463 = vsel %vm164, %v2370, 0
    %2465 = vmatpush.msra.mxu0 0.0
    %2466 = vmatpush.msra.mxu0 0.0
    %2467 = vmatpush.msra.mxu0 0.0
    %2468 = vmatpush.msra.mxu0 0.0
    %2469 = vmatpush.msra.mxu0 0.0
    %2470 = vmatpush.msra.mxu0 0.0
    %2471 = vmatpush.msra.mxu0 0.0
    %2472 = vmatpush.msra.mxu0 0.0
    %2473 = vmatpush.msra.mxu0 0.0
    %2474 = vmatpush.msra.mxu0 0.0
    %2475 = vmatpush.msra.mxu0 0.0
    %2476 = vmatpush.msra.mxu0 0.0
    %2477 = vmatpush.msra.mxu0 0.0
    %2478 = vmatpush.msra.mxu0 %v2373
    %2479 = vmatpush.msra.mxu0 %v2372
    %2480 = vmatpush.msra.mxu0 %v2371
    %2481 = vmatmul.f32.gmra.mxu0 %v2460
    %v2482 = vpop.f32.mrf.mxu0
    %v2483 = vadd.f32 %v2454, %v2482
    %2484 = vmatmul.f32.gmra.mxu0 %v2463
    %v2485 = vpop.f32.mrf.mxu0
    %v2486 = vadd.f32 %v2457, %v2485
    %2487 = vdwg.mxu0
    %v2488 = vmul.f32 %v2225, %v96
    %v2489 = vmul.f32 %v2228, %v96
    %v2491 = vsel %vm340, %v2488, 0
    %v2494 = vsel %vm340, %v2489, 0
    %2496 = vmatpush.xpose.msra.mxu0 0.0
    %2497 = vmatpush.xpose.msra.mxu0 0.0
    %2498 = vmatpush.xpose.msra.mxu0 0.0
    %2499 = vmatpush.xpose.msra.mxu0 0.0
    %2500 = vmatpush.xpose.msra.mxu0 0.0
    %2501 = vmatpush.xpose.msra.mxu0 0.0
    %2502 = vmatpush.xpose.msra.mxu0 0.0
    %2503 = vmatpush.xpose.msra.mxu0 0.0
    %2504 = vmatpush.xpose.msra.mxu0 0.0
    %2505 = vmatpush.xpose.msra.mxu0 0.0
    %2506 = vmatpush.xpose.msra.mxu0 0.0
    %2507 = vmatpush.xpose.msra.mxu0 0.0
    %2508 = vmatpush.xpose.msra.mxu0 0.0
    %2509 = vmatpush.xpose.msra.mxu0 %v2324
    %2510 = vmatpush.xpose.msra.mxu0 %v2321
    %2511 = vmatpush.xpose.msra.mxu0 %v2318
    %2512 = vmatmul.f32.gmra.mxu0 %v2491
    %v2513 = vpop.f32.mrf.mxu0
    %v2514 = vadd.f32 %v320, %v2513
    %2515 = vmatmul.f32.gmra.mxu0 %v2494
    %v2516 = vpop.f32.mrf.mxu0
    %v2517 = vadd.f32 %v321, %v2516
    %2518 = vdwg.mxu0
    %v2519 = vsel %vm164, %v2514, -inf
    %2520 = vmax.xlane.f32.xlu0 %v2519
    %v2521 = vpop.xlane.xlu0 %2520
    %v2522 = vsel %vm164, %v2517, -inf
    %2523 = vmax.xlane.f32.xlu0 %v2522
    %v2524 = vpop.xlane.xlu0 %2523
    %v2525 = vsub.f32 %v2514, %v2521
    %v2526 = vsub.f32 %v2517, %v2524
    %v2527 = vmul.f32 %v2525, 1.442695
    %v2528 = vpow.pop %v2527
    %v2529 = vmul.f32 %v2526, 1.442695
    %v2530 = vpow.pop %v2529
    %v2531 = vsel %vm164, %v2528, 0.0
    %2532 = vadd.xlane.f32.xlu0 %v2531
    %v2533 = vpop.xlane.xlu0 %2532
    %v2534 = vsel %vm164, %v2530, 0.0
    %2535 = vadd.xlane.f32.xlu0 %v2534
    %v2536 = vpop.xlane.xlu0 %2535
    %v2537 = vrcp.pop %v2533
    %v2538 = vrcp.pop %v2536
    %v2539 = vmul.f32 %v2528, %v2537
    %v2540 = vmul.f32 %v2530, %v2538
    %v2541 = vmul.f32 %v2301, %v85
    %v2542 = vmul.f32 %v2304, %v85
    %v2543 = vmul.f32 %v2307, %v85
    %v2545 = vsel %vm164, %v2539, 0
    %v2548 = vsel %vm164, %v2540, 0
    %2550 = vmatpush.msra.mxu0 0.0
    %2551 = vmatpush.msra.mxu0 0.0
    %2552 = vmatpush.msra.mxu0 0.0
    %2553 = vmatpush.msra.mxu0 0.0
    %2554 = vmatpush.msra.mxu0 0.0
    %2555 = vmatpush.msra.mxu0 0.0
    %2556 = vmatpush.msra.mxu0 0.0
    %2557 = vmatpush.msra.mxu0 0.0
    %2558 = vmatpush.msra.mxu0 0.0
    %2559 = vmatpush.msra.mxu0 0.0
    %2560 = vmatpush.msra.mxu0 0.0
    %2561 = vmatpush.msra.mxu0 0.0
    %2562 = vmatpush.msra.mxu0 0.0
    %2563 = vmatpush.msra.mxu0 %v2543
    %2564 = vmatpush.msra.mxu0 %v2542
    %2565 = vmatpush.msra.mxu0 %v2541
    %2566 = vmatmul.f32.gmra.mxu0 %v2545
    %v2567 = vpop.f32.mrf.mxu0
    %v2568 = vadd.f32 0.0, %v2567
    %2569 = vmatmul.f32.gmra.mxu0 %v2548
    %v2570 = vpop.f32.mrf.mxu0
    %v2571 = vadd.f32 0.0, %v2570
    %2572 = vdwg.mxu0
    %v2573 = vadd.f32 %v2483, %v2568
    %v2574 = vadd.f32 %v2486, %v2571
    %v2575 = vmul.f32 %v2225, %v97
    %v2576 = vmul.f32 %v2228, %v97
    %v2578 = vsel %vm340, %v2575, 0
    %v2581 = vsel %vm340, %v2576, 0
    %2583 = vmatpush.xpose.msra.mxu0 0.0
    %2584 = vmatpush.xpose.msra.mxu0 0.0
    %2585 = vmatpush.xpose.msra.mxu0 0.0
    %2586 = vmatpush.xpose.msra.mxu0 0.0
    %2587 = vmatpush.xpose.msra.mxu0 0.0
    %2588 = vmatpush.xpose.msra.mxu0 0.0
    %2589 = vmatpush.xpose.msra.mxu0 0.0
    %2590 = vmatpush.xpose.msra.mxu0 0.0
    %2591 = vmatpush.xpose.msra.mxu0 0.0
    %2592 = vmatpush.xpose.msra.mxu0 0.0
    %2593 = vmatpush.xpose.msra.mxu0 0.0
    %2594 = vmatpush.xpose.msra.mxu0 0.0
    %2595 = vmatpush.xpose.msra.mxu0 0.0
    %2596 = vmatpush.xpose.msra.mxu0 %v2324
    %2597 = vmatpush.xpose.msra.mxu0 %v2321
    %2598 = vmatpush.xpose.msra.mxu0 %v2318
    %2599 = vmatmul.f32.gmra.mxu0 %v2578
    %v2600 = vpop.f32.mrf.mxu0
    %v2601 = vadd.f32 %v320, %v2600
    %2602 = vmatmul.f32.gmra.mxu0 %v2581
    %v2603 = vpop.f32.mrf.mxu0
    %v2604 = vadd.f32 %v321, %v2603
    %2605 = vdwg.mxu0
    %v2606 = vsel %vm164, %v2601, -inf
    %2607 = vmax.xlane.f32.xlu0 %v2606
    %v2608 = vpop.xlane.xlu0 %2607
    %v2609 = vsel %vm164, %v2604, -inf
    %2610 = vmax.xlane.f32.xlu0 %v2609
    %v2611 = vpop.xlane.xlu0 %2610
    %v2612 = vsub.f32 %v2601, %v2608
    %v2613 = vsub.f32 %v2604, %v2611
    %v2614 = vmul.f32 %v2612, 1.442695
    %v2615 = vpow.pop %v2614
    %v2616 = vmul.f32 %v2613, 1.442695
    %v2617 = vpow.pop %v2616
    %v2618 = vsel %vm164, %v2615, 0.0
    %2619 = vadd.xlane.f32.xlu0 %v2618
    %v2620 = vpop.xlane.xlu0 %2619
    %v2621 = vsel %vm164, %v2617, 0.0
    %2622 = vadd.xlane.f32.xlu0 %v2621
    %v2623 = vpop.xlane.xlu0 %2622
    %v2624 = vrcp.pop %v2620
    %v2625 = vrcp.pop %v2623
    %v2626 = vmul.f32 %v2615, %v2624
    %v2627 = vmul.f32 %v2617, %v2625
    %v2628 = vmul.f32 %v2301, %v89
    %v2629 = vmul.f32 %v2304, %v89
    %v2630 = vmul.f32 %v2307, %v89
    %v2632 = vsel %vm164, %v2626, 0
    %v2635 = vsel %vm164, %v2627, 0
    %2637 = vmatpush.msra.mxu0 0.0
    %2638 = vmatpush.msra.mxu0 0.0
    %2639 = vmatpush.msra.mxu0 0.0
    %2640 = vmatpush.msra.mxu0 0.0
    %2641 = vmatpush.msra.mxu0 0.0
    %2642 = vmatpush.msra.mxu0 0.0
    %2643 = vmatpush.msra.mxu0 0.0
    %2644 = vmatpush.msra.mxu0 0.0
    %2645 = vmatpush.msra.mxu0 0.0
    %2646 = vmatpush.msra.mxu0 0.0
    %2647 = vmatpush.msra.mxu0 0.0
    %2648 = vmatpush.msra.mxu0 0.0
    %2649 = vmatpush.msra.mxu0 0.0
    %2650 = vmatpush.msra.mxu0 %v2630
    %2651 = vmatpush.msra.mxu0 %v2629
    %2652 = vmatpush.msra.mxu0 %v2628
    %2653 = vmatmul.f32.gmra.mxu0 %v2632
    %v2654 = vpop.f32.mrf.mxu0
    %v2655 = vadd.f32 0.0, %v2654
    %2656 = vmatmul.f32.gmra.mxu0 %v2635
    %v2657 = vpop.f32.mrf.mxu0
    %v2658 = vadd.f32 0.0, %v2657
    %2659 = vdwg.mxu0
    %v2660 = vadd.f32 %v2573, %v2655
    %v2661 = vadd.f32 %v2574, %v2658
    %v2662 = vmul.f32 %v2225, %v98
    %v2663 = vmul.f32 %v2228, %v98
    %v2665 = vsel %vm340, %v2662, 0
    %v2668 = vsel %vm340, %v2663, 0
    %2670 = vmatpush.xpose.msra.mxu0 0.0
    %2671 = vmatpush.xpose.msra.mxu0 0.0
    %2672 = vmatpush.xpose.msra.mxu0 0.0
    %2673 = vmatpush.xpose.msra.mxu0 0.0
    %2674 = vmatpush.xpose.msra.mxu0 0.0
    %2675 = vmatpush.xpose.msra.mxu0 0.0
    %2676 = vmatpush.xpose.msra.mxu0 0.0
    %2677 = vmatpush.xpose.msra.mxu0 0.0
    %2678 = vmatpush.xpose.msra.mxu0 0.0
    %2679 = vmatpush.xpose.msra.mxu0 0.0
    %2680 = vmatpush.xpose.msra.mxu0 0.0
    %2681 = vmatpush.xpose.msra.mxu0 0.0
    %2682 = vmatpush.xpose.msra.mxu0 0.0
    %2683 = vmatpush.xpose.msra.mxu0 %v2324
    %2684 = vmatpush.xpose.msra.mxu0 %v2321
    %2685 = vmatpush.xpose.msra.mxu0 %v2318
    %2686 = vmatmul.f32.gmra.mxu0 %v2665
    %v2687 = vpop.f32.mrf.mxu0
    %v2688 = vadd.f32 %v320, %v2687
    %2689 = vmatmul.f32.gmra.mxu0 %v2668
    %v2690 = vpop.f32.mrf.mxu0
    %v2691 = vadd.f32 %v321, %v2690
    %2692 = vdwg.mxu0
    %v2693 = vsel %vm164, %v2688, -inf
    %2694 = vmax.xlane.f32.xlu0 %v2693
    %v2695 = vpop.xlane.xlu0 %2694
    %v2696 = vsel %vm164, %v2691, -inf
    %2697 = vmax.xlane.f32.xlu0 %v2696
    %v2698 = vpop.xlane.xlu0 %2697
    %v2699 = vsub.f32 %v2688, %v2695
    %v2700 = vsub.f32 %v2691, %v2698
    %v2701 = vmul.f32 %v2699, 1.442695
    %v2702 = vpow.pop %v2701
    %v2703 = vmul.f32 %v2700, 1.442695
    %v2704 = vpow.pop %v2703
    %v2705 = vsel %vm164, %v2702, 0.0
    %2706 = vadd.xlane.f32.xlu0 %v2705
    %v2707 = vpop.xlane.xlu0 %2706
    %v2708 = vsel %vm164, %v2704, 0.0
    %2709 = vadd.xlane.f32.xlu0 %v2708
    %v2710 = vpop.xlane.xlu0 %2709
    %v2711 = vrcp.pop %v2707
    %v2712 = vrcp.pop %v2710
    %v2713 = vmul.f32 %v2702, %v2711
    %v2714 = vmul.f32 %v2704, %v2712
    %v2715 = vmul.f32 %v2301, %v93
    %v2716 = vmul.f32 %v2304, %v93
    %v2717 = vmul.f32 %v2307, %v93
    %v2719 = vsel %vm164, %v2713, 0
    %v2722 = vsel %vm164, %v2714, 0
    %2724 = vmatpush.msra.mxu0 0.0
    %2725 = vmatpush.msra.mxu0 0.0
    %2726 = vmatpush.msra.mxu0 0.0
    %2727 = vmatpush.msra.mxu0 0.0
    %2728 = vmatpush.msra.mxu0 0.0
    %2729 = vmatpush.msra.mxu0 0.0
    %2730 = vmatpush.msra.mxu0 0.0
    %2731 = vmatpush.msra.mxu0 0.0
    %2732 = vmatpush.msra.mxu0 0.0
    %2733 = vmatpush.msra.mxu0 0.0
    %2734 = vmatpush.msra.mxu0 0.0
    %2735 = vmatpush.msra.mxu0 0.0
    %2736 = vmatpush.msra.mxu0 0.0
    %2737 = vmatpush.msra.mxu0 %v2717
    %2738 = vmatpush.msra.mxu0 %v2716
    %2739 = vmatpush.msra.mxu0 %v2715
    %2740 = vmatmul.f32.gmra.mxu0 %v2719
    %v2741 = vpop.f32.mrf.mxu0
    %v2742 = vadd.f32 0.0, %v2741
    %2743 = vmatmul.f32.gmra.mxu0 %v2722
    %v2744 = vpop.f32.mrf.mxu0
    %v2745 = vadd.f32 0.0, %v2744
    %2746 = vdwg.mxu0
    %v2747 = vadd.f32 %v2660, %v2742
    %v2748 = vadd.f32 %v2661, %v2745
    %s2749 = scalar_lea.vmem %s6, 352
    %v2750 = vld [vmem:[%s2749] sm:$0xff]
    %v2751 = vld [vmem:[%s2749 + $0x8] sm:$0xff]
    %v2752 = vld [vmem:[%s2749 + $0x10] sm:$0xff]
    %v2753 = vld [vmem:[%s2749 + $0x18] sm:$0x3f]
    %v2754 = vperm.slane %v2176, 0
    %v2756 = vsel %vm340, %v2747, 0
    %v2759 = vsel %vm340, %v2748, 0
    %v2762 = vsel %vm491, %v2753, 0
    %2764 = vmatpush.msra.mxu0 0.0
    %2765 = vmatpush.msra.mxu0 0.0
    %2766 = vmatpush.msra.mxu0 0.0
    %2767 = vmatpush.msra.mxu0 0.0
    %2768 = vmatpush.msra.mxu0 0.0
    %2769 = vmatpush.msra.mxu0 0.0
    %2770 = vmatpush.msra.mxu0 0.0
    %2771 = vmatpush.msra.mxu0 0.0
    %2772 = vmatpush.msra.mxu0 0.0
    %2773 = vmatpush.msra.mxu0 0.0
    %2774 = vmatpush.msra.mxu0 0.0
    %2775 = vmatpush.msra.mxu0 0.0
    %2776 = vmatpush.msra.mxu0 %v2762
    %2777 = vmatpush.msra.mxu0 %v2752
    %2778 = vmatpush.msra.mxu0 %v2751
    %2779 = vmatpush.msra.mxu0 %v2750
    %2780 = vmatmul.f32.gmra.mxu0 %v2756
    %v2781 = vpop.f32.mrf.mxu0
    %v2782 = vadd.f32 %v2754, %v2781
    %2783 = vmatmul.f32.gmra.mxu0 %v2759
    %v2784 = vpop.f32.mrf.mxu0
    %v2785 = vadd.f32 %v2754, %v2784
    %2786 = vdwg.mxu0
    %v2787 = vadd.f32 %v258, %v2782
    %v2788 = vadd.f32 %v259, %v2785
    %v2789 = vsel %vm340, %v2787, 0.0
    %2790 = vadd.xlane.f32.xlu0 %v2789
    %v2791 = vpop.xlane.xlu0 %2790
    %v2792 = vsel %vm340, %v2788, 0.0
    %2793 = vadd.xlane.f32.xlu0 %v2792
    %v2794 = vpop.xlane.xlu0 %2793
    %v2795 = vmul.f32 %v2791, %v357
    %v2796 = vmul.f32 %v2794, %v357
    %v2797 = vsub.f32 %v2787, %v2795
    %v2798 = vsub.f32 %v2788, %v2796
    %v2799 = vmul.f32 %v2797, %v2797
    %v2800 = vmul.f32 %v2798, %v2798
    %v2801 = vsel %vm340, %v2799, 0.0
    %2802 = vadd.xlane.f32.xlu0 %v2801
    %v2803 = vpop.xlane.xlu0 %2802
    %v2804 = vsel %vm340, %v2800, 0.0
    %2805 = vadd.xlane.f32.xlu0 %v2804
    %v2806 = vpop.xlane.xlu0 %2805
    %v2807 = vmul.f32 %v2803, %v357
    %v2808 = vmul.f32 %v2806, %v357
    %v2809 = vadd.f32 %v2807, 1e-05
    %v2810 = vadd.f32 %v2808, 1e-05
    %v2811 = vrsqrt.pop %v2809
    %v2812 = vmul.f32 %v2811, %v2809
    %v2813 = vmul.f32 %v2812, %v2811
    %v2814 = vmul.f32 0.5, %v2813
    %v2815 = vsub.f32 1.5, %v2814
    %v2816 = vmul.f32 %v2811, %v2815
    %vm2817 = vweird.f32 %v2809
    %vm2818 = vweird.f32 %v2811
    %vm2819 = vmor %vm2817, %vm2818
    %v2820 = vsel %vm2819, %v2811, %v2816
    %v2821 = vrsqrt.pop %v2810
    %v2822 = vmul.f32 %v2821, %v2810
    %v2823 = vmul.f32 %v2822, %v2821
    %v2824 = vmul.f32 0.5, %v2823
    %v2825 = vsub.f32 1.5, %v2824
    %v2826 = vmul.f32 %v2821, %v2825
    %vm2827 = vweird.f32 %v2810
    %vm2828 = vweird.f32 %v2821
    %vm2829 = vmor %vm2827, %vm2828
    %v2830 = vsel %vm2829, %v2821, %v2826
    %v2831 = vmul.f32 %v2797, %v2820
    %v2832 = vmul.f32 %v2798, %v2830
    %v2833 = vperm.slane %v2177, 0
    %v2834 = vmul.f32 %v2831, %v2833
    %v2835 = vmul.f32 %v2832, %v2833
    %v2836 = vperm.slane %v2178, 0
    %v2837 = vadd.f32 %v2834, %v2836
    %v2838 = vadd.f32 %v2835, %v2836
    %s2839 = scalar_lea.vmem %s7, 64
    %v2840 = vld [vmem:[%s2839] sm:$0xff]
    %v2841 = vld [vmem:[%s2839 + $0x8] sm:$0xff]
    %v2842 = vld [vmem:[%s2839 + $0x10] sm:$0xff]
    %v2843 = vld [vmem:[%s2839 + $0x18] sm:$0x3f]
    %s2844 = scalar_lea.vmem %s10, 2
    %v2845 = vld [vmem:[%s2844] sm:$0x1]
    %v2847 = vperm.slane %v2845, 0
    %v2850 = vsel %vm340, %v2837, 0
    %v2853 = vsel %vm340, %v2838, 0
    %v2856 = vsel %vm491, %v2843, 0
    %2858 = vmatpush.msra.mxu0 0.0
    %2859 = vmatpush.msra.mxu0 0.0
    %2860 = vmatpush.msra.mxu0 0.0
    %2861 = vmatpush.msra.mxu0 0.0
    %2862 = vmatpush.msra.mxu0 0.0
    %2863 = vmatpush.msra.mxu0 0.0
    %2864 = vmatpush.msra.mxu0 0.0
    %2865 = vmatpush.msra.mxu0 0.0
    %2866 = vmatpush.msra.mxu0 0.0
    %2867 = vmatpush.msra.mxu0 0.0
    %2868 = vmatpush.msra.mxu0 0.0
    %2869 = vmatpush.msra.mxu0 0.0
    %2870 = vmatpush.msra.mxu0 %v2856
    %2871 = vmatpush.msra.mxu0 %v2842
    %2872 = vmatpush.msra.mxu0 %v2841
    %2873 = vmatpush.msra.mxu0 %v2840
    %2874 = vmatmul.f32.gmra.mxu0 %v2850
    %v2875 = vpop.f32.mrf.mxu0
    %v2876 = vadd.f32 %v2847, %v2875
    %2877 = vmatmul.f32.gmra.mxu0 %v2853
    %v2878 = vpop.f32.mrf.mxu0
    %v2879 = vadd.f32 %v2847, %v2878
    %2880 = vdwg.mxu0
    %v2881 = vmax.f32 %v2876, 0.0
    %v2882 = vmax.f32 %v2879, 0.0
    %s2883 = scalar_lea.vmem %s8, 240
    %v2884 = vld [vmem:[%s2883] sm:$0xff]
    %v2885 = vld [vmem:[%s2883 + $0x8] sm:$0xff]
    %v2886 = vld [vmem:[%s2883 + $0x10] sm:$0xff]
    %v2887 = vld [vmem:[%s2883 + $0x18] sm:$0xff]
    %v2888 = vld [vmem:[%s2883 + $0x20] sm:$0xff]
    %v2889 = vld [vmem:[%s2883 + $0x28] sm:$0xff]
    %v2890 = vld [vmem:[%s2883 + $0x30] sm:$0xff]
    %v2891 = vld [vmem:[%s2883 + $0x38] sm:$0xff]
    %v2892 = vld [vmem:[%s2883 + $0x40] sm:$0xff]
    %v2893 = vld [vmem:[%s2883 + $0x48] sm:$0xff]
    %v2894 = vld [vmem:[%s2883 + $0x50] sm:$0xff]
    %v2895 = vld [vmem:[%s2883 + $0x58] sm:$0xff]
    %v2896 = vld [vmem:[%s2883 + $0x60] sm:$0xff]
    %v2897 = vld [vmem:[%s2883 + $0x68] sm:$0xff]
    %v2898 = vld [vmem:[%s2883 + $0x70] sm:$0xff]
    %v2899 = vperm.slane %v2179, 0
    %v2901 = vsel %vm1200, %v2881, 0
    %v2904 = vsel %vm1200, %v2882, 0
    %2906 = vmatpush.msra.mxu0 0.0
    %2907 = vmatpush.msra.mxu0 %v2898
    %2908 = vmatpush.msra.mxu0 %v2897
    %2909 = vmatpush.msra.mxu0 %v2896
    %2910 = vmatpush.msra.mxu0 %v2895
    %2911 = vmatpush.msra.mxu0 %v2894
    %2912 = vmatpush.msra.mxu0 %v2893
    %2913 = vmatpush.msra.mxu0 %v2892
    %2914 = vmatpush.msra.mxu0 %v2891
    %2915 = vmatpush.msra.mxu0 %v2890
    %2916 = vmatpush.msra.mxu0 %v2889
    %2917 = vmatpush.msra.mxu0 %v2888
    %2918 = vmatpush.msra.mxu0 %v2887
    %2919 = vmatpush.msra.mxu0 %v2886
    %2920 = vmatpush.msra.mxu0 %v2885
    %2921 = vmatpush.msra.mxu0 %v2884
    %2922 = vmatmul.f32.gmra.mxu0 %v2901
    %v2923 = vpop.f32.mrf.mxu0
    %v2924 = vadd.f32 %v2899, %v2923
    %2925 = vmatmul.f32.gmra.mxu0 %v2904
    %v2926 = vpop.f32.mrf.mxu0
    %v2927 = vadd.f32 %v2899, %v2926
    %2928 = vdwg.mxu0
    %v2929 = vadd.f32 %v2787, %v2924
    %v2930 = vadd.f32 %v2788, %v2927
    %s2931 = scalar_lea.vmem %s9, 48
    %v2932 = vld [vmem:[%s2931] sm:$0x1]
    %v2933 = vld [vmem:[%s2931 + $0x1] sm:$0x1]
    %v2934 = vld [vmem:[%s2931 + $0x2] sm:$0x1]
    %v2935 = vld [vmem:[%s2931 + $0x3] sm:$0x1]
    %v2936 = vld [vmem:[%s2931 + $0x4] sm:$0x1]
    %v2937 = vld [vmem:[%s2931 + $0x5] sm:$0x1]
    %v2938 = vld [vmem:[%s2931 + $0x6] sm:$0x1]
    %v2939 = vld [vmem:[%s2931 + $0x7] sm:$0x1]
    %v2940 = vld [vmem:[%s2931 + $0x8] sm:$0x1]
    %v2941 = vsel %vm340, %v2929, 0.0
    %2942 = vadd.xlane.f32.xlu0 %v2941
    %v2943 = vpop.xlane.xlu0 %2942
    %v2944 = vsel %vm340, %v2930, 0.0
    %2945 = vadd.xlane.f32.xlu0 %v2944
    %v2946 = vpop.xlane.xlu0 %2945
    %v2947 = vmul.f32 %v2943, %v357
    %v2948 = vmul.f32 %v2946, %v357
    %v2949 = vsub.f32 %v2929, %v2947
    %v2950 = vsub.f32 %v2930, %v2948
    %v2951 = vmul.f32 %v2949, %v2949
    %v2952 = vmul.f32 %v2950, %v2950
    %v2953 = vsel %vm340, %v2951, 0.0
    %2954 = vadd.xlane.f32.xlu0 %v2953
    %v2955 = vpop.xlane.xlu0 %2954
    %v2956 = vsel %vm340, %v2952, 0.0
    %2957 = vadd.xlane.f32.xlu0 %v2956
    %v2958 = vpop.xlane.xlu0 %2957
    %v2959 = vmul.f32 %v2955, %v357
    %v2960 = vmul.f32 %v2958, %v357
    %v2961 = vadd.f32 %v2959, 1e-05
    %v2962 = vadd.f32 %v2960, 1e-05
    %v2963 = vrsqrt.pop %v2961
    %v2964 = vmul.f32 %v2963, %v2961
    %v2965 = vmul.f32 %v2964, %v2963
    %v2966 = vmul.f32 0.5, %v2965
    %v2967 = vsub.f32 1.5, %v2966
    %v2968 = vmul.f32 %v2963, %v2967
    %vm2969 = vweird.f32 %v2961
    %vm2970 = vweird.f32 %v2963
    %vm2971 = vmor %vm2969, %vm2970
    %v2972 = vsel %vm2971, %v2963, %v2968
    %v2973 = vrsqrt.pop %v2962
    %v2974 = vmul.f32 %v2973, %v2962
    %v2975 = vmul.f32 %v2974, %v2973
    %v2976 = vmul.f32 0.5, %v2975
    %v2977 = vsub.f32 1.5, %v2976
    %v2978 = vmul.f32 %v2973, %v2977
    %vm2979 = vweird.f32 %v2962
    %vm2980 = vweird.f32 %v2973
    %vm2981 = vmor %vm2979, %vm2980
    %v2982 = vsel %vm2981, %v2973, %v2978
    %v2983 = vmul.f32 %v2949, %v2972
    %v2984 = vmul.f32 %v2950, %v2982
    %v2985 = vperm.slane %v2932, 0
    %v2986 = vmul.f32 %v2983, %v2985
    %v2987 = vmul.f32 %v2984, %v2985
    %v2988 = vperm.slane %v2933, 0
    %v2989 = vadd.f32 %v2986, %v2988
    %v2990 = vadd.f32 %v2987, %v2988
    %v2991 = vmul.f32 %v2167, %v2985
    %v2992 = vmul.f32 %v2168, %v2985
    %v2993 = vmul.f32 %v2169, %v2985
    %v2994 = vadd.f32 %v2991, %v2988
    %v2995 = vadd.f32 %v2992, %v2988
    %v2996 = vadd.f32 %v2993, %v2988
    %s2997 = scalar_lea.vmem %s6, 384
    %v2998 = vld [vmem:[%s2997] sm:$0xff]
    %v2999 = vld [vmem:[%s2997 + $0x8] sm:$0xff]
    %v3000 = vld [vmem:[%s2997 + $0x10] sm:$0xff]
    %v3001 = vld [vmem:[%s2997 + $0x18] sm:$0x3f]
    %v3002 = vperm.slane %v2934, 0
    %v3004 = vsel %vm340, %v2989, 0
    %v3007 = vsel %vm340, %v2990, 0
    %v3010 = vsel %vm491, %v3001, 0
    %3012 = vmatpush.msra.mxu0 0.0
    %3013 = vmatpush.msra.mxu0 0.0
    %3014 = vmatpush.msra.mxu0 0.0
    %3015 = vmatpush.msra.mxu0 0.0
    %3016 = vmatpush.msra.mxu0 0.0
    %3017 = vmatpush.msra.mxu0 0.0
    %3018 = vmatpush.msra.mxu0 0.0
    %3019 = vmatpush.msra.mxu0 0.0
    %3020 = vmatpush.msra.mxu0 0.0
    %3021 = vmatpush.msra.mxu0 0.0
    %3022 = vmatpush.msra.mxu0 0.0
    %3023 = vmatpush.msra.mxu0 0.0
    %3024 = vmatpush.msra.mxu0 %v3010
    %3025 = vmatpush.msra.mxu0 %v3000
    %3026 = vmatpush.msra.mxu0 %v2999
    %3027 = vmatpush.msra.mxu0 %v2998
    %3028 = vmatmul.f32.gmra.mxu0 %v3004
    %v3029 = vpop.f32.mrf.mxu0
    %v3030 = vadd.f32 %v3002, %v3029
    %3031 = vmatmul.f32.gmra.mxu0 %v3007
    %v3032 = vpop.f32.mrf.mxu0
    %v3033 = vadd.f32 %v3002, %v3032
    %3034 = vdwg.mxu0
    %s3035 = scalar_lea.vmem %s6, 416
    %v3036 = vld [vmem:[%s3035] sm:$0xff]
    %v3037 = vld [vmem:[%s3035 + $0x8] sm:$0xff]
    %v3038 = vld [vmem:[%s3035 + $0x10] sm:$0xff]
    %v3039 = vld [vmem:[%s3035 + $0x18] sm:$0x3f]
    %v3040 = vperm.slane %v2935, 0
    %v3042 = vsel %vm340, %v2994, 0
    %v3045 = vsel %vm340, %v2995, 0
    %v3048 = vsel %vm340, %v2996, 0
    %v3051 = vsel %vm491, %v3039, 0
    %3053 = vmatpush.msra.mxu0 0.0
    %3054 = vmatpush.msra.mxu0 0.0
    %3055 = vmatpush.msra.mxu0 0.0
    %3056 = vmatpush.msra.mxu0 0.0
    %3057 = vmatpush.msra.mxu0 0.0
    %3058 = vmatpush.msra.mxu0 0.0
    %3059 = vmatpush.msra.mxu0 0.0
    %3060 = vmatpush.msra.mxu0 0.0
    %3061 = vmatpush.msra.mxu0 0.0
    %3062 = vmatpush.msra.mxu0 0.0
    %3063 = vmatpush.msra.mxu0 0.0
    %3064 = vmatpush.msra.mxu0 0.0
    %3065 = vmatpush.msra.mxu0 %v3051
    %3066 = vmatpush.msra.mxu0 %v3038
    %3067 = vmatpush.msra.mxu0 %v3037
    %3068 = vmatpush.msra.mxu0 %v3036
    %3069 = vmatmul.f32.gmra.mxu0 %v3042
    %v3070 = vpop.f32.mrf.mxu0
    %v3071 = vadd.f32 %v3040, %v3070
    %3072 = vmatmul.f32.gmra.mxu0 %v3045
    %v3073 = vpop.f32.mrf.mxu0
    %v3074 = vadd.f32 %v3040, %v3073
    %3075 = vmatmul.f32.gmra.mxu0 %v3048
    %v3076 = vpop.f32.mrf.mxu0
    %v3077 = vadd.f32 %v3040, %v3076
    %3078 = vdwg.mxu0
    %s3079 = scalar_lea.vmem %s6, 448
    %v3080 = vld [vmem:[%s3079] sm:$0xff]
    %v3081 = vld [vmem:[%s3079 + $0x8] sm:$0xff]
    %v3082 = vld [vmem:[%s3079 + $0x10] sm:$0xff]
    %v3083 = vld [vmem:[%s3079 + $0x18] sm:$0x3f]
    %v3084 = vperm.slane %v2936, 0
    %v3086 = vsel %vm491, %v3083, 0
    %3088 = vmatpush.msra.mxu0 0.0
    %3089 = vmatpush.msra.mxu0 0.0
    %3090 = vmatpush.msra.mxu0 0.0
    %3091 = vmatpush.msra.mxu0 0.0
    %3092 = vmatpush.msra.mxu0 0.0
    %3093 = vmatpush.msra.mxu0 0.0
    %3094 = vmatpush.msra.mxu0 0.0
    %3095 = vmatpush.msra.mxu0 0.0
    %3096 = vmatpush.msra.mxu0 0.0
    %3097 = vmatpush.msra.mxu0 0.0
    %3098 = vmatpush.msra.mxu0 0.0
    %3099 = vmatpush.msra.mxu0 0.0
    %3100 = vmatpush.msra.mxu0 %v3086
    %3101 = vmatpush.msra.mxu0 %v3082
    %3102 = vmatpush.msra.mxu0 %v3081
    %3103 = vmatpush.msra.mxu0 %v3080
    %3104 = vmatmul.f32.gmra.mxu0 %v3042
    %v3105 = vpop.f32.mrf.mxu0
    %v3106 = vadd.f32 %v3084, %v3105
    %3107 = vmatmul.f32.gmra.mxu0 %v3045
    %v3108 = vpop.f32.mrf.mxu0
    %v3109 = vadd.f32 %v3084, %v3108
    %3110 = vmatmul.f32.gmra.mxu0 %v3048
    %v3111 = vpop.f32.mrf.mxu0
    %v3112 = vadd.f32 %v3084, %v3111
    %3113 = vdwg.mxu0
    %v3114 = vmul.f32 %v3030, %v94
    %v3115 = vmul.f32 %v3033, %v94
    %v3117 = vsel %vm340, %v3114, 0
    %v3120 = vsel %vm340, %v3115, 0
    %v3123 = vsel %vm340, %v3071, 0
    %v3126 = vsel %vm340, %v3074, 0
    %v3129 = vsel %vm340, %v3077, 0
    %3131 = vmatpush.xpose.msra.mxu0 0.0
    %3132 = vmatpush.xpose.msra.mxu0 0.0
    %3133 = vmatpush.xpose.msra.mxu0 0.0
    %3134 = vmatpush.xpose.msra.mxu0 0.0
    %3135 = vmatpush.xpose.msra.mxu0 0.0
    %3136 = vmatpush.xpose.msra.mxu0 0.0
    %3137 = vmatpush.xpose.msra.mxu0 0.0
    %3138 = vmatpush.xpose.msra.mxu0 0.0
    %3139 = vmatpush.xpose.msra.mxu0 0.0
    %3140 = vmatpush.xpose.msra.mxu0 0.0
    %3141 = vmatpush.xpose.msra.mxu0 0.0
    %3142 = vmatpush.xpose.msra.mxu0 0.0
    %3143 = vmatpush.xpose.msra.mxu0 0.0
    %3144 = vmatpush.xpose.msra.mxu0 %v3129
    %3145 = vmatpush.xpose.msra.mxu0 %v3126
    %3146 = vmatpush.xpose.msra.mxu0 %v3123
    %3147 = vmatmul.f32.gmra.mxu0 %v3117
    %v3148 = vpop.f32.mrf.mxu0
    %v3149 = vadd.f32 %v320, %v3148
    %3150 = vmatmul.f32.gmra.mxu0 %v3120
    %v3151 = vpop.f32.mrf.mxu0
    %v3152 = vadd.f32 %v321, %v3151
    %3153 = vdwg.mxu0
    %v3154 = vsel %vm164, %v3149, -inf
    %3155 = vmax.xlane.f32.xlu0 %v3154
    %v3156 = vpop.xlane.xlu0 %3155
    %v3157 = vsel %vm164, %v3152, -inf
    %3158 = vmax.xlane.f32.xlu0 %v3157
    %v3159 = vpop.xlane.xlu0 %3158
    %v3160 = vsub.f32 %v3149, %v3156
    %v3161 = vsub.f32 %v3152, %v3159
    %v3162 = vmul.f32 %v3160, 1.442695
    %v3163 = vpow.pop %v3162
    %v3164 = vmul.f32 %v3161, 1.442695
    %v3165 = vpow.pop %v3164
    %v3166 = vsel %vm164, %v3163, 0.0
    %3167 = vadd.xlane.f32.xlu0 %v3166
    %v3168 = vpop.xlane.xlu0 %3167
    %v3169 = vsel %vm164, %v3165, 0.0
    %3170 = vadd.xlane.f32.xlu0 %v3169
    %v3171 = vpop.xlane.xlu0 %3170
    %v3172 = vrcp.pop %v3168
    %v3173 = vrcp.pop %v3171
    %v3174 = vmul.f32 %v3163, %v3172
    %v3175 = vmul.f32 %v3165, %v3173
    %v3176 = vmul.f32 %v3106, %v77
    %v3177 = vmul.f32 %v3109, %v77
    %v3178 = vmul.f32 %v3112, %v77
    %v3179 = vmul.f32 %v3030, %v95
    %v3180 = vmul.f32 %v3033, %v95
    %v3182 = vsel %vm340, %v3179, 0
    %v3185 = vsel %vm340, %v3180, 0
    %3187 = vmatpush.xpose.msra.mxu0 0.0
    %3188 = vmatpush.xpose.msra.mxu0 0.0
    %3189 = vmatpush.xpose.msra.mxu0 0.0
    %3190 = vmatpush.xpose.msra.mxu0 0.0
    %3191 = vmatpush.xpose.msra.mxu0 0.0
    %3192 = vmatpush.xpose.msra.mxu0 0.0
    %3193 = vmatpush.xpose.msra.mxu0 0.0
    %3194 = vmatpush.xpose.msra.mxu0 0.0
    %3195 = vmatpush.xpose.msra.mxu0 0.0
    %3196 = vmatpush.xpose.msra.mxu0 0.0
    %3197 = vmatpush.xpose.msra.mxu0 0.0
    %3198 = vmatpush.xpose.msra.mxu0 0.0
    %3199 = vmatpush.xpose.msra.mxu0 0.0
    %3200 = vmatpush.xpose.msra.mxu0 %v3129
    %3201 = vmatpush.xpose.msra.mxu0 %v3126
    %3202 = vmatpush.xpose.msra.mxu0 %v3123
    %3203 = vmatmul.f32.gmra.mxu0 %v3182
    %v3204 = vpop.f32.mrf.mxu0
    %v3205 = vadd.f32 %v320, %v3204
    %3206 = vmatmul.f32.gmra.mxu0 %v3185
    %v3207 = vpop.f32.mrf.mxu0
    %v3208 = vadd.f32 %v321, %v3207
    %3209 = vdwg.mxu0
    %v3210 = vsel %vm164, %v3205, -inf
    %3211 = vmax.xlane.f32.xlu0 %v3210
    %v3212 = vpop.xlane.xlu0 %3211
    %v3213 = vsel %vm164, %v3208, -inf
    %3214 = vmax.xlane.f32.xlu0 %v3213
    %v3215 = vpop.xlane.xlu0 %3214
    %v3216 = vsub.f32 %v3205, %v3212
    %v3217 = vsub.f32 %v3208, %v3215
    %v3218 = vmul.f32 %v3216, 1.442695
    %v3219 = vpow.pop %v3218
    %v3220 = vmul.f32 %v3217, 1.442695
    %v3221 = vpow.pop %v3220
    %v3222 = vsel %vm164, %v3219, 0.0
    %3223 = vadd.xlane.f32.xlu0 %v3222
    %v3224 = vpop.xlane.xlu0 %3223
    %v3225 = vsel %vm164, %v3221, 0.0
    %3226 = vadd.xlane.f32.xlu0 %v3225
    %v3227 = vpop.xlane.xlu0 %3226
    %v3228 = vrcp.pop %v3224
    %v3229 = vrcp.pop %v3227
    %v3230 = vmul.f32 %v3219, %v3228
    %v3231 = vmul.f32 %v3221, %v3229
    %v3232 = vmul.f32 %v3106, %v81
    %v3233 = vmul.f32 %v3109, %v81
    %v3234 = vmul.f32 %v3112, %v81
    %v3236 = vsel %vm164, %v3230, 0
    %v3239 = vsel %vm164, %v3231, 0
    %3241 = vmatpush.msra.mxu0 0.0
    %3242 = vmatpush.msra.mxu0 0.0
    %3243 = vmatpush.msra.mxu0 0.0
    %3244 = vmatpush.msra.mxu0 0.0
    %3245 = vmatpush.msra.mxu0 0.0
    %3246 = vmatpush.msra.mxu0 0.0
    %3247 = vmatpush.msra.mxu0 0.0
    %3248 = vmatpush.msra.mxu0 0.0
    %3249 = vmatpush.msra.mxu0 0.0
    %3250 = vmatpush.msra.mxu0 0.0
    %3251 = vmatpush.msra.mxu0 0.0
    %3252 = vmatpush.msra.mxu0 0.0
    %3253 = vmatpush.msra.mxu0 0.0
    %3254 = vmatpush.msra.mxu0 %v3234
    %3255 = vmatpush.msra.mxu0 %v3233
    %3256 = vmatpush.msra.mxu0 %v3232
    %3257 = vmatmul.f32.gmra.mxu0 %v3236
    %v3258 = vpop.f32.mrf.mxu0
    %v3259 = vadd.f32 0.0, %v3258
    %3260 = vmatmul.f32.gmra.mxu0 %v3239
    %v3261 = vpop.f32.mrf.mxu0
    %v3262 = vadd.f32 0.0, %v3261
    %3263 = vdwg.mxu0
    %v3265 = vsel %vm164, %v3174, 0
    %v3268 = vsel %vm164, %v3175, 0
    %3270 = vmatpush.msra.mxu0 0.0
    %3271 = vmatpush.msra.mxu0 0.0
    %3272 = vmatpush.msra.mxu0 0.0
    %3273 = vmatpush.msra.mxu0 0.0
    %3274 = vmatpush.msra.mxu0 0.0
    %3275 = vmatpush.msra.mxu0 0.0
    %3276 = vmatpush.msra.mxu0 0.0
    %3277 = vmatpush.msra.mxu0 0.0
    %3278 = vmatpush.msra.mxu0 0.0
    %3279 = vmatpush.msra.mxu0 0.0
    %3280 = vmatpush.msra.mxu0 0.0
    %3281 = vmatpush.msra.mxu0 0.0
    %3282 = vmatpush.msra.mxu0 0.0
    %3283 = vmatpush.msra.mxu0 %v3178
    %3284 = vmatpush.msra.mxu0 %v3177
    %3285 = vmatpush.msra.mxu0 %v3176
    %3286 = vmatmul.f32.gmra.mxu0 %v3265
    %v3287 = vpop.f32.mrf.mxu0
    %v3288 = vadd.f32 %v3259, %v3287
    %3289 = vmatmul.f32.gmra.mxu0 %v3268
    %v3290 = vpop.f32.mrf.mxu0
    %v3291 = vadd.f32 %v3262, %v3290
    %3292 = vdwg.mxu0
    %v3293 = vmul.f32 %v3030, %v96
    %v3294 = vmul.f32 %v3033, %v96
    %v3296 = vsel %vm340, %v3293, 0
    %v3299 = vsel %vm340, %v3294, 0
    %3301 = vmatpush.xpose.msra.mxu0 0.0
    %3302 = vmatpush.xpose.msra.mxu0 0.0
    %3303 = vmatpush.xpose.msra.mxu0 0.0
    %3304 = vmatpush.xpose.msra.mxu0 0.0
    %3305 = vmatpush.xpose.msra.mxu0 0.0
    %3306 = vmatpush.xpose.msra.mxu0 0.0
    %3307 = vmatpush.xpose.msra.mxu0 0.0
    %3308 = vmatpush.xpose.msra.mxu0 0.0
    %3309 = vmatpush.xpose.msra.mxu0 0.0
    %3310 = vmatpush.xpose.msra.mxu0 0.0
    %3311 = vmatpush.xpose.msra.mxu0 0.0
    %3312 = vmatpush.xpose.msra.mxu0 0.0
    %3313 = vmatpush.xpose.msra.mxu0 0.0
    %3314 = vmatpush.xpose.msra.mxu0 %v3129
    %3315 = vmatpush.xpose.msra.mxu0 %v3126
    %3316 = vmatpush.xpose.msra.mxu0 %v3123
    %3317 = vmatmul.f32.gmra.mxu0 %v3296
    %v3318 = vpop.f32.mrf.mxu0
    %v3319 = vadd.f32 %v320, %v3318
    %3320 = vmatmul.f32.gmra.mxu0 %v3299
    %v3321 = vpop.f32.mrf.mxu0
    %v3322 = vadd.f32 %v321, %v3321
    %3323 = vdwg.mxu0
    %v3324 = vsel %vm164, %v3319, -inf
    %3325 = vmax.xlane.f32.xlu0 %v3324
    %v3326 = vpop.xlane.xlu0 %3325
    %v3327 = vsel %vm164, %v3322, -inf
    %3328 = vmax.xlane.f32.xlu0 %v3327
    %v3329 = vpop.xlane.xlu0 %3328
    %v3330 = vsub.f32 %v3319, %v3326
    %v3331 = vsub.f32 %v3322, %v3329
    %v3332 = vmul.f32 %v3330, 1.442695
    %v3333 = vpow.pop %v3332
    %v3334 = vmul.f32 %v3331, 1.442695
    %v3335 = vpow.pop %v3334
    %v3336 = vsel %vm164, %v3333, 0.0
    %3337 = vadd.xlane.f32.xlu0 %v3336
    %v3338 = vpop.xlane.xlu0 %3337
    %v3339 = vsel %vm164, %v3335, 0.0
    %3340 = vadd.xlane.f32.xlu0 %v3339
    %v3341 = vpop.xlane.xlu0 %3340
    %v3342 = vrcp.pop %v3338
    %v3343 = vrcp.pop %v3341
    %v3344 = vmul.f32 %v3333, %v3342
    %v3345 = vmul.f32 %v3335, %v3343
    %v3346 = vmul.f32 %v3106, %v85
    %v3347 = vmul.f32 %v3109, %v85
    %v3348 = vmul.f32 %v3112, %v85
    %v3350 = vsel %vm164, %v3344, 0
    %v3353 = vsel %vm164, %v3345, 0
    %3355 = vmatpush.msra.mxu0 0.0
    %3356 = vmatpush.msra.mxu0 0.0
    %3357 = vmatpush.msra.mxu0 0.0
    %3358 = vmatpush.msra.mxu0 0.0
    %3359 = vmatpush.msra.mxu0 0.0
    %3360 = vmatpush.msra.mxu0 0.0
    %3361 = vmatpush.msra.mxu0 0.0
    %3362 = vmatpush.msra.mxu0 0.0
    %3363 = vmatpush.msra.mxu0 0.0
    %3364 = vmatpush.msra.mxu0 0.0
    %3365 = vmatpush.msra.mxu0 0.0
    %3366 = vmatpush.msra.mxu0 0.0
    %3367 = vmatpush.msra.mxu0 0.0
    %3368 = vmatpush.msra.mxu0 %v3348
    %3369 = vmatpush.msra.mxu0 %v3347
    %3370 = vmatpush.msra.mxu0 %v3346
    %3371 = vmatmul.f32.gmra.mxu0 %v3350
    %v3372 = vpop.f32.mrf.mxu0
    %v3373 = vadd.f32 0.0, %v3372
    %3374 = vmatmul.f32.gmra.mxu0 %v3353
    %v3375 = vpop.f32.mrf.mxu0
    %v3376 = vadd.f32 0.0, %v3375
    %3377 = vdwg.mxu0
    %v3378 = vadd.f32 %v3288, %v3373
    %v3379 = vadd.f32 %v3291, %v3376
    %v3380 = vmul.f32 %v3030, %v97
    %v3381 = vmul.f32 %v3033, %v97
    %v3383 = vsel %vm340, %v3380, 0
    %v3386 = vsel %vm340, %v3381, 0
    %3388 = vmatpush.xpose.msra.mxu0 0.0
    %3389 = vmatpush.xpose.msra.mxu0 0.0
    %3390 = vmatpush.xpose.msra.mxu0 0.0
    %3391 = vmatpush.xpose.msra.mxu0 0.0
    %3392 = vmatpush.xpose.msra.mxu0 0.0
    %3393 = vmatpush.xpose.msra.mxu0 0.0
    %3394 = vmatpush.xpose.msra.mxu0 0.0
    %3395 = vmatpush.xpose.msra.mxu0 0.0
    %3396 = vmatpush.xpose.msra.mxu0 0.0
    %3397 = vmatpush.xpose.msra.mxu0 0.0
    %3398 = vmatpush.xpose.msra.mxu0 0.0
    %3399 = vmatpush.xpose.msra.mxu0 0.0
    %3400 = vmatpush.xpose.msra.mxu0 0.0
    %3401 = vmatpush.xpose.msra.mxu0 %v3129
    %3402 = vmatpush.xpose.msra.mxu0 %v3126
    %3403 = vmatpush.xpose.msra.mxu0 %v3123
    %3404 = vmatmul.f32.gmra.mxu0 %v3383
    %v3405 = vpop.f32.mrf.mxu0
    %v3406 = vadd.f32 %v320, %v3405
    %3407 = vmatmul.f32.gmra.mxu0 %v3386
    %v3408 = vpop.f32.mrf.mxu0
    %v3409 = vadd.f32 %v321, %v3408
    %3410 = vdwg.mxu0
    %v3411 = vsel %vm164, %v3406, -inf
    %3412 = vmax.xlane.f32.xlu0 %v3411
    %v3413 = vpop.xlane.xlu0 %3412
    %v3414 = vsel %vm164, %v3409, -inf
    %3415 = vmax.xlane.f32.xlu0 %v3414
    %v3416 = vpop.xlane.xlu0 %3415
    %v3417 = vsub.f32 %v3406, %v3413
    %v3418 = vsub.f32 %v3409, %v3416
    %v3419 = vmul.f32 %v3417, 1.442695
    %v3420 = vpow.pop %v3419
    %v3421 = vmul.f32 %v3418, 1.442695
    %v3422 = vpow.pop %v3421
    %v3423 = vsel %vm164, %v3420, 0.0
    %3424 = vadd.xlane.f32.xlu0 %v3423
    %v3425 = vpop.xlane.xlu0 %3424
    %v3426 = vsel %vm164, %v3422, 0.0
    %3427 = vadd.xlane.f32.xlu0 %v3426
    %v3428 = vpop.xlane.xlu0 %3427
    %v3429 = vrcp.pop %v3425
    %v3430 = vrcp.pop %v3428
    %v3431 = vmul.f32 %v3420, %v3429
    %v3432 = vmul.f32 %v3422, %v3430
    %v3433 = vmul.f32 %v3106, %v89
    %v3434 = vmul.f32 %v3109, %v89
    %v3435 = vmul.f32 %v3112, %v89
    %v3437 = vsel %vm164, %v3431, 0
    %v3440 = vsel %vm164, %v3432, 0
    %3442 = vmatpush.msra.mxu0 0.0
    %3443 = vmatpush.msra.mxu0 0.0
    %3444 = vmatpush.msra.mxu0 0.0
    %3445 = vmatpush.msra.mxu0 0.0
    %3446 = vmatpush.msra.mxu0 0.0
    %3447 = vmatpush.msra.mxu0 0.0
    %3448 = vmatpush.msra.mxu0 0.0
    %3449 = vmatpush.msra.mxu0 0.0
    %3450 = vmatpush.msra.mxu0 0.0
    %3451 = vmatpush.msra.mxu0 0.0
    %3452 = vmatpush.msra.mxu0 0.0
    %3453 = vmatpush.msra.mxu0 0.0
    %3454 = vmatpush.msra.mxu0 0.0
    %3455 = vmatpush.msra.mxu0 %v3435
    %3456 = vmatpush.msra.mxu0 %v3434
    %3457 = vmatpush.msra.mxu0 %v3433
    %3458 = vmatmul.f32.gmra.mxu0 %v3437
    %v3459 = vpop.f32.mrf.mxu0
    %v3460 = vadd.f32 0.0, %v3459
    %3461 = vmatmul.f32.gmra.mxu0 %v3440
    %v3462 = vpop.f32.mrf.mxu0
    %v3463 = vadd.f32 0.0, %v3462
    %3464 = vdwg.mxu0
    %v3465 = vadd.f32 %v3378, %v3460
    %v3466 = vadd.f32 %v3379, %v3463
    %v3467 = vmul.f32 %v3030, %v98
    %v3468 = vmul.f32 %v3033, %v98
    %v3470 = vsel %vm340, %v3467, 0
    %v3473 = vsel %vm340, %v3468, 0
    %3475 = vmatpush.xpose.msra.mxu0 0.0
    %3476 = vmatpush.xpose.msra.mxu0 0.0
    %3477 = vmatpush.xpose.msra.mxu0 0.0
    %3478 = vmatpush.xpose.msra.mxu0 0.0
    %3479 = vmatpush.xpose.msra.mxu0 0.0
    %3480 = vmatpush.xpose.msra.mxu0 0.0
    %3481 = vmatpush.xpose.msra.mxu0 0.0
    %3482 = vmatpush.xpose.msra.mxu0 0.0
    %3483 = vmatpush.xpose.msra.mxu0 0.0
    %3484 = vmatpush.xpose.msra.mxu0 0.0
    %3485 = vmatpush.xpose.msra.mxu0 0.0
    %3486 = vmatpush.xpose.msra.mxu0 0.0
    %3487 = vmatpush.xpose.msra.mxu0 0.0
    %3488 = vmatpush.xpose.msra.mxu0 %v3129
    %3489 = vmatpush.xpose.msra.mxu0 %v3126
    %3490 = vmatpush.xpose.msra.mxu0 %v3123
    %3491 = vmatmul.f32.gmra.mxu0 %v3470
    %v3492 = vpop.f32.mrf.mxu0
    %v3493 = vadd.f32 %v320, %v3492
    %3494 = vmatmul.f32.gmra.mxu0 %v3473
    %v3495 = vpop.f32.mrf.mxu0
    %v3496 = vadd.f32 %v321, %v3495
    %3497 = vdwg.mxu0
    %v3498 = vsel %vm164, %v3493, -inf
    %3499 = vmax.xlane.f32.xlu0 %v3498
    %v3500 = vpop.xlane.xlu0 %3499
    %v3501 = vsel %vm164, %v3496, -inf
    %3502 = vmax.xlane.f32.xlu0 %v3501
    %v3503 = vpop.xlane.xlu0 %3502
    %v3504 = vsub.f32 %v3493, %v3500
    %v3505 = vsub.f32 %v3496, %v3503
    %v3506 = vmul.f32 %v3504, 1.442695
    %v3507 = vpow.pop %v3506
    %v3508 = vmul.f32 %v3505, 1.442695
    %v3509 = vpow.pop %v3508
    %v3510 = vsel %vm164, %v3507, 0.0
    %3511 = vadd.xlane.f32.xlu0 %v3510
    %v3512 = vpop.xlane.xlu0 %3511
    %v3513 = vsel %vm164, %v3509, 0.0
    %3514 = vadd.xlane.f32.xlu0 %v3513
    %v3515 = vpop.xlane.xlu0 %3514
    %v3516 = vrcp.pop %v3512
    %v3517 = vrcp.pop %v3515
    %v3518 = vmul.f32 %v3507, %v3516
    %v3519 = vmul.f32 %v3509, %v3517
    %v3520 = vmul.f32 %v3106, %v93
    %v3521 = vmul.f32 %v3109, %v93
    %v3522 = vmul.f32 %v3112, %v93
    %v3524 = vsel %vm164, %v3518, 0
    %v3527 = vsel %vm164, %v3519, 0
    %3529 = vmatpush.msra.mxu0 0.0
    %3530 = vmatpush.msra.mxu0 0.0
    %3531 = vmatpush.msra.mxu0 0.0
    %3532 = vmatpush.msra.mxu0 0.0
    %3533 = vmatpush.msra.mxu0 0.0
    %3534 = vmatpush.msra.mxu0 0.0
    %3535 = vmatpush.msra.mxu0 0.0
    %3536 = vmatpush.msra.mxu0 0.0
    %3537 = vmatpush.msra.mxu0 0.0
    %3538 = vmatpush.msra.mxu0 0.0
    %3539 = vmatpush.msra.mxu0 0.0
    %3540 = vmatpush.msra.mxu0 0.0
    %3541 = vmatpush.msra.mxu0 0.0
    %3542 = vmatpush.msra.mxu0 %v3522
    %3543 = vmatpush.msra.mxu0 %v3521
    %3544 = vmatpush.msra.mxu0 %v3520
    %3545 = vmatmul.f32.gmra.mxu0 %v3524
    %v3546 = vpop.f32.mrf.mxu0
    %v3547 = vadd.f32 0.0, %v3546
    %3548 = vmatmul.f32.gmra.mxu0 %v3527
    %v3549 = vpop.f32.mrf.mxu0
    %v3550 = vadd.f32 0.0, %v3549
    %3551 = vdwg.mxu0
    %v3552 = vadd.f32 %v3465, %v3547
    %v3553 = vadd.f32 %v3466, %v3550
    %s3554 = scalar_lea.vmem %s6, 480
    %v3555 = vld [vmem:[%s3554] sm:$0xff]
    %v3556 = vld [vmem:[%s3554 + $0x8] sm:$0xff]
    %v3557 = vld [vmem:[%s3554 + $0x10] sm:$0xff]
    %v3558 = vld [vmem:[%s3554 + $0x18] sm:$0x3f]
    %v3559 = vperm.slane %v2937, 0
    %v3561 = vsel %vm340, %v3552, 0
    %v3564 = vsel %vm340, %v3553, 0
    %v3567 = vsel %vm491, %v3558, 0
    %3569 = vmatpush.msra.mxu0 0.0
    %3570 = vmatpush.msra.mxu0 0.0
    %3571 = vmatpush.msra.mxu0 0.0
    %3572 = vmatpush.msra.mxu0 0.0
    %3573 = vmatpush.msra.mxu0 0.0
    %3574 = vmatpush.msra.mxu0 0.0
    %3575 = vmatpush.msra.mxu0 0.0
    %3576 = vmatpush.msra.mxu0 0.0
    %3577 = vmatpush.msra.mxu0 0.0
    %3578 = vmatpush.msra.mxu0 0.0
    %3579 = vmatpush.msra.mxu0 0.0
    %3580 = vmatpush.msra.mxu0 0.0
    %3581 = vmatpush.msra.mxu0 %v3567
    %3582 = vmatpush.msra.mxu0 %v3557
    %3583 = vmatpush.msra.mxu0 %v3556
    %3584 = vmatpush.msra.mxu0 %v3555
    %3585 = vmatmul.f32.gmra.mxu0 %v3561
    %v3586 = vpop.f32.mrf.mxu0
    %v3587 = vadd.f32 %v3559, %v3586
    %3588 = vmatmul.f32.gmra.mxu0 %v3564
    %v3589 = vpop.f32.mrf.mxu0
    %v3590 = vadd.f32 %v3559, %v3589
    %3591 = vdwg.mxu0
    %v3592 = vadd.f32 %v2929, %v3587
    %v3593 = vadd.f32 %v2930, %v3590
    %v3594 = vsel %vm340, %v3592, 0.0
    %3595 = vadd.xlane.f32.xlu0 %v3594
    %v3596 = vpop.xlane.xlu0 %3595
    %v3597 = vsel %vm340, %v3593, 0.0
    %3598 = vadd.xlane.f32.xlu0 %v3597
    %v3599 = vpop.xlane.xlu0 %3598
    %v3600 = vmul.f32 %v3596, %v357
    %v3601 = vmul.f32 %v3599, %v357
    %v3602 = vsub.f32 %v3592, %v3600
    %v3603 = vsub.f32 %v3593, %v3601
    %v3604 = vmul.f32 %v3602, %v3602
    %v3605 = vmul.f32 %v3603, %v3603
    %v3606 = vsel %vm340, %v3604, 0.0
    %3607 = vadd.xlane.f32.xlu0 %v3606
    %v3608 = vpop.xlane.xlu0 %3607
    %v3609 = vsel %vm340, %v3605, 0.0
    %3610 = vadd.xlane.f32.xlu0 %v3609
    %v3611 = vpop.xlane.xlu0 %3610
    %v3612 = vmul.f32 %v3608, %v357
    %v3613 = vmul.f32 %v3611, %v357
    %v3614 = vadd.f32 %v3612, 1e-05
    %v3615 = vadd.f32 %v3613, 1e-05
    %v3616 = vrsqrt.pop %v3614
    %v3617 = vmul.f32 %v3616, %v3614
    %v3618 = vmul.f32 %v3617, %v3616
    %v3619 = vmul.f32 0.5, %v3618
    %v3620 = vsub.f32 1.5, %v3619
    %v3621 = vmul.f32 %v3616, %v3620
    %vm3622 = vweird.f32 %v3614
    %vm3623 = vweird.f32 %v3616
    %vm3624 = vmor %vm3622, %vm3623
    %v3625 = vsel %vm3624, %v3616, %v3621
    %v3626 = vrsqrt.pop %v3615
    %v3627 = vmul.f32 %v3626, %v3615
    %v3628 = vmul.f32 %v3627, %v3626
    %v3629 = vmul.f32 0.5, %v3628
    %v3630 = vsub.f32 1.5, %v3629
    %v3631 = vmul.f32 %v3626, %v3630
    %vm3632 = vweird.f32 %v3615
    %vm3633 = vweird.f32 %v3626
    %vm3634 = vmor %vm3632, %vm3633
    %v3635 = vsel %vm3634, %v3626, %v3631
    %v3636 = vmul.f32 %v3602, %v3625
    %v3637 = vmul.f32 %v3603, %v3635
    %v3638 = vperm.slane %v2938, 0
    %v3639 = vmul.f32 %v3636, %v3638
    %v3640 = vmul.f32 %v3637, %v3638
    %v3641 = vperm.slane %v2939, 0
    %v3642 = vadd.f32 %v3639, %v3641
    %v3643 = vadd.f32 %v3640, %v3641
    %s3644 = scalar_lea.vmem %s7, 96
    %v3645 = vld [vmem:[%s3644] sm:$0xff]
    %v3646 = vld [vmem:[%s3644 + $0x8] sm:$0xff]
    %v3647 = vld [vmem:[%s3644 + $0x10] sm:$0xff]
    %v3648 = vld [vmem:[%s3644 + $0x18] sm:$0x3f]
    %s3649 = scalar_lea.vmem %s10, 3
    %v3650 = vld [vmem:[%s3649] sm:$0x1]
    %v3652 = vperm.slane %v3650, 0
    %v3655 = vsel %vm340, %v3642, 0
    %v3658 = vsel %vm340, %v3643, 0
    %v3661 = vsel %vm491, %v3648, 0
    %3663 = vmatpush.msra.mxu0 0.0
    %3664 = vmatpush.msra.mxu0 0.0
    %3665 = vmatpush.msra.mxu0 0.0
    %3666 = vmatpush.msra.mxu0 0.0
    %3667 = vmatpush.msra.mxu0 0.0
    %3668 = vmatpush.msra.mxu0 0.0
    %3669 = vmatpush.msra.mxu0 0.0
    %3670 = vmatpush.msra.mxu0 0.0
    %3671 = vmatpush.msra.mxu0 0.0
    %3672 = vmatpush.msra.mxu0 0.0
    %3673 = vmatpush.msra.mxu0 0.0
    %3674 = vmatpush.msra.mxu0 0.0
    %3675 = vmatpush.msra.mxu0 %v3661
    %3676 = vmatpush.msra.mxu0 %v3647
    %3677 = vmatpush.msra.mxu0 %v3646
    %3678 = vmatpush.msra.mxu0 %v3645
    %3679 = vmatmul.f32.gmra.mxu0 %v3655
    %v3680 = vpop.f32.mrf.mxu0
    %v3681 = vadd.f32 %v3652, %v3680
    %3682 = vmatmul.f32.gmra.mxu0 %v3658
    %v3683 = vpop.f32.mrf.mxu0
    %v3684 = vadd.f32 %v3652, %v3683
    %3685 = vdwg.mxu0
    %v3686 = vmax.f32 %v3681, 0.0
    %v3687 = vmax.f32 %v3684, 0.0
    %s3688 = scalar_lea.vmem %s8, 360
    %v3689 = vld [vmem:[%s3688] sm:$0xff]
    %v3690 = vld [vmem:[%s3688 + $0x8] sm:$0xff]
    %v3691 = vld [vmem:[%s3688 + $0x10] sm:$0xff]
    %v3692 = vld [vmem:[%s3688 + $0x18] sm:$0xff]
    %v3693 = vld [vmem:[%s3688 + $0x20] sm:$0xff]
    %v3694 = vld [vmem:[%s3688 + $0x28] sm:$0xff]
    %v3695 = vld [vmem:[%s3688 + $0x30] sm:$0xff]
    %v3696 = vld [vmem:[%s3688 + $0x38] sm:$0xff]
    %v3697 = vld [vmem:[%s3688 + $0x40] sm:$0xff]
    %v3698 = vld [vmem:[%s3688 + $0x48] sm:$0xff]
    %v3699 = vld [vmem:[%s3688 + $0x50] sm:$0xff]
    %v3700 = vld [vmem:[%s3688 + $0x58] sm:$0xff]
    %v3701 = vld [vmem:[%s3688 + $0x60] sm:$0xff]
    %v3702 = vld [vmem:[%s3688 + $0x68] sm:$0xff]
    %v3703 = vld [vmem:[%s3688 + $0x70] sm:$0xff]
    %v3704 = vperm.slane %v2940, 0
    %v3706 = vsel %vm1200, %v3686, 0
    %v3709 = vsel %vm1200, %v3687, 0
    %3711 = vmatpush.msra.mxu0 0.0
    %3712 = vmatpush.msra.mxu0 %v3703
    %3713 = vmatpush.msra.mxu0 %v3702
    %3714 = vmatpush.msra.mxu0 %v3701
    %3715 = vmatpush.msra.mxu0 %v3700
    %3716 = vmatpush.msra.mxu0 %v3699
    %3717 = vmatpush.msra.mxu0 %v3698
    %3718 = vmatpush.msra.mxu0 %v3697
    %3719 = vmatpush.msra.mxu0 %v3696
    %3720 = vmatpush.msra.mxu0 %v3695
    %3721 = vmatpush.msra.mxu0 %v3694
    %3722 = vmatpush.msra.mxu0 %v3693
    %3723 = vmatpush.msra.mxu0 %v3692
    %3724 = vmatpush.msra.mxu0 %v3691
    %3725 = vmatpush.msra.mxu0 %v3690
    %3726 = vmatpush.msra.mxu0 %v3689
    %3727 = vmatmul.f32.gmra.mxu0 %v3706
    %v3728 = vpop.f32.mrf.mxu0
    %v3729 = vadd.f32 %v3704, %v3728
    %3730 = vmatmul.f32.gmra.mxu0 %v3709
    %v3731 = vpop.f32.mrf.mxu0
    %v3732 = vadd.f32 %v3704, %v3731
    %3733 = vdwg.mxu0
    %v3734 = vadd.f32 %v3592, %v3729
    %v3735 = vadd.f32 %v3593, %v3732
    %v3736 = vld [vmem:[%s11 + $0x2] sm:$0x1]
    %v3737 = vld [vmem:[%s11 + $0x3] sm:$0x1]
    %v3738 = vsel %vm340, %v3734, 0.0
    %3739 = vadd.xlane.f32.xlu0 %v3738
    %v3740 = vpop.xlane.xlu0 %3739
    %v3741 = vsel %vm340, %v3735, 0.0
    %3742 = vadd.xlane.f32.xlu0 %v3741
    %v3743 = vpop.xlane.xlu0 %3742
    %v3744 = vmul.f32 %v3740, %v357
    %v3745 = vmul.f32 %v3743, %v357
    %v3746 = vsub.f32 %v3734, %v3744
    %v3747 = vsub.f32 %v3735, %v3745
    %v3748 = vmul.f32 %v3746, %v3746
    %v3749 = vmul.f32 %v3747, %v3747
    %v3750 = vsel %vm340, %v3748, 0.0
    %3751 = vadd.xlane.f32.xlu0 %v3750
    %v3752 = vpop.xlane.xlu0 %3751
    %v3753 = vsel %vm340, %v3749, 0.0
    %3754 = vadd.xlane.f32.xlu0 %v3753
    %v3755 = vpop.xlane.xlu0 %3754
    %v3756 = vmul.f32 %v3752, %v357
    %v3757 = vmul.f32 %v3755, %v357
    %v3758 = vadd.f32 %v3756, 1e-05
    %v3759 = vadd.f32 %v3757, 1e-05
    %v3760 = vrsqrt.pop %v3758
    %v3761 = vmul.f32 %v3760, %v3758
    %v3762 = vmul.f32 %v3761, %v3760
    %v3763 = vmul.f32 0.5, %v3762
    %v3764 = vsub.f32 1.5, %v3763
    %v3765 = vmul.f32 %v3760, %v3764
    %vm3766 = vweird.f32 %v3758
    %vm3767 = vweird.f32 %v3760
    %vm3768 = vmor %vm3766, %vm3767
    %v3769 = vsel %vm3768, %v3760, %v3765
    %v3770 = vrsqrt.pop %v3759
    %v3771 = vmul.f32 %v3770, %v3759
    %v3772 = vmul.f32 %v3771, %v3770
    %v3773 = vmul.f32 0.5, %v3772
    %v3774 = vsub.f32 1.5, %v3773
    %v3775 = vmul.f32 %v3770, %v3774
    %vm3776 = vweird.f32 %v3759
    %vm3777 = vweird.f32 %v3770
    %vm3778 = vmor %vm3776, %vm3777
    %v3779 = vsel %vm3778, %v3770, %v3775
    %v3780 = vmul.f32 %v3746, %v3769
    %v3781 = vmul.f32 %v3747, %v3779
    %v3782 = vperm.slane %v3736, 0
    %v3783 = vmul.f32 %v3780, %v3782
    %v3784 = vmul.f32 %v3781, %v3782
    %v3785 = vperm.slane %v3737, 0
    %v3786 = vadd.f32 %v3783, %v3785
    %v3787 = vadd.f32 %v3784, %v3785
    %v3788 = vadd.s32 %v274, 16
    %v3789 = vadd.s32 %v274, 24
    %vm3790 = vcmp.eq.s32.totalorder %v73, %v274
    %vm3791 = vcmp.eq.s32.totalorder %v73, %v275
    %vm3792 = vcmp.eq.s32.totalorder %v73, %v3788
    %vm3793 = vcmp.eq.s32.totalorder %v73, %v3789
    %v3794 = vsel %vm3790, 1.0, 0.0
    %v3795 = vsel %vm3791, 1.0, 0.0
    %v3796 = vsel %vm3792, 1.0, 0.0
    %v3797 = vsel %vm3793, 1.0, 0.0
    %v3798 = vadd.s32 %v274, 30
    %v3799 = vadd.s32 %v275, 30
    %v3800 = vadd.s32 %v3788, 30
    %v3801 = vadd.s32 %v3789, 30
    %vm3802 = vcmp.eq.s32.totalorder %v73, %v3798
    %vm3803 = vcmp.eq.s32.totalorder %v73, %v3799
    %vm3804 = vcmp.eq.s32.totalorder %v73, %v3800
    %vm3805 = vcmp.eq.s32.totalorder %v73, %v3801
    %v3806 = vsel %vm3802, 1.0, 0.0
    %v3807 = vsel %vm3803, 1.0, 0.0
    %v3808 = vsel %vm3804, 1.0, 0.0
    %v3809 = vsel %vm3805, 1.0, 0.0
    %v3811 = vsel %vm340, %v3786, 0
    %v3814 = vsel %vm340, %v3787, 0
    %v3817 = vsel %vm491, %v3809, 0
    %3819 = vmatpush.msra.mxu0 0.0
    %3820 = vmatpush.msra.mxu0 0.0
    %3821 = vmatpush.msra.mxu0 0.0
    %3822 = vmatpush.msra.mxu0 0.0
    %3823 = vmatpush.msra.mxu0 0.0
    %3824 = vmatpush.msra.mxu0 0.0
    %3825 = vmatpush.msra.mxu0 0.0
    %3826 = vmatpush.msra.mxu0 0.0
    %3827 = vmatpush.msra.mxu0 0.0
    %3828 = vmatpush.msra.mxu0 0.0
    %3829 = vmatpush.msra.mxu0 0.0
    %3830 = vmatpush.msra.mxu0 0.0
    %3831 = vmatpush.msra.mxu0 %v3817
    %3832 = vmatpush.msra.mxu0 %v3808
    %3833 = vmatpush.msra.mxu0 %v3807
    %3834 = vmatpush.msra.mxu0 %v3806
    %3835 = vmatmul.f32.gmra.mxu0 %v3811
    %v3836 = vpop.f32.mrf.mxu0
    %v3837 = vadd.f32 0.0, %v3836
    %3838 = vmatmul.f32.gmra.mxu0 %v3814
    %v3839 = vpop.f32.mrf.mxu0
    %v3840 = vadd.f32 0.0, %v3839
    %3841 = vdwg.mxu0
    %v3843 = vsel %vm340, %v2102, 0
    %v3846 = vsel %vm340, %v2103, 0
    %v3849 = vsel %vm491, %v3797, 0
    %3851 = vmatpush.msra.mxu0 0.0
    %3852 = vmatpush.msra.mxu0 0.0
    %3853 = vmatpush.msra.mxu0 0.0
    %3854 = vmatpush.msra.mxu0 0.0
    %3855 = vmatpush.msra.mxu0 0.0
    %3856 = vmatpush.msra.mxu0 0.0
    %3857 = vmatpush.msra.mxu0 0.0
    %3858 = vmatpush.msra.mxu0 0.0
    %3859 = vmatpush.msra.mxu0 0.0
    %3860 = vmatpush.msra.mxu0 0.0
    %3861 = vmatpush.msra.mxu0 0.0
    %3862 = vmatpush.msra.mxu0 0.0
    %3863 = vmatpush.msra.mxu0 %v3849
    %3864 = vmatpush.msra.mxu0 %v3796
    %3865 = vmatpush.msra.mxu0 %v3795
    %3866 = vmatpush.msra.mxu0 %v3794
    %3867 = vmatmul.f32.gmra.mxu0 %v3843
    %v3868 = vpop.f32.mrf.mxu0
    %v3869 = vadd.f32 %v3837, %v3868
    %3870 = vmatmul.f32.gmra.mxu0 %v3846
    %v3871 = vpop.f32.mrf.mxu0
    %v3872 = vadd.f32 %v3840, %v3871
    %3873 = vdwg.mxu0
    %v3874 = vmul.f32 %v3869, 7.745967
    %v3875 = vmul.f32 %v3872, 7.745967
    %v3876 = vadd.f32 %v3874, %v254
    %v3877 = vadd.f32 %v3875, %v255
    %v3878 = vld [vmem:[%s15] sm:$0x1]
    %v3879 = vld [vmem:[%s15 + $0x1] sm:$0x1]
    %v3880 = vld [vmem:[%s15 + $0x2] sm:$0x1]
    %v3881 = vld [vmem:[%s15 + $0x3] sm:$0x1]
    %v3882 = vld [vmem:[%s15 + $0x4] sm:$0x1]
    %v3883 = vld [vmem:[%s15 + $0x5] sm:$0x1]
    %v3884 = vld [vmem:[%s15 + $0x6] sm:$0x1]
    %v3885 = vld [vmem:[%s15 + $0x7] sm:$0x1]
    %v3886 = vld [vmem:[%s15 + $0x8] sm:$0x1]
    %vm3887 = vcmask 490496
    %v3888 = vsel %vm3887, %v3876, 0.0
    %3889 = vadd.xlane.f32.xlu0 %v3888
    %v3890 = vpop.xlane.xlu0 %3889
    %v3891 = vsel %vm3887, %v3877, 0.0
    %3892 = vadd.xlane.f32.xlu0 %v3891
    %v3893 = vpop.xlane.xlu0 %3892
    %v3894 = vrcp.pop 60.0
    %v3895 = vmul.f32 60.0, %v3894
    %v3896 = vsub.f32 1.0, %v3895
    %v3897 = vmul.f32 %v3894, %v3896
    %v3898 = vadd.f32 %v3894, %v3897
    %vm3899 = vweird.f32 %v3894
    %v3900 = vsel %vm3899, %v3894, %v3898
    %v3901 = vmul.f32 %v3890, %v3900
    %v3902 = vmul.f32 %v3893, %v3900
    %v3903 = vsub.f32 %v3876, %v3901
    %v3904 = vsub.f32 %v3877, %v3902
    %v3905 = vmul.f32 %v3903, %v3903
    %v3906 = vmul.f32 %v3904, %v3904
    %v3907 = vsel %vm3887, %v3905, 0.0
    %3908 = vadd.xlane.f32.xlu0 %v3907
    %v3909 = vpop.xlane.xlu0 %3908
    %v3910 = vsel %vm3887, %v3906, 0.0
    %3911 = vadd.xlane.f32.xlu0 %v3910
    %v3912 = vpop.xlane.xlu0 %3911
    %v3913 = vmul.f32 %v3909, %v3900
    %v3914 = vmul.f32 %v3912, %v3900
    %v3915 = vadd.f32 %v3913, 1e-05
    %v3916 = vadd.f32 %v3914, 1e-05
    %v3917 = vrsqrt.pop %v3915
    %v3918 = vmul.f32 %v3917, %v3915
    %v3919 = vmul.f32 %v3918, %v3917
    %v3920 = vmul.f32 0.5, %v3919
    %v3921 = vsub.f32 1.5, %v3920
    %v3922 = vmul.f32 %v3917, %v3921
    %vm3923 = vweird.f32 %v3915
    %vm3924 = vweird.f32 %v3917
    %vm3925 = vmor %vm3923, %vm3924
    %v3926 = vsel %vm3925, %v3917, %v3922
    %v3927 = vrsqrt.pop %v3916
    %v3928 = vmul.f32 %v3927, %v3916
    %v3929 = vmul.f32 %v3928, %v3927
    %v3930 = vmul.f32 0.5, %v3929
    %v3931 = vsub.f32 1.5, %v3930
    %v3932 = vmul.f32 %v3927, %v3931
    %vm3933 = vweird.f32 %v3916
    %vm3934 = vweird.f32 %v3927
    %vm3935 = vmor %vm3933, %vm3934
    %v3936 = vsel %vm3935, %v3927, %v3932
    %v3937 = vmul.f32 %v3903, %v3926
    %v3938 = vmul.f32 %v3904, %v3936
    %v3939 = vperm.slane %v3878, 0
    %v3940 = vmul.f32 %v3937, %v3939
    %v3941 = vmul.f32 %v3938, %v3939
    %v3942 = vperm.slane %v3879, 0
    %v3943 = vadd.f32 %v3940, %v3942
    %v3944 = vadd.f32 %v3941, %v3942
    %v3945 = vld [vmem:[%s12] sm:$0xff]
    %v3946 = vld [vmem:[%s12 + $0x8] sm:$0xff]
    %v3947 = vld [vmem:[%s12 + $0x10] sm:$0xff]
    %v3948 = vld [vmem:[%s12 + $0x18] sm:$0xff]
    %v3949 = vld [vmem:[%s12 + $0x20] sm:$0xff]
    %v3950 = vld [vmem:[%s12 + $0x28] sm:$0xff]
    %v3951 = vld [vmem:[%s12 + $0x30] sm:$0xff]
    %v3952 = vld [vmem:[%s12 + $0x38] sm:$0xf]
    %v3953 = vperm.slane %v3880, 0
    %v3955 = vsel %vm3887, %v3943, 0
    %v3958 = vsel %vm3887, %v3944, 0
    %v3961 = vsel %vm131, %v3952, 0
    %3963 = vmatpush.msra.mxu0 0.0
    %3964 = vmatpush.msra.mxu0 0.0
    %3965 = vmatpush.msra.mxu0 0.0
    %3966 = vmatpush.msra.mxu0 0.0
    %3967 = vmatpush.msra.mxu0 0.0
    %3968 = vmatpush.msra.mxu0 0.0
    %3969 = vmatpush.msra.mxu0 0.0
    %3970 = vmatpush.msra.mxu0 0.0
    %3971 = vmatpush.msra.mxu0 %v3961
    %3972 = vmatpush.msra.mxu0 %v3951
    %3973 = vmatpush.msra.mxu0 %v3950
    %3974 = vmatpush.msra.mxu0 %v3949
    %3975 = vmatpush.msra.mxu0 %v3948
    %3976 = vmatpush.msra.mxu0 %v3947
    %3977 = vmatpush.msra.mxu0 %v3946
    %3978 = vmatpush.msra.mxu0 %v3945
    %3979 = vmatmul.f32.gmra.mxu0 %v3955
    %v3980 = vpop.f32.mrf.mxu0
    %v3981 = vadd.f32 %v3953, %v3980
    %3982 = vmatmul.f32.gmra.mxu0 %v3958
    %v3983 = vpop.f32.mrf.mxu0
    %v3984 = vadd.f32 %v3953, %v3983
    %3985 = vdwg.mxu0
    %s3986 = scalar_lea.vmem %s12, 64
    %v3987 = vld [vmem:[%s3986] sm:$0xff]
    %v3988 = vld [vmem:[%s3986 + $0x8] sm:$0xff]
    %v3989 = vld [vmem:[%s3986 + $0x10] sm:$0xff]
    %v3990 = vld [vmem:[%s3986 + $0x18] sm:$0xff]
    %v3991 = vld [vmem:[%s3986 + $0x20] sm:$0xff]
    %v3992 = vld [vmem:[%s3986 + $0x28] sm:$0xff]
    %v3993 = vld [vmem:[%s3986 + $0x30] sm:$0xff]
    %v3994 = vld [vmem:[%s3986 + $0x38] sm:$0xf]
    %v3995 = vperm.slane %v3881, 0
    %v3997 = vsel %vm131, %v3994, 0
    %3999 = vmatpush.msra.mxu0 0.0
    %4000 = vmatpush.msra.mxu0 0.0
    %4001 = vmatpush.msra.mxu0 0.0
    %4002 = vmatpush.msra.mxu0 0.0
    %4003 = vmatpush.msra.mxu0 0.0
    %4004 = vmatpush.msra.mxu0 0.0
    %4005 = vmatpush.msra.mxu0 0.0
    %4006 = vmatpush.msra.mxu0 0.0
    %4007 = vmatpush.msra.mxu0 %v3997
    %4008 = vmatpush.msra.mxu0 %v3993
    %4009 = vmatpush.msra.mxu0 %v3992
    %4010 = vmatpush.msra.mxu0 %v3991
    %4011 = vmatpush.msra.mxu0 %v3990
    %4012 = vmatpush.msra.mxu0 %v3989
    %4013 = vmatpush.msra.mxu0 %v3988
    %4014 = vmatpush.msra.mxu0 %v3987
    %4015 = vmatmul.f32.gmra.mxu0 %v3955
    %v4016 = vpop.f32.mrf.mxu0
    %v4017 = vadd.f32 %v3995, %v4016
    %4018 = vmatmul.f32.gmra.mxu0 %v3958
    %v4019 = vpop.f32.mrf.mxu0
    %v4020 = vadd.f32 %v3995, %v4019
    %4021 = vdwg.mxu0
    %s4022 = scalar_lea.vmem %s12, 128
    %v4023 = vld [vmem:[%s4022] sm:$0xff]
    %v4024 = vld [vmem:[%s4022 + $0x8] sm:$0xff]
    %v4025 = vld [vmem:[%s4022 + $0x10] sm:$0xff]
    %v4026 = vld [vmem:[%s4022 + $0x18] sm:$0xff]
    %v4027 = vld [vmem:[%s4022 + $0x20] sm:$0xff]
    %v4028 = vld [vmem:[%s4022 + $0x28] sm:$0xff]
    %v4029 = vld [vmem:[%s4022 + $0x30] sm:$0xff]
    %v4030 = vld [vmem:[%s4022 + $0x38] sm:$0xf]
    %v4031 = vperm.slane %v3882, 0
    %v4033 = vsel %vm131, %v4030, 0
    %4035 = vmatpush.msra.mxu0 0.0
    %4036 = vmatpush.msra.mxu0 0.0
    %4037 = vmatpush.msra.mxu0 0.0
    %4038 = vmatpush.msra.mxu0 0.0
    %4039 = vmatpush.msra.mxu0 0.0
    %4040 = vmatpush.msra.mxu0 0.0
    %4041 = vmatpush.msra.mxu0 0.0
    %4042 = vmatpush.msra.mxu0 0.0
    %4043 = vmatpush.msra.mxu0 %v4033
    %4044 = vmatpush.msra.mxu0 %v4029
    %4045 = vmatpush.msra.mxu0 %v4028
    %4046 = vmatpush.msra.mxu0 %v4027
    %4047 = vmatpush.msra.mxu0 %v4026
    %4048 = vmatpush.msra.mxu0 %v4025
    %4049 = vmatpush.msra.mxu0 %v4024
    %4050 = vmatpush.msra.mxu0 %v4023
    %4051 = vmatmul.f32.gmra.mxu0 %v3955
    %v4052 = vpop.f32.mrf.mxu0
    %v4053 = vadd.f32 %v4031, %v4052
    %4054 = vmatmul.f32.gmra.mxu0 %v3958
    %v4055 = vpop.f32.mrf.mxu0
    %v4056 = vadd.f32 %v4031, %v4055
    %4057 = vdwg.mxu0
    %v4058 = vmul.f32 %v3981, %v114
    %v4059 = vmul.f32 %v3984, %v114
    %v4061 = vsel %vm3887, %v4058, 0
    %v4064 = vsel %vm3887, %v4059, 0
    %v4067 = vsel %vm3887, %v4017, 0
    %v4070 = vsel %vm3887, %v4020, 0
    %4072 = vmatpush.xpose.msra.mxu0 0.0
    %4073 = vmatpush.xpose.msra.mxu0 0.0
    %4074 = vmatpush.xpose.msra.mxu0 0.0
    %4075 = vmatpush.xpose.msra.mxu0 0.0
    %4076 = vmatpush.xpose.msra.mxu0 0.0
    %4077 = vmatpush.xpose.msra.mxu0 0.0
    %4078 = vmatpush.xpose.msra.mxu0 0.0
    %4079 = vmatpush.xpose.msra.mxu0 0.0
    %4080 = vmatpush.xpose.msra.mxu0 0.0
    %4081 = vmatpush.xpose.msra.mxu0 0.0
    %4082 = vmatpush.xpose.msra.mxu0 0.0
    %4083 = vmatpush.xpose.msra.mxu0 0.0
    %4084 = vmatpush.xpose.msra.mxu0 0.0
    %4085 = vmatpush.xpose.msra.mxu0 0.0
    %4086 = vmatpush.xpose.msra.mxu0 %v4070
    %4087 = vmatpush.xpose.msra.mxu0 %v4067
    %4088 = vmatmul.f32.gmra.mxu0 %v4061
    %v4089 = vpop.f32.mrf.mxu0
    %v4090 = vadd.f32 %v338, %v4089
    %4091 = vmatmul.f32.gmra.mxu0 %v4064
    %v4092 = vpop.f32.mrf.mxu0
    %v4093 = vadd.f32 %v339, %v4092
    %4094 = vdwg.mxu0
    %vm4095 = vcmask 130048
    %v4096 = vsel %vm4095, %v4090, -inf
    %4097 = vmax.xlane.f32.xlu0 %v4096
    %v4098 = vpop.xlane.xlu0 %4097
    %v4099 = vsel %vm4095, %v4093, -inf
    %4100 = vmax.xlane.f32.xlu0 %v4099
    %v4101 = vpop.xlane.xlu0 %4100
    %v4102 = vsub.f32 %v4090, %v4098
    %v4103 = vsub.f32 %v4093, %v4101
    %v4104 = vmul.f32 %v4102, 1.442695
    %v4105 = vpow.pop %v4104
    %v4106 = vmul.f32 %v4103, 1.442695
    %v4107 = vpow.pop %v4106
    %v4108 = vsel %vm4095, %v4105, 0.0
    %4109 = vadd.xlane.f32.xlu0 %v4108
    %v4110 = vpop.xlane.xlu0 %4109
    %v4111 = vsel %vm4095, %v4107, 0.0
    %4112 = vadd.xlane.f32.xlu0 %v4111
    %v4113 = vpop.xlane.xlu0 %4112
    %v4114 = vrcp.pop %v4110
    %v4115 = vrcp.pop %v4113
    %v4116 = vmul.f32 %v4105, %v4114
    %v4117 = vmul.f32 %v4107, %v4115
    %v4118 = vmul.f32 %v4053, %v100
    %v4119 = vmul.f32 %v4056, %v100
    %v4120 = vmul.f32 %v3981, %v115
    %v4121 = vmul.f32 %v3984, %v115
    %v4123 = vsel %vm3887, %v4120, 0
    %v4126 = vsel %vm3887, %v4121, 0
    %4128 = vmatpush.xpose.msra.mxu0 0.0
    %4129 = vmatpush.xpose.msra.mxu0 0.0
    %4130 = vmatpush.xpose.msra.mxu0 0.0
    %4131 = vmatpush.xpose.msra.mxu0 0.0
    %4132 = vmatpush.xpose.msra.mxu0 0.0
    %4133 = vmatpush.xpose.msra.mxu0 0.0
    %4134 = vmatpush.xpose.msra.mxu0 0.0
    %4135 = vmatpush.xpose.msra.mxu0 0.0
    %4136 = vmatpush.xpose.msra.mxu0 0.0
    %4137 = vmatpush.xpose.msra.mxu0 0.0
    %4138 = vmatpush.xpose.msra.mxu0 0.0
    %4139 = vmatpush.xpose.msra.mxu0 0.0
    %4140 = vmatpush.xpose.msra.mxu0 0.0
    %4141 = vmatpush.xpose.msra.mxu0 0.0
    %4142 = vmatpush.xpose.msra.mxu0 %v4070
    %4143 = vmatpush.xpose.msra.mxu0 %v4067
    %4144 = vmatmul.f32.gmra.mxu0 %v4123
    %v4145 = vpop.f32.mrf.mxu0
    %v4146 = vadd.f32 %v338, %v4145
    %4147 = vmatmul.f32.gmra.mxu0 %v4126
    %v4148 = vpop.f32.mrf.mxu0
    %v4149 = vadd.f32 %v339, %v4148
    %4150 = vdwg.mxu0
    %v4151 = vsel %vm4095, %v4146, -inf
    %4152 = vmax.xlane.f32.xlu0 %v4151
    %v4153 = vpop.xlane.xlu0 %4152
    %v4154 = vsel %vm4095, %v4149, -inf
    %4155 = vmax.xlane.f32.xlu0 %v4154
    %v4156 = vpop.xlane.xlu0 %4155
    %v4157 = vsub.f32 %v4146, %v4153
    %v4158 = vsub.f32 %v4149, %v4156
    %v4159 = vmul.f32 %v4157, 1.442695
    %v4160 = vpow.pop %v4159
    %v4161 = vmul.f32 %v4158, 1.442695
    %v4162 = vpow.pop %v4161
    %v4163 = vsel %vm4095, %v4160, 0.0
    %4164 = vadd.xlane.f32.xlu0 %v4163
    %v4165 = vpop.xlane.xlu0 %4164
    %v4166 = vsel %vm4095, %v4162, 0.0
    %4167 = vadd.xlane.f32.xlu0 %v4166
    %v4168 = vpop.xlane.xlu0 %4167
    %v4169 = vrcp.pop %v4165
    %v4170 = vrcp.pop %v4168
    %v4171 = vmul.f32 %v4160, %v4169
    %v4172 = vmul.f32 %v4162, %v4170
    %v4173 = vmul.f32 %v4053, %v102
    %v4174 = vmul.f32 %v4056, %v102
    %v4176 = vsel %vm4095, %v4171, 0
    %v4179 = vsel %vm4095, %v4172, 0
    %4181 = vmatpush.msra.mxu0 0.0
    %4182 = vmatpush.msra.mxu0 0.0
    %4183 = vmatpush.msra.mxu0 0.0
    %4184 = vmatpush.msra.mxu0 0.0
    %4185 = vmatpush.msra.mxu0 0.0
    %4186 = vmatpush.msra.mxu0 0.0
    %4187 = vmatpush.msra.mxu0 0.0
    %4188 = vmatpush.msra.mxu0 0.0
    %4189 = vmatpush.msra.mxu0 0.0
    %4190 = vmatpush.msra.mxu0 0.0
    %4191 = vmatpush.msra.mxu0 0.0
    %4192 = vmatpush.msra.mxu0 0.0
    %4193 = vmatpush.msra.mxu0 0.0
    %4194 = vmatpush.msra.mxu0 0.0
    %4195 = vmatpush.msra.mxu0 %v4174
    %4196 = vmatpush.msra.mxu0 %v4173
    %4197 = vmatmul.f32.gmra.mxu0 %v4176
    %v4198 = vpop.f32.mrf.mxu0
    %v4199 = vadd.f32 0.0, %v4198
    %4200 = vmatmul.f32.gmra.mxu0 %v4179
    %v4201 = vpop.f32.mrf.mxu0
    %v4202 = vadd.f32 0.0, %v4201
    %4203 = vdwg.mxu0
    %v4205 = vsel %vm4095, %v4116, 0
    %v4208 = vsel %vm4095, %v4117, 0
    %4210 = vmatpush.msra.mxu0 0.0
    %4211 = vmatpush.msra.mxu0 0.0
    %4212 = vmatpush.msra.mxu0 0.0
    %4213 = vmatpush.msra.mxu0 0.0
    %4214 = vmatpush.msra.mxu0 0.0
    %4215 = vmatpush.msra.mxu0 0.0
    %4216 = vmatpush.msra.mxu0 0.0
    %4217 = vmatpush.msra.mxu0 0.0
    %4218 = vmatpush.msra.mxu0 0.0
    %4219 = vmatpush.msra.mxu0 0.0
    %4220 = vmatpush.msra.mxu0 0.0
    %4221 = vmatpush.msra.mxu0 0.0
    %4222 = vmatpush.msra.mxu0 0.0
    %4223 = vmatpush.msra.mxu0 0.0
    %4224 = vmatpush.msra.mxu0 %v4119
    %4225 = vmatpush.msra.mxu0 %v4118
    %4226 = vmatmul.f32.gmra.mxu0 %v4205
    %v4227 = vpop.f32.mrf.mxu0
    %v4228 = vadd.f32 %v4199, %v4227
    %4229 = vmatmul.f32.gmra.mxu0 %v4208
    %v4230 = vpop.f32.mrf.mxu0
    %v4231 = vadd.f32 %v4202, %v4230
    %4232 = vdwg.mxu0
    %v4233 = vmul.f32 %v3981, %v116
    %v4234 = vmul.f32 %v3984, %v116
    %v4236 = vsel %vm3887, %v4233, 0
    %v4239 = vsel %vm3887, %v4234, 0
    %4241 = vmatpush.xpose.msra.mxu0 0.0
    %4242 = vmatpush.xpose.msra.mxu0 0.0
    %4243 = vmatpush.xpose.msra.mxu0 0.0
    %4244 = vmatpush.xpose.msra.mxu0 0.0
    %4245 = vmatpush.xpose.msra.mxu0 0.0
    %4246 = vmatpush.xpose.msra.mxu0 0.0
    %4247 = vmatpush.xpose.msra.mxu0 0.0
    %4248 = vmatpush.xpose.msra.mxu0 0.0
    %4249 = vmatpush.xpose.msra.mxu0 0.0
    %4250 = vmatpush.xpose.msra.mxu0 0.0
    %4251 = vmatpush.xpose.msra.mxu0 0.0
    %4252 = vmatpush.xpose.msra.mxu0 0.0
    %4253 = vmatpush.xpose.msra.mxu0 0.0
    %4254 = vmatpush.xpose.msra.mxu0 0.0
    %4255 = vmatpush.xpose.msra.mxu0 %v4070
    %4256 = vmatpush.xpose.msra.mxu0 %v4067
    %4257 = vmatmul.f32.gmra.mxu0 %v4236
    %v4258 = vpop.f32.mrf.mxu0
    %v4259 = vadd.f32 %v338, %v4258
    %4260 = vmatmul.f32.gmra.mxu0 %v4239
    %v4261 = vpop.f32.mrf.mxu0
    %v4262 = vadd.f32 %v339, %v4261
    %4263 = vdwg.mxu0
    %v4264 = vsel %vm4095, %v4259, -inf
    %4265 = vmax.xlane.f32.xlu0 %v4264
    %v4266 = vpop.xlane.xlu0 %4265
    %v4267 = vsel %vm4095, %v4262, -inf
    %4268 = vmax.xlane.f32.xlu0 %v4267
    %v4269 = vpop.xlane.xlu0 %4268
    %v4270 = vsub.f32 %v4259, %v4266
    %v4271 = vsub.f32 %v4262, %v4269
    %v4272 = vmul.f32 %v4270, 1.442695
    %v4273 = vpow.pop %v4272
    %v4274 = vmul.f32 %v4271, 1.442695
    %v4275 = vpow.pop %v4274
    %v4276 = vsel %vm4095, %v4273, 0.0
    %4277 = vadd.xlane.f32.xlu0 %v4276
    %v4278 = vpop.xlane.xlu0 %4277
    %v4279 = vsel %vm4095, %v4275, 0.0
    %4280 = vadd.xlane.f32.xlu0 %v4279
    %v4281 = vpop.xlane.xlu0 %4280
    %v4282 = vrcp.pop %v4278
    %v4283 = vrcp.pop %v4281
    %v4284 = vmul.f32 %v4273, %v4282
    %v4285 = vmul.f32 %v4275, %v4283
    %v4286 = vmul.f32 %v4053, %v105
    %v4287 = vmul.f32 %v4056, %v105
    %v4289 = vsel %vm4095, %v4284, 0
    %v4292 = vsel %vm4095, %v4285, 0
    %4294 = vmatpush.msra.mxu0 0.0
    %4295 = vmatpush.msra.mxu0 0.0
    %4296 = vmatpush.msra.mxu0 0.0
    %4297 = vmatpush.msra.mxu0 0.0
    %4298 = vmatpush.msra.mxu0 0.0
    %4299 = vmatpush.msra.mxu0 0.0
    %4300 = vmatpush.msra.mxu0 0.0
    %4301 = vmatpush.msra.mxu0 0.0
    %4302 = vmatpush.msra.mxu0 0.0
    %4303 = vmatpush.msra.mxu0 0.0
    %4304 = vmatpush.msra.mxu0 0.0
    %4305 = vmatpush.msra.mxu0 0.0
    %4306 = vmatpush.msra.mxu0 0.0
    %4307 = vmatpush.msra.mxu0 0.0
    %4308 = vmatpush.msra.mxu0 %v4287
    %4309 = vmatpush.msra.mxu0 %v4286
    %4310 = vmatmul.f32.gmra.mxu0 %v4289
    %v4311 = vpop.f32.mrf.mxu0
    %v4312 = vadd.f32 0.0, %v4311
    %4313 = vmatmul.f32.gmra.mxu0 %v4292
    %v4314 = vpop.f32.mrf.mxu0
    %v4315 = vadd.f32 0.0, %v4314
    %4316 = vdwg.mxu0
    %v4317 = vadd.f32 %v4228, %v4312
    %v4318 = vadd.f32 %v4231, %v4315
    %v4319 = vmul.f32 %v3981, %v117
    %v4320 = vmul.f32 %v3984, %v117
    %v4322 = vsel %vm3887, %v4319, 0
    %v4325 = vsel %vm3887, %v4320, 0
    %4327 = vmatpush.xpose.msra.mxu0 0.0
    %4328 = vmatpush.xpose.msra.mxu0 0.0
    %4329 = vmatpush.xpose.msra.mxu0 0.0
    %4330 = vmatpush.xpose.msra.mxu0 0.0
    %4331 = vmatpush.xpose.msra.mxu0 0.0
    %4332 = vmatpush.xpose.msra.mxu0 0.0
    %4333 = vmatpush.xpose.msra.mxu0 0.0
    %4334 = vmatpush.xpose.msra.mxu0 0.0
    %4335 = vmatpush.xpose.msra.mxu0 0.0
    %4336 = vmatpush.xpose.msra.mxu0 0.0
    %4337 = vmatpush.xpose.msra.mxu0 0.0
    %4338 = vmatpush.xpose.msra.mxu0 0.0
    %4339 = vmatpush.xpose.msra.mxu0 0.0
    %4340 = vmatpush.xpose.msra.mxu0 0.0
    %4341 = vmatpush.xpose.msra.mxu0 %v4070
    %4342 = vmatpush.xpose.msra.mxu0 %v4067
    %4343 = vmatmul.f32.gmra.mxu0 %v4322
    %v4344 = vpop.f32.mrf.mxu0
    %v4345 = vadd.f32 %v338, %v4344
    %4346 = vmatmul.f32.gmra.mxu0 %v4325
    %v4347 = vpop.f32.mrf.mxu0
    %v4348 = vadd.f32 %v339, %v4347
    %4349 = vdwg.mxu0
    %v4350 = vsel %vm4095, %v4345, -inf
    %4351 = vmax.xlane.f32.xlu0 %v4350
    %v4352 = vpop.xlane.xlu0 %4351
    %v4353 = vsel %vm4095, %v4348, -inf
    %4354 = vmax.xlane.f32.xlu0 %v4353
    %v4355 = vpop.xlane.xlu0 %4354
    %v4356 = vsub.f32 %v4345, %v4352
    %v4357 = vsub.f32 %v4348, %v4355
    %v4358 = vmul.f32 %v4356, 1.442695
    %v4359 = vpow.pop %v4358
    %v4360 = vmul.f32 %v4357, 1.442695
    %v4361 = vpow.pop %v4360
    %v4362 = vsel %vm4095, %v4359, 0.0
    %4363 = vadd.xlane.f32.xlu0 %v4362
    %v4364 = vpop.xlane.xlu0 %4363
    %v4365 = vsel %vm4095, %v4361, 0.0
    %4366 = vadd.xlane.f32.xlu0 %v4365
    %v4367 = vpop.xlane.xlu0 %4366
    %v4368 = vrcp.pop %v4364
    %v4369 = vrcp.pop %v4367
    %v4370 = vmul.f32 %v4359, %v4368
    %v4371 = vmul.f32 %v4361, %v4369
    %v4372 = vmul.f32 %v4053, %v109
    %v4373 = vmul.f32 %v4056, %v109
    %v4375 = vsel %vm4095, %v4370, 0
    %v4378 = vsel %vm4095, %v4371, 0
    %4380 = vmatpush.msra.mxu0 0.0
    %4381 = vmatpush.msra.mxu0 0.0
    %4382 = vmatpush.msra.mxu0 0.0
    %4383 = vmatpush.msra.mxu0 0.0
    %4384 = vmatpush.msra.mxu0 0.0
    %4385 = vmatpush.msra.mxu0 0.0
    %4386 = vmatpush.msra.mxu0 0.0
    %4387 = vmatpush.msra.mxu0 0.0
    %4388 = vmatpush.msra.mxu0 0.0
    %4389 = vmatpush.msra.mxu0 0.0
    %4390 = vmatpush.msra.mxu0 0.0
    %4391 = vmatpush.msra.mxu0 0.0
    %4392 = vmatpush.msra.mxu0 0.0
    %4393 = vmatpush.msra.mxu0 0.0
    %4394 = vmatpush.msra.mxu0 %v4373
    %4395 = vmatpush.msra.mxu0 %v4372
    %4396 = vmatmul.f32.gmra.mxu0 %v4375
    %v4397 = vpop.f32.mrf.mxu0
    %v4398 = vadd.f32 0.0, %v4397
    %4399 = vmatmul.f32.gmra.mxu0 %v4378
    %v4400 = vpop.f32.mrf.mxu0
    %v4401 = vadd.f32 0.0, %v4400
    %4402 = vdwg.mxu0
    %v4403 = vadd.f32 %v4317, %v4398
    %v4404 = vadd.f32 %v4318, %v4401
    %v4405 = vmul.f32 %v3981, %v118
    %v4406 = vmul.f32 %v3984, %v118
    %v4408 = vsel %vm3887, %v4405, 0
    %v4411 = vsel %vm3887, %v4406, 0
    %4413 = vmatpush.xpose.msra.mxu0 0.0
    %4414 = vmatpush.xpose.msra.mxu0 0.0
    %4415 = vmatpush.xpose.msra.mxu0 0.0
    %4416 = vmatpush.xpose.msra.mxu0 0.0
    %4417 = vmatpush.xpose.msra.mxu0 0.0
    %4418 = vmatpush.xpose.msra.mxu0 0.0
    %4419 = vmatpush.xpose.msra.mxu0 0.0
    %4420 = vmatpush.xpose.msra.mxu0 0.0
    %4421 = vmatpush.xpose.msra.mxu0 0.0
    %4422 = vmatpush.xpose.msra.mxu0 0.0
    %4423 = vmatpush.xpose.msra.mxu0 0.0
    %4424 = vmatpush.xpose.msra.mxu0 0.0
    %4425 = vmatpush.xpose.msra.mxu0 0.0
    %4426 = vmatpush.xpose.msra.mxu0 0.0
    %4427 = vmatpush.xpose.msra.mxu0 %v4070
    %4428 = vmatpush.xpose.msra.mxu0 %v4067
    %4429 = vmatmul.f32.gmra.mxu0 %v4408
    %v4430 = vpop.f32.mrf.mxu0
    %v4431 = vadd.f32 %v338, %v4430
    %4432 = vmatmul.f32.gmra.mxu0 %v4411
    %v4433 = vpop.f32.mrf.mxu0
    %v4434 = vadd.f32 %v339, %v4433
    %4435 = vdwg.mxu0
    %v4436 = vsel %vm4095, %v4431, -inf
    %4437 = vmax.xlane.f32.xlu0 %v4436
    %v4438 = vpop.xlane.xlu0 %4437
    %v4439 = vsel %vm4095, %v4434, -inf
    %4440 = vmax.xlane.f32.xlu0 %v4439
    %v4441 = vpop.xlane.xlu0 %4440
    %v4442 = vsub.f32 %v4431, %v4438
    %v4443 = vsub.f32 %v4434, %v4441
    %v4444 = vmul.f32 %v4442, 1.442695
    %v4445 = vpow.pop %v4444
    %v4446 = vmul.f32 %v4443, 1.442695
    %v4447 = vpow.pop %v4446
    %v4448 = vsel %vm4095, %v4445, 0.0
    %4449 = vadd.xlane.f32.xlu0 %v4448
    %v4450 = vpop.xlane.xlu0 %4449
    %v4451 = vsel %vm4095, %v4447, 0.0
    %4452 = vadd.xlane.f32.xlu0 %v4451
    %v4453 = vpop.xlane.xlu0 %4452
    %v4454 = vrcp.pop %v4450
    %v4455 = vrcp.pop %v4453
    %v4456 = vmul.f32 %v4445, %v4454
    %v4457 = vmul.f32 %v4447, %v4455
    %v4458 = vmul.f32 %v4053, %v113
    %v4459 = vmul.f32 %v4056, %v113
    %v4461 = vsel %vm4095, %v4456, 0
    %v4464 = vsel %vm4095, %v4457, 0
    %4466 = vmatpush.msra.mxu0 0.0
    %4467 = vmatpush.msra.mxu0 0.0
    %4468 = vmatpush.msra.mxu0 0.0
    %4469 = vmatpush.msra.mxu0 0.0
    %4470 = vmatpush.msra.mxu0 0.0
    %4471 = vmatpush.msra.mxu0 0.0
    %4472 = vmatpush.msra.mxu0 0.0
    %4473 = vmatpush.msra.mxu0 0.0
    %4474 = vmatpush.msra.mxu0 0.0
    %4475 = vmatpush.msra.mxu0 0.0
    %4476 = vmatpush.msra.mxu0 0.0
    %4477 = vmatpush.msra.mxu0 0.0
    %4478 = vmatpush.msra.mxu0 0.0
    %4479 = vmatpush.msra.mxu0 0.0
    %4480 = vmatpush.msra.mxu0 %v4459
    %4481 = vmatpush.msra.mxu0 %v4458
    %4482 = vmatmul.f32.gmra.mxu0 %v4461
    %v4483 = vpop.f32.mrf.mxu0
    %v4484 = vadd.f32 0.0, %v4483
    %4485 = vmatmul.f32.gmra.mxu0 %v4464
    %v4486 = vpop.f32.mrf.mxu0
    %v4487 = vadd.f32 0.0, %v4486
    %4488 = vdwg.mxu0
    %v4489 = vadd.f32 %v4403, %v4484
    %v4490 = vadd.f32 %v4404, %v4487
    %s4491 = scalar_lea.vmem %s12, 192
    %v4492 = vld [vmem:[%s4491] sm:$0xff]
    %v4493 = vld [vmem:[%s4491 + $0x8] sm:$0xff]
    %v4494 = vld [vmem:[%s4491 + $0x10] sm:$0xff]
    %v4495 = vld [vmem:[%s4491 + $0x18] sm:$0xff]
    %v4496 = vld [vmem:[%s4491 + $0x20] sm:$0xff]
    %v4497 = vld [vmem:[%s4491 + $0x28] sm:$0xff]
    %v4498 = vld [vmem:[%s4491 + $0x30] sm:$0xff]
    %v4499 = vld [vmem:[%s4491 + $0x38] sm:$0xf]
    %v4500 = vperm.slane %v3883, 0
    %v4502 = vsel %vm3887, %v4489, 0
    %v4505 = vsel %vm3887, %v4490, 0
    %v4508 = vsel %vm131, %v4499, 0
    %4510 = vmatpush.msra.mxu0 0.0
    %4511 = vmatpush.msra.mxu0 0.0
    %4512 = vmatpush.msra.mxu0 0.0
    %4513 = vmatpush.msra.mxu0 0.0
    %4514 = vmatpush.msra.mxu0 0.0
    %4515 = vmatpush.msra.mxu0 0.0
    %4516 = vmatpush.msra.mxu0 0.0
    %4517 = vmatpush.msra.mxu0 0.0
    %4518 = vmatpush.msra.mxu0 %v4508
    %4519 = vmatpush.msra.mxu0 %v4498
    %4520 = vmatpush.msra.mxu0 %v4497
    %4521 = vmatpush.msra.mxu0 %v4496
    %4522 = vmatpush.msra.mxu0 %v4495
    %4523 = vmatpush.msra.mxu0 %v4494
    %4524 = vmatpush.msra.mxu0 %v4493
    %4525 = vmatpush.msra.mxu0 %v4492
    %4526 = vmatmul.f32.gmra.mxu0 %v4502
    %v4527 = vpop.f32.mrf.mxu0
    %v4528 = vadd.f32 %v4500, %v4527
    %4529 = vmatmul.f32.gmra.mxu0 %v4505
    %v4530 = vpop.f32.mrf.mxu0
    %v4531 = vadd.f32 %v4500, %v4530
    %4532 = vdwg.mxu0
    %v4533 = vadd.f32 %v3876, %v4528
    %v4534 = vadd.f32 %v3877, %v4531
    %v4535 = vsel %vm3887, %v4533, 0.0
    %4536 = vadd.xlane.f32.xlu0 %v4535
    %v4537 = vpop.xlane.xlu0 %4536
    %v4538 = vsel %vm3887, %v4534, 0.0
    %4539 = vadd.xlane.f32.xlu0 %v4538
    %v4540 = vpop.xlane.xlu0 %4539
    %v4541 = vmul.f32 %v4537, %v3900
    %v4542 = vmul.f32 %v4540, %v3900
    %v4543 = vsub.f32 %v4533, %v4541
    %v4544 = vsub.f32 %v4534, %v4542
    %v4545 = vmul.f32 %v4543, %v4543
    %v4546 = vmul.f32 %v4544, %v4544
    %v4547 = vsel %vm3887, %v4545, 0.0
    %4548 = vadd.xlane.f32.xlu0 %v4547
    %v4549 = vpop.xlane.xlu0 %4548
    %v4550 = vsel %vm3887, %v4546, 0.0
    %4551 = vadd.xlane.f32.xlu0 %v4550
    %v4552 = vpop.xlane.xlu0 %4551
    %v4553 = vmul.f32 %v4549, %v3900
    %v4554 = vmul.f32 %v4552, %v3900
    %v4555 = vadd.f32 %v4553, 1e-05
    %v4556 = vadd.f32 %v4554, 1e-05
    %v4557 = vrsqrt.pop %v4555
    %v4558 = vmul.f32 %v4557, %v4555
    %v4559 = vmul.f32 %v4558, %v4557
    %v4560 = vmul.f32 0.5, %v4559
    %v4561 = vsub.f32 1.5, %v4560
    %v4562 = vmul.f32 %v4557, %v4561
    %vm4563 = vweird.f32 %v4555
    %vm4564 = vweird.f32 %v4557
    %vm4565 = vmor %vm4563, %vm4564
    %v4566 = vsel %vm4565, %v4557, %v4562
    %v4567 = vrsqrt.pop %v4556
    %v4568 = vmul.f32 %v4567, %v4556
    %v4569 = vmul.f32 %v4568, %v4567
    %v4570 = vmul.f32 0.5, %v4569
    %v4571 = vsub.f32 1.5, %v4570
    %v4572 = vmul.f32 %v4567, %v4571
    %vm4573 = vweird.f32 %v4556
    %vm4574 = vweird.f32 %v4567
    %vm4575 = vmor %vm4573, %vm4574
    %v4576 = vsel %vm4575, %v4567, %v4572
    %v4577 = vmul.f32 %v4543, %v4566
    %v4578 = vmul.f32 %v4544, %v4576
    %v4579 = vperm.slane %v3884, 0
    %v4580 = vmul.f32 %v4577, %v4579
    %v4581 = vmul.f32 %v4578, %v4579
    %v4582 = vperm.slane %v3885, 0
    %v4583 = vadd.f32 %v4580, %v4582
    %v4584 = vadd.f32 %v4581, %v4582
    %v4585 = vld [vmem:[%s13] sm:$0xff]
    %v4586 = vld [vmem:[%s13 + $0x8] sm:$0xff]
    %v4587 = vld [vmem:[%s13 + $0x10] sm:$0xff]
    %v4588 = vld [vmem:[%s13 + $0x18] sm:$0xff]
    %v4589 = vld [vmem:[%s13 + $0x20] sm:$0xff]
    %v4590 = vld [vmem:[%s13 + $0x28] sm:$0xff]
    %v4591 = vld [vmem:[%s13 + $0x30] sm:$0xff]
    %v4592 = vld [vmem:[%s13 + $0x38] sm:$0xff]
    %v4593 = vld [vmem:[%s13 + $0x40] sm:$0xff]
    %v4594 = vld [vmem:[%s13 + $0x48] sm:$0xff]
    %v4595 = vld [vmem:[%s13 + $0x50] sm:$0xff]
    %v4596 = vld [vmem:[%s13 + $0x58] sm:$0xff]
    %v4597 = vld [vmem:[%s13 + $0x60] sm:$0xff]
    %v4598 = vld [vmem:[%s13 + $0x68] sm:$0xff]
    %v4599 = vld [vmem:[%s13 + $0x70] sm:$0xf]
    %v4600 = vld [vmem:[%s13 + $0x78] sm:$0xf]
    %v4601 = vld [vmem:[%s16] sm:$0x3]
    %v4603 = vperm.slane %v4601, 0
    %v4604 = vperm.slane %v4601, 1
    %v4608 = vsel %vm3887, %v4583, 0
    %v4611 = vsel %vm3887, %v4584, 0
    %v4614 = vsel %vm131, %v4599, 0
    %v4617 = vsel %vm131, %v4600, 0
    %4619 = vmatpush.msra.mxu0 0.0
    %4620 = vmatpush.msra.mxu0 0.0
    %4621 = vmatpush.msra.mxu0 0.0
    %4622 = vmatpush.msra.mxu0 0.0
    %4623 = vmatpush.msra.mxu0 0.0
    %4624 = vmatpush.msra.mxu0 0.0
    %4625 = vmatpush.msra.mxu0 0.0
    %4626 = vmatpush.msra.mxu0 0.0
    %4627 = vmatpush.msra.mxu0 %v4614
    %4628 = vmatpush.msra.mxu0 %v4597
    %4629 = vmatpush.msra.mxu0 %v4595
    %4630 = vmatpush.msra.mxu0 %v4593
    %4631 = vmatpush.msra.mxu0 %v4591
    %4632 = vmatpush.msra.mxu0 %v4589
    %4633 = vmatpush.msra.mxu0 %v4587
    %4634 = vmatpush.msra.mxu0 %v4585
    %4635 = vmatmul.f32.gmra.mxu0 %v4608
    %v4636 = vpop.f32.mrf.mxu0
    %v4637 = vadd.f32 %v4603, %v4636
    %4638 = vmatmul.f32.gmra.mxu0 %v4611
    %v4639 = vpop.f32.mrf.mxu0
    %v4640 = vadd.f32 %v4603, %v4639
    %4641 = vdwg.mxu0
    %4642 = vmatpush.msra.mxu0 0.0
    %4643 = vmatpush.msra.mxu0 0.0
    %4644 = vmatpush.msra.mxu0 0.0
    %4645 = vmatpush.msra.mxu0 0.0
    %4646 = vmatpush.msra.mxu0 0.0
    %4647 = vmatpush.msra.mxu0 0.0
    %4648 = vmatpush.msra.mxu0 0.0
    %4649 = vmatpush.msra.mxu0 0.0
    %4650 = vmatpush.msra.mxu0 %v4617
    %4651 = vmatpush.msra.mxu0 %v4598
    %4652 = vmatpush.msra.mxu0 %v4596
    %4653 = vmatpush.msra.mxu0 %v4594
    %4654 = vmatpush.msra.mxu0 %v4592
    %4655 = vmatpush.msra.mxu0 %v4590
    %4656 = vmatpush.msra.mxu0 %v4588
    %4657 = vmatpush.msra.mxu0 %v4586
    %4658 = vmatmul.f32.gmra.mxu0 %v4608
    %v4659 = vpop.f32.mrf.mxu0
    %v4660 = vadd.f32 %v4604, %v4659
    %4661 = vmatmul.f32.gmra.mxu0 %v4611
    %v4662 = vpop.f32.mrf.mxu0
    %v4663 = vadd.f32 %v4604, %v4662
    %4664 = vdwg.mxu0
    %v4665 = vmax.f32 %v4637, 0.0
    %v4666 = vmax.f32 %v4660, 0.0
    %v4667 = vmax.f32 %v4640, 0.0
    %v4668 = vmax.f32 %v4663, 0.0
    %v4669 = vld [vmem:[%s14] sm:$0xff]
    %v4670 = vld [vmem:[%s14 + $0x8] sm:$0xff]
    %v4671 = vld [vmem:[%s14 + $0x10] sm:$0xff]
    %v4672 = vld [vmem:[%s14 + $0x18] sm:$0xff]
    %v4673 = vld [vmem:[%s14 + $0x20] sm:$0xff]
    %v4674 = vld [vmem:[%s14 + $0x28] sm:$0xff]
    %v4675 = vld [vmem:[%s14 + $0x30] sm:$0xff]
    %v4676 = vld [vmem:[%s14 + $0x38] sm:$0xff]
    %v4677 = vld [vmem:[%s14 + $0x40] sm:$0xff]
    %v4678 = vld [vmem:[%s14 + $0x48] sm:$0xff]
    %v4679 = vld [vmem:[%s14 + $0x50] sm:$0xff]
    %v4680 = vld [vmem:[%s14 + $0x58] sm:$0xff]
    %v4681 = vld [vmem:[%s14 + $0x60] sm:$0xff]
    %v4682 = vld [vmem:[%s14 + $0x68] sm:$0xff]
    %v4683 = vld [vmem:[%s14 + $0x70] sm:$0xff]
    %v4684 = vld [vmem:[%s14 + $0x78] sm:$0xff]
    %v4685 = vld [vmem:[%s14 + $0x80] sm:$0xff]
    %v4686 = vld [vmem:[%s14 + $0x88] sm:$0xff]
    %v4687 = vld [vmem:[%s14 + $0x90] sm:$0xff]
    %v4688 = vld [vmem:[%s14 + $0x98] sm:$0xff]
    %v4689 = vld [vmem:[%s14 + $0xa0] sm:$0xff]
    %v4690 = vld [vmem:[%s14 + $0xa8] sm:$0xff]
    %v4691 = vld [vmem:[%s14 + $0xb0] sm:$0xff]
    %v4692 = vld [vmem:[%s14 + $0xb8] sm:$0xff]
    %v4693 = vld [vmem:[%s14 + $0xc0] sm:$0xff]
    %v4694 = vld [vmem:[%s14 + $0xc8] sm:$0xff]
    %v4695 = vld [vmem:[%s14 + $0xd0] sm:$0xff]
    %v4696 = vld [vmem:[%s14 + $0xd8] sm:$0xff]
    %v4697 = vld [vmem:[%s14 + $0xe0] sm:$0xff]
    %v4698 = vld [vmem:[%s14 + $0xe8] sm:$0xff]
    %v4699 = vperm.slane %v3886, 0
    %vm4700 = vcmask 916480
    %v4702 = vsel %vm4700, %v4666, 0
    %v4705 = vsel %vm4700, %v4668, 0
    %4707 = vmatpush.msra.mxu0 %v4684
    %4708 = vmatpush.msra.mxu0 %v4683
    %4709 = vmatpush.msra.mxu0 %v4682
    %4710 = vmatpush.msra.mxu0 %v4681
    %4711 = vmatpush.msra.mxu0 %v4680
    %4712 = vmatpush.msra.mxu0 %v4679
    %4713 = vmatpush.msra.mxu0 %v4678
    %4714 = vmatpush.msra.mxu0 %v4677
    %4715 = vmatpush.msra.mxu0 %v4676
    %4716 = vmatpush.msra.mxu0 %v4675
    %4717 = vmatpush.msra.mxu0 %v4674
    %4718 = vmatpush.msra.mxu0 %v4673
    %4719 = vmatpush.msra.mxu0 %v4672
    %4720 = vmatpush.msra.mxu0 %v4671
    %4721 = vmatpush.msra.mxu0 %v4670
    %4722 = vmatpush.msra.mxu0 %v4669
    %4723 = vmatmul.f32.gmra.mxu0 %v4665
    %v4724 = vpop.f32.mrf.mxu0
    %v4725 = vadd.f32 %v4699, %v4724
    %4726 = vmatmul.f32.gmra.mxu0 %v4667
    %v4727 = vpop.f32.mrf.mxu0
    %v4728 = vadd.f32 %v4699, %v4727
    %4729 = vdwg.mxu0
    %4730 = vmatpush.msra.mxu0 0.0
    %4731 = vmatpush.msra.mxu0 0.0
    %4732 = vmatpush.msra.mxu0 %v4698
    %4733 = vmatpush.msra.mxu0 %v4697
    %4734 = vmatpush.msra.mxu0 %v4696
    %4735 = vmatpush.msra.mxu0 %v4695
    %4736 = vmatpush.msra.mxu0 %v4694
    %4737 = vmatpush.msra.mxu0 %v4693
    %4738 = vmatpush.msra.mxu0 %v4692
    %4739 = vmatpush.msra.mxu0 %v4691
    %4740 = vmatpush.msra.mxu0 %v4690
    %4741 = vmatpush.msra.mxu0 %v4689
    %4742 = vmatpush.msra.mxu0 %v4688
    %4743 = vmatpush.msra.mxu0 %v4687
    %4744 = vmatpush.msra.mxu0 %v4686
    %4745 = vmatpush.msra.mxu0 %v4685
    %4746 = vmatmul.f32.gmra.mxu0 %v4702
    %v4747 = vpop.f32.mrf.mxu0
    %v4748 = vadd.f32 %v4725, %v4747
    %4749 = vmatmul.f32.gmra.mxu0 %v4705
    %v4750 = vpop.f32.mrf.mxu0
    %v4751 = vadd.f32 %v4728, %v4750
    %4752 = vdwg.mxu0
    %v4753 = vadd.f32 %v4533, %v4748
    %v4754 = vadd.f32 %v4534, %v4751
    %s4755 = scalar_lea.vmem %s15, 16
    %v4756 = vld [vmem:[%s4755] sm:$0x1]
    %v4757 = vld [vmem:[%s4755 + $0x1] sm:$0x1]
    %v4758 = vld [vmem:[%s4755 + $0x2] sm:$0x1]
    %v4759 = vld [vmem:[%s4755 + $0x3] sm:$0x1]
    %v4760 = vld [vmem:[%s4755 + $0x4] sm:$0x1]
    %v4761 = vld [vmem:[%s4755 + $0x5] sm:$0x1]
    %v4762 = vld [vmem:[%s4755 + $0x6] sm:$0x1]
    %v4763 = vld [vmem:[%s4755 + $0x7] sm:$0x1]
    %v4764 = vld [vmem:[%s4755 + $0x8] sm:$0x1]
    %v4765 = vsel %vm3887, %v4753, 0.0
    %4766 = vadd.xlane.f32.xlu0 %v4765
    %v4767 = vpop.xlane.xlu0 %4766
    %v4768 = vsel %vm3887, %v4754, 0.0
    %4769 = vadd.xlane.f32.xlu0 %v4768
    %v4770 = vpop.xlane.xlu0 %4769
    %v4771 = vmul.f32 %v4767, %v3900
    %v4772 = vmul.f32 %v4770, %v3900
    %v4773 = vsub.f32 %v4753, %v4771
    %v4774 = vsub.f32 %v4754, %v4772
    %v4775 = vmul.f32 %v4773, %v4773
    %v4776 = vmul.f32 %v4774, %v4774
    %v4777 = vsel %vm3887, %v4775, 0.0
    %4778 = vadd.xlane.f32.xlu0 %v4777
    %v4779 = vpop.xlane.xlu0 %4778
    %v4780 = vsel %vm3887, %v4776, 0.0
    %4781 = vadd.xlane.f32.xlu0 %v4780
    %v4782 = vpop.xlane.xlu0 %4781
    %v4783 = vmul.f32 %v4779, %v3900
    %v4784 = vmul.f32 %v4782, %v3900
    %v4785 = vadd.f32 %v4783, 1e-05
    %v4786 = vadd.f32 %v4784, 1e-05
    %v4787 = vrsqrt.pop %v4785
    %v4788 = vmul.f32 %v4787, %v4785
    %v4789 = vmul.f32 %v4788, %v4787
    %v4790 = vmul.f32 0.5, %v4789
    %v4791 = vsub.f32 1.5, %v4790
    %v4792 = vmul.f32 %v4787, %v4791
    %vm4793 = vweird.f32 %v4785
    %vm4794 = vweird.f32 %v4787
    %vm4795 = vmor %vm4793, %vm4794
    %v4796 = vsel %vm4795, %v4787, %v4792
    %v4797 = vrsqrt.pop %v4786
    %v4798 = vmul.f32 %v4797, %v4786
    %v4799 = vmul.f32 %v4798, %v4797
    %v4800 = vmul.f32 0.5, %v4799
    %v4801 = vsub.f32 1.5, %v4800
    %v4802 = vmul.f32 %v4797, %v4801
    %vm4803 = vweird.f32 %v4786
    %vm4804 = vweird.f32 %v4797
    %vm4805 = vmor %vm4803, %vm4804
    %v4806 = vsel %vm4805, %v4797, %v4802
    %v4807 = vmul.f32 %v4773, %v4796
    %v4808 = vmul.f32 %v4774, %v4806
    %v4809 = vperm.slane %v4756, 0
    %v4810 = vmul.f32 %v4807, %v4809
    %v4811 = vmul.f32 %v4808, %v4809
    %v4812 = vperm.slane %v4757, 0
    %v4813 = vadd.f32 %v4810, %v4812
    %v4814 = vadd.f32 %v4811, %v4812
    %s4815 = scalar_lea.vmem %s12, 256
    %v4816 = vld [vmem:[%s4815] sm:$0xff]
    %v4817 = vld [vmem:[%s4815 + $0x8] sm:$0xff]
    %v4818 = vld [vmem:[%s4815 + $0x10] sm:$0xff]
    %v4819 = vld [vmem:[%s4815 + $0x18] sm:$0xff]
    %v4820 = vld [vmem:[%s4815 + $0x20] sm:$0xff]
    %v4821 = vld [vmem:[%s4815 + $0x28] sm:$0xff]
    %v4822 = vld [vmem:[%s4815 + $0x30] sm:$0xff]
    %v4823 = vld [vmem:[%s4815 + $0x38] sm:$0xf]
    %v4824 = vperm.slane %v4758, 0
    %v4826 = vsel %vm3887, %v4813, 0
    %v4829 = vsel %vm3887, %v4814, 0
    %v4832 = vsel %vm131, %v4823, 0
    %4834 = vmatpush.msra.mxu0 0.0
    %4835 = vmatpush.msra.mxu0 0.0
    %4836 = vmatpush.msra.mxu0 0.0
    %4837 = vmatpush.msra.mxu0 0.0
    %4838 = vmatpush.msra.mxu0 0.0
    %4839 = vmatpush.msra.mxu0 0.0
    %4840 = vmatpush.msra.mxu0 0.0
    %4841 = vmatpush.msra.mxu0 0.0
    %4842 = vmatpush.msra.mxu0 %v4832
    %4843 = vmatpush.msra.mxu0 %v4822
    %4844 = vmatpush.msra.mxu0 %v4821
    %4845 = vmatpush.msra.mxu0 %v4820
    %4846 = vmatpush.msra.mxu0 %v4819
    %4847 = vmatpush.msra.mxu0 %v4818
    %4848 = vmatpush.msra.mxu0 %v4817
    %4849 = vmatpush.msra.mxu0 %v4816
    %4850 = vmatmul.f32.gmra.mxu0 %v4826
    %v4851 = vpop.f32.mrf.mxu0
    %v4852 = vadd.f32 %v4824, %v4851
    %4853 = vmatmul.f32.gmra.mxu0 %v4829
    %v4854 = vpop.f32.mrf.mxu0
    %v4855 = vadd.f32 %v4824, %v4854
    %4856 = vdwg.mxu0
    %s4857 = scalar_lea.vmem %s12, 320
    %v4858 = vld [vmem:[%s4857] sm:$0xff]
    %v4859 = vld [vmem:[%s4857 + $0x8] sm:$0xff]
    %v4860 = vld [vmem:[%s4857 + $0x10] sm:$0xff]
    %v4861 = vld [vmem:[%s4857 + $0x18] sm:$0xff]
    %v4862 = vld [vmem:[%s4857 + $0x20] sm:$0xff]
    %v4863 = vld [vmem:[%s4857 + $0x28] sm:$0xff]
    %v4864 = vld [vmem:[%s4857 + $0x30] sm:$0xff]
    %v4865 = vld [vmem:[%s4857 + $0x38] sm:$0xf]
    %v4866 = vperm.slane %v4759, 0
    %v4868 = vsel %vm131, %v4865, 0
    %4870 = vmatpush.msra.mxu0 0.0
    %4871 = vmatpush.msra.mxu0 0.0
    %4872 = vmatpush.msra.mxu0 0.0
    %4873 = vmatpush.msra.mxu0 0.0
    %4874 = vmatpush.msra.mxu0 0.0
    %4875 = vmatpush.msra.mxu0 0.0
    %4876 = vmatpush.msra.mxu0 0.0
    %4877 = vmatpush.msra.mxu0 0.0
    %4878 = vmatpush.msra.mxu0 %v4868
    %4879 = vmatpush.msra.mxu0 %v4864
    %4880 = vmatpush.msra.mxu0 %v4863
    %4881 = vmatpush.msra.mxu0 %v4862
    %4882 = vmatpush.msra.mxu0 %v4861
    %4883 = vmatpush.msra.mxu0 %v4860
    %4884 = vmatpush.msra.mxu0 %v4859
    %4885 = vmatpush.msra.mxu0 %v4858
    %4886 = vmatmul.f32.gmra.mxu0 %v4826
    %v4887 = vpop.f32.mrf.mxu0
    %v4888 = vadd.f32 %v4866, %v4887
    %4889 = vmatmul.f32.gmra.mxu0 %v4829
    %v4890 = vpop.f32.mrf.mxu0
    %v4891 = vadd.f32 %v4866, %v4890
    %4892 = vdwg.mxu0
    %s4893 = scalar_lea.vmem %s12, 384
    %v4894 = vld [vmem:[%s4893] sm:$0xff]
    %v4895 = vld [vmem:[%s4893 + $0x8] sm:$0xff]
    %v4896 = vld [vmem:[%s4893 + $0x10] sm:$0xff]
    %v4897 = vld [vmem:[%s4893 + $0x18] sm:$0xff]
    %v4898 = vld [vmem:[%s4893 + $0x20] sm:$0xff]
    %v4899 = vld [vmem:[%s4893 + $0x28] sm:$0xff]
    %v4900 = vld [vmem:[%s4893 + $0x30] sm:$0xff]
    %v4901 = vld [vmem:[%s4893 + $0x38] sm:$0xf]
    %v4902 = vperm.slane %v4760, 0
    %v4904 = vsel %vm131, %v4901, 0
    %4906 = vmatpush.msra.mxu0 0.0
    %4907 = vmatpush.msra.mxu0 0.0
    %4908 = vmatpush.msra.mxu0 0.0
    %4909 = vmatpush.msra.mxu0 0.0
    %4910 = vmatpush.msra.mxu0 0.0
    %4911 = vmatpush.msra.mxu0 0.0
    %4912 = vmatpush.msra.mxu0 0.0
    %4913 = vmatpush.msra.mxu0 0.0
    %4914 = vmatpush.msra.mxu0 %v4904
    %4915 = vmatpush.msra.mxu0 %v4900
    %4916 = vmatpush.msra.mxu0 %v4899
    %4917 = vmatpush.msra.mxu0 %v4898
    %4918 = vmatpush.msra.mxu0 %v4897
    %4919 = vmatpush.msra.mxu0 %v4896
    %4920 = vmatpush.msra.mxu0 %v4895
    %4921 = vmatpush.msra.mxu0 %v4894
    %4922 = vmatmul.f32.gmra.mxu0 %v4826
    %v4923 = vpop.f32.mrf.mxu0
    %v4924 = vadd.f32 %v4902, %v4923
    %4925 = vmatmul.f32.gmra.mxu0 %v4829
    %v4926 = vpop.f32.mrf.mxu0
    %v4927 = vadd.f32 %v4902, %v4926
    %4928 = vdwg.mxu0
    %v4929 = vmul.f32 %v4852, %v114
    %v4930 = vmul.f32 %v4855, %v114
    %v4932 = vsel %vm3887, %v4929, 0
    %v4935 = vsel %vm3887, %v4930, 0
    %v4938 = vsel %vm3887, %v4888, 0
    %v4941 = vsel %vm3887, %v4891, 0
    %4943 = vmatpush.xpose.msra.mxu0 0.0
    %4944 = vmatpush.xpose.msra.mxu0 0.0
    %4945 = vmatpush.xpose.msra.mxu0 0.0
    %4946 = vmatpush.xpose.msra.mxu0 0.0
    %4947 = vmatpush.xpose.msra.mxu0 0.0
    %4948 = vmatpush.xpose.msra.mxu0 0.0
    %4949 = vmatpush.xpose.msra.mxu0 0.0
    %4950 = vmatpush.xpose.msra.mxu0 0.0
    %4951 = vmatpush.xpose.msra.mxu0 0.0
    %4952 = vmatpush.xpose.msra.mxu0 0.0
    %4953 = vmatpush.xpose.msra.mxu0 0.0
    %4954 = vmatpush.xpose.msra.mxu0 0.0
    %4955 = vmatpush.xpose.msra.mxu0 0.0
    %4956 = vmatpush.xpose.msra.mxu0 0.0
    %4957 = vmatpush.xpose.msra.mxu0 %v4941
    %4958 = vmatpush.xpose.msra.mxu0 %v4938
    %4959 = vmatmul.f32.gmra.mxu0 %v4932
    %v4960 = vpop.f32.mrf.mxu0
    %v4961 = vadd.f32 %v338, %v4960
    %4962 = vmatmul.f32.gmra.mxu0 %v4935
    %v4963 = vpop.f32.mrf.mxu0
    %v4964 = vadd.f32 %v339, %v4963
    %4965 = vdwg.mxu0
    %v4966 = vsel %vm4095, %v4961, -inf
    %4967 = vmax.xlane.f32.xlu0 %v4966
    %v4968 = vpop.xlane.xlu0 %4967
    %v4969 = vsel %vm4095, %v4964, -inf
    %4970 = vmax.xlane.f32.xlu0 %v4969
    %v4971 = vpop.xlane.xlu0 %4970
    %v4972 = vsub.f32 %v4961, %v4968
    %v4973 = vsub.f32 %v4964, %v4971
    %v4974 = vmul.f32 %v4972, 1.442695
    %v4975 = vpow.pop %v4974
    %v4976 = vmul.f32 %v4973, 1.442695
    %v4977 = vpow.pop %v4976
    %v4978 = vsel %vm4095, %v4975, 0.0
    %4979 = vadd.xlane.f32.xlu0 %v4978
    %v4980 = vpop.xlane.xlu0 %4979
    %v4981 = vsel %vm4095, %v4977, 0.0
    %4982 = vadd.xlane.f32.xlu0 %v4981
    %v4983 = vpop.xlane.xlu0 %4982
    %v4984 = vrcp.pop %v4980
    %v4985 = vrcp.pop %v4983
    %v4986 = vmul.f32 %v4975, %v4984
    %v4987 = vmul.f32 %v4977, %v4985
    %v4988 = vmul.f32 %v4924, %v100
    %v4989 = vmul.f32 %v4927, %v100
    %v4990 = vmul.f32 %v4852, %v115
    %v4991 = vmul.f32 %v4855, %v115
    %v4993 = vsel %vm3887, %v4990, 0
    %v4996 = vsel %vm3887, %v4991, 0
    %4998 = vmatpush.xpose.msra.mxu0 0.0
    %4999 = vmatpush.xpose.msra.mxu0 0.0
    %5000 = vmatpush.xpose.msra.mxu0 0.0
    %5001 = vmatpush.xpose.msra.mxu0 0.0
    %5002 = vmatpush.xpose.msra.mxu0 0.0
    %5003 = vmatpush.xpose.msra.mxu0 0.0
    %5004 = vmatpush.xpose.msra.mxu0 0.0
    %5005 = vmatpush.xpose.msra.mxu0 0.0
    %5006 = vmatpush.xpose.msra.mxu0 0.0
    %5007 = vmatpush.xpose.msra.mxu0 0.0
    %5008 = vmatpush.xpose.msra.mxu0 0.0
    %5009 = vmatpush.xpose.msra.mxu0 0.0
    %5010 = vmatpush.xpose.msra.mxu0 0.0
    %5011 = vmatpush.xpose.msra.mxu0 0.0
    %5012 = vmatpush.xpose.msra.mxu0 %v4941
    %5013 = vmatpush.xpose.msra.mxu0 %v4938
    %5014 = vmatmul.f32.gmra.mxu0 %v4993
    %v5015 = vpop.f32.mrf.mxu0
    %v5016 = vadd.f32 %v338, %v5015
    %5017 = vmatmul.f32.gmra.mxu0 %v4996
    %v5018 = vpop.f32.mrf.mxu0
    %v5019 = vadd.f32 %v339, %v5018
    %5020 = vdwg.mxu0
    %v5021 = vsel %vm4095, %v5016, -inf
    %5022 = vmax.xlane.f32.xlu0 %v5021
    %v5023 = vpop.xlane.xlu0 %5022
    %v5024 = vsel %vm4095, %v5019, -inf
    %5025 = vmax.xlane.f32.xlu0 %v5024
    %v5026 = vpop.xlane.xlu0 %5025
    %v5027 = vsub.f32 %v5016, %v5023
    %v5028 = vsub.f32 %v5019, %v5026
    %v5029 = vmul.f32 %v5027, 1.442695
    %v5030 = vpow.pop %v5029
    %v5031 = vmul.f32 %v5028, 1.442695
    %v5032 = vpow.pop %v5031
    %v5033 = vsel %vm4095, %v5030, 0.0
    %5034 = vadd.xlane.f32.xlu0 %v5033
    %v5035 = vpop.xlane.xlu0 %5034
    %v5036 = vsel %vm4095, %v5032, 0.0
    %5037 = vadd.xlane.f32.xlu0 %v5036
    %v5038 = vpop.xlane.xlu0 %5037
    %v5039 = vrcp.pop %v5035
    %v5040 = vrcp.pop %v5038
    %v5041 = vmul.f32 %v5030, %v5039
    %v5042 = vmul.f32 %v5032, %v5040
    %v5043 = vmul.f32 %v4924, %v102
    %v5044 = vmul.f32 %v4927, %v102
    %v5046 = vsel %vm4095, %v5041, 0
    %v5049 = vsel %vm4095, %v5042, 0
    %5051 = vmatpush.msra.mxu0 0.0
    %5052 = vmatpush.msra.mxu0 0.0
    %5053 = vmatpush.msra.mxu0 0.0
    %5054 = vmatpush.msra.mxu0 0.0
    %5055 = vmatpush.msra.mxu0 0.0
    %5056 = vmatpush.msra.mxu0 0.0
    %5057 = vmatpush.msra.mxu0 0.0
    %5058 = vmatpush.msra.mxu0 0.0
    %5059 = vmatpush.msra.mxu0 0.0
    %5060 = vmatpush.msra.mxu0 0.0
    %5061 = vmatpush.msra.mxu0 0.0
    %5062 = vmatpush.msra.mxu0 0.0
    %5063 = vmatpush.msra.mxu0 0.0
    %5064 = vmatpush.msra.mxu0 0.0
    %5065 = vmatpush.msra.mxu0 %v5044
    %5066 = vmatpush.msra.mxu0 %v5043
    %5067 = vmatmul.f32.gmra.mxu0 %v5046
    %v5068 = vpop.f32.mrf.mxu0
    %v5069 = vadd.f32 0.0, %v5068
    %5070 = vmatmul.f32.gmra.mxu0 %v5049
    %v5071 = vpop.f32.mrf.mxu0
    %v5072 = vadd.f32 0.0, %v5071
    %5073 = vdwg.mxu0
    %v5075 = vsel %vm4095, %v4986, 0
    %v5078 = vsel %vm4095, %v4987, 0
    %5080 = vmatpush.msra.mxu0 0.0
    %5081 = vmatpush.msra.mxu0 0.0
    %5082 = vmatpush.msra.mxu0 0.0
    %5083 = vmatpush.msra.mxu0 0.0
    %5084 = vmatpush.msra.mxu0 0.0
    %5085 = vmatpush.msra.mxu0 0.0
    %5086 = vmatpush.msra.mxu0 0.0
    %5087 = vmatpush.msra.mxu0 0.0
    %5088 = vmatpush.msra.mxu0 0.0
    %5089 = vmatpush.msra.mxu0 0.0
    %5090 = vmatpush.msra.mxu0 0.0
    %5091 = vmatpush.msra.mxu0 0.0
    %5092 = vmatpush.msra.mxu0 0.0
    %5093 = vmatpush.msra.mxu0 0.0
    %5094 = vmatpush.msra.mxu0 %v4989
    %5095 = vmatpush.msra.mxu0 %v4988
    %5096 = vmatmul.f32.gmra.mxu0 %v5075
    %v5097 = vpop.f32.mrf.mxu0
    %v5098 = vadd.f32 %v5069, %v5097
    %5099 = vmatmul.f32.gmra.mxu0 %v5078
    %v5100 = vpop.f32.mrf.mxu0
    %v5101 = vadd.f32 %v5072, %v5100
    %5102 = vdwg.mxu0
    %v5103 = vmul.f32 %v4852, %v116
    %v5104 = vmul.f32 %v4855, %v116
    %v5106 = vsel %vm3887, %v5103, 0
    %v5109 = vsel %vm3887, %v5104, 0
    %5111 = vmatpush.xpose.msra.mxu0 0.0
    %5112 = vmatpush.xpose.msra.mxu0 0.0
    %5113 = vmatpush.xpose.msra.mxu0 0.0
    %5114 = vmatpush.xpose.msra.mxu0 0.0
    %5115 = vmatpush.xpose.msra.mxu0 0.0
    %5116 = vmatpush.xpose.msra.mxu0 0.0
    %5117 = vmatpush.xpose.msra.mxu0 0.0
    %5118 = vmatpush.xpose.msra.mxu0 0.0
    %5119 = vmatpush.xpose.msra.mxu0 0.0
    %5120 = vmatpush.xpose.msra.mxu0 0.0
    %5121 = vmatpush.xpose.msra.mxu0 0.0
    %5122 = vmatpush.xpose.msra.mxu0 0.0
    %5123 = vmatpush.xpose.msra.mxu0 0.0
    %5124 = vmatpush.xpose.msra.mxu0 0.0
    %5125 = vmatpush.xpose.msra.mxu0 %v4941
    %5126 = vmatpush.xpose.msra.mxu0 %v4938
    %5127 = vmatmul.f32.gmra.mxu0 %v5106
    %v5128 = vpop.f32.mrf.mxu0
    %v5129 = vadd.f32 %v338, %v5128
    %5130 = vmatmul.f32.gmra.mxu0 %v5109
    %v5131 = vpop.f32.mrf.mxu0
    %v5132 = vadd.f32 %v339, %v5131
    %5133 = vdwg.mxu0
    %v5134 = vsel %vm4095, %v5129, -inf
    %5135 = vmax.xlane.f32.xlu0 %v5134
    %v5136 = vpop.xlane.xlu0 %5135
    %v5137 = vsel %vm4095, %v5132, -inf
    %5138 = vmax.xlane.f32.xlu0 %v5137
    %v5139 = vpop.xlane.xlu0 %5138
    %v5140 = vsub.f32 %v5129, %v5136
    %v5141 = vsub.f32 %v5132, %v5139
    %v5142 = vmul.f32 %v5140, 1.442695
    %v5143 = vpow.pop %v5142
    %v5144 = vmul.f32 %v5141, 1.442695
    %v5145 = vpow.pop %v5144
    %v5146 = vsel %vm4095, %v5143, 0.0
    %5147 = vadd.xlane.f32.xlu0 %v5146
    %v5148 = vpop.xlane.xlu0 %5147
    %v5149 = vsel %vm4095, %v5145, 0.0
    %5150 = vadd.xlane.f32.xlu0 %v5149
    %v5151 = vpop.xlane.xlu0 %5150
    %v5152 = vrcp.pop %v5148
    %v5153 = vrcp.pop %v5151
    %v5154 = vmul.f32 %v5143, %v5152
    %v5155 = vmul.f32 %v5145, %v5153
    %v5156 = vmul.f32 %v4924, %v105
    %v5157 = vmul.f32 %v4927, %v105
    %v5159 = vsel %vm4095, %v5154, 0
    %v5162 = vsel %vm4095, %v5155, 0
    %5164 = vmatpush.msra.mxu0 0.0
    %5165 = vmatpush.msra.mxu0 0.0
    %5166 = vmatpush.msra.mxu0 0.0
    %5167 = vmatpush.msra.mxu0 0.0
    %5168 = vmatpush.msra.mxu0 0.0
    %5169 = vmatpush.msra.mxu0 0.0
    %5170 = vmatpush.msra.mxu0 0.0
    %5171 = vmatpush.msra.mxu0 0.0
    %5172 = vmatpush.msra.mxu0 0.0
    %5173 = vmatpush.msra.mxu0 0.0
    %5174 = vmatpush.msra.mxu0 0.0
    %5175 = vmatpush.msra.mxu0 0.0
    %5176 = vmatpush.msra.mxu0 0.0
    %5177 = vmatpush.msra.mxu0 0.0
    %5178 = vmatpush.msra.mxu0 %v5157
    %5179 = vmatpush.msra.mxu0 %v5156
    %5180 = vmatmul.f32.gmra.mxu0 %v5159
    %v5181 = vpop.f32.mrf.mxu0
    %v5182 = vadd.f32 0.0, %v5181
    %5183 = vmatmul.f32.gmra.mxu0 %v5162
    %v5184 = vpop.f32.mrf.mxu0
    %v5185 = vadd.f32 0.0, %v5184
    %5186 = vdwg.mxu0
    %v5187 = vadd.f32 %v5098, %v5182
    %v5188 = vadd.f32 %v5101, %v5185
    %v5189 = vmul.f32 %v4852, %v117
    %v5190 = vmul.f32 %v4855, %v117
    %v5192 = vsel %vm3887, %v5189, 0
    %v5195 = vsel %vm3887, %v5190, 0
    %5197 = vmatpush.xpose.msra.mxu0 0.0
    %5198 = vmatpush.xpose.msra.mxu0 0.0
    %5199 = vmatpush.xpose.msra.mxu0 0.0
    %5200 = vmatpush.xpose.msra.mxu0 0.0
    %5201 = vmatpush.xpose.msra.mxu0 0.0
    %5202 = vmatpush.xpose.msra.mxu0 0.0
    %5203 = vmatpush.xpose.msra.mxu0 0.0
    %5204 = vmatpush.xpose.msra.mxu0 0.0
    %5205 = vmatpush.xpose.msra.mxu0 0.0
    %5206 = vmatpush.xpose.msra.mxu0 0.0
    %5207 = vmatpush.xpose.msra.mxu0 0.0
    %5208 = vmatpush.xpose.msra.mxu0 0.0
    %5209 = vmatpush.xpose.msra.mxu0 0.0
    %5210 = vmatpush.xpose.msra.mxu0 0.0
    %5211 = vmatpush.xpose.msra.mxu0 %v4941
    %5212 = vmatpush.xpose.msra.mxu0 %v4938
    %5213 = vmatmul.f32.gmra.mxu0 %v5192
    %v5214 = vpop.f32.mrf.mxu0
    %v5215 = vadd.f32 %v338, %v5214
    %5216 = vmatmul.f32.gmra.mxu0 %v5195
    %v5217 = vpop.f32.mrf.mxu0
    %v5218 = vadd.f32 %v339, %v5217
    %5219 = vdwg.mxu0
    %v5220 = vsel %vm4095, %v5215, -inf
    %5221 = vmax.xlane.f32.xlu0 %v5220
    %v5222 = vpop.xlane.xlu0 %5221
    %v5223 = vsel %vm4095, %v5218, -inf
    %5224 = vmax.xlane.f32.xlu0 %v5223
    %v5225 = vpop.xlane.xlu0 %5224
    %v5226 = vsub.f32 %v5215, %v5222
    %v5227 = vsub.f32 %v5218, %v5225
    %v5228 = vmul.f32 %v5226, 1.442695
    %v5229 = vpow.pop %v5228
    %v5230 = vmul.f32 %v5227, 1.442695
    %v5231 = vpow.pop %v5230
    %v5232 = vsel %vm4095, %v5229, 0.0
    %5233 = vadd.xlane.f32.xlu0 %v5232
    %v5234 = vpop.xlane.xlu0 %5233
    %v5235 = vsel %vm4095, %v5231, 0.0
    %5236 = vadd.xlane.f32.xlu0 %v5235
    %v5237 = vpop.xlane.xlu0 %5236
    %v5238 = vrcp.pop %v5234
    %v5239 = vrcp.pop %v5237
    %v5240 = vmul.f32 %v5229, %v5238
    %v5241 = vmul.f32 %v5231, %v5239
    %v5242 = vmul.f32 %v4924, %v109
    %v5243 = vmul.f32 %v4927, %v109
    %v5245 = vsel %vm4095, %v5240, 0
    %v5248 = vsel %vm4095, %v5241, 0
    %5250 = vmatpush.msra.mxu0 0.0
    %5251 = vmatpush.msra.mxu0 0.0
    %5252 = vmatpush.msra.mxu0 0.0
    %5253 = vmatpush.msra.mxu0 0.0
    %5254 = vmatpush.msra.mxu0 0.0
    %5255 = vmatpush.msra.mxu0 0.0
    %5256 = vmatpush.msra.mxu0 0.0
    %5257 = vmatpush.msra.mxu0 0.0
    %5258 = vmatpush.msra.mxu0 0.0
    %5259 = vmatpush.msra.mxu0 0.0
    %5260 = vmatpush.msra.mxu0 0.0
    %5261 = vmatpush.msra.mxu0 0.0
    %5262 = vmatpush.msra.mxu0 0.0
    %5263 = vmatpush.msra.mxu0 0.0
    %5264 = vmatpush.msra.mxu0 %v5243
    %5265 = vmatpush.msra.mxu0 %v5242
    %5266 = vmatmul.f32.gmra.mxu0 %v5245
    %v5267 = vpop.f32.mrf.mxu0
    %v5268 = vadd.f32 0.0, %v5267
    %5269 = vmatmul.f32.gmra.mxu0 %v5248
    %v5270 = vpop.f32.mrf.mxu0
    %v5271 = vadd.f32 0.0, %v5270
    %5272 = vdwg.mxu0
    %v5273 = vadd.f32 %v5187, %v5268
    %v5274 = vadd.f32 %v5188, %v5271
    %v5275 = vmul.f32 %v4852, %v118
    %v5276 = vmul.f32 %v4855, %v118
    %v5278 = vsel %vm3887, %v5275, 0
    %v5281 = vsel %vm3887, %v5276, 0
    %5283 = vmatpush.xpose.msra.mxu0 0.0
    %5284 = vmatpush.xpose.msra.mxu0 0.0
    %5285 = vmatpush.xpose.msra.mxu0 0.0
    %5286 = vmatpush.xpose.msra.mxu0 0.0
    %5287 = vmatpush.xpose.msra.mxu0 0.0
    %5288 = vmatpush.xpose.msra.mxu0 0.0
    %5289 = vmatpush.xpose.msra.mxu0 0.0
    %5290 = vmatpush.xpose.msra.mxu0 0.0
    %5291 = vmatpush.xpose.msra.mxu0 0.0
    %5292 = vmatpush.xpose.msra.mxu0 0.0
    %5293 = vmatpush.xpose.msra.mxu0 0.0
    %5294 = vmatpush.xpose.msra.mxu0 0.0
    %5295 = vmatpush.xpose.msra.mxu0 0.0
    %5296 = vmatpush.xpose.msra.mxu0 0.0
    %5297 = vmatpush.xpose.msra.mxu0 %v4941
    %5298 = vmatpush.xpose.msra.mxu0 %v4938
    %5299 = vmatmul.f32.gmra.mxu0 %v5278
    %v5300 = vpop.f32.mrf.mxu0
    %v5301 = vadd.f32 %v338, %v5300
    %5302 = vmatmul.f32.gmra.mxu0 %v5281
    %v5303 = vpop.f32.mrf.mxu0
    %v5304 = vadd.f32 %v339, %v5303
    %5305 = vdwg.mxu0
    %v5306 = vsel %vm4095, %v5301, -inf
    %5307 = vmax.xlane.f32.xlu0 %v5306
    %v5308 = vpop.xlane.xlu0 %5307
    %v5309 = vsel %vm4095, %v5304, -inf
    %5310 = vmax.xlane.f32.xlu0 %v5309
    %v5311 = vpop.xlane.xlu0 %5310
    %v5312 = vsub.f32 %v5301, %v5308
    %v5313 = vsub.f32 %v5304, %v5311
    %v5314 = vmul.f32 %v5312, 1.442695
    %v5315 = vpow.pop %v5314
    %v5316 = vmul.f32 %v5313, 1.442695
    %v5317 = vpow.pop %v5316
    %v5318 = vsel %vm4095, %v5315, 0.0
    %5319 = vadd.xlane.f32.xlu0 %v5318
    %v5320 = vpop.xlane.xlu0 %5319
    %v5321 = vsel %vm4095, %v5317, 0.0
    %5322 = vadd.xlane.f32.xlu0 %v5321
    %v5323 = vpop.xlane.xlu0 %5322
    %v5324 = vrcp.pop %v5320
    %v5325 = vrcp.pop %v5323
    %v5326 = vmul.f32 %v5315, %v5324
    %v5327 = vmul.f32 %v5317, %v5325
    %v5328 = vmul.f32 %v4924, %v113
    %v5329 = vmul.f32 %v4927, %v113
    %v5331 = vsel %vm4095, %v5326, 0
    %v5334 = vsel %vm4095, %v5327, 0
    %5336 = vmatpush.msra.mxu0 0.0
    %5337 = vmatpush.msra.mxu0 0.0
    %5338 = vmatpush.msra.mxu0 0.0
    %5339 = vmatpush.msra.mxu0 0.0
    %5340 = vmatpush.msra.mxu0 0.0
    %5341 = vmatpush.msra.mxu0 0.0
    %5342 = vmatpush.msra.mxu0 0.0
    %5343 = vmatpush.msra.mxu0 0.0
    %5344 = vmatpush.msra.mxu0 0.0
    %5345 = vmatpush.msra.mxu0 0.0
    %5346 = vmatpush.msra.mxu0 0.0
    %5347 = vmatpush.msra.mxu0 0.0
    %5348 = vmatpush.msra.mxu0 0.0
    %5349 = vmatpush.msra.mxu0 0.0
    %5350 = vmatpush.msra.mxu0 %v5329
    %5351 = vmatpush.msra.mxu0 %v5328
    %5352 = vmatmul.f32.gmra.mxu0 %v5331
    %v5353 = vpop.f32.mrf.mxu0
    %v5354 = vadd.f32 0.0, %v5353
    %5355 = vmatmul.f32.gmra.mxu0 %v5334
    %v5356 = vpop.f32.mrf.mxu0
    %v5357 = vadd.f32 0.0, %v5356
    %5358 = vdwg.mxu0
    %v5359 = vadd.f32 %v5273, %v5354
    %v5360 = vadd.f32 %v5274, %v5357
    %s5361 = scalar_lea.vmem %s12, 448
    %v5362 = vld [vmem:[%s5361] sm:$0xff]
    %v5363 = vld [vmem:[%s5361 + $0x8] sm:$0xff]
    %v5364 = vld [vmem:[%s5361 + $0x10] sm:$0xff]
    %v5365 = vld [vmem:[%s5361 + $0x18] sm:$0xff]
    %v5366 = vld [vmem:[%s5361 + $0x20] sm:$0xff]
    %v5367 = vld [vmem:[%s5361 + $0x28] sm:$0xff]
    %v5368 = vld [vmem:[%s5361 + $0x30] sm:$0xff]
    %v5369 = vld [vmem:[%s5361 + $0x38] sm:$0xf]
    %v5370 = vperm.slane %v4761, 0
    %v5372 = vsel %vm3887, %v5359, 0
    %v5375 = vsel %vm3887, %v5360, 0
    %v5378 = vsel %vm131, %v5369, 0
    %5380 = vmatpush.msra.mxu0 0.0
    %5381 = vmatpush.msra.mxu0 0.0
    %5382 = vmatpush.msra.mxu0 0.0
    %5383 = vmatpush.msra.mxu0 0.0
    %5384 = vmatpush.msra.mxu0 0.0
    %5385 = vmatpush.msra.mxu0 0.0
    %5386 = vmatpush.msra.mxu0 0.0
    %5387 = vmatpush.msra.mxu0 0.0
    %5388 = vmatpush.msra.mxu0 %v5378
    %5389 = vmatpush.msra.mxu0 %v5368
    %5390 = vmatpush.msra.mxu0 %v5367
    %5391 = vmatpush.msra.mxu0 %v5366
    %5392 = vmatpush.msra.mxu0 %v5365
    %5393 = vmatpush.msra.mxu0 %v5364
    %5394 = vmatpush.msra.mxu0 %v5363
    %5395 = vmatpush.msra.mxu0 %v5362
    %5396 = vmatmul.f32.gmra.mxu0 %v5372
    %v5397 = vpop.f32.mrf.mxu0
    %v5398 = vadd.f32 %v5370, %v5397
    %5399 = vmatmul.f32.gmra.mxu0 %v5375
    %v5400 = vpop.f32.mrf.mxu0
    %v5401 = vadd.f32 %v5370, %v5400
    %5402 = vdwg.mxu0
    %v5403 = vadd.f32 %v4753, %v5398
    %v5404 = vadd.f32 %v4754, %v5401
    %v5405 = vsel %vm3887, %v5403, 0.0
    %5406 = vadd.xlane.f32.xlu0 %v5405
    %v5407 = vpop.xlane.xlu0 %5406
    %v5408 = vsel %vm3887, %v5404, 0.0
    %5409 = vadd.xlane.f32.xlu0 %v5408
    %v5410 = vpop.xlane.xlu0 %5409
    %v5411 = vmul.f32 %v5407, %v3900
    %v5412 = vmul.f32 %v5410, %v3900
    %v5413 = vsub.f32 %v5403, %v5411
    %v5414 = vsub.f32 %v5404, %v5412
    %v5415 = vmul.f32 %v5413, %v5413
    %v5416 = vmul.f32 %v5414, %v5414
    %v5417 = vsel %vm3887, %v5415, 0.0
    %5418 = vadd.xlane.f32.xlu0 %v5417
    %v5419 = vpop.xlane.xlu0 %5418
    %v5420 = vsel %vm3887, %v5416, 0.0
    %5421 = vadd.xlane.f32.xlu0 %v5420
    %v5422 = vpop.xlane.xlu0 %5421
    %v5423 = vmul.f32 %v5419, %v3900
    %v5424 = vmul.f32 %v5422, %v3900
    %v5425 = vadd.f32 %v5423, 1e-05
    %v5426 = vadd.f32 %v5424, 1e-05
    %v5427 = vrsqrt.pop %v5425
    %v5428 = vmul.f32 %v5427, %v5425
    %v5429 = vmul.f32 %v5428, %v5427
    %v5430 = vmul.f32 0.5, %v5429
    %v5431 = vsub.f32 1.5, %v5430
    %v5432 = vmul.f32 %v5427, %v5431
    %vm5433 = vweird.f32 %v5425
    %vm5434 = vweird.f32 %v5427
    %vm5435 = vmor %vm5433, %vm5434
    %v5436 = vsel %vm5435, %v5427, %v5432
    %v5437 = vrsqrt.pop %v5426
    %v5438 = vmul.f32 %v5437, %v5426
    %v5439 = vmul.f32 %v5438, %v5437
    %v5440 = vmul.f32 0.5, %v5439
    %v5441 = vsub.f32 1.5, %v5440
    %v5442 = vmul.f32 %v5437, %v5441
    %vm5443 = vweird.f32 %v5426
    %vm5444 = vweird.f32 %v5437
    %vm5445 = vmor %vm5443, %vm5444
    %v5446 = vsel %vm5445, %v5437, %v5442
    %v5447 = vmul.f32 %v5413, %v5436
    %v5448 = vmul.f32 %v5414, %v5446
    %v5449 = vperm.slane %v4762, 0
    %v5450 = vmul.f32 %v5447, %v5449
    %v5451 = vmul.f32 %v5448, %v5449
    %v5452 = vperm.slane %v4763, 0
    %v5453 = vadd.f32 %v5450, %v5452
    %v5454 = vadd.f32 %v5451, %v5452
    %s5455 = scalar_lea.vmem %s13, 128
    %v5456 = vld [vmem:[%s5455] sm:$0xff]
    %v5457 = vld [vmem:[%s5455 + $0x8] sm:$0xff]
    %v5458 = vld [vmem:[%s5455 + $0x10] sm:$0xff]
    %v5459 = vld [vmem:[%s5455 + $0x18] sm:$0xff]
    %v5460 = vld [vmem:[%s5455 + $0x20] sm:$0xff]
    %v5461 = vld [vmem:[%s5455 + $0x28] sm:$0xff]
    %v5462 = vld [vmem:[%s5455 + $0x30] sm:$0xff]
    %v5463 = vld [vmem:[%s5455 + $0x38] sm:$0xff]
    %v5464 = vld [vmem:[%s5455 + $0x40] sm:$0xff]
    %v5465 = vld [vmem:[%s5455 + $0x48] sm:$0xff]
    %v5466 = vld [vmem:[%s5455 + $0x50] sm:$0xff]
    %v5467 = vld [vmem:[%s5455 + $0x58] sm:$0xff]
    %v5468 = vld [vmem:[%s5455 + $0x60] sm:$0xff]
    %v5469 = vld [vmem:[%s5455 + $0x68] sm:$0xff]
    %v5470 = vld [vmem:[%s5455 + $0x70] sm:$0xf]
    %v5471 = vld [vmem:[%s5455 + $0x78] sm:$0xf]
    %s5472 = scalar_lea.vmem %s16, 2
    %v5473 = vld [vmem:[%s5472] sm:$0x3]
    %v5475 = vperm.slane %v5473, 0
    %v5476 = vperm.slane %v5473, 1
    %v5480 = vsel %vm3887, %v5453, 0
    %v5483 = vsel %vm3887, %v5454, 0
    %v5486 = vsel %vm131, %v5470, 0
    %v5489 = vsel %vm131, %v5471, 0
    %5491 = vmatpush.msra.mxu0 0.0
    %5492 = vmatpush.msra.mxu0 0.0
    %5493 = vmatpush.msra.mxu0 0.0
    %5494 = vmatpush.msra.mxu0 0.0
    %5495 = vmatpush.msra.mxu0 0.0
    %5496 = vmatpush.msra.mxu0 0.0
    %5497 = vmatpush.msra.mxu0 0.0
    %5498 = vmatpush.msra.mxu0 0.0
    %5499 = vmatpush.msra.mxu0 %v5486
    %5500 = vmatpush.msra.mxu0 %v5468
    %5501 = vmatpush.msra.mxu0 %v5466
    %5502 = vmatpush.msra.mxu0 %v5464
    %5503 = vmatpush.msra.mxu0 %v5462
    %5504 = vmatpush.msra.mxu0 %v5460
    %5505 = vmatpush.msra.mxu0 %v5458
    %5506 = vmatpush.msra.mxu0 %v5456
    %5507 = vmatmul.f32.gmra.mxu0 %v5480
    %v5508 = vpop.f32.mrf.mxu0
    %v5509 = vadd.f32 %v5475, %v5508
    %5510 = vmatmul.f32.gmra.mxu0 %v5483
    %v5511 = vpop.f32.mrf.mxu0
    %v5512 = vadd.f32 %v5475, %v5511
    %5513 = vdwg.mxu0
    %5514 = vmatpush.msra.mxu0 0.0
    %5515 = vmatpush.msra.mxu0 0.0
    %5516 = vmatpush.msra.mxu0 0.0
    %5517 = vmatpush.msra.mxu0 0.0
    %5518 = vmatpush.msra.mxu0 0.0
    %5519 = vmatpush.msra.mxu0 0.0
    %5520 = vmatpush.msra.mxu0 0.0
    %5521 = vmatpush.msra.mxu0 0.0
    %5522 = vmatpush.msra.mxu0 %v5489
    %5523 = vmatpush.msra.mxu0 %v5469
    %5524 = vmatpush.msra.mxu0 %v5467
    %5525 = vmatpush.msra.mxu0 %v5465
    %5526 = vmatpush.msra.mxu0 %v5463
    %5527 = vmatpush.msra.mxu0 %v5461
    %5528 = vmatpush.msra.mxu0 %v5459
    %5529 = vmatpush.msra.mxu0 %v5457
    %5530 = vmatmul.f32.gmra.mxu0 %v5480
    %v5531 = vpop.f32.mrf.mxu0
    %v5532 = vadd.f32 %v5476, %v5531
    %5533 = vmatmul.f32.gmra.mxu0 %v5483
    %v5534 = vpop.f32.mrf.mxu0
    %v5535 = vadd.f32 %v5476, %v5534
    %5536 = vdwg.mxu0
    %v5537 = vmax.f32 %v5509, 0.0
    %v5538 = vmax.f32 %v5532, 0.0
    %v5539 = vmax.f32 %v5512, 0.0
    %v5540 = vmax.f32 %v5535, 0.0
    %s5541 = scalar_lea.vmem %s14, 240
    %v5542 = vld [vmem:[%s5541] sm:$0xff]
    %v5543 = vld [vmem:[%s5541 + $0x8] sm:$0xff]
    %v5544 = vld [vmem:[%s5541 + $0x10] sm:$0xff]
    %v5545 = vld [vmem:[%s5541 + $0x18] sm:$0xff]
    %v5546 = vld [vmem:[%s5541 + $0x20] sm:$0xff]
    %v5547 = vld [vmem:[%s5541 + $0x28] sm:$0xff]
    %v5548 = vld [vmem:[%s5541 + $0x30] sm:$0xff]
    %v5549 = vld [vmem:[%s5541 + $0x38] sm:$0xff]
    %v5550 = vld [vmem:[%s5541 + $0x40] sm:$0xff]
    %v5551 = vld [vmem:[%s5541 + $0x48] sm:$0xff]
    %v5552 = vld [vmem:[%s5541 + $0x50] sm:$0xff]
    %v5553 = vld [vmem:[%s5541 + $0x58] sm:$0xff]
    %v5554 = vld [vmem:[%s5541 + $0x60] sm:$0xff]
    %v5555 = vld [vmem:[%s5541 + $0x68] sm:$0xff]
    %v5556 = vld [vmem:[%s5541 + $0x70] sm:$0xff]
    %v5557 = vld [vmem:[%s5541 + $0x78] sm:$0xff]
    %v5558 = vld [vmem:[%s5541 + $0x80] sm:$0xff]
    %v5559 = vld [vmem:[%s5541 + $0x88] sm:$0xff]
    %v5560 = vld [vmem:[%s5541 + $0x90] sm:$0xff]
    %v5561 = vld [vmem:[%s5541 + $0x98] sm:$0xff]
    %v5562 = vld [vmem:[%s5541 + $0xa0] sm:$0xff]
    %v5563 = vld [vmem:[%s5541 + $0xa8] sm:$0xff]
    %v5564 = vld [vmem:[%s5541 + $0xb0] sm:$0xff]
    %v5565 = vld [vmem:[%s5541 + $0xb8] sm:$0xff]
    %v5566 = vld [vmem:[%s5541 + $0xc0] sm:$0xff]
    %v5567 = vld [vmem:[%s5541 + $0xc8] sm:$0xff]
    %v5568 = vld [vmem:[%s5541 + $0xd0] sm:$0xff]
    %v5569 = vld [vmem:[%s5541 + $0xd8] sm:$0xff]
    %v5570 = vld [vmem:[%s5541 + $0xe0] sm:$0xff]
    %v5571 = vld [vmem:[%s5541 + $0xe8] sm:$0xff]
    %v5572 = vperm.slane %v4764, 0
    %v5574 = vsel %vm4700, %v5538, 0
    %v5577 = vsel %vm4700, %v5540, 0
    %5579 = vmatpush.msra.mxu0 %v5557
    %5580 = vmatpush.msra.mxu0 %v5556
    %5581 = vmatpush.msra.mxu0 %v5555
    %5582 = vmatpush.msra.mxu0 %v5554
    %5583 = vmatpush.msra.mxu0 %v5553
    %5584 = vmatpush.msra.mxu0 %v5552
    %5585 = vmatpush.msra.mxu0 %v5551
    %5586 = vmatpush.msra.mxu0 %v5550
    %5587 = vmatpush.msra.mxu0 %v5549
    %5588 = vmatpush.msra.mxu0 %v5548
    %5589 = vmatpush.msra.mxu0 %v5547
    %5590 = vmatpush.msra.mxu0 %v5546
    %5591 = vmatpush.msra.mxu0 %v5545
    %5592 = vmatpush.msra.mxu0 %v5544
    %5593 = vmatpush.msra.mxu0 %v5543
    %5594 = vmatpush.msra.mxu0 %v5542
    %5595 = vmatmul.f32.gmra.mxu0 %v5537
    %v5596 = vpop.f32.mrf.mxu0
    %v5597 = vadd.f32 %v5572, %v5596
    %5598 = vmatmul.f32.gmra.mxu0 %v5539
    %v5599 = vpop.f32.mrf.mxu0
    %v5600 = vadd.f32 %v5572, %v5599
    %5601 = vdwg.mxu0
    %5602 = vmatpush.msra.mxu0 0.0
    %5603 = vmatpush.msra.mxu0 0.0
    %5604 = vmatpush.msra.mxu0 %v5571
    %5605 = vmatpush.msra.mxu0 %v5570
    %5606 = vmatpush.msra.mxu0 %v5569
    %5607 = vmatpush.msra.mxu0 %v5568
    %5608 = vmatpush.msra.mxu0 %v5567
    %5609 = vmatpush.msra.mxu0 %v5566
    %5610 = vmatpush.msra.mxu0 %v5565
    %5611 = vmatpush.msra.mxu0 %v5564
    %5612 = vmatpush.msra.mxu0 %v5563
    %5613 = vmatpush.msra.mxu0 %v5562
    %5614 = vmatpush.msra.mxu0 %v5561
    %5615 = vmatpush.msra.mxu0 %v5560
    %5616 = vmatpush.msra.mxu0 %v5559
    %5617 = vmatpush.msra.mxu0 %v5558
    %5618 = vmatmul.f32.gmra.mxu0 %v5574
    %v5619 = vpop.f32.mrf.mxu0
    %v5620 = vadd.f32 %v5597, %v5619
    %5621 = vmatmul.f32.gmra.mxu0 %v5577
    %v5622 = vpop.f32.mrf.mxu0
    %v5623 = vadd.f32 %v5600, %v5622
    %5624 = vdwg.mxu0
    %v5625 = vadd.f32 %v5403, %v5620
    %v5626 = vadd.f32 %v5404, %v5623
    %s5627 = scalar_lea.vmem %s15, 32
    %v5628 = vld [vmem:[%s5627] sm:$0x1]
    %v5629 = vld [vmem:[%s5627 + $0x1] sm:$0x1]
    %v5630 = vld [vmem:[%s5627 + $0x2] sm:$0x1]
    %v5631 = vld [vmem:[%s5627 + $0x3] sm:$0x1]
    %v5632 = vld [vmem:[%s5627 + $0x4] sm:$0x1]
    %v5633 = vld [vmem:[%s5627 + $0x5] sm:$0x1]
    %v5634 = vld [vmem:[%s5627 + $0x6] sm:$0x1]
    %v5635 = vld [vmem:[%s5627 + $0x7] sm:$0x1]
    %v5636 = vld [vmem:[%s5627 + $0x8] sm:$0x1]
    %v5637 = vsel %vm3887, %v5625, 0.0
    %5638 = vadd.xlane.f32.xlu0 %v5637
    %v5639 = vpop.xlane.xlu0 %5638
    %v5640 = vsel %vm3887, %v5626, 0.0
    %5641 = vadd.xlane.f32.xlu0 %v5640
    %v5642 = vpop.xlane.xlu0 %5641
    %v5643 = vmul.f32 %v5639, %v3900
    %v5644 = vmul.f32 %v5642, %v3900
    %v5645 = vsub.f32 %v5625, %v5643
    %v5646 = vsub.f32 %v5626, %v5644
    %v5647 = vmul.f32 %v5645, %v5645
    %v5648 = vmul.f32 %v5646, %v5646
    %v5649 = vsel %vm3887, %v5647, 0.0
    %5650 = vadd.xlane.f32.xlu0 %v5649
    %v5651 = vpop.xlane.xlu0 %5650
    %v5652 = vsel %vm3887, %v5648, 0.0
    %5653 = vadd.xlane.f32.xlu0 %v5652
    %v5654 = vpop.xlane.xlu0 %5653
    %v5655 = vmul.f32 %v5651, %v3900
    %v5656 = vmul.f32 %v5654, %v3900
    %v5657 = vadd.f32 %v5655, 1e-05
    %v5658 = vadd.f32 %v5656, 1e-05
    %v5659 = vrsqrt.pop %v5657
    %v5660 = vmul.f32 %v5659, %v5657
    %v5661 = vmul.f32 %v5660, %v5659
    %v5662 = vmul.f32 0.5, %v5661
    %v5663 = vsub.f32 1.5, %v5662
    %v5664 = vmul.f32 %v5659, %v5663
    %vm5665 = vweird.f32 %v5657
    %vm5666 = vweird.f32 %v5659
    %vm5667 = vmor %vm5665, %vm5666
    %v5668 = vsel %vm5667, %v5659, %v5664
    %v5669 = vrsqrt.pop %v5658
    %v5670 = vmul.f32 %v5669, %v5658
    %v5671 = vmul.f32 %v5670, %v5669
    %v5672 = vmul.f32 0.5, %v5671
    %v5673 = vsub.f32 1.5, %v5672
    %v5674 = vmul.f32 %v5669, %v5673
    %vm5675 = vweird.f32 %v5658
    %vm5676 = vweird.f32 %v5669
    %vm5677 = vmor %vm5675, %vm5676
    %v5678 = vsel %vm5677, %v5669, %v5674
    %v5679 = vmul.f32 %v5645, %v5668
    %v5680 = vmul.f32 %v5646, %v5678
    %v5681 = vperm.slane %v5628, 0
    %v5682 = vmul.f32 %v5679, %v5681
    %v5683 = vmul.f32 %v5680, %v5681
    %v5684 = vperm.slane %v5629, 0
    %v5685 = vadd.f32 %v5682, %v5684
    %v5686 = vadd.f32 %v5683, %v5684
    %s5687 = scalar_lea.vmem %s12, 512
    %v5688 = vld [vmem:[%s5687] sm:$0xff]
    %v5689 = vld [vmem:[%s5687 + $0x8] sm:$0xff]
    %v5690 = vld [vmem:[%s5687 + $0x10] sm:$0xff]
    %v5691 = vld [vmem:[%s5687 + $0x18] sm:$0xff]
    %v5692 = vld [vmem:[%s5687 + $0x20] sm:$0xff]
    %v5693 = vld [vmem:[%s5687 + $0x28] sm:$0xff]
    %v5694 = vld [vmem:[%s5687 + $0x30] sm:$0xff]
    %v5695 = vld [vmem:[%s5687 + $0x38] sm:$0xf]
    %v5696 = vperm.slane %v5630, 0
    %v5698 = vsel %vm3887, %v5685, 0
    %v5701 = vsel %vm3887, %v5686, 0
    %v5704 = vsel %vm131, %v5695, 0
    %5706 = vmatpush.msra.mxu0 0.0
    %5707 = vmatpush.msra.mxu0 0.0
    %5708 = vmatpush.msra.mxu0 0.0
    %5709 = vmatpush.msra.mxu0 0.0
    %5710 = vmatpush.msra.mxu0 0.0
    %5711 = vmatpush.msra.mxu0 0.0
    %5712 = vmatpush.msra.mxu0 0.0
    %5713 = vmatpush.msra.mxu0 0.0
    %5714 = vmatpush.msra.mxu0 %v5704
    %5715 = vmatpush.msra.mxu0 %v5694
    %5716 = vmatpush.msra.mxu0 %v5693
    %5717 = vmatpush.msra.mxu0 %v5692
    %5718 = vmatpush.msra.mxu0 %v5691
    %5719 = vmatpush.msra.mxu0 %v5690
    %5720 = vmatpush.msra.mxu0 %v5689
    %5721 = vmatpush.msra.mxu0 %v5688
    %5722 = vmatmul.f32.gmra.mxu0 %v5698
    %v5723 = vpop.f32.mrf.mxu0
    %v5724 = vadd.f32 %v5696, %v5723
    %5725 = vmatmul.f32.gmra.mxu0 %v5701
    %v5726 = vpop.f32.mrf.mxu0
    %v5727 = vadd.f32 %v5696, %v5726
    %5728 = vdwg.mxu0
    %s5729 = scalar_lea.vmem %s12, 576
    %v5730 = vld [vmem:[%s5729] sm:$0xff]
    %v5731 = vld [vmem:[%s5729 + $0x8] sm:$0xff]
    %v5732 = vld [vmem:[%s5729 + $0x10] sm:$0xff]
    %v5733 = vld [vmem:[%s5729 + $0x18] sm:$0xff]
    %v5734 = vld [vmem:[%s5729 + $0x20] sm:$0xff]
    %v5735 = vld [vmem:[%s5729 + $0x28] sm:$0xff]
    %v5736 = vld [vmem:[%s5729 + $0x30] sm:$0xff]
    %v5737 = vld [vmem:[%s5729 + $0x38] sm:$0xf]
    %v5738 = vperm.slane %v5631, 0
    %v5740 = vsel %vm131, %v5737, 0
    %5742 = vmatpush.msra.mxu0 0.0
    %5743 = vmatpush.msra.mxu0 0.0
    %5744 = vmatpush.msra.mxu0 0.0
    %5745 = vmatpush.msra.mxu0 0.0
    %5746 = vmatpush.msra.mxu0 0.0
    %5747 = vmatpush.msra.mxu0 0.0
    %5748 = vmatpush.msra.mxu0 0.0
    %5749 = vmatpush.msra.mxu0 0.0
    %5750 = vmatpush.msra.mxu0 %v5740
    %5751 = vmatpush.msra.mxu0 %v5736
    %5752 = vmatpush.msra.mxu0 %v5735
    %5753 = vmatpush.msra.mxu0 %v5734
    %5754 = vmatpush.msra.mxu0 %v5733
    %5755 = vmatpush.msra.mxu0 %v5732
    %5756 = vmatpush.msra.mxu0 %v5731
    %5757 = vmatpush.msra.mxu0 %v5730
    %5758 = vmatmul.f32.gmra.mxu0 %v5698
    %v5759 = vpop.f32.mrf.mxu0
    %v5760 = vadd.f32 %v5738, %v5759
    %5761 = vmatmul.f32.gmra.mxu0 %v5701
    %v5762 = vpop.f32.mrf.mxu0
    %v5763 = vadd.f32 %v5738, %v5762
    %5764 = vdwg.mxu0
    %s5765 = scalar_lea.vmem %s12, 640
    %v5766 = vld [vmem:[%s5765] sm:$0xff]
    %v5767 = vld [vmem:[%s5765 + $0x8] sm:$0xff]
    %v5768 = vld [vmem:[%s5765 + $0x10] sm:$0xff]
    %v5769 = vld [vmem:[%s5765 + $0x18] sm:$0xff]
    %v5770 = vld [vmem:[%s5765 + $0x20] sm:$0xff]
    %v5771 = vld [vmem:[%s5765 + $0x28] sm:$0xff]
    %v5772 = vld [vmem:[%s5765 + $0x30] sm:$0xff]
    %v5773 = vld [vmem:[%s5765 + $0x38] sm:$0xf]
    %v5774 = vperm.slane %v5632, 0
    %v5776 = vsel %vm131, %v5773, 0
    %5778 = vmatpush.msra.mxu0 0.0
    %5779 = vmatpush.msra.mxu0 0.0
    %5780 = vmatpush.msra.mxu0 0.0
    %5781 = vmatpush.msra.mxu0 0.0
    %5782 = vmatpush.msra.mxu0 0.0
    %5783 = vmatpush.msra.mxu0 0.0
    %5784 = vmatpush.msra.mxu0 0.0
    %5785 = vmatpush.msra.mxu0 0.0
    %5786 = vmatpush.msra.mxu0 %v5776
    %5787 = vmatpush.msra.mxu0 %v5772
    %5788 = vmatpush.msra.mxu0 %v5771
    %5789 = vmatpush.msra.mxu0 %v5770
    %5790 = vmatpush.msra.mxu0 %v5769
    %5791 = vmatpush.msra.mxu0 %v5768
    %5792 = vmatpush.msra.mxu0 %v5767
    %5793 = vmatpush.msra.mxu0 %v5766
    %5794 = vmatmul.f32.gmra.mxu0 %v5698
    %v5795 = vpop.f32.mrf.mxu0
    %v5796 = vadd.f32 %v5774, %v5795
    %5797 = vmatmul.f32.gmra.mxu0 %v5701
    %v5798 = vpop.f32.mrf.mxu0
    %v5799 = vadd.f32 %v5774, %v5798
    %5800 = vdwg.mxu0
    %v5801 = vmul.f32 %v5724, %v114
    %v5802 = vmul.f32 %v5727, %v114
    %v5804 = vsel %vm3887, %v5801, 0
    %v5807 = vsel %vm3887, %v5802, 0
    %v5810 = vsel %vm3887, %v5760, 0
    %v5813 = vsel %vm3887, %v5763, 0
    %5815 = vmatpush.xpose.msra.mxu0 0.0
    %5816 = vmatpush.xpose.msra.mxu0 0.0
    %5817 = vmatpush.xpose.msra.mxu0 0.0
    %5818 = vmatpush.xpose.msra.mxu0 0.0
    %5819 = vmatpush.xpose.msra.mxu0 0.0
    %5820 = vmatpush.xpose.msra.mxu0 0.0
    %5821 = vmatpush.xpose.msra.mxu0 0.0
    %5822 = vmatpush.xpose.msra.mxu0 0.0
    %5823 = vmatpush.xpose.msra.mxu0 0.0
    %5824 = vmatpush.xpose.msra.mxu0 0.0
    %5825 = vmatpush.xpose.msra.mxu0 0.0
    %5826 = vmatpush.xpose.msra.mxu0 0.0
    %5827 = vmatpush.xpose.msra.mxu0 0.0
    %5828 = vmatpush.xpose.msra.mxu0 0.0
    %5829 = vmatpush.xpose.msra.mxu0 %v5813
    %5830 = vmatpush.xpose.msra.mxu0 %v5810
    %5831 = vmatmul.f32.gmra.mxu0 %v5804
    %v5832 = vpop.f32.mrf.mxu0
    %v5833 = vadd.f32 %v338, %v5832
    %5834 = vmatmul.f32.gmra.mxu0 %v5807
    %v5835 = vpop.f32.mrf.mxu0
    %v5836 = vadd.f32 %v339, %v5835
    %5837 = vdwg.mxu0
    %v5838 = vsel %vm4095, %v5833, -inf
    %5839 = vmax.xlane.f32.xlu0 %v5838
    %v5840 = vpop.xlane.xlu0 %5839
    %v5841 = vsel %vm4095, %v5836, -inf
    %5842 = vmax.xlane.f32.xlu0 %v5841
    %v5843 = vpop.xlane.xlu0 %5842
    %v5844 = vsub.f32 %v5833, %v5840
    %v5845 = vsub.f32 %v5836, %v5843
    %v5846 = vmul.f32 %v5844, 1.442695
    %v5847 = vpow.pop %v5846
    %v5848 = vmul.f32 %v5845, 1.442695
    %v5849 = vpow.pop %v5848
    %v5850 = vsel %vm4095, %v5847, 0.0
    %5851 = vadd.xlane.f32.xlu0 %v5850
    %v5852 = vpop.xlane.xlu0 %5851
    %v5853 = vsel %vm4095, %v5849, 0.0
    %5854 = vadd.xlane.f32.xlu0 %v5853
    %v5855 = vpop.xlane.xlu0 %5854
    %v5856 = vrcp.pop %v5852
    %v5857 = vrcp.pop %v5855
    %v5858 = vmul.f32 %v5847, %v5856
    %v5859 = vmul.f32 %v5849, %v5857
    %v5860 = vmul.f32 %v5796, %v100
    %v5861 = vmul.f32 %v5799, %v100
    %v5862 = vmul.f32 %v5724, %v115
    %v5863 = vmul.f32 %v5727, %v115
    %v5865 = vsel %vm3887, %v5862, 0
    %v5868 = vsel %vm3887, %v5863, 0
    %5870 = vmatpush.xpose.msra.mxu0 0.0
    %5871 = vmatpush.xpose.msra.mxu0 0.0
    %5872 = vmatpush.xpose.msra.mxu0 0.0
    %5873 = vmatpush.xpose.msra.mxu0 0.0
    %5874 = vmatpush.xpose.msra.mxu0 0.0
    %5875 = vmatpush.xpose.msra.mxu0 0.0
    %5876 = vmatpush.xpose.msra.mxu0 0.0
    %5877 = vmatpush.xpose.msra.mxu0 0.0
    %5878 = vmatpush.xpose.msra.mxu0 0.0
    %5879 = vmatpush.xpose.msra.mxu0 0.0
    %5880 = vmatpush.xpose.msra.mxu0 0.0
    %5881 = vmatpush.xpose.msra.mxu0 0.0
    %5882 = vmatpush.xpose.msra.mxu0 0.0
    %5883 = vmatpush.xpose.msra.mxu0 0.0
    %5884 = vmatpush.xpose.msra.mxu0 %v5813
    %5885 = vmatpush.xpose.msra.mxu0 %v5810
    %5886 = vmatmul.f32.gmra.mxu0 %v5865
    %v5887 = vpop.f32.mrf.mxu0
    %v5888 = vadd.f32 %v338, %v5887
    %5889 = vmatmul.f32.gmra.mxu0 %v5868
    %v5890 = vpop.f32.mrf.mxu0
    %v5891 = vadd.f32 %v339, %v5890
    %5892 = vdwg.mxu0
    %v5893 = vsel %vm4095, %v5888, -inf
    %5894 = vmax.xlane.f32.xlu0 %v5893
    %v5895 = vpop.xlane.xlu0 %5894
    %v5896 = vsel %vm4095, %v5891, -inf
    %5897 = vmax.xlane.f32.xlu0 %v5896
    %v5898 = vpop.xlane.xlu0 %5897
    %v5899 = vsub.f32 %v5888, %v5895
    %v5900 = vsub.f32 %v5891, %v5898
    %v5901 = vmul.f32 %v5899, 1.442695
    %v5902 = vpow.pop %v5901
    %v5903 = vmul.f32 %v5900, 1.442695
    %v5904 = vpow.pop %v5903
    %v5905 = vsel %vm4095, %v5902, 0.0
    %5906 = vadd.xlane.f32.xlu0 %v5905
    %v5907 = vpop.xlane.xlu0 %5906
    %v5908 = vsel %vm4095, %v5904, 0.0
    %5909 = vadd.xlane.f32.xlu0 %v5908
    %v5910 = vpop.xlane.xlu0 %5909
    %v5911 = vrcp.pop %v5907
    %v5912 = vrcp.pop %v5910
    %v5913 = vmul.f32 %v5902, %v5911
    %v5914 = vmul.f32 %v5904, %v5912
    %v5915 = vmul.f32 %v5796, %v102
    %v5916 = vmul.f32 %v5799, %v102
    %v5918 = vsel %vm4095, %v5913, 0
    %v5921 = vsel %vm4095, %v5914, 0
    %5923 = vmatpush.msra.mxu0 0.0
    %5924 = vmatpush.msra.mxu0 0.0
    %5925 = vmatpush.msra.mxu0 0.0
    %5926 = vmatpush.msra.mxu0 0.0
    %5927 = vmatpush.msra.mxu0 0.0
    %5928 = vmatpush.msra.mxu0 0.0
    %5929 = vmatpush.msra.mxu0 0.0
    %5930 = vmatpush.msra.mxu0 0.0
    %5931 = vmatpush.msra.mxu0 0.0
    %5932 = vmatpush.msra.mxu0 0.0
    %5933 = vmatpush.msra.mxu0 0.0
    %5934 = vmatpush.msra.mxu0 0.0
    %5935 = vmatpush.msra.mxu0 0.0
    %5936 = vmatpush.msra.mxu0 0.0
    %5937 = vmatpush.msra.mxu0 %v5916
    %5938 = vmatpush.msra.mxu0 %v5915
    %5939 = vmatmul.f32.gmra.mxu0 %v5918
    %v5940 = vpop.f32.mrf.mxu0
    %v5941 = vadd.f32 0.0, %v5940
    %5942 = vmatmul.f32.gmra.mxu0 %v5921
    %v5943 = vpop.f32.mrf.mxu0
    %v5944 = vadd.f32 0.0, %v5943
    %5945 = vdwg.mxu0
    %v5947 = vsel %vm4095, %v5858, 0
    %v5950 = vsel %vm4095, %v5859, 0
    %5952 = vmatpush.msra.mxu0 0.0
    %5953 = vmatpush.msra.mxu0 0.0
    %5954 = vmatpush.msra.mxu0 0.0
    %5955 = vmatpush.msra.mxu0 0.0
    %5956 = vmatpush.msra.mxu0 0.0
    %5957 = vmatpush.msra.mxu0 0.0
    %5958 = vmatpush.msra.mxu0 0.0
    %5959 = vmatpush.msra.mxu0 0.0
    %5960 = vmatpush.msra.mxu0 0.0
    %5961 = vmatpush.msra.mxu0 0.0
    %5962 = vmatpush.msra.mxu0 0.0
    %5963 = vmatpush.msra.mxu0 0.0
    %5964 = vmatpush.msra.mxu0 0.0
    %5965 = vmatpush.msra.mxu0 0.0
    %5966 = vmatpush.msra.mxu0 %v5861
    %5967 = vmatpush.msra.mxu0 %v5860
    %5968 = vmatmul.f32.gmra.mxu0 %v5947
    %v5969 = vpop.f32.mrf.mxu0
    %v5970 = vadd.f32 %v5941, %v5969
    %5971 = vmatmul.f32.gmra.mxu0 %v5950
    %v5972 = vpop.f32.mrf.mxu0
    %v5973 = vadd.f32 %v5944, %v5972
    %5974 = vdwg.mxu0
    %v5975 = vmul.f32 %v5724, %v116
    %v5976 = vmul.f32 %v5727, %v116
    %v5978 = vsel %vm3887, %v5975, 0
    %v5981 = vsel %vm3887, %v5976, 0
    %5983 = vmatpush.xpose.msra.mxu0 0.0
    %5984 = vmatpush.xpose.msra.mxu0 0.0
    %5985 = vmatpush.xpose.msra.mxu0 0.0
    %5986 = vmatpush.xpose.msra.mxu0 0.0
    %5987 = vmatpush.xpose.msra.mxu0 0.0
    %5988 = vmatpush.xpose.msra.mxu0 0.0
    %5989 = vmatpush.xpose.msra.mxu0 0.0
    %5990 = vmatpush.xpose.msra.mxu0 0.0
    %5991 = vmatpush.xpose.msra.mxu0 0.0
    %5992 = vmatpush.xpose.msra.mxu0 0.0
    %5993 = vmatpush.xpose.msra.mxu0 0.0
    %5994 = vmatpush.xpose.msra.mxu0 0.0
    %5995 = vmatpush.xpose.msra.mxu0 0.0
    %5996 = vmatpush.xpose.msra.mxu0 0.0
    %5997 = vmatpush.xpose.msra.mxu0 %v5813
    %5998 = vmatpush.xpose.msra.mxu0 %v5810
    %5999 = vmatmul.f32.gmra.mxu0 %v5978
    %v6000 = vpop.f32.mrf.mxu0
    %v6001 = vadd.f32 %v338, %v6000
    %6002 = vmatmul.f32.gmra.mxu0 %v5981
    %v6003 = vpop.f32.mrf.mxu0
    %v6004 = vadd.f32 %v339, %v6003
    %6005 = vdwg.mxu0
    %v6006 = vsel %vm4095, %v6001, -inf
    %6007 = vmax.xlane.f32.xlu0 %v6006
    %v6008 = vpop.xlane.xlu0 %6007
    %v6009 = vsel %vm4095, %v6004, -inf
    %6010 = vmax.xlane.f32.xlu0 %v6009
    %v6011 = vpop.xlane.xlu0 %6010
    %v6012 = vsub.f32 %v6001, %v6008
    %v6013 = vsub.f32 %v6004, %v6011
    %v6014 = vmul.f32 %v6012, 1.442695
    %v6015 = vpow.pop %v6014
    %v6016 = vmul.f32 %v6013, 1.442695
    %v6017 = vpow.pop %v6016
    %v6018 = vsel %vm4095, %v6015, 0.0
    %6019 = vadd.xlane.f32.xlu0 %v6018
    %v6020 = vpop.xlane.xlu0 %6019
    %v6021 = vsel %vm4095, %v6017, 0.0
    %6022 = vadd.xlane.f32.xlu0 %v6021
    %v6023 = vpop.xlane.xlu0 %6022
    %v6024 = vrcp.pop %v6020
    %v6025 = vrcp.pop %v6023
    %v6026 = vmul.f32 %v6015, %v6024
    %v6027 = vmul.f32 %v6017, %v6025
    %v6028 = vmul.f32 %v5796, %v105
    %v6029 = vmul.f32 %v5799, %v105
    %v6031 = vsel %vm4095, %v6026, 0
    %v6034 = vsel %vm4095, %v6027, 0
    %6036 = vmatpush.msra.mxu0 0.0
    %6037 = vmatpush.msra.mxu0 0.0
    %6038 = vmatpush.msra.mxu0 0.0
    %6039 = vmatpush.msra.mxu0 0.0
    %6040 = vmatpush.msra.mxu0 0.0
    %6041 = vmatpush.msra.mxu0 0.0
    %6042 = vmatpush.msra.mxu0 0.0
    %6043 = vmatpush.msra.mxu0 0.0
    %6044 = vmatpush.msra.mxu0 0.0
    %6045 = vmatpush.msra.mxu0 0.0
    %6046 = vmatpush.msra.mxu0 0.0
    %6047 = vmatpush.msra.mxu0 0.0
    %6048 = vmatpush.msra.mxu0 0.0
    %6049 = vmatpush.msra.mxu0 0.0
    %6050 = vmatpush.msra.mxu0 %v6029
    %6051 = vmatpush.msra.mxu0 %v6028
    %6052 = vmatmul.f32.gmra.mxu0 %v6031
    %v6053 = vpop.f32.mrf.mxu0
    %v6054 = vadd.f32 0.0, %v6053
    %6055 = vmatmul.f32.gmra.mxu0 %v6034
    %v6056 = vpop.f32.mrf.mxu0
    %v6057 = vadd.f32 0.0, %v6056
    %6058 = vdwg.mxu0
    %v6059 = vadd.f32 %v5970, %v6054
    %v6060 = vadd.f32 %v5973, %v6057
    %v6061 = vmul.f32 %v5724, %v117
    %v6062 = vmul.f32 %v5727, %v117
    %v6064 = vsel %vm3887, %v6061, 0
    %v6067 = vsel %vm3887, %v6062, 0
    %6069 = vmatpush.xpose.msra.mxu0 0.0
    %6070 = vmatpush.xpose.msra.mxu0 0.0
    %6071 = vmatpush.xpose.msra.mxu0 0.0
    %6072 = vmatpush.xpose.msra.mxu0 0.0
    %6073 = vmatpush.xpose.msra.mxu0 0.0
    %6074 = vmatpush.xpose.msra.mxu0 0.0
    %6075 = vmatpush.xpose.msra.mxu0 0.0
    %6076 = vmatpush.xpose.msra.mxu0 0.0
    %6077 = vmatpush.xpose.msra.mxu0 0.0
    %6078 = vmatpush.xpose.msra.mxu0 0.0
    %6079 = vmatpush.xpose.msra.mxu0 0.0
    %6080 = vmatpush.xpose.msra.mxu0 0.0
    %6081 = vmatpush.xpose.msra.mxu0 0.0
    %6082 = vmatpush.xpose.msra.mxu0 0.0
    %6083 = vmatpush.xpose.msra.mxu0 %v5813
    %6084 = vmatpush.xpose.msra.mxu0 %v5810
    %6085 = vmatmul.f32.gmra.mxu0 %v6064
    %v6086 = vpop.f32.mrf.mxu0
    %v6087 = vadd.f32 %v338, %v6086
    %6088 = vmatmul.f32.gmra.mxu0 %v6067
    %v6089 = vpop.f32.mrf.mxu0
    %v6090 = vadd.f32 %v339, %v6089
    %6091 = vdwg.mxu0
    %v6092 = vsel %vm4095, %v6087, -inf
    %6093 = vmax.xlane.f32.xlu0 %v6092
    %v6094 = vpop.xlane.xlu0 %6093
    %v6095 = vsel %vm4095, %v6090, -inf
    %6096 = vmax.xlane.f32.xlu0 %v6095
    %v6097 = vpop.xlane.xlu0 %6096
    %v6098 = vsub.f32 %v6087, %v6094
    %v6099 = vsub.f32 %v6090, %v6097
    %v6100 = vmul.f32 %v6098, 1.442695
    %v6101 = vpow.pop %v6100
    %v6102 = vmul.f32 %v6099, 1.442695
    %v6103 = vpow.pop %v6102
    %v6104 = vsel %vm4095, %v6101, 0.0
    %6105 = vadd.xlane.f32.xlu0 %v6104
    %v6106 = vpop.xlane.xlu0 %6105
    %v6107 = vsel %vm4095, %v6103, 0.0
    %6108 = vadd.xlane.f32.xlu0 %v6107
    %v6109 = vpop.xlane.xlu0 %6108
    %v6110 = vrcp.pop %v6106
    %v6111 = vrcp.pop %v6109
    %v6112 = vmul.f32 %v6101, %v6110
    %v6113 = vmul.f32 %v6103, %v6111
    %v6114 = vmul.f32 %v5796, %v109
    %v6115 = vmul.f32 %v5799, %v109
    %v6117 = vsel %vm4095, %v6112, 0
    %v6120 = vsel %vm4095, %v6113, 0
    %6122 = vmatpush.msra.mxu0 0.0
    %6123 = vmatpush.msra.mxu0 0.0
    %6124 = vmatpush.msra.mxu0 0.0
    %6125 = vmatpush.msra.mxu0 0.0
    %6126 = vmatpush.msra.mxu0 0.0
    %6127 = vmatpush.msra.mxu0 0.0
    %6128 = vmatpush.msra.mxu0 0.0
    %6129 = vmatpush.msra.mxu0 0.0
    %6130 = vmatpush.msra.mxu0 0.0
    %6131 = vmatpush.msra.mxu0 0.0
    %6132 = vmatpush.msra.mxu0 0.0
    %6133 = vmatpush.msra.mxu0 0.0
    %6134 = vmatpush.msra.mxu0 0.0
    %6135 = vmatpush.msra.mxu0 0.0
    %6136 = vmatpush.msra.mxu0 %v6115
    %6137 = vmatpush.msra.mxu0 %v6114
    %6138 = vmatmul.f32.gmra.mxu0 %v6117
    %v6139 = vpop.f32.mrf.mxu0
    %v6140 = vadd.f32 0.0, %v6139
    %6141 = vmatmul.f32.gmra.mxu0 %v6120
    %v6142 = vpop.f32.mrf.mxu0
    %v6143 = vadd.f32 0.0, %v6142
    %6144 = vdwg.mxu0
    %v6145 = vadd.f32 %v6059, %v6140
    %v6146 = vadd.f32 %v6060, %v6143
    %v6147 = vmul.f32 %v5724, %v118
    %v6148 = vmul.f32 %v5727, %v118
    %v6150 = vsel %vm3887, %v6147, 0
    %v6153 = vsel %vm3887, %v6148, 0
    %6155 = vmatpush.xpose.msra.mxu0 0.0
    %6156 = vmatpush.xpose.msra.mxu0 0.0
    %6157 = vmatpush.xpose.msra.mxu0 0.0
    %6158 = vmatpush.xpose.msra.mxu0 0.0
    %6159 = vmatpush.xpose.msra.mxu0 0.0
    %6160 = vmatpush.xpose.msra.mxu0 0.0
    %6161 = vmatpush.xpose.msra.mxu0 0.0
    %6162 = vmatpush.xpose.msra.mxu0 0.0
    %6163 = vmatpush.xpose.msra.mxu0 0.0
    %6164 = vmatpush.xpose.msra.mxu0 0.0
    %6165 = vmatpush.xpose.msra.mxu0 0.0
    %6166 = vmatpush.xpose.msra.mxu0 0.0
    %6167 = vmatpush.xpose.msra.mxu0 0.0
    %6168 = vmatpush.xpose.msra.mxu0 0.0
    %6169 = vmatpush.xpose.msra.mxu0 %v5813
    %6170 = vmatpush.xpose.msra.mxu0 %v5810
    %6171 = vmatmul.f32.gmra.mxu0 %v6150
    %v6172 = vpop.f32.mrf.mxu0
    %v6173 = vadd.f32 %v338, %v6172
    %6174 = vmatmul.f32.gmra.mxu0 %v6153
    %v6175 = vpop.f32.mrf.mxu0
    %v6176 = vadd.f32 %v339, %v6175
    %6177 = vdwg.mxu0
    %v6178 = vsel %vm4095, %v6173, -inf
    %6179 = vmax.xlane.f32.xlu0 %v6178
    %v6180 = vpop.xlane.xlu0 %6179
    %v6181 = vsel %vm4095, %v6176, -inf
    %6182 = vmax.xlane.f32.xlu0 %v6181
    %v6183 = vpop.xlane.xlu0 %6182
    %v6184 = vsub.f32 %v6173, %v6180
    %v6185 = vsub.f32 %v6176, %v6183
    %v6186 = vmul.f32 %v6184, 1.442695
    %v6187 = vpow.pop %v6186
    %v6188 = vmul.f32 %v6185, 1.442695
    %v6189 = vpow.pop %v6188
    %v6190 = vsel %vm4095, %v6187, 0.0
    %6191 = vadd.xlane.f32.xlu0 %v6190
    %v6192 = vpop.xlane.xlu0 %6191
    %v6193 = vsel %vm4095, %v6189, 0.0
    %6194 = vadd.xlane.f32.xlu0 %v6193
    %v6195 = vpop.xlane.xlu0 %6194
    %v6196 = vrcp.pop %v6192
    %v6197 = vrcp.pop %v6195
    %v6198 = vmul.f32 %v6187, %v6196
    %v6199 = vmul.f32 %v6189, %v6197
    %v6200 = vmul.f32 %v5796, %v113
    %v6201 = vmul.f32 %v5799, %v113
    %v6203 = vsel %vm4095, %v6198, 0
    %v6206 = vsel %vm4095, %v6199, 0
    %6208 = vmatpush.msra.mxu0 0.0
    %6209 = vmatpush.msra.mxu0 0.0
    %6210 = vmatpush.msra.mxu0 0.0
    %6211 = vmatpush.msra.mxu0 0.0
    %6212 = vmatpush.msra.mxu0 0.0
    %6213 = vmatpush.msra.mxu0 0.0
    %6214 = vmatpush.msra.mxu0 0.0
    %6215 = vmatpush.msra.mxu0 0.0
    %6216 = vmatpush.msra.mxu0 0.0
    %6217 = vmatpush.msra.mxu0 0.0
    %6218 = vmatpush.msra.mxu0 0.0
    %6219 = vmatpush.msra.mxu0 0.0
    %6220 = vmatpush.msra.mxu0 0.0
    %6221 = vmatpush.msra.mxu0 0.0
    %6222 = vmatpush.msra.mxu0 %v6201
    %6223 = vmatpush.msra.mxu0 %v6200
    %6224 = vmatmul.f32.gmra.mxu0 %v6203
    %v6225 = vpop.f32.mrf.mxu0
    %v6226 = vadd.f32 0.0, %v6225
    %6227 = vmatmul.f32.gmra.mxu0 %v6206
    %v6228 = vpop.f32.mrf.mxu0
    %v6229 = vadd.f32 0.0, %v6228
    %6230 = vdwg.mxu0
    %v6231 = vadd.f32 %v6145, %v6226
    %v6232 = vadd.f32 %v6146, %v6229
    %s6233 = scalar_lea.vmem %s12, 704
    %v6234 = vld [vmem:[%s6233] sm:$0xff]
    %v6235 = vld [vmem:[%s6233 + $0x8] sm:$0xff]
    %v6236 = vld [vmem:[%s6233 + $0x10] sm:$0xff]
    %v6237 = vld [vmem:[%s6233 + $0x18] sm:$0xff]
    %v6238 = vld [vmem:[%s6233 + $0x20] sm:$0xff]
    %v6239 = vld [vmem:[%s6233 + $0x28] sm:$0xff]
    %v6240 = vld [vmem:[%s6233 + $0x30] sm:$0xff]
    %v6241 = vld [vmem:[%s6233 + $0x38] sm:$0xf]
    %v6242 = vperm.slane %v5633, 0
    %v6244 = vsel %vm3887, %v6231, 0
    %v6247 = vsel %vm3887, %v6232, 0
    %v6250 = vsel %vm131, %v6241, 0
    %6252 = vmatpush.msra.mxu0 0.0
    %6253 = vmatpush.msra.mxu0 0.0
    %6254 = vmatpush.msra.mxu0 0.0
    %6255 = vmatpush.msra.mxu0 0.0
    %6256 = vmatpush.msra.mxu0 0.0
    %6257 = vmatpush.msra.mxu0 0.0
    %6258 = vmatpush.msra.mxu0 0.0
    %6259 = vmatpush.msra.mxu0 0.0
    %6260 = vmatpush.msra.mxu0 %v6250
    %6261 = vmatpush.msra.mxu0 %v6240
    %6262 = vmatpush.msra.mxu0 %v6239
    %6263 = vmatpush.msra.mxu0 %v6238
    %6264 = vmatpush.msra.mxu0 %v6237
    %6265 = vmatpush.msra.mxu0 %v6236
    %6266 = vmatpush.msra.mxu0 %v6235
    %6267 = vmatpush.msra.mxu0 %v6234
    %6268 = vmatmul.f32.gmra.mxu0 %v6244
    %v6269 = vpop.f32.mrf.mxu0
    %v6270 = vadd.f32 %v6242, %v6269
    %6271 = vmatmul.f32.gmra.mxu0 %v6247
    %v6272 = vpop.f32.mrf.mxu0
    %v6273 = vadd.f32 %v6242, %v6272
    %6274 = vdwg.mxu0
    %v6275 = vadd.f32 %v5625, %v6270
    %v6276 = vadd.f32 %v5626, %v6273
    %v6277 = vsel %vm3887, %v6275, 0.0
    %6278 = vadd.xlane.f32.xlu0 %v6277
    %v6279 = vpop.xlane.xlu0 %6278
    %v6280 = vsel %vm3887, %v6276, 0.0
    %6281 = vadd.xlane.f32.xlu0 %v6280
    %v6282 = vpop.xlane.xlu0 %6281
    %v6283 = vmul.f32 %v6279, %v3900
    %v6284 = vmul.f32 %v6282, %v3900
    %v6285 = vsub.f32 %v6275, %v6283
    %v6286 = vsub.f32 %v6276, %v6284
    %v6287 = vmul.f32 %v6285, %v6285
    %v6288 = vmul.f32 %v6286, %v6286
    %v6289 = vsel %vm3887, %v6287, 0.0
    %6290 = vadd.xlane.f32.xlu0 %v6289
    %v6291 = vpop.xlane.xlu0 %6290
    %v6292 = vsel %vm3887, %v6288, 0.0
    %6293 = vadd.xlane.f32.xlu0 %v6292
    %v6294 = vpop.xlane.xlu0 %6293
    %v6295 = vmul.f32 %v6291, %v3900
    %v6296 = vmul.f32 %v6294, %v3900
    %v6297 = vadd.f32 %v6295, 1e-05
    %v6298 = vadd.f32 %v6296, 1e-05
    %v6299 = vrsqrt.pop %v6297
    %v6300 = vmul.f32 %v6299, %v6297
    %v6301 = vmul.f32 %v6300, %v6299
    %v6302 = vmul.f32 0.5, %v6301
    %v6303 = vsub.f32 1.5, %v6302
    %v6304 = vmul.f32 %v6299, %v6303
    %vm6305 = vweird.f32 %v6297
    %vm6306 = vweird.f32 %v6299
    %vm6307 = vmor %vm6305, %vm6306
    %v6308 = vsel %vm6307, %v6299, %v6304
    %v6309 = vrsqrt.pop %v6298
    %v6310 = vmul.f32 %v6309, %v6298
    %v6311 = vmul.f32 %v6310, %v6309
    %v6312 = vmul.f32 0.5, %v6311
    %v6313 = vsub.f32 1.5, %v6312
    %v6314 = vmul.f32 %v6309, %v6313
    %vm6315 = vweird.f32 %v6298
    %vm6316 = vweird.f32 %v6309
    %vm6317 = vmor %vm6315, %vm6316
    %v6318 = vsel %vm6317, %v6309, %v6314
    %v6319 = vmul.f32 %v6285, %v6308
    %v6320 = vmul.f32 %v6286, %v6318
    %v6321 = vperm.slane %v5634, 0
    %v6322 = vmul.f32 %v6319, %v6321
    %v6323 = vmul.f32 %v6320, %v6321
    %v6324 = vperm.slane %v5635, 0
    %v6325 = vadd.f32 %v6322, %v6324
    %v6326 = vadd.f32 %v6323, %v6324
    %s6327 = scalar_lea.vmem %s13, 256
    %v6328 = vld [vmem:[%s6327] sm:$0xff]
    %v6329 = vld [vmem:[%s6327 + $0x8] sm:$0xff]
    %v6330 = vld [vmem:[%s6327 + $0x10] sm:$0xff]
    %v6331 = vld [vmem:[%s6327 + $0x18] sm:$0xff]
    %v6332 = vld [vmem:[%s6327 + $0x20] sm:$0xff]
    %v6333 = vld [vmem:[%s6327 + $0x28] sm:$0xff]
    %v6334 = vld [vmem:[%s6327 + $0x30] sm:$0xff]
    %v6335 = vld [vmem:[%s6327 + $0x38] sm:$0xff]
    %v6336 = vld [vmem:[%s6327 + $0x40] sm:$0xff]
    %v6337 = vld [vmem:[%s6327 + $0x48] sm:$0xff]
    %v6338 = vld [vmem:[%s6327 + $0x50] sm:$0xff]
    %v6339 = vld [vmem:[%s6327 + $0x58] sm:$0xff]
    %v6340 = vld [vmem:[%s6327 + $0x60] sm:$0xff]
    %v6341 = vld [vmem:[%s6327 + $0x68] sm:$0xff]
    %v6342 = vld [vmem:[%s6327 + $0x70] sm:$0xf]
    %v6343 = vld [vmem:[%s6327 + $0x78] sm:$0xf]
    %s6344 = scalar_lea.vmem %s16, 4
    %v6345 = vld [vmem:[%s6344] sm:$0x3]
    %v6347 = vperm.slane %v6345, 0
    %v6348 = vperm.slane %v6345, 1
    %v6352 = vsel %vm3887, %v6325, 0
    %v6355 = vsel %vm3887, %v6326, 0
    %v6358 = vsel %vm131, %v6342, 0
    %v6361 = vsel %vm131, %v6343, 0
    %6363 = vmatpush.msra.mxu0 0.0
    %6364 = vmatpush.msra.mxu0 0.0
    %6365 = vmatpush.msra.mxu0 0.0
    %6366 = vmatpush.msra.mxu0 0.0
    %6367 = vmatpush.msra.mxu0 0.0
    %6368 = vmatpush.msra.mxu0 0.0
    %6369 = vmatpush.msra.mxu0 0.0
    %6370 = vmatpush.msra.mxu0 0.0
    %6371 = vmatpush.msra.mxu0 %v6358
    %6372 = vmatpush.msra.mxu0 %v6340
    %6373 = vmatpush.msra.mxu0 %v6338
    %6374 = vmatpush.msra.mxu0 %v6336
    %6375 = vmatpush.msra.mxu0 %v6334
    %6376 = vmatpush.msra.mxu0 %v6332
    %6377 = vmatpush.msra.mxu0 %v6330
    %6378 = vmatpush.msra.mxu0 %v6328
    %6379 = vmatmul.f32.gmra.mxu0 %v6352
    %v6380 = vpop.f32.mrf.mxu0
    %v6381 = vadd.f32 %v6347, %v6380
    %6382 = vmatmul.f32.gmra.mxu0 %v6355
    %v6383 = vpop.f32.mrf.mxu0
    %v6384 = vadd.f32 %v6347, %v6383
    %6385 = vdwg.mxu0
    %6386 = vmatpush.msra.mxu0 0.0
    %6387 = vmatpush.msra.mxu0 0.0
    %6388 = vmatpush.msra.mxu0 0.0
    %6389 = vmatpush.msra.mxu0 0.0
    %6390 = vmatpush.msra.mxu0 0.0
    %6391 = vmatpush.msra.mxu0 0.0
    %6392 = vmatpush.msra.mxu0 0.0
    %6393 = vmatpush.msra.mxu0 0.0
    %6394 = vmatpush.msra.mxu0 %v6361
    %6395 = vmatpush.msra.mxu0 %v6341
    %6396 = vmatpush.msra.mxu0 %v6339
    %6397 = vmatpush.msra.mxu0 %v6337
    %6398 = vmatpush.msra.mxu0 %v6335
    %6399 = vmatpush.msra.mxu0 %v6333
    %6400 = vmatpush.msra.mxu0 %v6331
    %6401 = vmatpush.msra.mxu0 %v6329
    %6402 = vmatmul.f32.gmra.mxu0 %v6352
    %v6403 = vpop.f32.mrf.mxu0
    %v6404 = vadd.f32 %v6348, %v6403
    %6405 = vmatmul.f32.gmra.mxu0 %v6355
    %v6406 = vpop.f32.mrf.mxu0
    %v6407 = vadd.f32 %v6348, %v6406
    %6408 = vdwg.mxu0
    %v6409 = vmax.f32 %v6381, 0.0
    %v6410 = vmax.f32 %v6404, 0.0
    %v6411 = vmax.f32 %v6384, 0.0
    %v6412 = vmax.f32 %v6407, 0.0
    %s6413 = scalar_lea.vmem %s14, 480
    %v6414 = vld [vmem:[%s6413] sm:$0xff]
    %v6415 = vld [vmem:[%s6413 + $0x8] sm:$0xff]
    %v6416 = vld [vmem:[%s6413 + $0x10] sm:$0xff]
    %v6417 = vld [vmem:[%s6413 + $0x18] sm:$0xff]
    %v6418 = vld [vmem:[%s6413 + $0x20] sm:$0xff]
    %v6419 = vld [vmem:[%s6413 + $0x28] sm:$0xff]
    %v6420 = vld [vmem:[%s6413 + $0x30] sm:$0xff]
    %v6421 = vld [vmem:[%s6413 + $0x38] sm:$0xff]
    %v6422 = vld [vmem:[%s6413 + $0x40] sm:$0xff]
    %v6423 = vld [vmem:[%s6413 + $0x48] sm:$0xff]
    %v6424 = vld [vmem:[%s6413 + $0x50] sm:$0xff]
    %v6425 = vld [vmem:[%s6413 + $0x58] sm:$0xff]
    %v6426 = vld [vmem:[%s6413 + $0x60] sm:$0xff]
    %v6427 = vld [vmem:[%s6413 + $0x68] sm:$0xff]
    %v6428 = vld [vmem:[%s6413 + $0x70] sm:$0xff]
    %v6429 = vld [vmem:[%s6413 + $0x78] sm:$0xff]
    %v6430 = vld [vmem:[%s6413 + $0x80] sm:$0xff]
    %v6431 = vld [vmem:[%s6413 + $0x88] sm:$0xff]
    %v6432 = vld [vmem:[%s6413 + $0x90] sm:$0xff]
    %v6433 = vld [vmem:[%s6413 + $0x98] sm:$0xff]
    %v6434 = vld [vmem:[%s6413 + $0xa0] sm:$0xff]
    %v6435 = vld [vmem:[%s6413 + $0xa8] sm:$0xff]
    %v6436 = vld [vmem:[%s6413 + $0xb0] sm:$0xff]
    %v6437 = vld [vmem:[%s6413 + $0xb8] sm:$0xff]
    %v6438 = vld [vmem:[%s6413 + $0xc0] sm:$0xff]
    %v6439 = vld [vmem:[%s6413 + $0xc8] sm:$0xff]
    %v6440 = vld [vmem:[%s6413 + $0xd0] sm:$0xff]
    %v6441 = vld [vmem:[%s6413 + $0xd8] sm:$0xff]
    %v6442 = vld [vmem:[%s6413 + $0xe0] sm:$0xff]
    %v6443 = vld [vmem:[%s6413 + $0xe8] sm:$0xff]
    %v6444 = vperm.slane %v5636, 0
    %v6446 = vsel %vm4700, %v6410, 0
    %v6449 = vsel %vm4700, %v6412, 0
    %6451 = vmatpush.msra.mxu0 %v6429
    %6452 = vmatpush.msra.mxu0 %v6428
    %6453 = vmatpush.msra.mxu0 %v6427
    %6454 = vmatpush.msra.mxu0 %v6426
    %6455 = vmatpush.msra.mxu0 %v6425
    %6456 = vmatpush.msra.mxu0 %v6424
    %6457 = vmatpush.msra.mxu0 %v6423
    %6458 = vmatpush.msra.mxu0 %v6422
    %6459 = vmatpush.msra.mxu0 %v6421
    %6460 = vmatpush.msra.mxu0 %v6420
    %6461 = vmatpush.msra.mxu0 %v6419
    %6462 = vmatpush.msra.mxu0 %v6418
    %6463 = vmatpush.msra.mxu0 %v6417
    %6464 = vmatpush.msra.mxu0 %v6416
    %6465 = vmatpush.msra.mxu0 %v6415
    %6466 = vmatpush.msra.mxu0 %v6414
    %6467 = vmatmul.f32.gmra.mxu0 %v6409
    %v6468 = vpop.f32.mrf.mxu0
    %v6469 = vadd.f32 %v6444, %v6468
    %6470 = vmatmul.f32.gmra.mxu0 %v6411
    %v6471 = vpop.f32.mrf.mxu0
    %v6472 = vadd.f32 %v6444, %v6471
    %6473 = vdwg.mxu0
    %6474 = vmatpush.msra.mxu0 0.0
    %6475 = vmatpush.msra.mxu0 0.0
    %6476 = vmatpush.msra.mxu0 %v6443
    %6477 = vmatpush.msra.mxu0 %v6442
    %6478 = vmatpush.msra.mxu0 %v6441
    %6479 = vmatpush.msra.mxu0 %v6440
    %6480 = vmatpush.msra.mxu0 %v6439
    %6481 = vmatpush.msra.mxu0 %v6438
    %6482 = vmatpush.msra.mxu0 %v6437
    %6483 = vmatpush.msra.mxu0 %v6436
    %6484 = vmatpush.msra.mxu0 %v6435
    %6485 = vmatpush.msra.mxu0 %v6434
    %6486 = vmatpush.msra.mxu0 %v6433
    %6487 = vmatpush.msra.mxu0 %v6432
    %6488 = vmatpush.msra.mxu0 %v6431
    %6489 = vmatpush.msra.mxu0 %v6430
    %6490 = vmatmul.f32.gmra.mxu0 %v6446
    %v6491 = vpop.f32.mrf.mxu0
    %v6492 = vadd.f32 %v6469, %v6491
    %6493 = vmatmul.f32.gmra.mxu0 %v6449
    %v6494 = vpop.f32.mrf.mxu0
    %v6495 = vadd.f32 %v6472, %v6494
    %6496 = vdwg.mxu0
    %v6497 = vadd.f32 %v6275, %v6492
    %v6498 = vadd.f32 %v6276, %v6495
    %v6499 = vld [vmem:[%s17] sm:$0x1]
    %v6500 = vld [vmem:[%s17 + $0x1] sm:$0x1]
    %v6501 = vsel %vm3887, %v6497, 0.0
    %6502 = vadd.xlane.f32.xlu0 %v6501
    %v6503 = vpop.xlane.xlu0 %6502
    %v6504 = vsel %vm3887, %v6498, 0.0
    %6505 = vadd.xlane.f32.xlu0 %v6504
    %v6506 = vpop.xlane.xlu0 %6505
    %v6507 = vmul.f32 %v6503, %v3900
    %v6508 = vmul.f32 %v6506, %v3900
    %v6509 = vsub.f32 %v6497, %v6507
    %v6510 = vsub.f32 %v6498, %v6508
    %v6511 = vmul.f32 %v6509, %v6509
    %v6512 = vmul.f32 %v6510, %v6510
    %v6513 = vsel %vm3887, %v6511, 0.0
    %6514 = vadd.xlane.f32.xlu0 %v6513
    %v6515 = vpop.xlane.xlu0 %6514
    %v6516 = vsel %vm3887, %v6512, 0.0
    %6517 = vadd.xlane.f32.xlu0 %v6516
    %v6518 = vpop.xlane.xlu0 %6517
    %v6519 = vmul.f32 %v6515, %v3900
    %v6520 = vmul.f32 %v6518, %v3900
    %v6521 = vadd.f32 %v6519, 1e-05
    %v6522 = vadd.f32 %v6520, 1e-05
    %v6523 = vrsqrt.pop %v6521
    %v6524 = vmul.f32 %v6523, %v6521
    %v6525 = vmul.f32 %v6524, %v6523
    %v6526 = vmul.f32 0.5, %v6525
    %v6527 = vsub.f32 1.5, %v6526
    %v6528 = vmul.f32 %v6523, %v6527
    %vm6529 = vweird.f32 %v6521
    %vm6530 = vweird.f32 %v6523
    %vm6531 = vmor %vm6529, %vm6530
    %v6532 = vsel %vm6531, %v6523, %v6528
    %v6533 = vrsqrt.pop %v6522
    %v6534 = vmul.f32 %v6533, %v6522
    %v6535 = vmul.f32 %v6534, %v6533
    %v6536 = vmul.f32 0.5, %v6535
    %v6537 = vsub.f32 1.5, %v6536
    %v6538 = vmul.f32 %v6533, %v6537
    %vm6539 = vweird.f32 %v6522
    %vm6540 = vweird.f32 %v6533
    %vm6541 = vmor %vm6539, %vm6540
    %v6542 = vsel %vm6541, %v6533, %v6538
    %v6543 = vmul.f32 %v6509, %v6532
    %v6544 = vmul.f32 %v6510, %v6542
    %v6545 = vperm.slane %v6499, 0
    %v6546 = vmul.f32 %v6543, %v6545
    %v6547 = vmul.f32 %v6544, %v6545
    %v6548 = vperm.slane %v6500, 0
    %v6549 = vadd.f32 %v6546, %v6548
    %v6550 = vadd.f32 %v6547, %v6548
    %v6551 = vadd.s32 %v274, 1
    %v6552 = vmul.u32 %v6551, 8
    %v6553 = vsub.s32 %v6552, 1
    %vm6554 = vcmp.eq.s32.totalorder %v73, %v6553
    %v6555 = vsel %vm6554, 1.0, 0.0
    %v6557 = vsel %vm4095, %v6555, 0
    %6559 = vmatpush.msra.mxu0 0.0
    %6560 = vmatpush.msra.mxu0 0.0
    %6561 = vmatpush.msra.mxu0 0.0
    %6562 = vmatpush.msra.mxu0 0.0
    %6563 = vmatpush.msra.mxu0 0.0
    %6564 = vmatpush.msra.mxu0 0.0
    %6565 = vmatpush.msra.mxu0 0.0
    %6566 = vmatpush.msra.mxu0 0.0
    %6567 = vmatpush.msra.mxu0 0.0
    %6568 = vmatpush.msra.mxu0 0.0
    %6569 = vmatpush.msra.mxu0 0.0
    %6570 = vmatpush.msra.mxu0 0.0
    %6571 = vmatpush.msra.mxu0 0.0
    %6572 = vmatpush.msra.mxu0 0.0
    %6573 = vmatpush.msra.mxu0 %v6550
    %6574 = vmatpush.msra.mxu0 %v6549
    %6575 = vmatmul.f32.gmra.mxu0 %v6557
    %v6576 = vpop.f32.mrf.mxu0
    %v6577 = vadd.f32 0.0, %v6576
    %6578 = vdwg.mxu0
    %v6579 = vld [vmem:[%s18] sm:$0xff]
    %v6580 = vld [vmem:[%s18 + $0x8] sm:$0xff]
    %v6581 = vld [vmem:[%s18 + $0x10] sm:$0xff]
    %v6582 = vld [vmem:[%s18 + $0x18] sm:$0xff]
    %v6583 = vld [vmem:[%s18 + $0x20] sm:$0xff]
    %v6584 = vld [vmem:[%s18 + $0x28] sm:$0xff]
    %v6585 = vld [vmem:[%s18 + $0x30] sm:$0xff]
    %v6586 = vld [vmem:[%s18 + $0x38] sm:$0xf]
    %v6587 = vld [vmem:[%s19] sm:$0x1]
    %v6588 = vperm.slane %v6587, 0
    %v6590 = vsel %vm3887, %v6577, 0
    %v6593 = vsel %vm131, %v6586, 0
    %6595 = vmatpush.msra.mxu0 0.0
    %6596 = vmatpush.msra.mxu0 0.0
    %6597 = vmatpush.msra.mxu0 0.0
    %6598 = vmatpush.msra.mxu0 0.0
    %6599 = vmatpush.msra.mxu0 0.0
    %6600 = vmatpush.msra.mxu0 0.0
    %6601 = vmatpush.msra.mxu0 0.0
    %6602 = vmatpush.msra.mxu0 0.0
    %6603 = vmatpush.msra.mxu0 %v6593
    %6604 = vmatpush.msra.mxu0 %v6585
    %6605 = vmatpush.msra.mxu0 %v6584
    %6606 = vmatpush.msra.mxu0 %v6583
    %6607 = vmatpush.msra.mxu0 %v6582
    %6608 = vmatpush.msra.mxu0 %v6581
    %6609 = vmatpush.msra.mxu0 %v6580
    %6610 = vmatpush.msra.mxu0 %v6579
    %6611 = vmatmul.f32.gmra.mxu0 %v6590
    %v6612 = vpop.f32.mrf.mxu0
    %v6613 = vadd.f32 %v6588, %v6612
    %6614 = vdwg.mxu0
    %v6615 = vmax.f32 %v6613, 0.0
    %s6616 = scalar_lea.vmem %s18, 64
    %v6617 = vld [vmem:[%s6616] sm:$0xff]
    %v6618 = vld [vmem:[%s6616 + $0x8] sm:$0xff]
    %v6619 = vld [vmem:[%s6616 + $0x10] sm:$0xff]
    %v6620 = vld [vmem:[%s6616 + $0x18] sm:$0xff]
    %v6621 = vld [vmem:[%s6616 + $0x20] sm:$0xff]
    %v6622 = vld [vmem:[%s6616 + $0x28] sm:$0xff]
    %v6623 = vld [vmem:[%s6616 + $0x30] sm:$0xff]
    %v6624 = vld [vmem:[%s6616 + $0x38] sm:$0xf]
    %v6625 = vld [vmem:[%s19 + $0x1] sm:$0x1]
    %v6626 = vperm.slane %v6625, 0
    %v6628 = vsel %vm3887, %v6615, 0
    %v6631 = vsel %vm131, %v6624, 0
    %6633 = vmatpush.msra.mxu0 0.0
    %6634 = vmatpush.msra.mxu0 0.0
    %6635 = vmatpush.msra.mxu0 0.0
    %6636 = vmatpush.msra.mxu0 0.0
    %6637 = vmatpush.msra.mxu0 0.0
    %6638 = vmatpush.msra.mxu0 0.0
    %6639 = vmatpush.msra.mxu0 0.0
    %6640 = vmatpush.msra.mxu0 0.0
    %6641 = vmatpush.msra.mxu0 %v6631
    %6642 = vmatpush.msra.mxu0 %v6623
    %6643 = vmatpush.msra.mxu0 %v6622
    %6644 = vmatpush.msra.mxu0 %v6621
    %6645 = vmatpush.msra.mxu0 %v6620
    %6646 = vmatpush.msra.mxu0 %v6619
    %6647 = vmatpush.msra.mxu0 %v6618
    %6648 = vmatpush.msra.mxu0 %v6617
    %6649 = vmatmul.f32.gmra.mxu0 %v6628
    %v6650 = vpop.f32.mrf.mxu0
    %v6651 = vadd.f32 %v6626, %v6650
    %6652 = vdwg.mxu0
    %v6653 = vadd.f32 %v6651, %v6577
    %v6654 = vld [vmem:[%s20] sm:$0xff]
    %v6655 = vld [vmem:[%s20 + $0x8] sm:$0xff]
    %v6656 = vld [vmem:[%s20 + $0x10] sm:$0xff]
    %v6657 = vld [vmem:[%s20 + $0x18] sm:$0xff]
    %v6658 = vld [vmem:[%s20 + $0x20] sm:$0xff]
    %v6659 = vld [vmem:[%s20 + $0x28] sm:$0xff]
    %v6660 = vld [vmem:[%s20 + $0x30] sm:$0xff]
    %v6661 = vld [vmem:[%s20 + $0x38] sm:$0xf]
    %v6662 = vld [vmem:[%s21] sm:$0x1]
    %v6664 = vperm.slane %v6662, 0
    %v6667 = vsel %vm3887, %v6653, 0
    %v6670 = vsel %vm131, %v6661, 0
    %6672 = vmatpush.msra.mxu0 0.0
    %6673 = vmatpush.msra.mxu0 0.0
    %6674 = vmatpush.msra.mxu0 0.0
    %6675 = vmatpush.msra.mxu0 0.0
    %6676 = vmatpush.msra.mxu0 0.0
    %6677 = vmatpush.msra.mxu0 0.0
    %6678 = vmatpush.msra.mxu0 0.0
    %6679 = vmatpush.msra.mxu0 0.0
    %6680 = vmatpush.msra.mxu0 %v6670
    %6681 = vmatpush.msra.mxu0 %v6660
    %6682 = vmatpush.msra.mxu0 %v6659
    %6683 = vmatpush.msra.mxu0 %v6658
    %6684 = vmatpush.msra.mxu0 %v6657
    %6685 = vmatpush.msra.mxu0 %v6656
    %6686 = vmatpush.msra.mxu0 %v6655
    %6687 = vmatpush.msra.mxu0 %v6654
    %6688 = vmatmul.f32.gmra.mxu0 %v6667
    %v6689 = vpop.f32.mrf.mxu0
    %v6690 = vadd.f32 %v6664, %v6689
    %6691 = vdwg.mxu0
    %vm6692 = vcmask 25600
    %6693 = vst.msk [vmem:[#allocation2] sm:$0x3] %vm6692, %v6690
    // Predicated region
    $region90: #{mult_forward.1} parent=1 // pred_check
      _
    $region91: #{mult_forward.1} parent=1 // pred_check_branch
      %6695 = sbr.rel (0) target = $region93
    $region92: #{mult_forward.1} parent=1 // pred_region
      %6697 = vsyncadd [#allocation3], 0
      %s6699 = sshll.u32 [#allocation2], 4
      %s6700 = int_to_ptr.vmem [resolvable:$true] %s6699
      %s6701 = sshll.u32 %s22, 4
      %s6702 = int_to_ptr.hbm [resolvable:$true] %s6701
      %6704 = dma.vmem_to_hbm [thread:$0]  %s6700, 32, %s6702, [#allocation3]
    $region93: #{mult_forward.1} parent=1 // pred_fallthru
      _
    // Predicated region
    $region94: #{mult_forward.1} parent=1 // pred_check
      _
    $region95: #{mult_forward.1} parent=1 // pred_check_branch
      %6706 = sbr.rel (0) target = $region97
    $region96: #{mult_forward.1} parent=1 // pred_region
      %6708 = dma.done [#allocation3], 32
    $region97: #{mult_forward.1} parent=1 // pred_fallthru
      _
    %6709 = vsyncpa [#allocation3], 1

</llo_original>
